<compile_context>
chip_gen: v6e
topology: v6e:2x2x1
jax: 0.10.0
libtpu: 0.0.40
codegen_flags: <defaults>
</compile_context>

<pallas_src>
import functools

import jax
import jax.numpy as jnp
from jax import lax
from jax.experimental import pallas as pl
from jax.experimental.pallas import tpu as pltpu

ENC_LAYERS = 16   # enc_layers in the reference
DEC_LAYERS = 16   # dec_layers in the reference


def _vmem():
    return pl.BlockSpec(memory_space=pltpu.MemorySpace.VMEM)


def _smem():
    return pl.BlockSpec(memory_space=pltpu.MemorySpace.SMEM)


# ----------------------------- the fused Pallas kernel -----------------------------

def _treeqn_fused_kernel(gamma, N, A, E,
                         patches_ref, wconv_ref, bconv_ref, bng_ref, bnb_ref,
                         wtile_ref, seg_ref, encb_ref,
                         tmat_ref, goal_ref, sel_ref, gbeta_ref,
                         wfc_ref, bfc_ref, wfold_ref, bdec_ref,
                         dec0_ref, dec1_ref, dec2_ref, dec3_ref, dec4_ref,
                         t1_ref, t2_ref, t3_ref, t4_ref, cos_ref):
    f32 = jnp.float32

    # --- CNN_Encoder: im2col conv matmul + train-mode BatchNorm (batch stats) + ReLU ---
    y = jnp.dot(patches_ref[...], wconv_ref[...], preferred_element_type=f32) + bconv_ref[...]
    mean = jnp.mean(y, axis=0, keepdims=True)
    var = jnp.mean(jnp.square(y - mean), axis=0, keepdims=True)            # biased variance
    act = jnp.maximum((y - mean) * lax.rsqrt(var + 1e-5) * bng_ref[...] + bnb_ref[...], 0.0)

    # --- Embed linear (+ReLU): contract (position, channel) activations against the
    #     per-channel encoder-weight slabs (VPU), then segment-sum positions per batch
    #     row on the MXU.  This avoids any in-kernel NCHW-flatten relayout.
    cout = act.shape[1]
    contrib = act[:, 0:1] * wtile_ref[0]                                    # (N*P, E)
    for c in range(1, cout):
        contrib = contrib + act[:, c:c + 1] * wtile_ref[c]
    emb0 = jnp.dot(seg_ref[...], contrib, preferred_element_type=f32)       # (N, E)
    emb0 = jnp.maximum(emb0 + encb_ref[...], 0.0)

    # --- tree plan: 4 transition levels, rewards via an MXU segmented reduction.
    #     Level-l data is action-major: rows = (b_l, ..., b_1, n), newest action most
    #     significant; lanes of the "wide" form carry (b_new, e).
    beta = gbeta_ref[0, 0]
    goal = goal_ref[...]                   # (1, A*E)
    sel = sel_ref[...]                     # (A*E, A)
    tmat = tmat_ref[...]                   # (E, A*E)

    x = emb0
    rewards, embs = [], []
    for _ in range(4):
        wide = jnp.dot(x, tmat, preferred_element_type=f32)                 # (M, A*E)
        d = wide - goal
        sumsq = jnp.dot(d * d, sel, preferred_element_type=f32)             # (M, A)
        rewards.append(-jnp.sqrt(sumsq) * beta)
        x = jnp.concatenate([wide[:, b * E:(b + 1) * E] for b in range(A)], axis=0)
        embs.append(x)                                                       # (A*M, E)
    r1, r2, r3, r4 = rewards
    x1, x2, x3, x4 = embs

    def regroup(v):
        # (A*m, 1) action-major rows -> (m, A), newest action on lanes
        m = v.shape[0] // A
        return jnp.concatenate([v[b * m:(b + 1) * m, :] for b in range(A)], axis=1)

    def spread(t):
        # (m, A) -> (A*m, 1) action-major rows (inverse of regroup)
        return jnp.concatenate([t[:, b:b + 1] for b in range(A)], axis=0)

    def row_softmax(z):
        ez = jnp.exp(z - jnp.max(z, axis=1, keepdims=True))
        return ez / jnp.sum(ez, axis=1, keepdims=True)

    # --- tree backup ---
    fourth_vibes = jnp.sum(r4, axis=1, keepdims=True)
    third = r3 + gamma * regroup(fourth_vibes)
    third_vibes = jnp.sum(third, axis=1, keepdims=True)
    second = r2 + gamma * regroup(third_vibes)
    second_vibes = jnp.sum(second, axis=1, keepdims=True)
    first = r1 + gamma * regroup(second_vibes)

    # softmax over ALL elements of `first` (torch: dim=0 on the flat (N*A,) vector)
    fmax = jnp.max(jnp.max(first, axis=1, keepdims=True), axis=0, keepdims=True)
    e1 = jnp.exp(first - fmax)
    s1 = jnp.sum(jnp.sum(e1, axis=1, keepdims=True), axis=0, keepdims=True)
    t1 = e1 / s1                                                             # (N, A)
    t2 = row_softmax(second) * spread(t1)                                    # (N*A, A)
    t3 = row_softmax(third) * spread(t2)                                     # (N*A*A, A)
    t4 = row_softmax(r4) * spread(t3)                                        # (N*A^3, A)

    def lane_pad_store(t, ref):
        rows, cols = t.shape
        ref[...] = jnp.concatenate([t, jnp.zeros((rows, ref.shape[1] - cols), f32)], axis=1)

    lane_pad_store(t1, t1_ref)
    lane_pad_store(t2, t2_ref)
    lane_pad_store(t3, t3_ref)
    lane_pad_store(t4, t4_ref)

    # --- mean pairwise cosine similarity of the level-1 embeddings (permutation
    #     invariant, so the action-major row order is fine).
    #     sum_{i,j} <v_i, v_j> = ||sum_i v_i||^2 with v_i the eps-normalized rows.
    sq = jnp.sum(x1 * x1, axis=1, keepdims=True)
    v = x1 * lax.rsqrt(jnp.maximum(sq, 1e-16))                               # torch eps=1e-8
    s = jnp.sum(v, axis=0, keepdims=True)                                    # (1, E)
    m_rows = x1.shape[0]
    cos_ref[...] = jnp.sum(s * s, axis=1, keepdims=True) / (m_rows * m_rows)

    # --- CNN_Decoder for every embedding level: fc + ReLU, then the ConvTranspose2d
    #     folded into a dense matmul.  Hidden dim padded 400->512, output lane-dense 128.
    wfc = wfc_ref[...]
    bfc = bfc_ref[...]
    wfold = wfold_ref[...]
    bdec = bdec_ref[...]

    def decode(xe, out_ref):
        h = jnp.maximum(jnp.dot(xe, wfc, preferred_element_type=f32) + bfc, 0.0)
        out_ref[...] = jnp.dot(h, wfold, preferred_element_type=f32) + bdec

    decode(emb0, dec0_ref)
    decode(x1, dec1_ref)
    decode(x2, dec2_ref)
    decode(x3, dec3_ref)
    decode(x4, dec4_ref)


# ----------------------------- JAX glue -----------------------------

def im2col(x, kh, kw, pad):
    """x: (N, C, H, W) -> patches (N*Ho*Wo, C*kh*kw), column order (c, ky, kx)."""
    N, C, H, W = x.shape
    xp = jnp.pad(x, ((0, 0), (0, 0), (pad, pad), (pad, pad)))
    Ho = H + 2 * pad - kh + 1
    Wo = W + 2 * pad - kw + 1
    cols = []
    for ky in range(kh):
        for kx in range(kw):
            cols.append(xp[:, :, ky:ky + Ho, kx:kx + Wo])     # (N, C, Ho, Wo)
    p = jnp.stack(cols, axis=2)                               # (N, C, kh*kw, Ho, Wo)
    p = jnp.transpose(p, (0, 3, 4, 1, 2))                     # (N, Ho, Wo, C, kh*kw)
    return p.reshape(N * Ho * Wo, C * kh * kw), Ho, Wo


def _build_deconv_fold(deconv_w):
    """ConvTranspose2d(C,1,k=3,s=1,p=1) on a 5x5 map == dense (C*25, 25) linear map."""
    C = deconv_w.shape[0]
    wflip = jnp.flip(deconv_w[:, 0, :, :], axis=(1, 2)).astype(jnp.float32)   # (C, 3, 3)
    idx = jnp.arange(5)
    d = idx[:, None] - idx[None, :] + 1                       # (5, 5)  [in_pos, out_pos]
    valid = (d >= 0) & (d < 3)
    dc = jnp.clip(d, 0, 2)
    F = wflip[:, dc[:, None, :, None], dc[None, :, None, :]]  # (C, 5, 5, 5, 5)
    mask = valid[:, None, :, None] & valid[None, :, None, :]  # (5, 5, 5, 5)
    F = jnp.where(mask[None], F, 0.0)
    return F.reshape(C * 25, 25)                              # rows (c,i,j), cols (y,x)


def treeqn_forward(x, params, *, embedding_dim, num_actions, tree_depth, gamma):
    assert tree_depth == 4, "tree_backup in the reference hard-codes a depth-4 tree"
    f32 = jnp.float32
    N, C, H, W = x.shape
    E, A = embedding_dim, num_actions

    # -------- encoder prep --------
    patches, Ho, Wo = im2col(x, 2, 2, 2)                      # (N*Ho*Wo, C*4)
    P = Ho * Wo
    wconv = jnp.transpose(params['conv_w'], (1, 2, 3, 0)).reshape(C * 4, ENC_LAYERS)
    bconv = params['conv_b'].reshape(1, ENC_LAYERS)
    bng = params['bn_gamma'].reshape(1, ENC_LAYERS)
    bnb = params['bn_beta'].reshape(1, ENC_LAYERS)

    # encoder linear weight split into per-conv-channel slabs, tiled over the batch:
    #   wtile[c, n*P + p, e] = enc_lin_w[e, c*P + p]   (torch NCHW flatten order)
    wtile = params['enc_lin_w'].reshape(E, ENC_LAYERS, P).transpose(1, 2, 0)   # (C, P, E)
    wtile = jnp.tile(wtile, (1, N, 1))                                          # (C, N*P, E)
    seg = jnp.repeat(jnp.eye(N, dtype=f32), P, axis=1)                          # (N, N*P)
    encb = params['enc_lin_b'].reshape(1, E)

    # -------- tree prep --------
    # t_mat[j, b*E + a] = transition_fun[j, a, b]  (einsum 'ij,jab->iba' as a matmul)
    t_mat = jnp.transpose(params['transition_fun'], (0, 2, 1)).reshape(E, A * E)
    goal_tile = jnp.tile(params['goal'], A).reshape(1, A * E)
    sel = jnp.repeat(jnp.eye(A, dtype=f32), E, axis=0)                           # (A*E, A)
    gbeta = jnp.asarray(params['goal_beta'], f32).reshape(1, 1)

    # -------- decoder prep (hidden padded 400 -> 512, output lane-padded to 128) --------
    HID = DEC_LAYERS * 25
    HIDP, OUTP, PIX = 512, 128, 25
    wfc = jnp.zeros((E, HIDP), f32).at[:, :HID].set(params['dec_fc_w'].T)
    bfc = jnp.zeros((1, HIDP), f32).at[:, :HID].set(params['dec_fc_b'].reshape(1, HID))
    wfold = jnp.zeros((HIDP, OUTP), f32).at[:HID, :PIX].set(_build_deconv_fold(params['deconv_w']))
    bdec = jnp.full((1, OUTP), params['deconv_b'][0], f32)

    dec_rows = [N * A ** l for l in range(5)]                 # 2, 8, 32, 128, 512
    prob_rows = [N * A ** l for l in range(4)]                # 2, 8, 32, 128
    out_shapes = (
        tuple(jax.ShapeDtypeStruct((r, OUTP), f32) for r in dec_rows)
        + tuple(jax.ShapeDtypeStruct((r, 128), f32) for r in prob_rows)
        + (jax.ShapeDtypeStruct((1, 1), f32),)
    )

    outs = pl.pallas_call(
        functools.partial(_treeqn_fused_kernel, gamma, N, A, E),
        out_shape=out_shapes,
        in_specs=[_vmem()] * 11 + [_smem()] + [_vmem()] * 4,
        out_specs=tuple([_vmem()] * 10),
        cost_estimate=pl.CostEstimate(flops=115_000_000, transcendentals=2_048,
                                      bytes_accessed=1_500_000),
    )(patches, wconv, bconv, bng, bnb, wtile, seg, encb,
      t_mat, goal_tile, sel, gbeta, wfc, bfc, wfold, bdec)

    dec_slabs = outs[:5]
    t1p, t2p, t3p, t4p = outs[5:9]
    cos = outs[9]

    # -------- row permutations back to torch order (cheap XLA, inside jit) --------
    def dec_to_torch(slab, lvl):
        img = slab[:, :PIX]
        if lvl == 0:
            return img.reshape(N, 1, 5, 5)
        t = img.reshape((A,) * lvl + (N, PIX))                # dims (b_l, ..., b_1, n, pix)
        perm = tuple(range(lvl, -1, -1)) + (lvl + 1,)         # -> (n, b_1, ..., b_l, pix)
        return jnp.transpose(t, perm).reshape(N * A ** lvl, 1, 5, 5)

    decoded = [dec_to_torch(s, l) for l, s in enumerate(dec_slabs)]

    t1 = t1p[:, :A].reshape(N * A, 1)
    t2 = jnp.transpose(t2p[:, :A].reshape(A, N, A), (1, 0, 2)).reshape(N * A, A, 1)
    t3 = jnp.transpose(t3p[:, :A].reshape(A, A, N, A), (2, 1, 0, 3)).reshape(N * A, A, A, 1)
    t4 = jnp.transpose(t4p[:, :A].reshape(A, A, A, N, A), (3, 2, 1, 0, 4)).reshape(N * A, A, A, A)
    probs = [t1, t2, t3, t4]

    return decoded, probs, cos[0, 0]


# ----------------------------- parameters -----------------------------

def init_params(key, in_channels, embedding_dim, num_actions, flat_conv_dim):
    ks = jax.random.split(key, 12)
    E, A, C = embedding_dim, num_actions, in_channels
    p = {}
    p['conv_w'] = 0.3 * jax.random.normal(ks[0], (ENC_LAYERS, C, 2, 2), jnp.float32)
    p['conv_b'] = 0.05 * jax.random.normal(ks[1], (ENC_LAYERS,), jnp.float32)
    p['bn_gamma'] = 1.0 + 0.1 * jax.random.normal(ks[2], (ENC_LAYERS,), jnp.float32)
    p['bn_beta'] = 0.1 * jax.random.normal(ks[3], (ENC_LAYERS,), jnp.float32)
    p['enc_lin_w'] = jax.random.normal(ks[4], (E, flat_conv_dim), jnp.float32) / jnp.sqrt(flat_conv_dim)
    p['enc_lin_b'] = 0.05 * jax.random.normal(ks[5], (E,), jnp.float32)
    p['transition_fun'] = jax.random.normal(ks[6], (E, E, A), jnp.float32) * jnp.sqrt(2.0 / (E + E))
    p['goal'] = jax.random.uniform(ks[7], (E,), jnp.float32)
    p['goal_beta'] = jnp.asarray(0.1, jnp.float32)            # traced (torch Parameter)
    p['dec_fc_w'] = jax.random.normal(ks[8], (DEC_LAYERS * 25, E), jnp.float32) / jnp.sqrt(E)
    p['dec_fc_b'] = 0.05 * jax.random.normal(ks[9], (DEC_LAYERS * 25,), jnp.float32)
    p['deconv_w'] = 0.1 * jax.random.normal(ks[10], (DEC_LAYERS, 1, 3, 3), jnp.float32)
    p['deconv_b'] = 0.05 * jax.random.normal(ks[11], (1,), jnp.float32)
    return p


# ----------------------------- main -----------------------------

if __name__ == "__main__":
    key = jax.random.PRNGKey(0)
    N, C, H, W = 2, 3, 5, 5          # input_shape (batch, channels, 5x5 grid-world image)
    E, A, DEPTH, GAMMA = 32, 4, 4, 0.99
    # decode_dropout = 0.0 (identity)

    Ho = H + 2 * 2 - 2 + 1           # Conv2d(k=2, s=1, p=2) output spatial size = 8
    flat_conv_dim = ENC_LAYERS * Ho * Ho

    k_x, k_p = jax.random.split(key)
    x = jax.random.normal(k_x, (N, C, H, W), jnp.float32)
    params = init_params(k_p, C, E, A, flat_conv_dim)

    fwd = jax.jit(functools.partial(
        treeqn_forward, embedding_dim=E, num_actions=A, tree_depth=DEPTH, gamma=GAMMA))

    decoded, probs, cos = fwd(x, params)
    jax.block_until_ready((decoded, probs, cos))

    # mirror the torch asserts: each transition-prob tensor sums to ~1
    for p_ in probs:
        s = float(jnp.sum(p_))
        assert 0.99 <= s <= 1.01, s
    # basic shape checks
    assert [d.shape for d in decoded] == [(2, 1, 5, 5), (8, 1, 5, 5), (32, 1, 5, 5),
                                          (128, 1, 5, 5), (512, 1, 5, 5)]
    assert probs[0].shape == (N * A, 1) and probs[1].shape == (N * A, A, 1)
    assert probs[2].shape == (N * A, A, A, 1) and probs[3].shape == (N * A, A, A, A)
    cos = float(cos)                 # host transfer only after everything is done
    assert isinstance(cos, float)

    print("KERNEL_OK")
</pallas_src>

<mosaic_0001>
module attributes {stable_mosaic.version = 11 : i64} {
  func.func @_treeqn_fused_kernel(%arg0: memref<128x12xf32, #tpu.memory_space<vmem>>, %arg1: memref<12x16xf32, #tpu.memory_space<vmem>>, %arg2: memref<1x16xf32, #tpu.memory_space<vmem>>, %arg3: memref<1x16xf32, #tpu.memory_space<vmem>>, %arg4: memref<1x16xf32, #tpu.memory_space<vmem>>, %arg5: memref<16x128x32xf32, #tpu.memory_space<vmem>>, %arg6: memref<2x128xf32, #tpu.memory_space<vmem>>, %arg7: memref<1x32xf32, #tpu.memory_space<vmem>>, %arg8: memref<32x128xf32, #tpu.memory_space<vmem>>, %arg9: memref<1x128xf32, #tpu.memory_space<vmem>>, %arg10: memref<128x4xf32, #tpu.memory_space<vmem>>, %arg11: memref<1x1xf32, #tpu.memory_space<smem>>, %arg12: memref<32x512xf32, #tpu.memory_space<vmem>>, %arg13: memref<1x512xf32, #tpu.memory_space<vmem>>, %arg14: memref<512x128xf32, #tpu.memory_space<vmem>>, %arg15: memref<1x128xf32, #tpu.memory_space<vmem>>, %arg16: memref<2x128xf32, #tpu.memory_space<vmem>>, %arg17: memref<8x128xf32, #tpu.memory_space<vmem>>, %arg18: memref<32x128xf32, #tpu.memory_space<vmem>>, %arg19: memref<128x128xf32, #tpu.memory_space<vmem>>, %arg20: memref<512x128xf32, #tpu.memory_space<vmem>>, %arg21: memref<2x128xf32, #tpu.memory_space<vmem>>, %arg22: memref<8x128xf32, #tpu.memory_space<vmem>>, %arg23: memref<32x128xf32, #tpu.memory_space<vmem>>, %arg24: memref<128x128xf32, #tpu.memory_space<vmem>>, %arg25: memref<1x1xf32, #tpu.memory_space<vmem>>) attributes {dimension_semantics = [], scalar_prefetch = 0 : i64, scratch_operands = 0 : i64, tpu.core_type = #tpu.core_type<tc>} {
    %c0 = arith.constant 0 : index
    %c0_0 = arith.constant 0 : index
    %0 = vector.load %arg0[%c0, %c0_0] : memref<128x12xf32, #tpu.memory_space<vmem>>, vector<128x12xf32>
    %c0_1 = arith.constant 0 : index
    %c0_2 = arith.constant 0 : index
    %1 = vector.load %arg1[%c0_1, %c0_2] : memref<12x16xf32, #tpu.memory_space<vmem>>, vector<12x16xf32>
    %cst = arith.constant dense<0.000000e+00> : vector<128x16xf32>
    %2 = tpu.matmul %0, %1, %cst {dimension_numbers = #tpu.dot_dimension_numbers<[1], [0], [0], [1], [0, 0, 1, 1], [], []>} : vector<128x12xf32>, vector<12x16xf32>, vector<128x16xf32> -> vector<128x16xf32>
    %c0_3 = arith.constant 0 : index
    %c0_4 = arith.constant 0 : index
    %3 = vector.load %arg2[%c0_3, %c0_4] : memref<1x16xf32, #tpu.memory_space<vmem>>, vector<1x16xf32>
    %4 = vector.broadcast %3 : vector<1x16xf32> to vector<128x16xf32>
    %5 = arith.addf %2, %4 : vector<128x16xf32>
    %cst_5 = arith.constant dense<0.000000e+00> : vector<16xf32>
    %6 = vector.multi_reduction <add>, %5, %cst_5 [0] : vector<128x16xf32> to vector<16xf32>
    %7 = vector.shape_cast %6 : vector<16xf32> to vector<1x16xf32>
    %cst_6 = arith.constant 1.280000e+02 : f32
    %8 = vector.broadcast %cst_6 : f32 to vector<1x16xf32>
    %9 = arith.divf %7, %8 : vector<1x16xf32>
    %10 = vector.broadcast %9 : vector<1x16xf32> to vector<128x16xf32>
    %11 = arith.subf %5, %10 : vector<128x16xf32>
    %12 = arith.mulf %11, %11 : vector<128x16xf32>
    %cst_7 = arith.constant dense<0.000000e+00> : vector<16xf32>
    %13 = vector.multi_reduction <add>, %12, %cst_7 [0] : vector<128x16xf32> to vector<16xf32>
    %14 = vector.shape_cast %13 : vector<16xf32> to vector<1x16xf32>
    %cst_8 = arith.constant 1.280000e+02 : f32
    %15 = vector.broadcast %cst_8 : f32 to vector<1x16xf32>
    %16 = arith.divf %14, %15 : vector<1x16xf32>
    %17 = vector.broadcast %9 : vector<1x16xf32> to vector<128x16xf32>
    %18 = arith.subf %5, %17 : vector<128x16xf32>
    %cst_9 = arith.constant 9.99999974E-6 : f32
    %19 = vector.broadcast %cst_9 : f32 to vector<1x16xf32>
    %20 = arith.addf %16, %19 : vector<1x16xf32>
    %21 = math.rsqrt %20 : vector<1x16xf32>
    %22 = vector.broadcast %21 : vector<1x16xf32> to vector<128x16xf32>
    %23 = arith.mulf %18, %22 : vector<128x16xf32>
    %c0_10 = arith.constant 0 : index
    %c0_11 = arith.constant 0 : index
    %24 = vector.load %arg3[%c0_10, %c0_11] : memref<1x16xf32, #tpu.memory_space<vmem>>, vector<1x16xf32>
    %25 = vector.broadcast %24 : vector<1x16xf32> to vector<128x16xf32>
    %26 = arith.mulf %23, %25 : vector<128x16xf32>
    %c0_12 = arith.constant 0 : index
    %c0_13 = arith.constant 0 : index
    %27 = vector.load %arg4[%c0_12, %c0_13] : memref<1x16xf32, #tpu.memory_space<vmem>>, vector<1x16xf32>
    %28 = vector.broadcast %27 : vector<1x16xf32> to vector<128x16xf32>
    %29 = arith.addf %26, %28 : vector<128x16xf32>
    %cst_14 = arith.constant 0.000000e+00 : f32
    %30 = vector.broadcast %cst_14 : f32 to vector<128x16xf32>
    %31 = arith.maximumf %29, %30 : vector<128x16xf32>
    %32 = vector.extract_strided_slice %31 {offsets = [0, 0], sizes = [128, 1], strides = [1, 1]} : vector<128x16xf32> to vector<128x1xf32>
    %c0_15 = arith.constant 0 : index
    %c0_16 = arith.constant 0 : index
    %c0_17 = arith.constant 0 : index
    %33 = vector.load %arg5[%c0_15, %c0_16, %c0_17] : memref<16x128x32xf32, #tpu.memory_space<vmem>>, vector<1x128x32xf32>
    %34 = vector.shape_cast %33 : vector<1x128x32xf32> to vector<128x32xf32>
    %35 = vector.broadcast %32 : vector<128x1xf32> to vector<128x32xf32>
    %36 = arith.mulf %35, %34 : vector<128x32xf32>
    %37 = vector.extract_strided_slice %31 {offsets = [0, 1], sizes = [128, 1], strides = [1, 1]} : vector<128x16xf32> to vector<128x1xf32>
    %c1 = arith.constant 1 : index
    %c0_18 = arith.constant 0 : index
    %c0_19 = arith.constant 0 : index
    %38 = vector.load %arg5[%c1, %c0_18, %c0_19] : memref<16x128x32xf32, #tpu.memory_space<vmem>>, vector<1x128x32xf32>
    %39 = vector.shape_cast %38 : vector<1x128x32xf32> to vector<128x32xf32>
    %40 = vector.broadcast %37 : vector<128x1xf32> to vector<128x32xf32>
    %41 = arith.mulf %40, %39 : vector<128x32xf32>
    %42 = arith.addf %36, %41 : vector<128x32xf32>
    %43 = vector.extract_strided_slice %31 {offsets = [0, 2], sizes = [128, 1], strides = [1, 1]} : vector<128x16xf32> to vector<128x1xf32>
    %c2 = arith.constant 2 : index
    %c0_20 = arith.constant 0 : index
    %c0_21 = arith.constant 0 : index
    %44 = vector.load %arg5[%c2, %c0_20, %c0_21] : memref<16x128x32xf32, #tpu.memory_space<vmem>>, vector<1x128x32xf32>
    %45 = vector.shape_cast %44 : vector<1x128x32xf32> to vector<128x32xf32>
    %46 = vector.broadcast %43 : vector<128x1xf32> to vector<128x32xf32>
    %47 = arith.mulf %46, %45 : vector<128x32xf32>
    %48 = arith.addf %42, %47 : vector<128x32xf32>
    %49 = vector.extract_strided_slice %31 {offsets = [0, 3], sizes = [128, 1], strides = [1, 1]} : vector<128x16xf32> to vector<128x1xf32>
    %c3 = arith.constant 3 : index
    %c0_22 = arith.constant 0 : index
    %c0_23 = arith.constant 0 : index
    %50 = vector.load %arg5[%c3, %c0_22, %c0_23] : memref<16x128x32xf32, #tpu.memory_space<vmem>>, vector<1x128x32xf32>
    %51 = vector.shape_cast %50 : vector<1x128x32xf32> to vector<128x32xf32>
    %52 = vector.broadcast %49 : vector<128x1xf32> to vector<128x32xf32>
    %53 = arith.mulf %52, %51 : vector<128x32xf32>
    %54 = arith.addf %48, %53 : vector<128x32xf32>
    %55 = vector.extract_strided_slice %31 {offsets = [0, 4], sizes = [128, 1], strides = [1, 1]} : vector<128x16xf32> to vector<128x1xf32>
    %c4 = arith.constant 4 : index
    %c0_24 = arith.constant 0 : index
    %c0_25 = arith.constant 0 : index
    %56 = vector.load %arg5[%c4, %c0_24, %c0_25] : memref<16x128x32xf32, #tpu.memory_space<vmem>>, vector<1x128x32xf32>
    %57 = vector.shape_cast %56 : vector<1x128x32xf32> to vector<128x32xf32>
    %58 = vector.broadcast %55 : vector<128x1xf32> to vector<128x32xf32>
    %59 = arith.mulf %58, %57 : vector<128x32xf32>
    %60 = arith.addf %54, %59 : vector<128x32xf32>
    %61 = vector.extract_strided_slice %31 {offsets = [0, 5], sizes = [128, 1], strides = [1, 1]} : vector<128x16xf32> to vector<128x1xf32>
    %c5 = arith.constant 5 : index
    %c0_26 = arith.constant 0 : index
    %c0_27 = arith.constant 0 : index
    %62 = vector.load %arg5[%c5, %c0_26, %c0_27] : memref<16x128x32xf32, #tpu.memory_space<vmem>>, vector<1x128x32xf32>
    %63 = vector.shape_cast %62 : vector<1x128x32xf32> to vector<128x32xf32>
    %64 = vector.broadcast %61 : vector<128x1xf32> to vector<128x32xf32>
    %65 = arith.mulf %64, %63 : vector<128x32xf32>
    %66 = arith.addf %60, %65 : vector<128x32xf32>
    %67 = vector.extract_strided_slice %31 {offsets = [0, 6], sizes = [128, 1], strides = [1, 1]} : vector<128x16xf32> to vector<128x1xf32>
    %c6 = arith.constant 6 : index
    %c0_28 = arith.constant 0 : index
    %c0_29 = arith.constant 0 : index
    %68 = vector.load %arg5[%c6, %c0_28, %c0_29] : memref<16x128x32xf32, #tpu.memory_space<vmem>>, vector<1x128x32xf32>
    %69 = vector.shape_cast %68 : vector<1x128x32xf32> to vector<128x32xf32>
    %70 = vector.broadcast %67 : vector<128x1xf32> to vector<128x32xf32>
    %71 = arith.mulf %70, %69 : vector<128x32xf32>
    %72 = arith.addf %66, %71 : vector<128x32xf32>
    %73 = vector.extract_strided_slice %31 {offsets = [0, 7], sizes = [128, 1], strides = [1, 1]} : vector<128x16xf32> to vector<128x1xf32>
    %c7 = arith.constant 7 : index
    %c0_30 = arith.constant 0 : index
    %c0_31 = arith.constant 0 : index
    %74 = vector.load %arg5[%c7, %c0_30, %c0_31] : memref<16x128x32xf32, #tpu.memory_space<vmem>>, vector<1x128x32xf32>
    %75 = vector.shape_cast %74 : vector<1x128x32xf32> to vector<128x32xf32>
    %76 = vector.broadcast %73 : vector<128x1xf32> to vector<128x32xf32>
    %77 = arith.mulf %76, %75 : vector<128x32xf32>
    %78 = arith.addf %72, %77 : vector<128x32xf32>
    %79 = vector.extract_strided_slice %31 {offsets = [0, 8], sizes = [128, 1], strides = [1, 1]} : vector<128x16xf32> to vector<128x1xf32>
    %c8 = arith.constant 8 : index
    %c0_32 = arith.constant 0 : index
    %c0_33 = arith.constant 0 : index
    %80 = vector.load %arg5[%c8, %c0_32, %c0_33] : memref<16x128x32xf32, #tpu.memory_space<vmem>>, vector<1x128x32xf32>
    %81 = vector.shape_cast %80 : vector<1x128x32xf32> to vector<128x32xf32>
    %82 = vector.broadcast %79 : vector<128x1xf32> to vector<128x32xf32>
    %83 = arith.mulf %82, %81 : vector<128x32xf32>
    %84 = arith.addf %78, %83 : vector<128x32xf32>
    %85 = vector.extract_strided_slice %31 {offsets = [0, 9], sizes = [128, 1], strides = [1, 1]} : vector<128x16xf32> to vector<128x1xf32>
    %c9 = arith.constant 9 : index
    %c0_34 = arith.constant 0 : index
    %c0_35 = arith.constant 0 : index
    %86 = vector.load %arg5[%c9, %c0_34, %c0_35] : memref<16x128x32xf32, #tpu.memory_space<vmem>>, vector<1x128x32xf32>
    %87 = vector.shape_cast %86 : vector<1x128x32xf32> to vector<128x32xf32>
    %88 = vector.broadcast %85 : vector<128x1xf32> to vector<128x32xf32>
    %89 = arith.mulf %88, %87 : vector<128x32xf32>
    %90 = arith.addf %84, %89 : vector<128x32xf32>
    %91 = vector.extract_strided_slice %31 {offsets = [0, 10], sizes = [128, 1], strides = [1, 1]} : vector<128x16xf32> to vector<128x1xf32>
    %c10 = arith.constant 10 : index
    %c0_36 = arith.constant 0 : index
    %c0_37 = arith.constant 0 : index
    %92 = vector.load %arg5[%c10, %c0_36, %c0_37] : memref<16x128x32xf32, #tpu.memory_space<vmem>>, vector<1x128x32xf32>
    %93 = vector.shape_cast %92 : vector<1x128x32xf32> to vector<128x32xf32>
    %94 = vector.broadcast %91 : vector<128x1xf32> to vector<128x32xf32>
    %95 = arith.mulf %94, %93 : vector<128x32xf32>
    %96 = arith.addf %90, %95 : vector<128x32xf32>
    %97 = vector.extract_strided_slice %31 {offsets = [0, 11], sizes = [128, 1], strides = [1, 1]} : vector<128x16xf32> to vector<128x1xf32>
    %c11 = arith.constant 11 : index
    %c0_38 = arith.constant 0 : index
    %c0_39 = arith.constant 0 : index
    %98 = vector.load %arg5[%c11, %c0_38, %c0_39] : memref<16x128x32xf32, #tpu.memory_space<vmem>>, vector<1x128x32xf32>
    %99 = vector.shape_cast %98 : vector<1x128x32xf32> to vector<128x32xf32>
    %100 = vector.broadcast %97 : vector<128x1xf32> to vector<128x32xf32>
    %101 = arith.mulf %100, %99 : vector<128x32xf32>
    %102 = arith.addf %96, %101 : vector<128x32xf32>
    %103 = vector.extract_strided_slice %31 {offsets = [0, 12], sizes = [128, 1], strides = [1, 1]} : vector<128x16xf32> to vector<128x1xf32>
    %c12 = arith.constant 12 : index
    %c0_40 = arith.constant 0 : index
    %c0_41 = arith.constant 0 : index
    %104 = vector.load %arg5[%c12, %c0_40, %c0_41] : memref<16x128x32xf32, #tpu.memory_space<vmem>>, vector<1x128x32xf32>
    %105 = vector.shape_cast %104 : vector<1x128x32xf32> to vector<128x32xf32>
    %106 = vector.broadcast %103 : vector<128x1xf32> to vector<128x32xf32>
    %107 = arith.mulf %106, %105 : vector<128x32xf32>
    %108 = arith.addf %102, %107 : vector<128x32xf32>
    %109 = vector.extract_strided_slice %31 {offsets = [0, 13], sizes = [128, 1], strides = [1, 1]} : vector<128x16xf32> to vector<128x1xf32>
    %c13 = arith.constant 13 : index
    %c0_42 = arith.constant 0 : index
    %c0_43 = arith.constant 0 : index
    %110 = vector.load %arg5[%c13, %c0_42, %c0_43] : memref<16x128x32xf32, #tpu.memory_space<vmem>>, vector<1x128x32xf32>
    %111 = vector.shape_cast %110 : vector<1x128x32xf32> to vector<128x32xf32>
    %112 = vector.broadcast %109 : vector<128x1xf32> to vector<128x32xf32>
    %113 = arith.mulf %112, %111 : vector<128x32xf32>
    %114 = arith.addf %108, %113 : vector<128x32xf32>
    %115 = vector.extract_strided_slice %31 {offsets = [0, 14], sizes = [128, 1], strides = [1, 1]} : vector<128x16xf32> to vector<128x1xf32>
    %c14 = arith.constant 14 : index
    %c0_44 = arith.constant 0 : index
    %c0_45 = arith.constant 0 : index
    %116 = vector.load %arg5[%c14, %c0_44, %c0_45] : memref<16x128x32xf32, #tpu.memory_space<vmem>>, vector<1x128x32xf32>
    %117 = vector.shape_cast %116 : vector<1x128x32xf32> to vector<128x32xf32>
    %118 = vector.broadcast %115 : vector<128x1xf32> to vector<128x32xf32>
    %119 = arith.mulf %118, %117 : vector<128x32xf32>
    %120 = arith.addf %114, %119 : vector<128x32xf32>
    %121 = vector.extract_strided_slice %31 {offsets = [0, 15], sizes = [128, 1], strides = [1, 1]} : vector<128x16xf32> to vector<128x1xf32>
    %c15 = arith.constant 15 : index
    %c0_46 = arith.constant 0 : index
    %c0_47 = arith.constant 0 : index
    %122 = vector.load %arg5[%c15, %c0_46, %c0_47] : memref<16x128x32xf32, #tpu.memory_space<vmem>>, vector<1x128x32xf32>
    %123 = vector.shape_cast %122 : vector<1x128x32xf32> to vector<128x32xf32>
    %124 = vector.broadcast %121 : vector<128x1xf32> to vector<128x32xf32>
    %125 = arith.mulf %124, %123 : vector<128x32xf32>
    %126 = arith.addf %120, %125 : vector<128x32xf32>
    %c0_48 = arith.constant 0 : index
    %c0_49 = arith.constant 0 : index
    %127 = vector.load %arg6[%c0_48, %c0_49] : memref<2x128xf32, #tpu.memory_space<vmem>>, vector<2x128xf32>
    %cst_50 = arith.constant dense<0.000000e+00> : vector<2x32xf32>
    %128 = tpu.matmul %127, %126, %cst_50 {dimension_numbers = #tpu.dot_dimension_numbers<[1], [0], [0], [1], [0, 0, 1, 1], [], []>} : vector<2x128xf32>, vector<128x32xf32>, vector<2x32xf32> -> vector<2x32xf32>
    %c0_51 = arith.constant 0 : index
    %c0_52 = arith.constant 0 : index
    %129 = vector.load %arg7[%c0_51, %c0_52] : memref<1x32xf32, #tpu.memory_space<vmem>>, vector<1x32xf32>
    %130 = vector.broadcast %129 : vector<1x32xf32> to vector<2x32xf32>
    %131 = arith.addf %128, %130 : vector<2x32xf32>
    %cst_53 = arith.constant 0.000000e+00 : f32
    %132 = vector.broadcast %cst_53 : f32 to vector<2x32xf32>
    %133 = arith.maximumf %131, %132 : vector<2x32xf32>
    %c0_54 = arith.constant 0 : index
    %c0_55 = arith.constant 0 : index
    %134 = memref.load %arg11[%c0_54, %c0_55] : memref<1x1xf32, #tpu.memory_space<smem>>
    %c0_56 = arith.constant 0 : index
    %c0_57 = arith.constant 0 : index
    %135 = vector.load %arg9[%c0_56, %c0_57] : memref<1x128xf32, #tpu.memory_space<vmem>>, vector<1x128xf32>
    %c0_58 = arith.constant 0 : index
    %c0_59 = arith.constant 0 : index
    %136 = vector.load %arg10[%c0_58, %c0_59] : memref<128x4xf32, #tpu.memory_space<vmem>>, vector<128x4xf32>
    %c0_60 = arith.constant 0 : index
    %c0_61 = arith.constant 0 : index
    %137 = vector.load %arg8[%c0_60, %c0_61] : memref<32x128xf32, #tpu.memory_space<vmem>>, vector<32x128xf32>
    %cst_62 = arith.constant dense<0.000000e+00> : vector<2x128xf32>
    %138 = tpu.matmul %133, %137, %cst_62 {dimension_numbers = #tpu.dot_dimension_numbers<[1], [0], [0], [1], [0, 0, 1, 1], [], []>} : vector<2x32xf32>, vector<32x128xf32>, vector<2x128xf32> -> vector<2x128xf32>
    %139 = vector.broadcast %135 : vector<1x128xf32> to vector<2x128xf32>
    %140 = arith.subf %138, %139 : vector<2x128xf32>
    %141 = arith.mulf %140, %140 : vector<2x128xf32>
    %cst_63 = arith.constant dense<0.000000e+00> : vector<2x4xf32>
    %142 = tpu.matmul %141, %136, %cst_63 {dimension_numbers = #tpu.dot_dimension_numbers<[1], [0], [0], [1], [0, 0, 1, 1], [], []>} : vector<2x128xf32>, vector<128x4xf32>, vector<2x4xf32> -> vector<2x4xf32>
    %143 = math.sqrt %142 : vector<2x4xf32>
    %cst_64 = arith.constant 0.000000e+00 : f32
    %144 = vector.broadcast %cst_64 : f32 to vector<2x4xf32>
    %145 = arith.subf %144, %143 : vector<2x4xf32>
    %146 = vector.broadcast %134 : f32 to vector<2x4xf32>
    %147 = arith.mulf %145, %146 : vector<2x4xf32>
    %148 = vector.extract_strided_slice %138 {offsets = [0, 0], sizes = [2, 32], strides = [1, 1]} : vector<2x128xf32> to vector<2x32xf32>
    %149 = vector.extract_strided_slice %138 {offsets = [0, 32], sizes = [2, 32], strides = [1, 1]} : vector<2x128xf32> to vector<2x32xf32>
    %150 = vector.extract_strided_slice %138 {offsets = [0, 64], sizes = [2, 32], strides = [1, 1]} : vector<2x128xf32> to vector<2x32xf32>
    %151 = vector.extract_strided_slice %138 {offsets = [0, 96], sizes = [2, 32], strides = [1, 1]} : vector<2x128xf32> to vector<2x32xf32>
    %152 = tpu.concatenate %148, %149, %150, %151 in 0 : vector<2x32xf32>, vector<2x32xf32>, vector<2x32xf32>, vector<2x32xf32> -> vector<8x32xf32>
    %cst_65 = arith.constant dense<0.000000e+00> : vector<8x128xf32>
    %153 = tpu.matmul %152, %137, %cst_65 {dimension_numbers = #tpu.dot_dimension_numbers<[1], [0], [0], [1], [0, 0, 1, 1], [], []>} : vector<8x32xf32>, vector<32x128xf32>, vector<8x128xf32> -> vector<8x128xf32>
    %154 = vector.broadcast %135 : vector<1x128xf32> to vector<8x128xf32>
    %155 = arith.subf %153, %154 : vector<8x128xf32>
    %156 = arith.mulf %155, %155 : vector<8x128xf32>
    %cst_66 = arith.constant dense<0.000000e+00> : vector<8x4xf32>
    %157 = tpu.matmul %156, %136, %cst_66 {dimension_numbers = #tpu.dot_dimension_numbers<[1], [0], [0], [1], [0, 0, 1, 1], [], []>} : vector<8x128xf32>, vector<128x4xf32>, vector<8x4xf32> -> vector<8x4xf32>
    %158 = math.sqrt %157 : vector<8x4xf32>
    %cst_67 = arith.constant 0.000000e+00 : f32
    %159 = vector.broadcast %cst_67 : f32 to vector<8x4xf32>
    %160 = arith.subf %159, %158 : vector<8x4xf32>
    %161 = vector.broadcast %134 : f32 to vector<8x4xf32>
    %162 = arith.mulf %160, %161 : vector<8x4xf32>
    %163 = vector.extract_strided_slice %153 {offsets = [0, 0], sizes = [8, 32], strides = [1, 1]} : vector<8x128xf32> to vector<8x32xf32>
    %164 = vector.extract_strided_slice %153 {offsets = [0, 32], sizes = [8, 32], strides = [1, 1]} : vector<8x128xf32> to vector<8x32xf32>
    %165 = vector.extract_strided_slice %153 {offsets = [0, 64], sizes = [8, 32], strides = [1, 1]} : vector<8x128xf32> to vector<8x32xf32>
    %166 = vector.extract_strided_slice %153 {offsets = [0, 96], sizes = [8, 32], strides = [1, 1]} : vector<8x128xf32> to vector<8x32xf32>
    %167 = tpu.concatenate %163, %164, %165, %166 in 0 : vector<8x32xf32>, vector<8x32xf32>, vector<8x32xf32>, vector<8x32xf32> -> vector<32x32xf32>
    %cst_68 = arith.constant dense<0.000000e+00> : vector<32x128xf32>
    %168 = tpu.matmul %167, %137, %cst_68 {dimension_numbers = #tpu.dot_dimension_numbers<[1], [0], [0], [1], [0, 0, 1, 1], [], []>} : vector<32x32xf32>, vector<32x128xf32>, vector<32x128xf32> -> vector<32x128xf32>
    %169 = vector.broadcast %135 : vector<1x128xf32> to vector<32x128xf32>
    %170 = arith.subf %168, %169 : vector<32x128xf32>
    %171 = arith.mulf %170, %170 : vector<32x128xf32>
    %cst_69 = arith.constant dense<0.000000e+00> : vector<32x4xf32>
    %172 = tpu.matmul %171, %136, %cst_69 {dimension_numbers = #tpu.dot_dimension_numbers<[1], [0], [0], [1], [0, 0, 1, 1], [], []>} : vector<32x128xf32>, vector<128x4xf32>, vector<32x4xf32> -> vector<32x4xf32>
    %173 = math.sqrt %172 : vector<32x4xf32>
    %cst_70 = arith.constant 0.000000e+00 : f32
    %174 = vector.broadcast %cst_70 : f32 to vector<32x4xf32>
    %175 = arith.subf %174, %173 : vector<32x4xf32>
    %176 = vector.broadcast %134 : f32 to vector<32x4xf32>
    %177 = arith.mulf %175, %176 : vector<32x4xf32>
    %178 = vector.extract_strided_slice %168 {offsets = [0, 0], sizes = [32, 32], strides = [1, 1]} : vector<32x128xf32> to vector<32x32xf32>
    %179 = vector.extract_strided_slice %168 {offsets = [0, 32], sizes = [32, 32], strides = [1, 1]} : vector<32x128xf32> to vector<32x32xf32>
    %180 = vector.extract_strided_slice %168 {offsets = [0, 64], sizes = [32, 32], strides = [1, 1]} : vector<32x128xf32> to vector<32x32xf32>
    %181 = vector.extract_strided_slice %168 {offsets = [0, 96], sizes = [32, 32], strides = [1, 1]} : vector<32x128xf32> to vector<32x32xf32>
    %182 = tpu.concatenate %178, %179, %180, %181 in 0 : vector<32x32xf32>, vector<32x32xf32>, vector<32x32xf32>, vector<32x32xf32> -> vector<128x32xf32>
    %cst_71 = arith.constant dense<0.000000e+00> : vector<128x128xf32>
    %183 = tpu.matmul %182, %137, %cst_71 {dimension_numbers = #tpu.dot_dimension_numbers<[1], [0], [0], [1], [0, 0, 1, 1], [], []>} : vector<128x32xf32>, vector<32x128xf32>, vector<128x128xf32> -> vector<128x128xf32>
    %184 = vector.broadcast %135 : vector<1x128xf32> to vector<128x128xf32>
    %185 = arith.subf %183, %184 : vector<128x128xf32>
    %186 = arith.mulf %185, %185 : vector<128x128xf32>
    %cst_72 = arith.constant dense<0.000000e+00> : vector<128x4xf32>
    %187 = tpu.matmul %186, %136, %cst_72 {dimension_numbers = #tpu.dot_dimension_numbers<[1], [0], [0], [1], [0, 0, 1, 1], [], []>} : vector<128x128xf32>, vector<128x4xf32>, vector<128x4xf32> -> vector<128x4xf32>
    %188 = math.sqrt %187 : vector<128x4xf32>
    %cst_73 = arith.constant 0.000000e+00 : f32
    %189 = vector.broadcast %cst_73 : f32 to vector<128x4xf32>
    %190 = arith.subf %189, %188 : vector<128x4xf32>
    %191 = vector.broadcast %134 : f32 to vector<128x4xf32>
    %192 = arith.mulf %190, %191 : vector<128x4xf32>
    %193 = vector.extract_strided_slice %183 {offsets = [0, 0], sizes = [128, 32], strides = [1, 1]} : vector<128x128xf32> to vector<128x32xf32>
    %194 = vector.extract_strided_slice %183 {offsets = [0, 32], sizes = [128, 32], strides = [1, 1]} : vector<128x128xf32> to vector<128x32xf32>
    %195 = vector.extract_strided_slice %183 {offsets = [0, 64], sizes = [128, 32], strides = [1, 1]} : vector<128x128xf32> to vector<128x32xf32>
    %196 = vector.extract_strided_slice %183 {offsets = [0, 96], sizes = [128, 32], strides = [1, 1]} : vector<128x128xf32> to vector<128x32xf32>
    %197 = tpu.concatenate %193, %194, %195, %196 in 0 : vector<128x32xf32>, vector<128x32xf32>, vector<128x32xf32>, vector<128x32xf32> -> vector<512x32xf32>
    %cst_74 = arith.constant dense<0.000000e+00> : vector<128xf32>
    %198 = vector.multi_reduction <add>, %192, %cst_74 [1] : vector<128x4xf32> to vector<128xf32>
    %199 = vector.shape_cast %198 : vector<128xf32> to vector<128x1xf32>
    %200 = vector.extract_strided_slice %199 {offsets = [0, 0], sizes = [32, 1], strides = [1, 1]} : vector<128x1xf32> to vector<32x1xf32>
    %201 = vector.extract_strided_slice %199 {offsets = [32, 0], sizes = [32, 1], strides = [1, 1]} : vector<128x1xf32> to vector<32x1xf32>
    %202 = vector.extract_strided_slice %199 {offsets = [64, 0], sizes = [32, 1], strides = [1, 1]} : vector<128x1xf32> to vector<32x1xf32>
    %203 = vector.extract_strided_slice %199 {offsets = [96, 0], sizes = [32, 1], strides = [1, 1]} : vector<128x1xf32> to vector<32x1xf32>
    %204 = tpu.concatenate %200, %201, %202, %203 in 1 : vector<32x1xf32>, vector<32x1xf32>, vector<32x1xf32>, vector<32x1xf32> -> vector<32x4xf32>
    %cst_75 = arith.constant 9.900000e-01 : f32
    %205 = vector.broadcast %cst_75 : f32 to vector<32x4xf32>
    %206 = arith.mulf %205, %204 : vector<32x4xf32>
    %207 = arith.addf %177, %206 : vector<32x4xf32>
    %cst_76 = arith.constant dense<0.000000e+00> : vector<32xf32>
    %208 = vector.multi_reduction <add>, %207, %cst_76 [1] : vector<32x4xf32> to vector<32xf32>
    %209 = vector.shape_cast %208 : vector<32xf32> to vector<32x1xf32>
    %210 = vector.extract_strided_slice %209 {offsets = [0, 0], sizes = [8, 1], strides = [1, 1]} : vector<32x1xf32> to vector<8x1xf32>
    %211 = vector.extract_strided_slice %209 {offsets = [8, 0], sizes = [8, 1], strides = [1, 1]} : vector<32x1xf32> to vector<8x1xf32>
    %212 = vector.extract_strided_slice %209 {offsets = [16, 0], sizes = [8, 1], strides = [1, 1]} : vector<32x1xf32> to vector<8x1xf32>
    %213 = vector.extract_strided_slice %209 {offsets = [24, 0], sizes = [8, 1], strides = [1, 1]} : vector<32x1xf32> to vector<8x1xf32>
    %214 = tpu.concatenate %210, %211, %212, %213 in 1 : vector<8x1xf32>, vector<8x1xf32>, vector<8x1xf32>, vector<8x1xf32> -> vector<8x4xf32>
    %cst_77 = arith.constant 9.900000e-01 : f32
    %215 = vector.broadcast %cst_77 : f32 to vector<8x4xf32>
    %216 = arith.mulf %215, %214 : vector<8x4xf32>
    %217 = arith.addf %162, %216 : vector<8x4xf32>
    %cst_78 = arith.constant dense<0.000000e+00> : vector<8xf32>
    %218 = vector.multi_reduction <add>, %217, %cst_78 [1] : vector<8x4xf32> to vector<8xf32>
    %219 = vector.shape_cast %218 : vector<8xf32> to vector<8x1xf32>
    %220 = vector.extract_strided_slice %219 {offsets = [0, 0], sizes = [2, 1], strides = [1, 1]} : vector<8x1xf32> to vector<2x1xf32>
    %221 = vector.extract_strided_slice %219 {offsets = [2, 0], sizes = [2, 1], strides = [1, 1]} : vector<8x1xf32> to vector<2x1xf32>
    %222 = vector.extract_strided_slice %219 {offsets = [4, 0], sizes = [2, 1], strides = [1, 1]} : vector<8x1xf32> to vector<2x1xf32>
    %223 = vector.extract_strided_slice %219 {offsets = [6, 0], sizes = [2, 1], strides = [1, 1]} : vector<8x1xf32> to vector<2x1xf32>
    %224 = tpu.concatenate %220, %221, %222, %223 in 1 : vector<2x1xf32>, vector<2x1xf32>, vector<2x1xf32>, vector<2x1xf32> -> vector<2x4xf32>
    %cst_79 = arith.constant 9.900000e-01 : f32
    %225 = vector.broadcast %cst_79 : f32 to vector<2x4xf32>
    %226 = arith.mulf %225, %224 : vector<2x4xf32>
    %227 = arith.addf %147, %226 : vector<2x4xf32>
    %cst_80 = arith.constant dense<0xFF800000> : vector<2xf32>
    %228 = vector.multi_reduction <maximumf>, %227, %cst_80 [1] : vector<2x4xf32> to vector<2xf32>
    %229 = vector.shape_cast %228 : vector<2xf32> to vector<2x1xf32>
    %cst_81 = arith.constant dense<0xFF800000> : vector<1xf32>
    %230 = vector.multi_reduction <maximumf>, %229, %cst_81 [0] : vector<2x1xf32> to vector<1xf32>
    %231 = vector.shape_cast %230 : vector<1xf32> to vector<1x1xf32>
    %232 = vector.broadcast %231 : vector<1x1xf32> to vector<2x4xf32>
    %233 = arith.subf %227, %232 : vector<2x4xf32>
    %234 = math.exp %233 : vector<2x4xf32>
    %cst_82 = arith.constant dense<0.000000e+00> : vector<2xf32>
    %235 = vector.multi_reduction <add>, %234, %cst_82 [1] : vector<2x4xf32> to vector<2xf32>
    %236 = vector.shape_cast %235 : vector<2xf32> to vector<2x1xf32>
    %cst_83 = arith.constant dense<0.000000e+00> : vector<1xf32>
    %237 = vector.multi_reduction <add>, %236, %cst_83 [0] : vector<2x1xf32> to vector<1xf32>
    %238 = vector.shape_cast %237 : vector<1xf32> to vector<1x1xf32>
    %239 = vector.broadcast %238 : vector<1x1xf32> to vector<2x4xf32>
    %240 = arith.divf %234, %239 : vector<2x4xf32>
    %cst_84 = arith.constant dense<0xFF800000> : vector<8xf32>
    %241 = vector.multi_reduction <maximumf>, %217, %cst_84 [1] : vector<8x4xf32> to vector<8xf32>
    %242 = vector.shape_cast %241 : vector<8xf32> to vector<8x1xf32>
    %243 = vector.broadcast %242 : vector<8x1xf32> to vector<8x4xf32>
    %244 = arith.subf %217, %243 : vector<8x4xf32>
    %245 = math.exp %244 : vector<8x4xf32>
    %cst_85 = arith.constant dense<0.000000e+00> : vector<8xf32>
    %246 = vector.multi_reduction <add>, %245, %cst_85 [1] : vector<8x4xf32> to vector<8xf32>
    %247 = vector.shape_cast %246 : vector<8xf32> to vector<8x1xf32>
    %248 = vector.broadcast %247 : vector<8x1xf32> to vector<8x4xf32>
    %249 = arith.divf %245, %248 : vector<8x4xf32>
    %250 = vector.extract_strided_slice %240 {offsets = [0, 0], sizes = [2, 1], strides = [1, 1]} : vector<2x4xf32> to vector<2x1xf32>
    %251 = vector.extract_strided_slice %240 {offsets = [0, 1], sizes = [2, 1], strides = [1, 1]} : vector<2x4xf32> to vector<2x1xf32>
    %252 = vector.extract_strided_slice %240 {offsets = [0, 2], sizes = [2, 1], strides = [1, 1]} : vector<2x4xf32> to vector<2x1xf32>
    %253 = vector.extract_strided_slice %240 {offsets = [0, 3], sizes = [2, 1], strides = [1, 1]} : vector<2x4xf32> to vector<2x1xf32>
    %254 = tpu.concatenate %250, %251, %252, %253 in 0 : vector<2x1xf32>, vector<2x1xf32>, vector<2x1xf32>, vector<2x1xf32> -> vector<8x1xf32>
    %255 = vector.broadcast %254 : vector<8x1xf32> to vector<8x4xf32>
    %256 = arith.mulf %249, %255 : vector<8x4xf32>
    %cst_86 = arith.constant dense<0xFF800000> : vector<32xf32>
    %257 = vector.multi_reduction <maximumf>, %207, %cst_86 [1] : vector<32x4xf32> to vector<32xf32>
    %258 = vector.shape_cast %257 : vector<32xf32> to vector<32x1xf32>
    %259 = vector.broadcast %258 : vector<32x1xf32> to vector<32x4xf32>
    %260 = arith.subf %207, %259 : vector<32x4xf32>
    %261 = math.exp %260 : vector<32x4xf32>
    %cst_87 = arith.constant dense<0.000000e+00> : vector<32xf32>
    %262 = vector.multi_reduction <add>, %261, %cst_87 [1] : vector<32x4xf32> to vector<32xf32>
    %263 = vector.shape_cast %262 : vector<32xf32> to vector<32x1xf32>
    %264 = vector.broadcast %263 : vector<32x1xf32> to vector<32x4xf32>
    %265 = arith.divf %261, %264 : vector<32x4xf32>
    %266 = vector.extract_strided_slice %256 {offsets = [0, 0], sizes = [8, 1], strides = [1, 1]} : vector<8x4xf32> to vector<8x1xf32>
    %267 = vector.extract_strided_slice %256 {offsets = [0, 1], sizes = [8, 1], strides = [1, 1]} : vector<8x4xf32> to vector<8x1xf32>
    %268 = vector.extract_strided_slice %256 {offsets = [0, 2], sizes = [8, 1], strides = [1, 1]} : vector<8x4xf32> to vector<8x1xf32>
    %269 = vector.extract_strided_slice %256 {offsets = [0, 3], sizes = [8, 1], strides = [1, 1]} : vector<8x4xf32> to vector<8x1xf32>
    %270 = tpu.concatenate %266, %267, %268, %269 in 0 : vector<8x1xf32>, vector<8x1xf32>, vector<8x1xf32>, vector<8x1xf32> -> vector<32x1xf32>
    %271 = vector.broadcast %270 : vector<32x1xf32> to vector<32x4xf32>
    %272 = arith.mulf %265, %271 : vector<32x4xf32>
    %cst_88 = arith.constant dense<0xFF800000> : vector<128xf32>
    %273 = vector.multi_reduction <maximumf>, %192, %cst_88 [1] : vector<128x4xf32> to vector<128xf32>
    %274 = vector.shape_cast %273 : vector<128xf32> to vector<128x1xf32>
    %275 = vector.broadcast %274 : vector<128x1xf32> to vector<128x4xf32>
    %276 = arith.subf %192, %275 : vector<128x4xf32>
    %277 = math.exp %276 : vector<128x4xf32>
    %cst_89 = arith.constant dense<0.000000e+00> : vector<128xf32>
    %278 = vector.multi_reduction <add>, %277, %cst_89 [1] : vector<128x4xf32> to vector<128xf32>
    %279 = vector.shape_cast %278 : vector<128xf32> to vector<128x1xf32>
    %280 = vector.broadcast %279 : vector<128x1xf32> to vector<128x4xf32>
    %281 = arith.divf %277, %280 : vector<128x4xf32>
    %282 = vector.extract_strided_slice %272 {offsets = [0, 0], sizes = [32, 1], strides = [1, 1]} : vector<32x4xf32> to vector<32x1xf32>
    %283 = vector.extract_strided_slice %272 {offsets = [0, 1], sizes = [32, 1], strides = [1, 1]} : vector<32x4xf32> to vector<32x1xf32>
    %284 = vector.extract_strided_slice %272 {offsets = [0, 2], sizes = [32, 1], strides = [1, 1]} : vector<32x4xf32> to vector<32x1xf32>
    %285 = vector.extract_strided_slice %272 {offsets = [0, 3], sizes = [32, 1], strides = [1, 1]} : vector<32x4xf32> to vector<32x1xf32>
    %286 = tpu.concatenate %282, %283, %284, %285 in 0 : vector<32x1xf32>, vector<32x1xf32>, vector<32x1xf32>, vector<32x1xf32> -> vector<128x1xf32>
    %287 = vector.broadcast %286 : vector<128x1xf32> to vector<128x4xf32>
    %288 = arith.mulf %281, %287 : vector<128x4xf32>
    %cst_90 = arith.constant 0.000000e+00 : f32
    %289 = vector.broadcast %cst_90 : f32 to vector<2x124xf32>
    %290 = tpu.concatenate %240, %289 in 1 : vector<2x4xf32>, vector<2x124xf32> -> vector<2x128xf32>
    %c0_91 = arith.constant 0 : index
    %c0_92 = arith.constant 0 : index
    %291 = vector.load %arg21[%c0_91, %c0_92] : memref<2x128xf32, #tpu.memory_space<vmem>>, vector<2x128xf32>
    tpu.vector_store %arg21[%c0_91, %c0_92], %290 {strides = array<i32>} : memref<2x128xf32, #tpu.memory_space<vmem>>, vector<2x128xf32>,
    %cst_93 = arith.constant 0.000000e+00 : f32
    %292 = vector.broadcast %cst_93 : f32 to vector<8x124xf32>
    %293 = tpu.concatenate %256, %292 in 1 : vector<8x4xf32>, vector<8x124xf32> -> vector<8x128xf32>
    %c0_94 = arith.constant 0 : index
    %c0_95 = arith.constant 0 : index
    %294 = vector.load %arg22[%c0_94, %c0_95] : memref<8x128xf32, #tpu.memory_space<vmem>>, vector<8x128xf32>
    tpu.vector_store %arg22[%c0_94, %c0_95], %293 {strides = array<i32>} : memref<8x128xf32, #tpu.memory_space<vmem>>, vector<8x128xf32>,
    %cst_96 = arith.constant 0.000000e+00 : f32
    %295 = vector.broadcast %cst_96 : f32 to vector<32x124xf32>
    %296 = tpu.concatenate %272, %295 in 1 : vector<32x4xf32>, vector<32x124xf32> -> vector<32x128xf32>
    %c0_97 = arith.constant 0 : index
    %c0_98 = arith.constant 0 : index
    %297 = vector.load %arg23[%c0_97, %c0_98] : memref<32x128xf32, #tpu.memory_space<vmem>>, vector<32x128xf32>
    tpu.vector_store %arg23[%c0_97, %c0_98], %296 {strides = array<i32>} : memref<32x128xf32, #tpu.memory_space<vmem>>, vector<32x128xf32>,
    %cst_99 = arith.constant 0.000000e+00 : f32
    %298 = vector.broadcast %cst_99 : f32 to vector<128x124xf32>
    %299 = tpu.concatenate %288, %298 in 1 : vector<128x4xf32>, vector<128x124xf32> -> vector<128x128xf32>
    %c0_100 = arith.constant 0 : index
    %c0_101 = arith.constant 0 : index
    %300 = vector.load %arg24[%c0_100, %c0_101] : memref<128x128xf32, #tpu.memory_space<vmem>>, vector<128x128xf32>
    tpu.vector_store %arg24[%c0_100, %c0_101], %299 {strides = array<i32>} : memref<128x128xf32, #tpu.memory_space<vmem>>, vector<128x128xf32>,
    %301 = arith.mulf %152, %152 : vector<8x32xf32>
    %cst_102 = arith.constant dense<0.000000e+00> : vector<8xf32>
    %302 = vector.multi_reduction <add>, %301, %cst_102 [1] : vector<8x32xf32> to vector<8xf32>
    %303 = vector.shape_cast %302 : vector<8xf32> to vector<8x1xf32>
    %cst_103 = arith.constant 1.000000e-16 : f32
    %304 = vector.broadcast %cst_103 : f32 to vector<8x1xf32>
    %305 = arith.maximumf %303, %304 : vector<8x1xf32>
    %306 = math.rsqrt %305 : vector<8x1xf32>
    %307 = vector.broadcast %306 : vector<8x1xf32> to vector<8x32xf32>
    %308 = arith.mulf %152, %307 : vector<8x32xf32>
    %cst_104 = arith.constant dense<0.000000e+00> : vector<32xf32>
    %309 = vector.multi_reduction <add>, %308, %cst_104 [0] : vector<8x32xf32> to vector<32xf32>
    %310 = vector.shape_cast %309 : vector<32xf32> to vector<1x32xf32>
    %311 = arith.mulf %310, %310 : vector<1x32xf32>
    %cst_105 = arith.constant dense<0.000000e+00> : vector<1xf32>
    %312 = vector.multi_reduction <add>, %311, %cst_105 [1] : vector<1x32xf32> to vector<1xf32>
    %313 = vector.shape_cast %312 : vector<1xf32> to vector<1x1xf32>
    %cst_106 = arith.constant 6.400000e+01 : f32
    %314 = vector.broadcast %cst_106 : f32 to vector<1x1xf32>
    %315 = arith.divf %313, %314 : vector<1x1xf32>
    %c0_107 = arith.constant 0 : index
    %c0_108 = arith.constant 0 : index
    %316 = vector.load %arg25[%c0_107, %c0_108] : memref<1x1xf32, #tpu.memory_space<vmem>>, vector<1x1xf32>
    tpu.vector_store %arg25[%c0_107, %c0_108], %315 {strides = array<i32>} : memref<1x1xf32, #tpu.memory_space<vmem>>, vector<1x1xf32>,
    %c0_109 = arith.constant 0 : index
    %c0_110 = arith.constant 0 : index
    %317 = vector.load %arg12[%c0_109, %c0_110] : memref<32x512xf32, #tpu.memory_space<vmem>>, vector<32x512xf32>
    %c0_111 = arith.constant 0 : index
    %c0_112 = arith.constant 0 : index
    %318 = vector.load %arg13[%c0_111, %c0_112] : memref<1x512xf32, #tpu.memory_space<vmem>>, vector<1x512xf32>
    %c0_113 = arith.constant 0 : index
    %c0_114 = arith.constant 0 : index
    %319 = vector.load %arg14[%c0_113, %c0_114] : memref<512x128xf32, #tpu.memory_space<vmem>>, vector<512x128xf32>
    %c0_115 = arith.constant 0 : index
    %c0_116 = arith.constant 0 : index
    %320 = vector.load %arg15[%c0_115, %c0_116] : memref<1x128xf32, #tpu.memory_space<vmem>>, vector<1x128xf32>
    %cst_117 = arith.constant dense<0.000000e+00> : vector<2x512xf32>
    %321 = tpu.matmul %133, %317, %cst_117 {dimension_numbers = #tpu.dot_dimension_numbers<[1], [0], [0], [1], [0, 0, 1, 1], [], []>} : vector<2x32xf32>, vector<32x512xf32>, vector<2x512xf32> -> vector<2x512xf32>
    %322 = vector.broadcast %318 : vector<1x512xf32> to vector<2x512xf32>
    %323 = arith.addf %321, %322 : vector<2x512xf32>
    %cst_118 = arith.constant 0.000000e+00 : f32
    %324 = vector.broadcast %cst_118 : f32 to vector<2x512xf32>
    %325 = arith.maximumf %323, %324 : vector<2x512xf32>
    %cst_119 = arith.constant dense<0.000000e+00> : vector<2x128xf32>
    %326 = tpu.matmul %325, %319, %cst_119 {dimension_numbers = #tpu.dot_dimension_numbers<[1], [0], [0], [1], [0, 0, 1, 1], [], []>} : vector<2x512xf32>, vector<512x128xf32>, vector<2x128xf32> -> vector<2x128xf32>
    %327 = vector.broadcast %320 : vector<1x128xf32> to vector<2x128xf32>
    %328 = arith.addf %326, %327 : vector<2x128xf32>
    %c0_120 = arith.constant 0 : index
    %c0_121 = arith.constant 0 : index
    %329 = vector.load %arg16[%c0_120, %c0_121] : memref<2x128xf32, #tpu.memory_space<vmem>>, vector<2x128xf32>
    tpu.vector_store %arg16[%c0_120, %c0_121], %328 {strides = array<i32>} : memref<2x128xf32, #tpu.memory_space<vmem>>, vector<2x128xf32>,
    %cst_122 = arith.constant dense<0.000000e+00> : vector<8x512xf32>
    %330 = tpu.matmul %152, %317, %cst_122 {dimension_numbers = #tpu.dot_dimension_numbers<[1], [0], [0], [1], [0, 0, 1, 1], [], []>} : vector<8x32xf32>, vector<32x512xf32>, vector<8x512xf32> -> vector<8x512xf32>
    %331 = vector.broadcast %318 : vector<1x512xf32> to vector<8x512xf32>
    %332 = arith.addf %330, %331 : vector<8x512xf32>
    %cst_123 = arith.constant 0.000000e+00 : f32
    %333 = vector.broadcast %cst_123 : f32 to vector<8x512xf32>
    %334 = arith.maximumf %332, %333 : vector<8x512xf32>
    %cst_124 = arith.constant dense<0.000000e+00> : vector<8x128xf32>
    %335 = tpu.matmul %334, %319, %cst_124 {dimension_numbers = #tpu.dot_dimension_numbers<[1], [0], [0], [1], [0, 0, 1, 1], [], []>} : vector<8x512xf32>, vector<512x128xf32>, vector<8x128xf32> -> vector<8x128xf32>
    %336 = vector.broadcast %320 : vector<1x128xf32> to vector<8x128xf32>
    %337 = arith.addf %335, %336 : vector<8x128xf32>
    %c0_125 = arith.constant 0 : index
    %c0_126 = arith.constant 0 : index
    %338 = vector.load %arg17[%c0_125, %c0_126] : memref<8x128xf32, #tpu.memory_space<vmem>>, vector<8x128xf32>
    tpu.vector_store %arg17[%c0_125, %c0_126], %337 {strides = array<i32>} : memref<8x128xf32, #tpu.memory_space<vmem>>, vector<8x128xf32>,
    %cst_127 = arith.constant dense<0.000000e+00> : vector<32x512xf32>
    %339 = tpu.matmul %167, %317, %cst_127 {dimension_numbers = #tpu.dot_dimension_numbers<[1], [0], [0], [1], [0, 0, 1, 1], [], []>} : vector<32x32xf32>, vector<32x512xf32>, vector<32x512xf32> -> vector<32x512xf32>
    %340 = vector.broadcast %318 : vector<1x512xf32> to vector<32x512xf32>
    %341 = arith.addf %339, %340 : vector<32x512xf32>
    %cst_128 = arith.constant 0.000000e+00 : f32
    %342 = vector.broadcast %cst_128 : f32 to vector<32x512xf32>
    %343 = arith.maximumf %341, %342 : vector<32x512xf32>
    %cst_129 = arith.constant dense<0.000000e+00> : vector<32x128xf32>
    %344 = tpu.matmul %343, %319, %cst_129 {dimension_numbers = #tpu.dot_dimension_numbers<[1], [0], [0], [1], [0, 0, 1, 1], [], []>} : vector<32x512xf32>, vector<512x128xf32>, vector<32x128xf32> -> vector<32x128xf32>
    %345 = vector.broadcast %320 : vector<1x128xf32> to vector<32x128xf32>
    %346 = arith.addf %344, %345 : vector<32x128xf32>
    %c0_130 = arith.constant 0 : index
    %c0_131 = arith.constant 0 : index
    %347 = vector.load %arg18[%c0_130, %c0_131] : memref<32x128xf32, #tpu.memory_space<vmem>>, vector<32x128xf32>
    tpu.vector_store %arg18[%c0_130, %c0_131], %346 {strides = array<i32>} : memref<32x128xf32, #tpu.memory_space<vmem>>, vector<32x128xf32>,
    %cst_132 = arith.constant dense<0.000000e+00> : vector<128x512xf32>
    %348 = tpu.matmul %182, %317, %cst_132 {dimension_numbers = #tpu.dot_dimension_numbers<[1], [0], [0], [1], [0, 0, 1, 1], [], []>} : vector<128x32xf32>, vector<32x512xf32>, vector<128x512xf32> -> vector<128x512xf32>
    %349 = vector.broadcast %318 : vector<1x512xf32> to vector<128x512xf32>
    %350 = arith.addf %348, %349 : vector<128x512xf32>
    %cst_133 = arith.constant 0.000000e+00 : f32
    %351 = vector.broadcast %cst_133 : f32 to vector<128x512xf32>
    %352 = arith.maximumf %350, %351 : vector<128x512xf32>
    %cst_134 = arith.constant dense<0.000000e+00> : vector<128x128xf32>
    %353 = tpu.matmul %352, %319, %cst_134 {dimension_numbers = #tpu.dot_dimension_numbers<[1], [0], [0], [1], [0, 0, 1, 1], [], []>} : vector<128x512xf32>, vector<512x128xf32>, vector<128x128xf32> -> vector<128x128xf32>
    %354 = vector.broadcast %320 : vector<1x128xf32> to vector<128x128xf32>
    %355 = arith.addf %353, %354 : vector<128x128xf32>
    %c0_135 = arith.constant 0 : index
    %c0_136 = arith.constant 0 : index
    %356 = vector.load %arg19[%c0_135, %c0_136] : memref<128x128xf32, #tpu.memory_space<vmem>>, vector<128x128xf32>
    tpu.vector_store %arg19[%c0_135, %c0_136], %355 {strides = array<i32>} : memref<128x128xf32, #tpu.memory_space<vmem>>, vector<128x128xf32>,
    %cst_137 = arith.constant dense<0.000000e+00> : vector<512x512xf32>
    %357 = tpu.matmul %197, %317, %cst_137 {dimension_numbers = #tpu.dot_dimension_numbers<[1], [0], [0], [1], [0, 0, 1, 1], [], []>} : vector<512x32xf32>, vector<32x512xf32>, vector<512x512xf32> -> vector<512x512xf32>
    %358 = vector.broadcast %318 : vector<1x512xf32> to vector<512x512xf32>
    %359 = arith.addf %357, %358 : vector<512x512xf32>
    %cst_138 = arith.constant 0.000000e+00 : f32
    %360 = vector.broadcast %cst_138 : f32 to vector<512x512xf32>
    %361 = arith.maximumf %359, %360 : vector<512x512xf32>
    %cst_139 = arith.constant dense<0.000000e+00> : vector<512x128xf32>
    %362 = tpu.matmul %361, %319, %cst_139 {dimension_numbers = #tpu.dot_dimension_numbers<[1], [0], [0], [1], [0, 0, 1, 1], [], []>} : vector<512x512xf32>, vector<512x128xf32>, vector<512x128xf32> -> vector<512x128xf32>
    %363 = vector.broadcast %320 : vector<1x128xf32> to vector<512x128xf32>
    %364 = arith.addf %362, %363 : vector<512x128xf32>
    %c0_140 = arith.constant 0 : index
    %c0_141 = arith.constant 0 : index
    %365 = vector.load %arg20[%c0_140, %c0_141] : memref<512x128xf32, #tpu.memory_space<vmem>>, vector<512x128xf32>
    tpu.vector_store %arg20[%c0_140, %c0_141], %364 {strides = array<i32>} : memref<512x128xf32, #tpu.memory_space<vmem>>, vector<512x128xf32>,
    return
  }
}

</mosaic_0001>

<llo_original>
// kernel: tile.18
$region0: #{tile.18}
  #allocation0 [shape = 's32[1]{0}', space=sflag, size = 0x4, scoped, tag = 'scoped memory for tile.18']
  %s0 = inlined_call_operand.vmem [shape: f32[32], index: 0, kind: input, shape index: {}]
  %s1 = inlined_call_operand.vmem [shape: f32[4,32], index: 1, kind: output, shape index: {}]
  // Predicated region
  $region2: #{tile.18} parent=0 // pred_check
    _
  $region3: #{tile.18} parent=0 // pred_check_branch
    %3 = sbr.rel (0) target = $region5
  $region4: #{tile.18} parent=0 // pred_region
    _
  $region5: #{tile.18} parent=0 // pred_fallthru
    _
  %v4 = vld [vmem:[%s0] ss:$0 sm:$0xff]
  %5 = vst [vmem:[%s1] sm:$0xf] %v4

// kernel: tile.19
$region0: #{tile.19}
  %s0 = inlined_call_operand.vmem [shape: f32[4,32], index: 0, kind: input, shape index: {}]
  %s1 = inlined_call_operand.vmem [shape: f32[1,128], index: 1, kind: output, shape index: {}]
  $region1: #{tile.19} parent=0
    #allocation0 [shape = 'u8[4096]{0}', space=vmem, size = 0x1000, scoped, tag = 'scoped mem for output reshape']
    #allocation1 [shape = 'u8[4096]{0}', space=vmem, size = 0x1000, scoped, tag = 'scoped mem for input reshape']
    %s3 = sshll.u32 1, 4
    %s4 = ssub.s32 %s3, 1
    %v5 = vld [vmem:[%s0] sm:%s4]
    %6 = vst [vmem:[#allocation1] sm:%s4] %v5
    %v7 = vld [vmem:[#allocation1] sm:$0x1]
    %vm8 = vcmask 261120
    %9 = vst.msk [vmem:[#allocation0] sm:$0x1] %vm8, %v7
    %s10 = scalar_lea.vmem [#allocation1], 3
    %v11 = vld [vmem:[%s10] sm:$0x1]
    %12 = vrot.lane.b32.xlu0 %v11, 96
    %v13 = vpop.permute.xlu0 %12
    %vm14 = vcmask 1048320
    %15 = vst.msk [vmem:[#allocation0] sm:$0x1] %vm14, %v13
    %s16 = scalar_lea.vmem [#allocation1], 2
    %v17 = vld [vmem:[%s16] sm:$0x1]
    %18 = vrot.lane.b32.xlu0 %v17, 64
    %v19 = vpop.permute.xlu0 %18
    %vm20 = vcmask 785920
    %21 = vst.msk [vmem:[#allocation0] sm:$0x1] %vm20, %v19
    %s22 = scalar_lea.vmem [#allocation1], 1
    %v23 = vld [vmem:[%s22] sm:$0x1]
    %24 = vrot.lane.b32.xlu0 %v23, 32
    %v25 = vpop.permute.xlu0 %24
    %vm26 = vcmask 523520
    %27 = vst.msk [vmem:[#allocation0] sm:$0x1] %vm26, %v25
    %s29 = sshll.u32 1, 1
    %s30 = ssub.s32 %s29, 1
    %v32 = vld [vmem:[#allocation0] sm:%s30]
    %s33 = sshll.u32 1, 1
    %s34 = ssub.s32 %s33, 1
    %35 = vst [vmem:[%s1] sm:%s34] %v32

// kernel: treeqn_forward.1
$region0: #{treeqn_forward.1}
  #allocation0 [shape = 'u32[]', space=smem, size = 0x4, offset = 0x4, fixed_abs, tag = 'smem constant byte address 0x4 - core index']
  #allocation1 [shape = 'u32[144,128]{1,0:T(1,128)}', space=vmem, size = 0x12000, scoped, tag = 'internal scratch']
  #allocation2 [shape = 'f32[1,1]{1,0:T(1,128)S(6)}', space=smem, size = 0x200, scoped, tag = 'scoped memory for treeqn_forward.1']
  %s0 = inlined_call_operand.vmem [shape: f32[128,12], index: 0, kind: input, shape index: {}]
  %s1 = inlined_call_operand.vmem [shape: f32[12,16], index: 1, kind: input, shape index: {}]
  %s2 = inlined_call_operand.vmem [shape: f32[1,16], index: 2, kind: input, shape index: {}]
  %s3 = inlined_call_operand.vmem [shape: f32[1,16], index: 3, kind: input, shape index: {}]
  %s4 = inlined_call_operand.vmem [shape: f32[1,16], index: 4, kind: input, shape index: {}]
  %s5 = inlined_call_operand.vmem [shape: f32[16,128,32], index: 5, kind: input, shape index: {}]
  %s6 = inlined_call_operand.vmem [shape: f32[2,128], index: 6, kind: input, shape index: {}]
  %s7 = inlined_call_operand.vmem [shape: f32[1,32], index: 7, kind: input, shape index: {}]
  %s8 = inlined_call_operand.vmem [shape: f32[32,128], index: 8, kind: input, shape index: {}]
  %s9 = inlined_call_operand.vmem [shape: f32[1,128], index: 9, kind: input, shape index: {}]
  %s10 = inlined_call_operand.vmem [shape: f32[128,4], index: 10, kind: input, shape index: {}]
  %s11 = inlined_call_operand.<no memory space> [shape: f32[1,1], index: 11, kind: input, shape index: {}]
  %s12 = inlined_call_operand.vmem [shape: f32[32,512], index: 12, kind: input, shape index: {}]
  %s13 = inlined_call_operand.vmem [shape: f32[1,512], index: 13, kind: input, shape index: {}]
  %s14 = inlined_call_operand.vmem [shape: f32[512,128], index: 14, kind: input, shape index: {}]
  %s15 = inlined_call_operand.vmem [shape: f32[1,128], index: 15, kind: input, shape index: {}]
  %s16 = inlined_call_operand.vmem [shape: f32[2,128], index: 16, kind: output, shape index: {0}]
  %s17 = inlined_call_operand.vmem [shape: f32[8,128], index: 17, kind: output, shape index: {1}]
  %s18 = inlined_call_operand.vmem [shape: f32[32,128], index: 18, kind: output, shape index: {2}]
  %s19 = inlined_call_operand.vmem [shape: f32[128,128], index: 19, kind: output, shape index: {3}]
  %s20 = inlined_call_operand.vmem [shape: f32[512,128], index: 20, kind: output, shape index: {4}]
  %s21 = inlined_call_operand.vmem [shape: f32[2,128], index: 21, kind: output, shape index: {5}]
  %s22 = inlined_call_operand.vmem [shape: f32[8,128], index: 22, kind: output, shape index: {6}]
  %s23 = inlined_call_operand.vmem [shape: f32[32,128], index: 23, kind: output, shape index: {7}]
  %s24 = inlined_call_operand.vmem [shape: f32[128,128], index: 24, kind: output, shape index: {8}]
  %s25 = inlined_call_operand.hbm [shape: f32[1,1], index: 25, kind: output, shape index: {9}]
  %26 = xla_tuple %s16, %s17, %s18, %s19, %s20, %s21, %s22, %s23, %s24, %s25
  %s27 = sld [smem:[#allocation0]]
  $region146: #{treeqn_forward.1} parent=0
    _
  %s29 = ssub.s32 1, %s27
  %s30 = scalar_select 0, %s29, %s27
  %31 = sst [smem:[#allocation2]] %s11
  $region1: #{treeqn_forward.1} parent=0
    #allocation3 [shape = 'u8[512]{0}', space=vmem, size = 0x400, scoped, tag = 'output window, operand 9, single buffered']
    #allocation4 [shape = 's32[1]{0}', space=sflag, size = 0x4, scoped, tag = 'scoped memory for treeqn_forward.1']
    %32 = vsyncpa [#allocation4], 0
    // Predicated region
    $region2: #{treeqn_forward.1} parent=1 // pred_check
      _
    $region3: #{treeqn_forward.1} parent=1 // pred_check_branch
      %34 = sbr.rel (0) target = $region5
    $region4: #{treeqn_forward.1} parent=1 // pred_region
      _
    $region5: #{treeqn_forward.1} parent=1 // pred_fallthru
      _
    // Predicated region
    $region6: #{treeqn_forward.1} parent=1 // pred_check
      _
    $region7: #{treeqn_forward.1} parent=1 // pred_check_branch
      %36 = sbr.rel (0) target = $region9
    $region8: #{treeqn_forward.1} parent=1 // pred_region
      _
    $region9: #{treeqn_forward.1} parent=1 // pred_fallthru
      _
    // Predicated region
    $region10: #{treeqn_forward.1} parent=1 // pred_check
      _
    $region11: #{treeqn_forward.1} parent=1 // pred_check_branch
      %38 = sbr.rel (0) target = $region13
    $region12: #{treeqn_forward.1} parent=1 // pred_region
      _
    $region13: #{treeqn_forward.1} parent=1 // pred_fallthru
      _
    // Predicated region
    $region14: #{treeqn_forward.1} parent=1 // pred_check
      _
    $region15: #{treeqn_forward.1} parent=1 // pred_check_branch
      %40 = sbr.rel (0) target = $region17
    $region16: #{treeqn_forward.1} parent=1 // pred_region
      _
    $region17: #{treeqn_forward.1} parent=1 // pred_fallthru
      _
    // Predicated region
    $region18: #{treeqn_forward.1} parent=1 // pred_check
      _
    $region19: #{treeqn_forward.1} parent=1 // pred_check_branch
      %42 = sbr.rel (0) target = $region21
    $region20: #{treeqn_forward.1} parent=1 // pred_region
      _
    $region21: #{treeqn_forward.1} parent=1 // pred_fallthru
      _
    // Predicated region
    $region22: #{treeqn_forward.1} parent=1 // pred_check
      _
    $region23: #{treeqn_forward.1} parent=1 // pred_check_branch
      %44 = sbr.rel (0) target = $region25
    $region24: #{treeqn_forward.1} parent=1 // pred_region
      _
    $region25: #{treeqn_forward.1} parent=1 // pred_fallthru
      _
    // Predicated region
    $region26: #{treeqn_forward.1} parent=1 // pred_check
      _
    $region27: #{treeqn_forward.1} parent=1 // pred_check_branch
      %46 = sbr.rel (0) target = $region29
    $region28: #{treeqn_forward.1} parent=1 // pred_region
      _
    $region29: #{treeqn_forward.1} parent=1 // pred_fallthru
      _
    // Predicated region
    $region30: #{treeqn_forward.1} parent=1 // pred_check
      _
    $region31: #{treeqn_forward.1} parent=1 // pred_check_branch
      %48 = sbr.rel (0) target = $region33
    $region32: #{treeqn_forward.1} parent=1 // pred_region
      _
    $region33: #{treeqn_forward.1} parent=1 // pred_fallthru
      _
    // Predicated region
    $region34: #{treeqn_forward.1} parent=1 // pred_check
      _
    $region35: #{treeqn_forward.1} parent=1 // pred_check_branch
      %50 = sbr.rel (0) target = $region37
    $region36: #{treeqn_forward.1} parent=1 // pred_region
      _
    $region37: #{treeqn_forward.1} parent=1 // pred_fallthru
      _
    // Predicated region
    $region38: #{treeqn_forward.1} parent=1 // pred_check
      _
    $region39: #{treeqn_forward.1} parent=1 // pred_check_branch
      %52 = sbr.rel (0) target = $region41
    $region40: #{treeqn_forward.1} parent=1 // pred_region
      _
    $region41: #{treeqn_forward.1} parent=1 // pred_fallthru
      _
    // Predicated region
    $region42: #{treeqn_forward.1} parent=1 // pred_check
      _
    $region43: #{treeqn_forward.1} parent=1 // pred_check_branch
      %54 = sbr.rel (0) target = $region45
    $region44: #{treeqn_forward.1} parent=1 // pred_region
      _
    $region45: #{treeqn_forward.1} parent=1 // pred_fallthru
      _
    // Predicated region
    $region46: #{treeqn_forward.1} parent=1 // pred_check
      _
    $region47: #{treeqn_forward.1} parent=1 // pred_check_branch
      %56 = sbr.rel (0) target = $region49
    $region48: #{treeqn_forward.1} parent=1 // pred_region
      _
    $region49: #{treeqn_forward.1} parent=1 // pred_fallthru
      _
    // Predicated region
    $region50: #{treeqn_forward.1} parent=1 // pred_check
      _
    $region51: #{treeqn_forward.1} parent=1 // pred_check_branch
      %58 = sbr.rel (0) target = $region53
    $region52: #{treeqn_forward.1} parent=1 // pred_region
      _
    $region53: #{treeqn_forward.1} parent=1 // pred_fallthru
      _
    // Predicated region
    $region54: #{treeqn_forward.1} parent=1 // pred_check
      _
    $region55: #{treeqn_forward.1} parent=1 // pred_check_branch
      %60 = sbr.rel (0) target = $region57
    $region56: #{treeqn_forward.1} parent=1 // pred_region
      _
    $region57: #{treeqn_forward.1} parent=1 // pred_fallthru
      _
    // Predicated region
    $region58: #{treeqn_forward.1} parent=1 // pred_check
      _
    $region59: #{treeqn_forward.1} parent=1 // pred_check_branch
      %62 = sbr.rel (0) target = $region61
    $region60: #{treeqn_forward.1} parent=1 // pred_region
      _
    $region61: #{treeqn_forward.1} parent=1 // pred_fallthru
      _
    // Predicated region
    $region62: #{treeqn_forward.1} parent=1 // pred_check
      _
    $region63: #{treeqn_forward.1} parent=1 // pred_check_branch
      %64 = sbr.rel (0) target = $region65
    $region64: #{treeqn_forward.1} parent=1 // pred_region
      _
    $region65: #{treeqn_forward.1} parent=1 // pred_fallthru
      _
    %v65 = vld [vmem:[%s0] sm:$0xff]
    %v66 = vld [vmem:[%s0 + $0x8] sm:$0xff]
    %v67 = vld [vmem:[%s0 + $0x10] sm:$0xff]
    %v68 = vld [vmem:[%s0 + $0x18] sm:$0xff]
    %v69 = vld [vmem:[%s0 + $0x20] sm:$0xff]
    %v70 = vld [vmem:[%s0 + $0x28] sm:$0xff]
    %v71 = vld [vmem:[%s0 + $0x30] sm:$0xff]
    %v72 = vld [vmem:[%s0 + $0x38] sm:$0xff]
    %v73 = vld [vmem:[%s0 + $0x40] sm:$0xff]
    %v74 = vld [vmem:[%s0 + $0x48] sm:$0xff]
    %v75 = vld [vmem:[%s0 + $0x50] sm:$0xff]
    %v76 = vld [vmem:[%s0 + $0x58] sm:$0xff]
    %v77 = vld [vmem:[%s0 + $0x60] sm:$0xff]
    %v78 = vld [vmem:[%s0 + $0x68] sm:$0xff]
    %v79 = vld [vmem:[%s0 + $0x70] sm:$0xff]
    %v80 = vld [vmem:[%s0 + $0x78] sm:$0xff]
    %v81 = vld [vmem:[%s1] sm:$0xff]
    %v82 = vld [vmem:[%s1 + $0x8] sm:$0xf]
    %v83 = vld [vmem:[%s2] sm:$0x1]
    %v85 = vlaneseq
    %v86 = vshrl.u32 %v85, 7
    %v87 = vsub.s32 0, %v86
    %v88 = vrot.slane %v83, %v87
    %vm90 = vcmask 97280
    %v92 = vsel %vm90, %v65, 0
    %v95 = vsel %vm90, %v66, 0
    %v98 = vsel %vm90, %v67, 0
    %v101 = vsel %vm90, %v68, 0
    %v104 = vsel %vm90, %v69, 0
    %v107 = vsel %vm90, %v70, 0
    %v110 = vsel %vm90, %v71, 0
    %v113 = vsel %vm90, %v72, 0
    %v116 = vsel %vm90, %v73, 0
    %v119 = vsel %vm90, %v74, 0
    %v122 = vsel %vm90, %v75, 0
    %v125 = vsel %vm90, %v76, 0
    %v128 = vsel %vm90, %v77, 0
    %v131 = vsel %vm90, %v78, 0
    %v134 = vsel %vm90, %v79, 0
    %v137 = vsel %vm90, %v80, 0
    %vm139 = vcmask 1043456
    %v141 = vsel %vm139, %v82, 0
    %143 = vmatprep.subr.mxu0 0.0
    %144 = vmatpush1.msra.mxu0 0.0
    %145 = vmatprep.subr.mxu0 0.0
    %146 = vmatpush1.msra.mxu0 0.0
    %147 = vmatprep.subr.mxu0 0.0
    %148 = vmatpush1.msra.mxu0 0.0
    %149 = vmatprep.subr.mxu0 0.0
    %150 = vmatpush1.msra.mxu0 0.0
    %151 = vmatprep.subr.mxu0 0.0
    %152 = vmatpush1.msra.mxu0 0.0
    %153 = vmatprep.subr.mxu0 0.0
    %154 = vmatpush1.msra.mxu0 0.0
    %155 = vmatprep.subr.mxu0 0.0
    %156 = vmatpush1.msra.mxu0 0.0
    %157 = vmatprep.subr.mxu0 0.0
    %158 = vmatpush1.msra.mxu0 0.0
    %159 = vmatprep.subr.mxu0 0.0
    %160 = vmatpush1.msra.mxu0 0.0
    %161 = vmatprep.subr.mxu0 0.0
    %162 = vmatpush1.msra.mxu0 0.0
    %163 = vmatprep.subr.mxu0 0.0
    %164 = vmatpush1.msra.mxu0 0.0
    %165 = vmatprep.subr.mxu0 0.0
    %166 = vmatpush1.msra.mxu0 0.0
    %167 = vmatprep.subr.mxu0 0.0
    %168 = vmatpush1.msra.mxu0 0.0
    %169 = vmatprep.subr.mxu0 0.0
    %170 = vmatpush1.msra.mxu0 0.0
    %171 = vmatprep.subr.mxu0 0.0
    %172 = vmatpush1.msra.mxu0 %v141
    %173 = vmatprep.subr.mxu0 0.0
    %174 = vmatpush1.msra.mxu0 %v81
    %175 = vmatprep.subr.mxu0 0.0
    %176 = vmatpush2.msra.mxu0 0.0
    %177 = vmatprep.subr.mxu0 0.0
    %178 = vmatpush2.msra.mxu0 0.0
    %179 = vmatprep.subr.mxu0 0.0
    %180 = vmatpush2.msra.mxu0 0.0
    %181 = vmatprep.subr.mxu0 0.0
    %182 = vmatpush2.msra.mxu0 0.0
    %183 = vmatprep.subr.mxu0 0.0
    %184 = vmatpush2.msra.mxu0 0.0
    %185 = vmatprep.subr.mxu0 0.0
    %186 = vmatpush2.msra.mxu0 0.0
    %187 = vmatprep.subr.mxu0 0.0
    %188 = vmatpush2.msra.mxu0 0.0
    %189 = vmatprep.subr.mxu0 0.0
    %190 = vmatpush2.msra.mxu0 0.0
    %191 = vmatprep.subr.mxu0 0.0
    %192 = vmatpush2.msra.mxu0 0.0
    %193 = vmatprep.subr.mxu0 0.0
    %194 = vmatpush2.msra.mxu0 0.0
    %195 = vmatprep.subr.mxu0 0.0
    %196 = vmatpush2.msra.mxu0 0.0
    %197 = vmatprep.subr.mxu0 0.0
    %198 = vmatpush2.msra.mxu0 0.0
    %199 = vmatprep.subr.mxu0 0.0
    %200 = vmatpush2.msra.mxu0 0.0
    %201 = vmatprep.subr.mxu0 0.0
    %202 = vmatpush2.msra.mxu0 0.0
    %203 = vmatprep.subr.mxu0 0.0
    %204 = vmatpush2.msra.mxu0 0.0
    %205 = vmatprep.subr.mxu0 0.0
    %206 = vmatpush2.msra.mxu0 0.0
    %207 = vmatprep.mubr.f32.mxu0 0.0
    %208 = vmatmul.mubr.f32.gmra.mxu0 %v92
    %v209 = vpop.f32.mrf.mxu0
    %v210 = vadd.f32 %v88, %v209
    %v211 = vpop.f32.mrf.mxu0
    %212 = vmatprep.mubr.f32.mxu0 0.0
    %213 = vmatmul.mubr.f32.gmra.mxu0 %v95
    %v214 = vpop.f32.mrf.mxu0
    %v215 = vadd.f32 %v88, %v214
    %v216 = vpop.f32.mrf.mxu0
    %217 = vmatprep.mubr.f32.mxu0 0.0
    %218 = vmatmul.mubr.f32.gmra.mxu0 %v98
    %v219 = vpop.f32.mrf.mxu0
    %v220 = vadd.f32 %v88, %v219
    %v221 = vpop.f32.mrf.mxu0
    %222 = vmatprep.mubr.f32.mxu0 0.0
    %223 = vmatmul.mubr.f32.gmra.mxu0 %v101
    %v224 = vpop.f32.mrf.mxu0
    %v225 = vadd.f32 %v88, %v224
    %v226 = vpop.f32.mrf.mxu0
    %227 = vmatprep.mubr.f32.mxu0 0.0
    %228 = vmatmul.mubr.f32.gmra.mxu0 %v104
    %v229 = vpop.f32.mrf.mxu0
    %v230 = vadd.f32 %v88, %v229
    %v231 = vpop.f32.mrf.mxu0
    %232 = vmatprep.mubr.f32.mxu0 0.0
    %233 = vmatmul.mubr.f32.gmra.mxu0 %v107
    %v234 = vpop.f32.mrf.mxu0
    %v235 = vadd.f32 %v88, %v234
    %v236 = vpop.f32.mrf.mxu0
    %237 = vmatprep.mubr.f32.mxu0 0.0
    %238 = vmatmul.mubr.f32.gmra.mxu0 %v110
    %v239 = vpop.f32.mrf.mxu0
    %v240 = vadd.f32 %v88, %v239
    %v241 = vpop.f32.mrf.mxu0
    %242 = vmatprep.mubr.f32.mxu0 0.0
    %243 = vmatmul.mubr.f32.gmra.mxu0 %v113
    %v244 = vpop.f32.mrf.mxu0
    %v245 = vadd.f32 %v88, %v244
    %v246 = vpop.f32.mrf.mxu0
    %247 = vmatprep.mubr.f32.mxu0 0.0
    %248 = vmatmul.mubr.f32.gmra.mxu0 %v116
    %v249 = vpop.f32.mrf.mxu0
    %v250 = vadd.f32 %v88, %v249
    %v251 = vpop.f32.mrf.mxu0
    %252 = vmatprep.mubr.f32.mxu0 0.0
    %253 = vmatmul.mubr.f32.gmra.mxu0 %v119
    %v254 = vpop.f32.mrf.mxu0
    %v255 = vadd.f32 %v88, %v254
    %v256 = vpop.f32.mrf.mxu0
    %257 = vmatprep.mubr.f32.mxu0 0.0
    %258 = vmatmul.mubr.f32.gmra.mxu0 %v122
    %v259 = vpop.f32.mrf.mxu0
    %v260 = vadd.f32 %v88, %v259
    %v261 = vpop.f32.mrf.mxu0
    %262 = vmatprep.mubr.f32.mxu0 0.0
    %263 = vmatmul.mubr.f32.gmra.mxu0 %v125
    %v264 = vpop.f32.mrf.mxu0
    %v265 = vadd.f32 %v88, %v264
    %v266 = vpop.f32.mrf.mxu0
    %267 = vmatprep.mubr.f32.mxu0 0.0
    %268 = vmatmul.mubr.f32.gmra.mxu0 %v128
    %v269 = vpop.f32.mrf.mxu0
    %v270 = vadd.f32 %v88, %v269
    %v271 = vpop.f32.mrf.mxu0
    %272 = vmatprep.mubr.f32.mxu0 0.0
    %273 = vmatmul.mubr.f32.gmra.mxu0 %v131
    %v274 = vpop.f32.mrf.mxu0
    %v275 = vadd.f32 %v88, %v274
    %v276 = vpop.f32.mrf.mxu0
    %277 = vmatprep.mubr.f32.mxu0 0.0
    %278 = vmatmul.mubr.f32.gmra.mxu0 %v134
    %v279 = vpop.f32.mrf.mxu0
    %v280 = vadd.f32 %v88, %v279
    %v281 = vpop.f32.mrf.mxu0
    %282 = vmatprep.mubr.f32.mxu0 0.0
    %283 = vmatmul.mubr.f32.gmra.mxu0 %v137
    %v284 = vpop.f32.mrf.mxu0
    %v285 = vadd.f32 %v88, %v284
    %v286 = vpop.f32.mrf.mxu0
    %287 = vdwg.mxu0
    %vm288 = vcmask 130048
    %v289 = vsel %vm288, %v210, 0.0
    %v290 = vsel %vm288, %v215, 0.0
    %v291 = vadd.f32 %v289, %v290
    %v292 = vsel %vm288, %v220, 0.0
    %v293 = vadd.f32 %v291, %v292
    %v294 = vsel %vm288, %v225, 0.0
    %v295 = vadd.f32 %v293, %v294
    %v296 = vsel %vm288, %v230, 0.0
    %v297 = vadd.f32 %v295, %v296
    %v298 = vsel %vm288, %v235, 0.0
    %v299 = vadd.f32 %v297, %v298
    %v300 = vsel %vm288, %v240, 0.0
    %v301 = vadd.f32 %v299, %v300
    %v302 = vsel %vm288, %v245, 0.0
    %v303 = vadd.f32 %v301, %v302
    %v304 = vsel %vm288, %v250, 0.0
    %v305 = vadd.f32 %v303, %v304
    %v306 = vsel %vm288, %v255, 0.0
    %v307 = vadd.f32 %v305, %v306
    %v308 = vsel %vm288, %v260, 0.0
    %v309 = vadd.f32 %v307, %v308
    %v310 = vsel %vm288, %v265, 0.0
    %v311 = vadd.f32 %v309, %v310
    %v312 = vsel %vm288, %v270, 0.0
    %v313 = vadd.f32 %v311, %v312
    %v314 = vsel %vm288, %v275, 0.0
    %v315 = vadd.f32 %v313, %v314
    %v316 = vsel %vm288, %v280, 0.0
    %v317 = vadd.f32 %v315, %v316
    %v318 = vsel %vm288, %v285, 0.0
    %v319 = vadd.f32 %v317, %v318
    %v320 = vrot.slane %v319, 4
    %v321 = vadd.f32 %v319, %v320
    %v322 = vrot.slane %v321, 2
    %v323 = vadd.f32 %v321, %v322
    %v324 = vrot.slane %v323, 1
    %v325 = vadd.f32 %v323, %v324
    %v326 = vrcp.pop 128.0
    %v327 = vmul.f32 %v325, %v326
    %v328 = vsub.f32 %v210, %v327
    %v329 = vsub.f32 %v215, %v327
    %v330 = vsub.f32 %v220, %v327
    %v331 = vsub.f32 %v225, %v327
    %v332 = vsub.f32 %v230, %v327
    %v333 = vsub.f32 %v235, %v327
    %v334 = vsub.f32 %v240, %v327
    %v335 = vsub.f32 %v245, %v327
    %v336 = vsub.f32 %v250, %v327
    %v337 = vsub.f32 %v255, %v327
    %v338 = vsub.f32 %v260, %v327
    %v339 = vsub.f32 %v265, %v327
    %v340 = vsub.f32 %v270, %v327
    %v341 = vsub.f32 %v275, %v327
    %v342 = vsub.f32 %v280, %v327
    %v343 = vsub.f32 %v285, %v327
    %v344 = vmul.f32 %v328, %v328
    %v345 = vmul.f32 %v329, %v329
    %v346 = vmul.f32 %v330, %v330
    %v347 = vmul.f32 %v331, %v331
    %v348 = vmul.f32 %v332, %v332
    %v349 = vmul.f32 %v333, %v333
    %v350 = vmul.f32 %v334, %v334
    %v351 = vmul.f32 %v335, %v335
    %v352 = vmul.f32 %v336, %v336
    %v353 = vmul.f32 %v337, %v337
    %v354 = vmul.f32 %v338, %v338
    %v355 = vmul.f32 %v339, %v339
    %v356 = vmul.f32 %v340, %v340
    %v357 = vmul.f32 %v341, %v341
    %v358 = vmul.f32 %v342, %v342
    %v359 = vmul.f32 %v343, %v343
    %v360 = vsel %vm288, %v344, 0.0
    %v361 = vsel %vm288, %v345, 0.0
    %v362 = vadd.f32 %v360, %v361
    %v363 = vsel %vm288, %v346, 0.0
    %v364 = vadd.f32 %v362, %v363
    %v365 = vsel %vm288, %v347, 0.0
    %v366 = vadd.f32 %v364, %v365
    %v367 = vsel %vm288, %v348, 0.0
    %v368 = vadd.f32 %v366, %v367
    %v369 = vsel %vm288, %v349, 0.0
    %v370 = vadd.f32 %v368, %v369
    %v371 = vsel %vm288, %v350, 0.0
    %v372 = vadd.f32 %v370, %v371
    %v373 = vsel %vm288, %v351, 0.0
    %v374 = vadd.f32 %v372, %v373
    %v375 = vsel %vm288, %v352, 0.0
    %v376 = vadd.f32 %v374, %v375
    %v377 = vsel %vm288, %v353, 0.0
    %v378 = vadd.f32 %v376, %v377
    %v379 = vsel %vm288, %v354, 0.0
    %v380 = vadd.f32 %v378, %v379
    %v381 = vsel %vm288, %v355, 0.0
    %v382 = vadd.f32 %v380, %v381
    %v383 = vsel %vm288, %v356, 0.0
    %v384 = vadd.f32 %v382, %v383
    %v385 = vsel %vm288, %v357, 0.0
    %v386 = vadd.f32 %v384, %v385
    %v387 = vsel %vm288, %v358, 0.0
    %v388 = vadd.f32 %v386, %v387
    %v389 = vsel %vm288, %v359, 0.0
    %v390 = vadd.f32 %v388, %v389
    %v391 = vrot.slane %v390, 4
    %v392 = vadd.f32 %v390, %v391
    %v393 = vrot.slane %v392, 2
    %v394 = vadd.f32 %v392, %v393
    %v395 = vrot.slane %v394, 1
    %v396 = vadd.f32 %v394, %v395
    %v397 = vmul.f32 %v396, %v326
    %v398 = vadd.f32 %v397, 1e-05
    %v399 = vrsqrt.pop %v398
    %v400 = vmul.f32 %v328, %v399
    %v401 = vmul.f32 %v329, %v399
    %v402 = vmul.f32 %v330, %v399
    %v403 = vmul.f32 %v331, %v399
    %v404 = vmul.f32 %v332, %v399
    %v405 = vmul.f32 %v333, %v399
    %v406 = vmul.f32 %v334, %v399
    %v407 = vmul.f32 %v335, %v399
    %v408 = vmul.f32 %v336, %v399
    %v409 = vmul.f32 %v337, %v399
    %v410 = vmul.f32 %v338, %v399
    %v411 = vmul.f32 %v339, %v399
    %v412 = vmul.f32 %v340, %v399
    %v413 = vmul.f32 %v341, %v399
    %v414 = vmul.f32 %v342, %v399
    %v415 = vmul.f32 %v343, %v399
    %v416 = vld [vmem:[%s3] sm:$0x1]
    %v418 = vlaneseq
    %v419 = vshrl.u32 %v418, 7
    %v420 = vsub.s32 0, %v419
    %v421 = vrot.slane %v416, %v420
    %v423 = vmul.f32 %v400, %v421
    %v424 = vmul.f32 %v401, %v421
    %v425 = vmul.f32 %v402, %v421
    %v426 = vmul.f32 %v403, %v421
    %v427 = vmul.f32 %v404, %v421
    %v428 = vmul.f32 %v405, %v421
    %v429 = vmul.f32 %v406, %v421
    %v430 = vmul.f32 %v407, %v421
    %v431 = vmul.f32 %v408, %v421
    %v432 = vmul.f32 %v409, %v421
    %v433 = vmul.f32 %v410, %v421
    %v434 = vmul.f32 %v411, %v421
    %v435 = vmul.f32 %v412, %v421
    %v436 = vmul.f32 %v413, %v421
    %v437 = vmul.f32 %v414, %v421
    %v438 = vmul.f32 %v415, %v421
    %v439 = vld [vmem:[%s4] sm:$0x1]
    %v441 = vlaneseq
    %v442 = vshrl.u32 %v441, 7
    %v443 = vsub.s32 0, %v442
    %v444 = vrot.slane %v439, %v443
    %v446 = vadd.f32 %v423, %v444
    %v447 = vadd.f32 %v424, %v444
    %v448 = vadd.f32 %v425, %v444
    %v449 = vadd.f32 %v426, %v444
    %v450 = vadd.f32 %v427, %v444
    %v451 = vadd.f32 %v428, %v444
    %v452 = vadd.f32 %v429, %v444
    %v453 = vadd.f32 %v430, %v444
    %v454 = vadd.f32 %v431, %v444
    %v455 = vadd.f32 %v432, %v444
    %v456 = vadd.f32 %v433, %v444
    %v457 = vadd.f32 %v434, %v444
    %v458 = vadd.f32 %v435, %v444
    %v459 = vadd.f32 %v436, %v444
    %v460 = vadd.f32 %v437, %v444
    %v461 = vadd.f32 %v438, %v444
    %v462 = vmax.f32 %v446, 0.0
    %v463 = vmax.f32 %v447, 0.0
    %v464 = vmax.f32 %v448, 0.0
    %v465 = vmax.f32 %v449, 0.0
    %v466 = vmax.f32 %v450, 0.0
    %v467 = vmax.f32 %v451, 0.0
    %v468 = vmax.f32 %v452, 0.0
    %v469 = vmax.f32 %v453, 0.0
    %v470 = vmax.f32 %v454, 0.0
    %v471 = vmax.f32 %v455, 0.0
    %v472 = vmax.f32 %v456, 0.0
    %v473 = vmax.f32 %v457, 0.0
    %v474 = vmax.f32 %v458, 0.0
    %v475 = vmax.f32 %v459, 0.0
    %v476 = vmax.f32 %v460, 0.0
    %v477 = vmax.f32 %v461, 0.0
    %v478 = vld [vmem:[%s5] sm:$0xff]
    %v479 = vld [vmem:[%s5 + $0x8] sm:$0xff]
    %v480 = vld [vmem:[%s5 + $0x10] sm:$0xff]
    %v481 = vld [vmem:[%s5 + $0x18] sm:$0xff]
    %v482 = vld [vmem:[%s5 + $0x20] sm:$0xff]
    %v483 = vld [vmem:[%s5 + $0x28] sm:$0xff]
    %v484 = vld [vmem:[%s5 + $0x30] sm:$0xff]
    %v485 = vld [vmem:[%s5 + $0x38] sm:$0xff]
    %v486 = vld [vmem:[%s5 + $0x40] sm:$0xff]
    %v487 = vld [vmem:[%s5 + $0x48] sm:$0xff]
    %v488 = vld [vmem:[%s5 + $0x50] sm:$0xff]
    %v489 = vld [vmem:[%s5 + $0x58] sm:$0xff]
    %v490 = vld [vmem:[%s5 + $0x60] sm:$0xff]
    %v491 = vld [vmem:[%s5 + $0x68] sm:$0xff]
    %v492 = vld [vmem:[%s5 + $0x70] sm:$0xff]
    %v493 = vld [vmem:[%s5 + $0x78] sm:$0xff]
    %495 = vset.pattern.permute.xlu0 0
    %496 = vperm.xlu0 %495, %v462
    %v497 = vpop.permute.xlu0 %496
    %500 = vset.pattern.permute.xlu0 0
    %501 = vperm.xlu0 %500, %v463
    %v502 = vpop.permute.xlu0 %501
    %505 = vset.pattern.permute.xlu0 0
    %506 = vperm.xlu0 %505, %v464
    %v507 = vpop.permute.xlu0 %506
    %510 = vset.pattern.permute.xlu0 0
    %511 = vperm.xlu0 %510, %v465
    %v512 = vpop.permute.xlu0 %511
    %515 = vset.pattern.permute.xlu0 0
    %516 = vperm.xlu0 %515, %v466
    %v517 = vpop.permute.xlu0 %516
    %520 = vset.pattern.permute.xlu0 0
    %521 = vperm.xlu0 %520, %v467
    %v522 = vpop.permute.xlu0 %521
    %525 = vset.pattern.permute.xlu0 0
    %526 = vperm.xlu0 %525, %v468
    %v527 = vpop.permute.xlu0 %526
    %530 = vset.pattern.permute.xlu0 0
    %531 = vperm.xlu0 %530, %v469
    %v532 = vpop.permute.xlu0 %531
    %535 = vset.pattern.permute.xlu0 0
    %536 = vperm.xlu0 %535, %v470
    %v537 = vpop.permute.xlu0 %536
    %540 = vset.pattern.permute.xlu0 0
    %541 = vperm.xlu0 %540, %v471
    %v542 = vpop.permute.xlu0 %541
    %545 = vset.pattern.permute.xlu0 0
    %546 = vperm.xlu0 %545, %v472
    %v547 = vpop.permute.xlu0 %546
    %550 = vset.pattern.permute.xlu0 0
    %551 = vperm.xlu0 %550, %v473
    %v552 = vpop.permute.xlu0 %551
    %555 = vset.pattern.permute.xlu0 0
    %556 = vperm.xlu0 %555, %v474
    %v557 = vpop.permute.xlu0 %556
    %560 = vset.pattern.permute.xlu0 0
    %561 = vperm.xlu0 %560, %v475
    %v562 = vpop.permute.xlu0 %561
    %565 = vset.pattern.permute.xlu0 0
    %566 = vperm.xlu0 %565, %v476
    %v567 = vpop.permute.xlu0 %566
    %570 = vset.pattern.permute.xlu0 0
    %571 = vperm.xlu0 %570, %v477
    %v572 = vpop.permute.xlu0 %571
    %v574 = vmul.f32 %v497, %v478
    %v575 = vmul.f32 %v502, %v479
    %v576 = vmul.f32 %v507, %v480
    %v577 = vmul.f32 %v512, %v481
    %v578 = vmul.f32 %v517, %v482
    %v579 = vmul.f32 %v522, %v483
    %v580 = vmul.f32 %v527, %v484
    %v581 = vmul.f32 %v532, %v485
    %v582 = vmul.f32 %v537, %v486
    %v583 = vmul.f32 %v542, %v487
    %v584 = vmul.f32 %v547, %v488
    %v585 = vmul.f32 %v552, %v489
    %v586 = vmul.f32 %v557, %v490
    %v587 = vmul.f32 %v562, %v491
    %v588 = vmul.f32 %v567, %v492
    %v589 = vmul.f32 %v572, %v493
    %s590 = scalar_lea.vmem %s5, 128
    %v591 = vld [vmem:[%s590] sm:$0xff]
    %v592 = vld [vmem:[%s590 + $0x8] sm:$0xff]
    %v593 = vld [vmem:[%s590 + $0x10] sm:$0xff]
    %v594 = vld [vmem:[%s590 + $0x18] sm:$0xff]
    %v595 = vld [vmem:[%s590 + $0x20] sm:$0xff]
    %v596 = vld [vmem:[%s590 + $0x28] sm:$0xff]
    %v597 = vld [vmem:[%s590 + $0x30] sm:$0xff]
    %v598 = vld [vmem:[%s590 + $0x38] sm:$0xff]
    %v599 = vld [vmem:[%s590 + $0x40] sm:$0xff]
    %v600 = vld [vmem:[%s590 + $0x48] sm:$0xff]
    %v601 = vld [vmem:[%s590 + $0x50] sm:$0xff]
    %v602 = vld [vmem:[%s590 + $0x58] sm:$0xff]
    %v603 = vld [vmem:[%s590 + $0x60] sm:$0xff]
    %v604 = vld [vmem:[%s590 + $0x68] sm:$0xff]
    %v605 = vld [vmem:[%s590 + $0x70] sm:$0xff]
    %v606 = vld [vmem:[%s590 + $0x78] sm:$0xff]
    %607 = vset.pattern.permute.xlu0 1
    %608 = vperm.xlu0 %607, %v462
    %v609 = vpop.permute.xlu0 %608
    %611 = vset.pattern.permute.xlu0 1
    %612 = vperm.xlu0 %611, %v463
    %v613 = vpop.permute.xlu0 %612
    %615 = vset.pattern.permute.xlu0 1
    %616 = vperm.xlu0 %615, %v464
    %v617 = vpop.permute.xlu0 %616
    %619 = vset.pattern.permute.xlu0 1
    %620 = vperm.xlu0 %619, %v465
    %v621 = vpop.permute.xlu0 %620
    %623 = vset.pattern.permute.xlu0 1
    %624 = vperm.xlu0 %623, %v466
    %v625 = vpop.permute.xlu0 %624
    %627 = vset.pattern.permute.xlu0 1
    %628 = vperm.xlu0 %627, %v467
    %v629 = vpop.permute.xlu0 %628
    %631 = vset.pattern.permute.xlu0 1
    %632 = vperm.xlu0 %631, %v468
    %v633 = vpop.permute.xlu0 %632
    %635 = vset.pattern.permute.xlu0 1
    %636 = vperm.xlu0 %635, %v469
    %v637 = vpop.permute.xlu0 %636
    %639 = vset.pattern.permute.xlu0 1
    %640 = vperm.xlu0 %639, %v470
    %v641 = vpop.permute.xlu0 %640
    %643 = vset.pattern.permute.xlu0 1
    %644 = vperm.xlu0 %643, %v471
    %v645 = vpop.permute.xlu0 %644
    %647 = vset.pattern.permute.xlu0 1
    %648 = vperm.xlu0 %647, %v472
    %v649 = vpop.permute.xlu0 %648
    %651 = vset.pattern.permute.xlu0 1
    %652 = vperm.xlu0 %651, %v473
    %v653 = vpop.permute.xlu0 %652
    %655 = vset.pattern.permute.xlu0 1
    %656 = vperm.xlu0 %655, %v474
    %v657 = vpop.permute.xlu0 %656
    %659 = vset.pattern.permute.xlu0 1
    %660 = vperm.xlu0 %659, %v475
    %v661 = vpop.permute.xlu0 %660
    %663 = vset.pattern.permute.xlu0 1
    %664 = vperm.xlu0 %663, %v476
    %v665 = vpop.permute.xlu0 %664
    %667 = vset.pattern.permute.xlu0 1
    %668 = vperm.xlu0 %667, %v477
    %v669 = vpop.permute.xlu0 %668
    %v671 = vmul.f32 %v609, %v591
    %v672 = vmul.f32 %v613, %v592
    %v673 = vmul.f32 %v617, %v593
    %v674 = vmul.f32 %v621, %v594
    %v675 = vmul.f32 %v625, %v595
    %v676 = vmul.f32 %v629, %v596
    %v677 = vmul.f32 %v633, %v597
    %v678 = vmul.f32 %v637, %v598
    %v679 = vmul.f32 %v641, %v599
    %v680 = vmul.f32 %v645, %v600
    %v681 = vmul.f32 %v649, %v601
    %v682 = vmul.f32 %v653, %v602
    %v683 = vmul.f32 %v657, %v603
    %v684 = vmul.f32 %v661, %v604
    %v685 = vmul.f32 %v665, %v605
    %v686 = vmul.f32 %v669, %v606
    %v687 = vadd.f32 %v574, %v671
    %v688 = vadd.f32 %v575, %v672
    %v689 = vadd.f32 %v576, %v673
    %v690 = vadd.f32 %v577, %v674
    %v691 = vadd.f32 %v578, %v675
    %v692 = vadd.f32 %v579, %v676
    %v693 = vadd.f32 %v580, %v677
    %v694 = vadd.f32 %v581, %v678
    %v695 = vadd.f32 %v582, %v679
    %v696 = vadd.f32 %v583, %v680
    %v697 = vadd.f32 %v584, %v681
    %v698 = vadd.f32 %v585, %v682
    %v699 = vadd.f32 %v586, %v683
    %v700 = vadd.f32 %v587, %v684
    %v701 = vadd.f32 %v588, %v685
    %v702 = vadd.f32 %v589, %v686
    %s703 = scalar_lea.vmem %s5, 256
    %v704 = vld [vmem:[%s703] sm:$0xff]
    %v705 = vld [vmem:[%s703 + $0x8] sm:$0xff]
    %v706 = vld [vmem:[%s703 + $0x10] sm:$0xff]
    %v707 = vld [vmem:[%s703 + $0x18] sm:$0xff]
    %v708 = vld [vmem:[%s703 + $0x20] sm:$0xff]
    %v709 = vld [vmem:[%s703 + $0x28] sm:$0xff]
    %v710 = vld [vmem:[%s703 + $0x30] sm:$0xff]
    %v711 = vld [vmem:[%s703 + $0x38] sm:$0xff]
    %v712 = vld [vmem:[%s703 + $0x40] sm:$0xff]
    %v713 = vld [vmem:[%s703 + $0x48] sm:$0xff]
    %v714 = vld [vmem:[%s703 + $0x50] sm:$0xff]
    %v715 = vld [vmem:[%s703 + $0x58] sm:$0xff]
    %v716 = vld [vmem:[%s703 + $0x60] sm:$0xff]
    %v717 = vld [vmem:[%s703 + $0x68] sm:$0xff]
    %v718 = vld [vmem:[%s703 + $0x70] sm:$0xff]
    %v719 = vld [vmem:[%s703 + $0x78] sm:$0xff]
    %720 = vset.pattern.permute.xlu0 2
    %721 = vperm.xlu0 %720, %v462
    %v722 = vpop.permute.xlu0 %721
    %724 = vset.pattern.permute.xlu0 2
    %725 = vperm.xlu0 %724, %v463
    %v726 = vpop.permute.xlu0 %725
    %728 = vset.pattern.permute.xlu0 2
    %729 = vperm.xlu0 %728, %v464
    %v730 = vpop.permute.xlu0 %729
    %732 = vset.pattern.permute.xlu0 2
    %733 = vperm.xlu0 %732, %v465
    %v734 = vpop.permute.xlu0 %733
    %736 = vset.pattern.permute.xlu0 2
    %737 = vperm.xlu0 %736, %v466
    %v738 = vpop.permute.xlu0 %737
    %740 = vset.pattern.permute.xlu0 2
    %741 = vperm.xlu0 %740, %v467
    %v742 = vpop.permute.xlu0 %741
    %744 = vset.pattern.permute.xlu0 2
    %745 = vperm.xlu0 %744, %v468
    %v746 = vpop.permute.xlu0 %745
    %748 = vset.pattern.permute.xlu0 2
    %749 = vperm.xlu0 %748, %v469
    %v750 = vpop.permute.xlu0 %749
    %752 = vset.pattern.permute.xlu0 2
    %753 = vperm.xlu0 %752, %v470
    %v754 = vpop.permute.xlu0 %753
    %756 = vset.pattern.permute.xlu0 2
    %757 = vperm.xlu0 %756, %v471
    %v758 = vpop.permute.xlu0 %757
    %760 = vset.pattern.permute.xlu0 2
    %761 = vperm.xlu0 %760, %v472
    %v762 = vpop.permute.xlu0 %761
    %764 = vset.pattern.permute.xlu0 2
    %765 = vperm.xlu0 %764, %v473
    %v766 = vpop.permute.xlu0 %765
    %768 = vset.pattern.permute.xlu0 2
    %769 = vperm.xlu0 %768, %v474
    %v770 = vpop.permute.xlu0 %769
    %772 = vset.pattern.permute.xlu0 2
    %773 = vperm.xlu0 %772, %v475
    %v774 = vpop.permute.xlu0 %773
    %776 = vset.pattern.permute.xlu0 2
    %777 = vperm.xlu0 %776, %v476
    %v778 = vpop.permute.xlu0 %777
    %780 = vset.pattern.permute.xlu0 2
    %781 = vperm.xlu0 %780, %v477
    %v782 = vpop.permute.xlu0 %781
    %v784 = vmul.f32 %v722, %v704
    %v785 = vmul.f32 %v726, %v705
    %v786 = vmul.f32 %v730, %v706
    %v787 = vmul.f32 %v734, %v707
    %v788 = vmul.f32 %v738, %v708
    %v789 = vmul.f32 %v742, %v709
    %v790 = vmul.f32 %v746, %v710
    %v791 = vmul.f32 %v750, %v711
    %v792 = vmul.f32 %v754, %v712
    %v793 = vmul.f32 %v758, %v713
    %v794 = vmul.f32 %v762, %v714
    %v795 = vmul.f32 %v766, %v715
    %v796 = vmul.f32 %v770, %v716
    %v797 = vmul.f32 %v774, %v717
    %v798 = vmul.f32 %v778, %v718
    %v799 = vmul.f32 %v782, %v719
    %v800 = vadd.f32 %v687, %v784
    %v801 = vadd.f32 %v688, %v785
    %v802 = vadd.f32 %v689, %v786
    %v803 = vadd.f32 %v690, %v787
    %v804 = vadd.f32 %v691, %v788
    %v805 = vadd.f32 %v692, %v789
    %v806 = vadd.f32 %v693, %v790
    %v807 = vadd.f32 %v694, %v791
    %v808 = vadd.f32 %v695, %v792
    %v809 = vadd.f32 %v696, %v793
    %v810 = vadd.f32 %v697, %v794
    %v811 = vadd.f32 %v698, %v795
    %v812 = vadd.f32 %v699, %v796
    %v813 = vadd.f32 %v700, %v797
    %v814 = vadd.f32 %v701, %v798
    %v815 = vadd.f32 %v702, %v799
    %s816 = scalar_lea.vmem %s5, 384
    %v817 = vld [vmem:[%s816] sm:$0xff]
    %v818 = vld [vmem:[%s816 + $0x8] sm:$0xff]
    %v819 = vld [vmem:[%s816 + $0x10] sm:$0xff]
    %v820 = vld [vmem:[%s816 + $0x18] sm:$0xff]
    %v821 = vld [vmem:[%s816 + $0x20] sm:$0xff]
    %v822 = vld [vmem:[%s816 + $0x28] sm:$0xff]
    %v823 = vld [vmem:[%s816 + $0x30] sm:$0xff]
    %v824 = vld [vmem:[%s816 + $0x38] sm:$0xff]
    %v825 = vld [vmem:[%s816 + $0x40] sm:$0xff]
    %v826 = vld [vmem:[%s816 + $0x48] sm:$0xff]
    %v827 = vld [vmem:[%s816 + $0x50] sm:$0xff]
    %v828 = vld [vmem:[%s816 + $0x58] sm:$0xff]
    %v829 = vld [vmem:[%s816 + $0x60] sm:$0xff]
    %v830 = vld [vmem:[%s816 + $0x68] sm:$0xff]
    %v831 = vld [vmem:[%s816 + $0x70] sm:$0xff]
    %v832 = vld [vmem:[%s816 + $0x78] sm:$0xff]
    %833 = vset.pattern.permute.xlu0 3
    %834 = vperm.xlu0 %833, %v462
    %v835 = vpop.permute.xlu0 %834
    %837 = vset.pattern.permute.xlu0 3
    %838 = vperm.xlu0 %837, %v463
    %v839 = vpop.permute.xlu0 %838
    %841 = vset.pattern.permute.xlu0 3
    %842 = vperm.xlu0 %841, %v464
    %v843 = vpop.permute.xlu0 %842
    %845 = vset.pattern.permute.xlu0 3
    %846 = vperm.xlu0 %845, %v465
    %v847 = vpop.permute.xlu0 %846
    %849 = vset.pattern.permute.xlu0 3
    %850 = vperm.xlu0 %849, %v466
    %v851 = vpop.permute.xlu0 %850
    %853 = vset.pattern.permute.xlu0 3
    %854 = vperm.xlu0 %853, %v467
    %v855 = vpop.permute.xlu0 %854
    %857 = vset.pattern.permute.xlu0 3
    %858 = vperm.xlu0 %857, %v468
    %v859 = vpop.permute.xlu0 %858
    %861 = vset.pattern.permute.xlu0 3
    %862 = vperm.xlu0 %861, %v469
    %v863 = vpop.permute.xlu0 %862
    %865 = vset.pattern.permute.xlu0 3
    %866 = vperm.xlu0 %865, %v470
    %v867 = vpop.permute.xlu0 %866
    %869 = vset.pattern.permute.xlu0 3
    %870 = vperm.xlu0 %869, %v471
    %v871 = vpop.permute.xlu0 %870
    %873 = vset.pattern.permute.xlu0 3
    %874 = vperm.xlu0 %873, %v472
    %v875 = vpop.permute.xlu0 %874
    %877 = vset.pattern.permute.xlu0 3
    %878 = vperm.xlu0 %877, %v473
    %v879 = vpop.permute.xlu0 %878
    %881 = vset.pattern.permute.xlu0 3
    %882 = vperm.xlu0 %881, %v474
    %v883 = vpop.permute.xlu0 %882
    %885 = vset.pattern.permute.xlu0 3
    %886 = vperm.xlu0 %885, %v475
    %v887 = vpop.permute.xlu0 %886
    %889 = vset.pattern.permute.xlu0 3
    %890 = vperm.xlu0 %889, %v476
    %v891 = vpop.permute.xlu0 %890
    %893 = vset.pattern.permute.xlu0 3
    %894 = vperm.xlu0 %893, %v477
    %v895 = vpop.permute.xlu0 %894
    %v897 = vmul.f32 %v835, %v817
    %v898 = vmul.f32 %v839, %v818
    %v899 = vmul.f32 %v843, %v819
    %v900 = vmul.f32 %v847, %v820
    %v901 = vmul.f32 %v851, %v821
    %v902 = vmul.f32 %v855, %v822
    %v903 = vmul.f32 %v859, %v823
    %v904 = vmul.f32 %v863, %v824
    %v905 = vmul.f32 %v867, %v825
    %v906 = vmul.f32 %v871, %v826
    %v907 = vmul.f32 %v875, %v827
    %v908 = vmul.f32 %v879, %v828
    %v909 = vmul.f32 %v883, %v829
    %v910 = vmul.f32 %v887, %v830
    %v911 = vmul.f32 %v891, %v831
    %v912 = vmul.f32 %v895, %v832
    %v913 = vadd.f32 %v800, %v897
    %v914 = vadd.f32 %v801, %v898
    %v915 = vadd.f32 %v802, %v899
    %v916 = vadd.f32 %v803, %v900
    %v917 = vadd.f32 %v804, %v901
    %v918 = vadd.f32 %v805, %v902
    %v919 = vadd.f32 %v806, %v903
    %v920 = vadd.f32 %v807, %v904
    %v921 = vadd.f32 %v808, %v905
    %v922 = vadd.f32 %v809, %v906
    %v923 = vadd.f32 %v810, %v907
    %v924 = vadd.f32 %v811, %v908
    %v925 = vadd.f32 %v812, %v909
    %v926 = vadd.f32 %v813, %v910
    %v927 = vadd.f32 %v814, %v911
    %v928 = vadd.f32 %v815, %v912
    %s929 = scalar_lea.vmem %s5, 512
    %v930 = vld [vmem:[%s929] sm:$0xff]
    %v931 = vld [vmem:[%s929 + $0x8] sm:$0xff]
    %v932 = vld [vmem:[%s929 + $0x10] sm:$0xff]
    %v933 = vld [vmem:[%s929 + $0x18] sm:$0xff]
    %v934 = vld [vmem:[%s929 + $0x20] sm:$0xff]
    %v935 = vld [vmem:[%s929 + $0x28] sm:$0xff]
    %v936 = vld [vmem:[%s929 + $0x30] sm:$0xff]
    %v937 = vld [vmem:[%s929 + $0x38] sm:$0xff]
    %v938 = vld [vmem:[%s929 + $0x40] sm:$0xff]
    %v939 = vld [vmem:[%s929 + $0x48] sm:$0xff]
    %v940 = vld [vmem:[%s929 + $0x50] sm:$0xff]
    %v941 = vld [vmem:[%s929 + $0x58] sm:$0xff]
    %v942 = vld [vmem:[%s929 + $0x60] sm:$0xff]
    %v943 = vld [vmem:[%s929 + $0x68] sm:$0xff]
    %v944 = vld [vmem:[%s929 + $0x70] sm:$0xff]
    %v945 = vld [vmem:[%s929 + $0x78] sm:$0xff]
    %946 = vset.pattern.permute.xlu0 4
    %947 = vperm.xlu0 %946, %v462
    %v948 = vpop.permute.xlu0 %947
    %950 = vset.pattern.permute.xlu0 4
    %951 = vperm.xlu0 %950, %v463
    %v952 = vpop.permute.xlu0 %951
    %954 = vset.pattern.permute.xlu0 4
    %955 = vperm.xlu0 %954, %v464
    %v956 = vpop.permute.xlu0 %955
    %958 = vset.pattern.permute.xlu0 4
    %959 = vperm.xlu0 %958, %v465
    %v960 = vpop.permute.xlu0 %959
    %962 = vset.pattern.permute.xlu0 4
    %963 = vperm.xlu0 %962, %v466
    %v964 = vpop.permute.xlu0 %963
    %966 = vset.pattern.permute.xlu0 4
    %967 = vperm.xlu0 %966, %v467
    %v968 = vpop.permute.xlu0 %967
    %970 = vset.pattern.permute.xlu0 4
    %971 = vperm.xlu0 %970, %v468
    %v972 = vpop.permute.xlu0 %971
    %974 = vset.pattern.permute.xlu0 4
    %975 = vperm.xlu0 %974, %v469
    %v976 = vpop.permute.xlu0 %975
    %978 = vset.pattern.permute.xlu0 4
    %979 = vperm.xlu0 %978, %v470
    %v980 = vpop.permute.xlu0 %979
    %982 = vset.pattern.permute.xlu0 4
    %983 = vperm.xlu0 %982, %v471
    %v984 = vpop.permute.xlu0 %983
    %986 = vset.pattern.permute.xlu0 4
    %987 = vperm.xlu0 %986, %v472
    %v988 = vpop.permute.xlu0 %987
    %990 = vset.pattern.permute.xlu0 4
    %991 = vperm.xlu0 %990, %v473
    %v992 = vpop.permute.xlu0 %991
    %994 = vset.pattern.permute.xlu0 4
    %995 = vperm.xlu0 %994, %v474
    %v996 = vpop.permute.xlu0 %995
    %998 = vset.pattern.permute.xlu0 4
    %999 = vperm.xlu0 %998, %v475
    %v1000 = vpop.permute.xlu0 %999
    %1002 = vset.pattern.permute.xlu0 4
    %1003 = vperm.xlu0 %1002, %v476
    %v1004 = vpop.permute.xlu0 %1003
    %1006 = vset.pattern.permute.xlu0 4
    %1007 = vperm.xlu0 %1006, %v477
    %v1008 = vpop.permute.xlu0 %1007
    %v1010 = vmul.f32 %v948, %v930
    %v1011 = vmul.f32 %v952, %v931
    %v1012 = vmul.f32 %v956, %v932
    %v1013 = vmul.f32 %v960, %v933
    %v1014 = vmul.f32 %v964, %v934
    %v1015 = vmul.f32 %v968, %v935
    %v1016 = vmul.f32 %v972, %v936
    %v1017 = vmul.f32 %v976, %v937
    %v1018 = vmul.f32 %v980, %v938
    %v1019 = vmul.f32 %v984, %v939
    %v1020 = vmul.f32 %v988, %v940
    %v1021 = vmul.f32 %v992, %v941
    %v1022 = vmul.f32 %v996, %v942
    %v1023 = vmul.f32 %v1000, %v943
    %v1024 = vmul.f32 %v1004, %v944
    %v1025 = vmul.f32 %v1008, %v945
    %v1026 = vadd.f32 %v913, %v1010
    %v1027 = vadd.f32 %v914, %v1011
    %v1028 = vadd.f32 %v915, %v1012
    %v1029 = vadd.f32 %v916, %v1013
    %v1030 = vadd.f32 %v917, %v1014
    %v1031 = vadd.f32 %v918, %v1015
    %v1032 = vadd.f32 %v919, %v1016
    %v1033 = vadd.f32 %v920, %v1017
    %v1034 = vadd.f32 %v921, %v1018
    %v1035 = vadd.f32 %v922, %v1019
    %v1036 = vadd.f32 %v923, %v1020
    %v1037 = vadd.f32 %v924, %v1021
    %v1038 = vadd.f32 %v925, %v1022
    %v1039 = vadd.f32 %v926, %v1023
    %v1040 = vadd.f32 %v927, %v1024
    %v1041 = vadd.f32 %v928, %v1025
    %s1042 = scalar_lea.vmem %s5, 640
    %v1043 = vld [vmem:[%s1042] sm:$0xff]
    %v1044 = vld [vmem:[%s1042 + $0x8] sm:$0xff]
    %v1045 = vld [vmem:[%s1042 + $0x10] sm:$0xff]
    %v1046 = vld [vmem:[%s1042 + $0x18] sm:$0xff]
    %v1047 = vld [vmem:[%s1042 + $0x20] sm:$0xff]
    %v1048 = vld [vmem:[%s1042 + $0x28] sm:$0xff]
    %v1049 = vld [vmem:[%s1042 + $0x30] sm:$0xff]
    %v1050 = vld [vmem:[%s1042 + $0x38] sm:$0xff]
    %v1051 = vld [vmem:[%s1042 + $0x40] sm:$0xff]
    %v1052 = vld [vmem:[%s1042 + $0x48] sm:$0xff]
    %v1053 = vld [vmem:[%s1042 + $0x50] sm:$0xff]
    %v1054 = vld [vmem:[%s1042 + $0x58] sm:$0xff]
    %v1055 = vld [vmem:[%s1042 + $0x60] sm:$0xff]
    %v1056 = vld [vmem:[%s1042 + $0x68] sm:$0xff]
    %v1057 = vld [vmem:[%s1042 + $0x70] sm:$0xff]
    %v1058 = vld [vmem:[%s1042 + $0x78] sm:$0xff]
    %1059 = vset.pattern.permute.xlu0 5
    %1060 = vperm.xlu0 %1059, %v462
    %v1061 = vpop.permute.xlu0 %1060
    %1063 = vset.pattern.permute.xlu0 5
    %1064 = vperm.xlu0 %1063, %v463
    %v1065 = vpop.permute.xlu0 %1064
    %1067 = vset.pattern.permute.xlu0 5
    %1068 = vperm.xlu0 %1067, %v464
    %v1069 = vpop.permute.xlu0 %1068
    %1071 = vset.pattern.permute.xlu0 5
    %1072 = vperm.xlu0 %1071, %v465
    %v1073 = vpop.permute.xlu0 %1072
    %1075 = vset.pattern.permute.xlu0 5
    %1076 = vperm.xlu0 %1075, %v466
    %v1077 = vpop.permute.xlu0 %1076
    %1079 = vset.pattern.permute.xlu0 5
    %1080 = vperm.xlu0 %1079, %v467
    %v1081 = vpop.permute.xlu0 %1080
    %1083 = vset.pattern.permute.xlu0 5
    %1084 = vperm.xlu0 %1083, %v468
    %v1085 = vpop.permute.xlu0 %1084
    %1087 = vset.pattern.permute.xlu0 5
    %1088 = vperm.xlu0 %1087, %v469
    %v1089 = vpop.permute.xlu0 %1088
    %1091 = vset.pattern.permute.xlu0 5
    %1092 = vperm.xlu0 %1091, %v470
    %v1093 = vpop.permute.xlu0 %1092
    %1095 = vset.pattern.permute.xlu0 5
    %1096 = vperm.xlu0 %1095, %v471
    %v1097 = vpop.permute.xlu0 %1096
    %1099 = vset.pattern.permute.xlu0 5
    %1100 = vperm.xlu0 %1099, %v472
    %v1101 = vpop.permute.xlu0 %1100
    %1103 = vset.pattern.permute.xlu0 5
    %1104 = vperm.xlu0 %1103, %v473
    %v1105 = vpop.permute.xlu0 %1104
    %1107 = vset.pattern.permute.xlu0 5
    %1108 = vperm.xlu0 %1107, %v474
    %v1109 = vpop.permute.xlu0 %1108
    %1111 = vset.pattern.permute.xlu0 5
    %1112 = vperm.xlu0 %1111, %v475
    %v1113 = vpop.permute.xlu0 %1112
    %1115 = vset.pattern.permute.xlu0 5
    %1116 = vperm.xlu0 %1115, %v476
    %v1117 = vpop.permute.xlu0 %1116
    %1119 = vset.pattern.permute.xlu0 5
    %1120 = vperm.xlu0 %1119, %v477
    %v1121 = vpop.permute.xlu0 %1120
    %v1123 = vmul.f32 %v1061, %v1043
    %v1124 = vmul.f32 %v1065, %v1044
    %v1125 = vmul.f32 %v1069, %v1045
    %v1126 = vmul.f32 %v1073, %v1046
    %v1127 = vmul.f32 %v1077, %v1047
    %v1128 = vmul.f32 %v1081, %v1048
    %v1129 = vmul.f32 %v1085, %v1049
    %v1130 = vmul.f32 %v1089, %v1050
    %v1131 = vmul.f32 %v1093, %v1051
    %v1132 = vmul.f32 %v1097, %v1052
    %v1133 = vmul.f32 %v1101, %v1053
    %v1134 = vmul.f32 %v1105, %v1054
    %v1135 = vmul.f32 %v1109, %v1055
    %v1136 = vmul.f32 %v1113, %v1056
    %v1137 = vmul.f32 %v1117, %v1057
    %v1138 = vmul.f32 %v1121, %v1058
    %v1139 = vadd.f32 %v1026, %v1123
    %v1140 = vadd.f32 %v1027, %v1124
    %v1141 = vadd.f32 %v1028, %v1125
    %v1142 = vadd.f32 %v1029, %v1126
    %v1143 = vadd.f32 %v1030, %v1127
    %v1144 = vadd.f32 %v1031, %v1128
    %v1145 = vadd.f32 %v1032, %v1129
    %v1146 = vadd.f32 %v1033, %v1130
    %v1147 = vadd.f32 %v1034, %v1131
    %v1148 = vadd.f32 %v1035, %v1132
    %v1149 = vadd.f32 %v1036, %v1133
    %v1150 = vadd.f32 %v1037, %v1134
    %v1151 = vadd.f32 %v1038, %v1135
    %v1152 = vadd.f32 %v1039, %v1136
    %v1153 = vadd.f32 %v1040, %v1137
    %v1154 = vadd.f32 %v1041, %v1138
    %s1155 = scalar_lea.vmem %s5, 768
    %v1156 = vld [vmem:[%s1155] sm:$0xff]
    %v1157 = vld [vmem:[%s1155 + $0x8] sm:$0xff]
    %v1158 = vld [vmem:[%s1155 + $0x10] sm:$0xff]
    %v1159 = vld [vmem:[%s1155 + $0x18] sm:$0xff]
    %v1160 = vld [vmem:[%s1155 + $0x20] sm:$0xff]
    %v1161 = vld [vmem:[%s1155 + $0x28] sm:$0xff]
    %v1162 = vld [vmem:[%s1155 + $0x30] sm:$0xff]
    %v1163 = vld [vmem:[%s1155 + $0x38] sm:$0xff]
    %v1164 = vld [vmem:[%s1155 + $0x40] sm:$0xff]
    %v1165 = vld [vmem:[%s1155 + $0x48] sm:$0xff]
    %v1166 = vld [vmem:[%s1155 + $0x50] sm:$0xff]
    %v1167 = vld [vmem:[%s1155 + $0x58] sm:$0xff]
    %v1168 = vld [vmem:[%s1155 + $0x60] sm:$0xff]
    %v1169 = vld [vmem:[%s1155 + $0x68] sm:$0xff]
    %v1170 = vld [vmem:[%s1155 + $0x70] sm:$0xff]
    %v1171 = vld [vmem:[%s1155 + $0x78] sm:$0xff]
    %1172 = vset.pattern.permute.xlu0 6
    %1173 = vperm.xlu0 %1172, %v462
    %v1174 = vpop.permute.xlu0 %1173
    %1176 = vset.pattern.permute.xlu0 6
    %1177 = vperm.xlu0 %1176, %v463
    %v1178 = vpop.permute.xlu0 %1177
    %1180 = vset.pattern.permute.xlu0 6
    %1181 = vperm.xlu0 %1180, %v464
    %v1182 = vpop.permute.xlu0 %1181
    %1184 = vset.pattern.permute.xlu0 6
    %1185 = vperm.xlu0 %1184, %v465
    %v1186 = vpop.permute.xlu0 %1185
    %1188 = vset.pattern.permute.xlu0 6
    %1189 = vperm.xlu0 %1188, %v466
    %v1190 = vpop.permute.xlu0 %1189
    %1192 = vset.pattern.permute.xlu0 6
    %1193 = vperm.xlu0 %1192, %v467
    %v1194 = vpop.permute.xlu0 %1193
    %1196 = vset.pattern.permute.xlu0 6
    %1197 = vperm.xlu0 %1196, %v468
    %v1198 = vpop.permute.xlu0 %1197
    %1200 = vset.pattern.permute.xlu0 6
    %1201 = vperm.xlu0 %1200, %v469
    %v1202 = vpop.permute.xlu0 %1201
    %1204 = vset.pattern.permute.xlu0 6
    %1205 = vperm.xlu0 %1204, %v470
    %v1206 = vpop.permute.xlu0 %1205
    %1208 = vset.pattern.permute.xlu0 6
    %1209 = vperm.xlu0 %1208, %v471
    %v1210 = vpop.permute.xlu0 %1209
    %1212 = vset.pattern.permute.xlu0 6
    %1213 = vperm.xlu0 %1212, %v472
    %v1214 = vpop.permute.xlu0 %1213
    %1216 = vset.pattern.permute.xlu0 6
    %1217 = vperm.xlu0 %1216, %v473
    %v1218 = vpop.permute.xlu0 %1217
    %1220 = vset.pattern.permute.xlu0 6
    %1221 = vperm.xlu0 %1220, %v474
    %v1222 = vpop.permute.xlu0 %1221
    %1224 = vset.pattern.permute.xlu0 6
    %1225 = vperm.xlu0 %1224, %v475
    %v1226 = vpop.permute.xlu0 %1225
    %1228 = vset.pattern.permute.xlu0 6
    %1229 = vperm.xlu0 %1228, %v476
    %v1230 = vpop.permute.xlu0 %1229
    %1232 = vset.pattern.permute.xlu0 6
    %1233 = vperm.xlu0 %1232, %v477
    %v1234 = vpop.permute.xlu0 %1233
    %v1236 = vmul.f32 %v1174, %v1156
    %v1237 = vmul.f32 %v1178, %v1157
    %v1238 = vmul.f32 %v1182, %v1158
    %v1239 = vmul.f32 %v1186, %v1159
    %v1240 = vmul.f32 %v1190, %v1160
    %v1241 = vmul.f32 %v1194, %v1161
    %v1242 = vmul.f32 %v1198, %v1162
    %v1243 = vmul.f32 %v1202, %v1163
    %v1244 = vmul.f32 %v1206, %v1164
    %v1245 = vmul.f32 %v1210, %v1165
    %v1246 = vmul.f32 %v1214, %v1166
    %v1247 = vmul.f32 %v1218, %v1167
    %v1248 = vmul.f32 %v1222, %v1168
    %v1249 = vmul.f32 %v1226, %v1169
    %v1250 = vmul.f32 %v1230, %v1170
    %v1251 = vmul.f32 %v1234, %v1171
    %v1252 = vadd.f32 %v1139, %v1236
    %v1253 = vadd.f32 %v1140, %v1237
    %v1254 = vadd.f32 %v1141, %v1238
    %v1255 = vadd.f32 %v1142, %v1239
    %v1256 = vadd.f32 %v1143, %v1240
    %v1257 = vadd.f32 %v1144, %v1241
    %v1258 = vadd.f32 %v1145, %v1242
    %v1259 = vadd.f32 %v1146, %v1243
    %v1260 = vadd.f32 %v1147, %v1244
    %v1261 = vadd.f32 %v1148, %v1245
    %v1262 = vadd.f32 %v1149, %v1246
    %v1263 = vadd.f32 %v1150, %v1247
    %v1264 = vadd.f32 %v1151, %v1248
    %v1265 = vadd.f32 %v1152, %v1249
    %v1266 = vadd.f32 %v1153, %v1250
    %v1267 = vadd.f32 %v1154, %v1251
    %s1268 = scalar_lea.vmem %s5, 896
    %v1269 = vld [vmem:[%s1268] sm:$0xff]
    %v1270 = vld [vmem:[%s1268 + $0x8] sm:$0xff]
    %v1271 = vld [vmem:[%s1268 + $0x10] sm:$0xff]
    %v1272 = vld [vmem:[%s1268 + $0x18] sm:$0xff]
    %v1273 = vld [vmem:[%s1268 + $0x20] sm:$0xff]
    %v1274 = vld [vmem:[%s1268 + $0x28] sm:$0xff]
    %v1275 = vld [vmem:[%s1268 + $0x30] sm:$0xff]
    %v1276 = vld [vmem:[%s1268 + $0x38] sm:$0xff]
    %v1277 = vld [vmem:[%s1268 + $0x40] sm:$0xff]
    %v1278 = vld [vmem:[%s1268 + $0x48] sm:$0xff]
    %v1279 = vld [vmem:[%s1268 + $0x50] sm:$0xff]
    %v1280 = vld [vmem:[%s1268 + $0x58] sm:$0xff]
    %v1281 = vld [vmem:[%s1268 + $0x60] sm:$0xff]
    %v1282 = vld [vmem:[%s1268 + $0x68] sm:$0xff]
    %v1283 = vld [vmem:[%s1268 + $0x70] sm:$0xff]
    %v1284 = vld [vmem:[%s1268 + $0x78] sm:$0xff]
    %1285 = vset.pattern.permute.xlu0 7
    %1286 = vperm.xlu0 %1285, %v462
    %v1287 = vpop.permute.xlu0 %1286
    %1289 = vset.pattern.permute.xlu0 7
    %1290 = vperm.xlu0 %1289, %v463
    %v1291 = vpop.permute.xlu0 %1290
    %1293 = vset.pattern.permute.xlu0 7
    %1294 = vperm.xlu0 %1293, %v464
    %v1295 = vpop.permute.xlu0 %1294
    %1297 = vset.pattern.permute.xlu0 7
    %1298 = vperm.xlu0 %1297, %v465
    %v1299 = vpop.permute.xlu0 %1298
    %1301 = vset.pattern.permute.xlu0 7
    %1302 = vperm.xlu0 %1301, %v466
    %v1303 = vpop.permute.xlu0 %1302
    %1305 = vset.pattern.permute.xlu0 7
    %1306 = vperm.xlu0 %1305, %v467
    %v1307 = vpop.permute.xlu0 %1306
    %1309 = vset.pattern.permute.xlu0 7
    %1310 = vperm.xlu0 %1309, %v468
    %v1311 = vpop.permute.xlu0 %1310
    %1313 = vset.pattern.permute.xlu0 7
    %1314 = vperm.xlu0 %1313, %v469
    %v1315 = vpop.permute.xlu0 %1314
    %1317 = vset.pattern.permute.xlu0 7
    %1318 = vperm.xlu0 %1317, %v470
    %v1319 = vpop.permute.xlu0 %1318
    %1321 = vset.pattern.permute.xlu0 7
    %1322 = vperm.xlu0 %1321, %v471
    %v1323 = vpop.permute.xlu0 %1322
    %1325 = vset.pattern.permute.xlu0 7
    %1326 = vperm.xlu0 %1325, %v472
    %v1327 = vpop.permute.xlu0 %1326
    %1329 = vset.pattern.permute.xlu0 7
    %1330 = vperm.xlu0 %1329, %v473
    %v1331 = vpop.permute.xlu0 %1330
    %1333 = vset.pattern.permute.xlu0 7
    %1334 = vperm.xlu0 %1333, %v474
    %v1335 = vpop.permute.xlu0 %1334
    %1337 = vset.pattern.permute.xlu0 7
    %1338 = vperm.xlu0 %1337, %v475
    %v1339 = vpop.permute.xlu0 %1338
    %1341 = vset.pattern.permute.xlu0 7
    %1342 = vperm.xlu0 %1341, %v476
    %v1343 = vpop.permute.xlu0 %1342
    %1345 = vset.pattern.permute.xlu0 7
    %1346 = vperm.xlu0 %1345, %v477
    %v1347 = vpop.permute.xlu0 %1346
    %v1349 = vmul.f32 %v1287, %v1269
    %v1350 = vmul.f32 %v1291, %v1270
    %v1351 = vmul.f32 %v1295, %v1271
    %v1352 = vmul.f32 %v1299, %v1272
    %v1353 = vmul.f32 %v1303, %v1273
    %v1354 = vmul.f32 %v1307, %v1274
    %v1355 = vmul.f32 %v1311, %v1275
    %v1356 = vmul.f32 %v1315, %v1276
    %v1357 = vmul.f32 %v1319, %v1277
    %v1358 = vmul.f32 %v1323, %v1278
    %v1359 = vmul.f32 %v1327, %v1279
    %v1360 = vmul.f32 %v1331, %v1280
    %v1361 = vmul.f32 %v1335, %v1281
    %v1362 = vmul.f32 %v1339, %v1282
    %v1363 = vmul.f32 %v1343, %v1283
    %v1364 = vmul.f32 %v1347, %v1284
    %v1365 = vadd.f32 %v1252, %v1349
    %v1366 = vadd.f32 %v1253, %v1350
    %v1367 = vadd.f32 %v1254, %v1351
    %v1368 = vadd.f32 %v1255, %v1352
    %v1369 = vadd.f32 %v1256, %v1353
    %v1370 = vadd.f32 %v1257, %v1354
    %v1371 = vadd.f32 %v1258, %v1355
    %v1372 = vadd.f32 %v1259, %v1356
    %v1373 = vadd.f32 %v1260, %v1357
    %v1374 = vadd.f32 %v1261, %v1358
    %v1375 = vadd.f32 %v1262, %v1359
    %v1376 = vadd.f32 %v1263, %v1360
    %v1377 = vadd.f32 %v1264, %v1361
    %v1378 = vadd.f32 %v1265, %v1362
    %v1379 = vadd.f32 %v1266, %v1363
    %v1380 = vadd.f32 %v1267, %v1364
    %s1381 = scalar_lea.vmem %s5, 1024
    %v1382 = vld [vmem:[%s1381] sm:$0xff]
    %v1383 = vld [vmem:[%s1381 + $0x8] sm:$0xff]
    %v1384 = vld [vmem:[%s1381 + $0x10] sm:$0xff]
    %v1385 = vld [vmem:[%s1381 + $0x18] sm:$0xff]
    %v1386 = vld [vmem:[%s1381 + $0x20] sm:$0xff]
    %v1387 = vld [vmem:[%s1381 + $0x28] sm:$0xff]
    %v1388 = vld [vmem:[%s1381 + $0x30] sm:$0xff]
    %v1389 = vld [vmem:[%s1381 + $0x38] sm:$0xff]
    %v1390 = vld [vmem:[%s1381 + $0x40] sm:$0xff]
    %v1391 = vld [vmem:[%s1381 + $0x48] sm:$0xff]
    %v1392 = vld [vmem:[%s1381 + $0x50] sm:$0xff]
    %v1393 = vld [vmem:[%s1381 + $0x58] sm:$0xff]
    %v1394 = vld [vmem:[%s1381 + $0x60] sm:$0xff]
    %v1395 = vld [vmem:[%s1381 + $0x68] sm:$0xff]
    %v1396 = vld [vmem:[%s1381 + $0x70] sm:$0xff]
    %v1397 = vld [vmem:[%s1381 + $0x78] sm:$0xff]
    %1398 = vset.pattern.permute.xlu0 8
    %1399 = vperm.xlu0 %1398, %v462
    %v1400 = vpop.permute.xlu0 %1399
    %1402 = vset.pattern.permute.xlu0 8
    %1403 = vperm.xlu0 %1402, %v463
    %v1404 = vpop.permute.xlu0 %1403
    %1406 = vset.pattern.permute.xlu0 8
    %1407 = vperm.xlu0 %1406, %v464
    %v1408 = vpop.permute.xlu0 %1407
    %1410 = vset.pattern.permute.xlu0 8
    %1411 = vperm.xlu0 %1410, %v465
    %v1412 = vpop.permute.xlu0 %1411
    %1414 = vset.pattern.permute.xlu0 8
    %1415 = vperm.xlu0 %1414, %v466
    %v1416 = vpop.permute.xlu0 %1415
    %1418 = vset.pattern.permute.xlu0 8
    %1419 = vperm.xlu0 %1418, %v467
    %v1420 = vpop.permute.xlu0 %1419
    %1422 = vset.pattern.permute.xlu0 8
    %1423 = vperm.xlu0 %1422, %v468
    %v1424 = vpop.permute.xlu0 %1423
    %1426 = vset.pattern.permute.xlu0 8
    %1427 = vperm.xlu0 %1426, %v469
    %v1428 = vpop.permute.xlu0 %1427
    %1430 = vset.pattern.permute.xlu0 8
    %1431 = vperm.xlu0 %1430, %v470
    %v1432 = vpop.permute.xlu0 %1431
    %1434 = vset.pattern.permute.xlu0 8
    %1435 = vperm.xlu0 %1434, %v471
    %v1436 = vpop.permute.xlu0 %1435
    %1438 = vset.pattern.permute.xlu0 8
    %1439 = vperm.xlu0 %1438, %v472
    %v1440 = vpop.permute.xlu0 %1439
    %1442 = vset.pattern.permute.xlu0 8
    %1443 = vperm.xlu0 %1442, %v473
    %v1444 = vpop.permute.xlu0 %1443
    %1446 = vset.pattern.permute.xlu0 8
    %1447 = vperm.xlu0 %1446, %v474
    %v1448 = vpop.permute.xlu0 %1447
    %1450 = vset.pattern.permute.xlu0 8
    %1451 = vperm.xlu0 %1450, %v475
    %v1452 = vpop.permute.xlu0 %1451
    %1454 = vset.pattern.permute.xlu0 8
    %1455 = vperm.xlu0 %1454, %v476
    %v1456 = vpop.permute.xlu0 %1455
    %1458 = vset.pattern.permute.xlu0 8
    %1459 = vperm.xlu0 %1458, %v477
    %v1460 = vpop.permute.xlu0 %1459
    %v1462 = vmul.f32 %v1400, %v1382
    %v1463 = vmul.f32 %v1404, %v1383
    %v1464 = vmul.f32 %v1408, %v1384
    %v1465 = vmul.f32 %v1412, %v1385
    %v1466 = vmul.f32 %v1416, %v1386
    %v1467 = vmul.f32 %v1420, %v1387
    %v1468 = vmul.f32 %v1424, %v1388
    %v1469 = vmul.f32 %v1428, %v1389
    %v1470 = vmul.f32 %v1432, %v1390
    %v1471 = vmul.f32 %v1436, %v1391
    %v1472 = vmul.f32 %v1440, %v1392
    %v1473 = vmul.f32 %v1444, %v1393
    %v1474 = vmul.f32 %v1448, %v1394
    %v1475 = vmul.f32 %v1452, %v1395
    %v1476 = vmul.f32 %v1456, %v1396
    %v1477 = vmul.f32 %v1460, %v1397
    %v1478 = vadd.f32 %v1365, %v1462
    %v1479 = vadd.f32 %v1366, %v1463
    %v1480 = vadd.f32 %v1367, %v1464
    %v1481 = vadd.f32 %v1368, %v1465
    %v1482 = vadd.f32 %v1369, %v1466
    %v1483 = vadd.f32 %v1370, %v1467
    %v1484 = vadd.f32 %v1371, %v1468
    %v1485 = vadd.f32 %v1372, %v1469
    %v1486 = vadd.f32 %v1373, %v1470
    %v1487 = vadd.f32 %v1374, %v1471
    %v1488 = vadd.f32 %v1375, %v1472
    %v1489 = vadd.f32 %v1376, %v1473
    %v1490 = vadd.f32 %v1377, %v1474
    %v1491 = vadd.f32 %v1378, %v1475
    %v1492 = vadd.f32 %v1379, %v1476
    %v1493 = vadd.f32 %v1380, %v1477
    %s1494 = scalar_lea.vmem %s5, 1152
    %v1495 = vld [vmem:[%s1494] sm:$0xff]
    %v1496 = vld [vmem:[%s1494 + $0x8] sm:$0xff]
    %v1497 = vld [vmem:[%s1494 + $0x10] sm:$0xff]
    %v1498 = vld [vmem:[%s1494 + $0x18] sm:$0xff]
    %v1499 = vld [vmem:[%s1494 + $0x20] sm:$0xff]
    %v1500 = vld [vmem:[%s1494 + $0x28] sm:$0xff]
    %v1501 = vld [vmem:[%s1494 + $0x30] sm:$0xff]
    %v1502 = vld [vmem:[%s1494 + $0x38] sm:$0xff]
    %v1503 = vld [vmem:[%s1494 + $0x40] sm:$0xff]
    %v1504 = vld [vmem:[%s1494 + $0x48] sm:$0xff]
    %v1505 = vld [vmem:[%s1494 + $0x50] sm:$0xff]
    %v1506 = vld [vmem:[%s1494 + $0x58] sm:$0xff]
    %v1507 = vld [vmem:[%s1494 + $0x60] sm:$0xff]
    %v1508 = vld [vmem:[%s1494 + $0x68] sm:$0xff]
    %v1509 = vld [vmem:[%s1494 + $0x70] sm:$0xff]
    %v1510 = vld [vmem:[%s1494 + $0x78] sm:$0xff]
    %1511 = vset.pattern.permute.xlu0 9
    %1512 = vperm.xlu0 %1511, %v462
    %v1513 = vpop.permute.xlu0 %1512
    %1515 = vset.pattern.permute.xlu0 9
    %1516 = vperm.xlu0 %1515, %v463
    %v1517 = vpop.permute.xlu0 %1516
    %1519 = vset.pattern.permute.xlu0 9
    %1520 = vperm.xlu0 %1519, %v464
    %v1521 = vpop.permute.xlu0 %1520
    %1523 = vset.pattern.permute.xlu0 9
    %1524 = vperm.xlu0 %1523, %v465
    %v1525 = vpop.permute.xlu0 %1524
    %1527 = vset.pattern.permute.xlu0 9
    %1528 = vperm.xlu0 %1527, %v466
    %v1529 = vpop.permute.xlu0 %1528
    %1531 = vset.pattern.permute.xlu0 9
    %1532 = vperm.xlu0 %1531, %v467
    %v1533 = vpop.permute.xlu0 %1532
    %1535 = vset.pattern.permute.xlu0 9
    %1536 = vperm.xlu0 %1535, %v468
    %v1537 = vpop.permute.xlu0 %1536
    %1539 = vset.pattern.permute.xlu0 9
    %1540 = vperm.xlu0 %1539, %v469
    %v1541 = vpop.permute.xlu0 %1540
    %1543 = vset.pattern.permute.xlu0 9
    %1544 = vperm.xlu0 %1543, %v470
    %v1545 = vpop.permute.xlu0 %1544
    %1547 = vset.pattern.permute.xlu0 9
    %1548 = vperm.xlu0 %1547, %v471
    %v1549 = vpop.permute.xlu0 %1548
    %1551 = vset.pattern.permute.xlu0 9
    %1552 = vperm.xlu0 %1551, %v472
    %v1553 = vpop.permute.xlu0 %1552
    %1555 = vset.pattern.permute.xlu0 9
    %1556 = vperm.xlu0 %1555, %v473
    %v1557 = vpop.permute.xlu0 %1556
    %1559 = vset.pattern.permute.xlu0 9
    %1560 = vperm.xlu0 %1559, %v474
    %v1561 = vpop.permute.xlu0 %1560
    %1563 = vset.pattern.permute.xlu0 9
    %1564 = vperm.xlu0 %1563, %v475
    %v1565 = vpop.permute.xlu0 %1564
    %1567 = vset.pattern.permute.xlu0 9
    %1568 = vperm.xlu0 %1567, %v476
    %v1569 = vpop.permute.xlu0 %1568
    %1571 = vset.pattern.permute.xlu0 9
    %1572 = vperm.xlu0 %1571, %v477
    %v1573 = vpop.permute.xlu0 %1572
    %v1575 = vmul.f32 %v1513, %v1495
    %v1576 = vmul.f32 %v1517, %v1496
    %v1577 = vmul.f32 %v1521, %v1497
    %v1578 = vmul.f32 %v1525, %v1498
    %v1579 = vmul.f32 %v1529, %v1499
    %v1580 = vmul.f32 %v1533, %v1500
    %v1581 = vmul.f32 %v1537, %v1501
    %v1582 = vmul.f32 %v1541, %v1502
    %v1583 = vmul.f32 %v1545, %v1503
    %v1584 = vmul.f32 %v1549, %v1504
    %v1585 = vmul.f32 %v1553, %v1505
    %v1586 = vmul.f32 %v1557, %v1506
    %v1587 = vmul.f32 %v1561, %v1507
    %v1588 = vmul.f32 %v1565, %v1508
    %v1589 = vmul.f32 %v1569, %v1509
    %v1590 = vmul.f32 %v1573, %v1510
    %v1591 = vadd.f32 %v1478, %v1575
    %v1592 = vadd.f32 %v1479, %v1576
    %v1593 = vadd.f32 %v1480, %v1577
    %v1594 = vadd.f32 %v1481, %v1578
    %v1595 = vadd.f32 %v1482, %v1579
    %v1596 = vadd.f32 %v1483, %v1580
    %v1597 = vadd.f32 %v1484, %v1581
    %v1598 = vadd.f32 %v1485, %v1582
    %v1599 = vadd.f32 %v1486, %v1583
    %v1600 = vadd.f32 %v1487, %v1584
    %v1601 = vadd.f32 %v1488, %v1585
    %v1602 = vadd.f32 %v1489, %v1586
    %v1603 = vadd.f32 %v1490, %v1587
    %v1604 = vadd.f32 %v1491, %v1588
    %v1605 = vadd.f32 %v1492, %v1589
    %v1606 = vadd.f32 %v1493, %v1590
    %s1607 = scalar_lea.vmem %s5, 1280
    %v1608 = vld [vmem:[%s1607] sm:$0xff]
    %v1609 = vld [vmem:[%s1607 + $0x8] sm:$0xff]
    %v1610 = vld [vmem:[%s1607 + $0x10] sm:$0xff]
    %v1611 = vld [vmem:[%s1607 + $0x18] sm:$0xff]
    %v1612 = vld [vmem:[%s1607 + $0x20] sm:$0xff]
    %v1613 = vld [vmem:[%s1607 + $0x28] sm:$0xff]
    %v1614 = vld [vmem:[%s1607 + $0x30] sm:$0xff]
    %v1615 = vld [vmem:[%s1607 + $0x38] sm:$0xff]
    %v1616 = vld [vmem:[%s1607 + $0x40] sm:$0xff]
    %v1617 = vld [vmem:[%s1607 + $0x48] sm:$0xff]
    %v1618 = vld [vmem:[%s1607 + $0x50] sm:$0xff]
    %v1619 = vld [vmem:[%s1607 + $0x58] sm:$0xff]
    %v1620 = vld [vmem:[%s1607 + $0x60] sm:$0xff]
    %v1621 = vld [vmem:[%s1607 + $0x68] sm:$0xff]
    %v1622 = vld [vmem:[%s1607 + $0x70] sm:$0xff]
    %v1623 = vld [vmem:[%s1607 + $0x78] sm:$0xff]
    %1624 = vset.pattern.permute.xlu0 10
    %1625 = vperm.xlu0 %1624, %v462
    %v1626 = vpop.permute.xlu0 %1625
    %1628 = vset.pattern.permute.xlu0 10
    %1629 = vperm.xlu0 %1628, %v463
    %v1630 = vpop.permute.xlu0 %1629
    %1632 = vset.pattern.permute.xlu0 10
    %1633 = vperm.xlu0 %1632, %v464
    %v1634 = vpop.permute.xlu0 %1633
    %1636 = vset.pattern.permute.xlu0 10
    %1637 = vperm.xlu0 %1636, %v465
    %v1638 = vpop.permute.xlu0 %1637
    %1640 = vset.pattern.permute.xlu0 10
    %1641 = vperm.xlu0 %1640, %v466
    %v1642 = vpop.permute.xlu0 %1641
    %1644 = vset.pattern.permute.xlu0 10
    %1645 = vperm.xlu0 %1644, %v467
    %v1646 = vpop.permute.xlu0 %1645
    %1648 = vset.pattern.permute.xlu0 10
    %1649 = vperm.xlu0 %1648, %v468
    %v1650 = vpop.permute.xlu0 %1649
    %1652 = vset.pattern.permute.xlu0 10
    %1653 = vperm.xlu0 %1652, %v469
    %v1654 = vpop.permute.xlu0 %1653
    %1656 = vset.pattern.permute.xlu0 10
    %1657 = vperm.xlu0 %1656, %v470
    %v1658 = vpop.permute.xlu0 %1657
    %1660 = vset.pattern.permute.xlu0 10
    %1661 = vperm.xlu0 %1660, %v471
    %v1662 = vpop.permute.xlu0 %1661
    %1664 = vset.pattern.permute.xlu0 10
    %1665 = vperm.xlu0 %1664, %v472
    %v1666 = vpop.permute.xlu0 %1665
    %1668 = vset.pattern.permute.xlu0 10
    %1669 = vperm.xlu0 %1668, %v473
    %v1670 = vpop.permute.xlu0 %1669
    %1672 = vset.pattern.permute.xlu0 10
    %1673 = vperm.xlu0 %1672, %v474
    %v1674 = vpop.permute.xlu0 %1673
    %1676 = vset.pattern.permute.xlu0 10
    %1677 = vperm.xlu0 %1676, %v475
    %v1678 = vpop.permute.xlu0 %1677
    %1680 = vset.pattern.permute.xlu0 10
    %1681 = vperm.xlu0 %1680, %v476
    %v1682 = vpop.permute.xlu0 %1681
    %1684 = vset.pattern.permute.xlu0 10
    %1685 = vperm.xlu0 %1684, %v477
    %v1686 = vpop.permute.xlu0 %1685
    %v1688 = vmul.f32 %v1626, %v1608
    %v1689 = vmul.f32 %v1630, %v1609
    %v1690 = vmul.f32 %v1634, %v1610
    %v1691 = vmul.f32 %v1638, %v1611
    %v1692 = vmul.f32 %v1642, %v1612
    %v1693 = vmul.f32 %v1646, %v1613
    %v1694 = vmul.f32 %v1650, %v1614
    %v1695 = vmul.f32 %v1654, %v1615
    %v1696 = vmul.f32 %v1658, %v1616
    %v1697 = vmul.f32 %v1662, %v1617
    %v1698 = vmul.f32 %v1666, %v1618
    %v1699 = vmul.f32 %v1670, %v1619
    %v1700 = vmul.f32 %v1674, %v1620
    %v1701 = vmul.f32 %v1678, %v1621
    %v1702 = vmul.f32 %v1682, %v1622
    %v1703 = vmul.f32 %v1686, %v1623
    %v1704 = vadd.f32 %v1591, %v1688
    %v1705 = vadd.f32 %v1592, %v1689
    %v1706 = vadd.f32 %v1593, %v1690
    %v1707 = vadd.f32 %v1594, %v1691
    %v1708 = vadd.f32 %v1595, %v1692
    %v1709 = vadd.f32 %v1596, %v1693
    %v1710 = vadd.f32 %v1597, %v1694
    %v1711 = vadd.f32 %v1598, %v1695
    %v1712 = vadd.f32 %v1599, %v1696
    %v1713 = vadd.f32 %v1600, %v1697
    %v1714 = vadd.f32 %v1601, %v1698
    %v1715 = vadd.f32 %v1602, %v1699
    %v1716 = vadd.f32 %v1603, %v1700
    %v1717 = vadd.f32 %v1604, %v1701
    %v1718 = vadd.f32 %v1605, %v1702
    %v1719 = vadd.f32 %v1606, %v1703
    %s1720 = scalar_lea.vmem %s5, 1408
    %v1721 = vld [vmem:[%s1720] sm:$0xff]
    %v1722 = vld [vmem:[%s1720 + $0x8] sm:$0xff]
    %v1723 = vld [vmem:[%s1720 + $0x10] sm:$0xff]
    %v1724 = vld [vmem:[%s1720 + $0x18] sm:$0xff]
    %v1725 = vld [vmem:[%s1720 + $0x20] sm:$0xff]
    %v1726 = vld [vmem:[%s1720 + $0x28] sm:$0xff]
    %v1727 = vld [vmem:[%s1720 + $0x30] sm:$0xff]
    %v1728 = vld [vmem:[%s1720 + $0x38] sm:$0xff]
    %v1729 = vld [vmem:[%s1720 + $0x40] sm:$0xff]
    %v1730 = vld [vmem:[%s1720 + $0x48] sm:$0xff]
    %v1731 = vld [vmem:[%s1720 + $0x50] sm:$0xff]
    %v1732 = vld [vmem:[%s1720 + $0x58] sm:$0xff]
    %v1733 = vld [vmem:[%s1720 + $0x60] sm:$0xff]
    %v1734 = vld [vmem:[%s1720 + $0x68] sm:$0xff]
    %v1735 = vld [vmem:[%s1720 + $0x70] sm:$0xff]
    %v1736 = vld [vmem:[%s1720 + $0x78] sm:$0xff]
    %1737 = vset.pattern.permute.xlu0 11
    %1738 = vperm.xlu0 %1737, %v462
    %v1739 = vpop.permute.xlu0 %1738
    %1741 = vset.pattern.permute.xlu0 11
    %1742 = vperm.xlu0 %1741, %v463
    %v1743 = vpop.permute.xlu0 %1742
    %1745 = vset.pattern.permute.xlu0 11
    %1746 = vperm.xlu0 %1745, %v464
    %v1747 = vpop.permute.xlu0 %1746
    %1749 = vset.pattern.permute.xlu0 11
    %1750 = vperm.xlu0 %1749, %v465
    %v1751 = vpop.permute.xlu0 %1750
    %1753 = vset.pattern.permute.xlu0 11
    %1754 = vperm.xlu0 %1753, %v466
    %v1755 = vpop.permute.xlu0 %1754
    %1757 = vset.pattern.permute.xlu0 11
    %1758 = vperm.xlu0 %1757, %v467
    %v1759 = vpop.permute.xlu0 %1758
    %1761 = vset.pattern.permute.xlu0 11
    %1762 = vperm.xlu0 %1761, %v468
    %v1763 = vpop.permute.xlu0 %1762
    %1765 = vset.pattern.permute.xlu0 11
    %1766 = vperm.xlu0 %1765, %v469
    %v1767 = vpop.permute.xlu0 %1766
    %1769 = vset.pattern.permute.xlu0 11
    %1770 = vperm.xlu0 %1769, %v470
    %v1771 = vpop.permute.xlu0 %1770
    %1773 = vset.pattern.permute.xlu0 11
    %1774 = vperm.xlu0 %1773, %v471
    %v1775 = vpop.permute.xlu0 %1774
    %1777 = vset.pattern.permute.xlu0 11
    %1778 = vperm.xlu0 %1777, %v472
    %v1779 = vpop.permute.xlu0 %1778
    %1781 = vset.pattern.permute.xlu0 11
    %1782 = vperm.xlu0 %1781, %v473
    %v1783 = vpop.permute.xlu0 %1782
    %1785 = vset.pattern.permute.xlu0 11
    %1786 = vperm.xlu0 %1785, %v474
    %v1787 = vpop.permute.xlu0 %1786
    %1789 = vset.pattern.permute.xlu0 11
    %1790 = vperm.xlu0 %1789, %v475
    %v1791 = vpop.permute.xlu0 %1790
    %1793 = vset.pattern.permute.xlu0 11
    %1794 = vperm.xlu0 %1793, %v476
    %v1795 = vpop.permute.xlu0 %1794
    %1797 = vset.pattern.permute.xlu0 11
    %1798 = vperm.xlu0 %1797, %v477
    %v1799 = vpop.permute.xlu0 %1798
    %v1801 = vmul.f32 %v1739, %v1721
    %v1802 = vmul.f32 %v1743, %v1722
    %v1803 = vmul.f32 %v1747, %v1723
    %v1804 = vmul.f32 %v1751, %v1724
    %v1805 = vmul.f32 %v1755, %v1725
    %v1806 = vmul.f32 %v1759, %v1726
    %v1807 = vmul.f32 %v1763, %v1727
    %v1808 = vmul.f32 %v1767, %v1728
    %v1809 = vmul.f32 %v1771, %v1729
    %v1810 = vmul.f32 %v1775, %v1730
    %v1811 = vmul.f32 %v1779, %v1731
    %v1812 = vmul.f32 %v1783, %v1732
    %v1813 = vmul.f32 %v1787, %v1733
    %v1814 = vmul.f32 %v1791, %v1734
    %v1815 = vmul.f32 %v1795, %v1735
    %v1816 = vmul.f32 %v1799, %v1736
    %v1817 = vadd.f32 %v1704, %v1801
    %v1818 = vadd.f32 %v1705, %v1802
    %v1819 = vadd.f32 %v1706, %v1803
    %v1820 = vadd.f32 %v1707, %v1804
    %v1821 = vadd.f32 %v1708, %v1805
    %v1822 = vadd.f32 %v1709, %v1806
    %v1823 = vadd.f32 %v1710, %v1807
    %v1824 = vadd.f32 %v1711, %v1808
    %v1825 = vadd.f32 %v1712, %v1809
    %v1826 = vadd.f32 %v1713, %v1810
    %v1827 = vadd.f32 %v1714, %v1811
    %v1828 = vadd.f32 %v1715, %v1812
    %v1829 = vadd.f32 %v1716, %v1813
    %v1830 = vadd.f32 %v1717, %v1814
    %v1831 = vadd.f32 %v1718, %v1815
    %v1832 = vadd.f32 %v1719, %v1816
    %s1833 = scalar_lea.vmem %s5, 1536
    %v1834 = vld [vmem:[%s1833] sm:$0xff]
    %v1835 = vld [vmem:[%s1833 + $0x8] sm:$0xff]
    %v1836 = vld [vmem:[%s1833 + $0x10] sm:$0xff]
    %v1837 = vld [vmem:[%s1833 + $0x18] sm:$0xff]
    %v1838 = vld [vmem:[%s1833 + $0x20] sm:$0xff]
    %v1839 = vld [vmem:[%s1833 + $0x28] sm:$0xff]
    %v1840 = vld [vmem:[%s1833 + $0x30] sm:$0xff]
    %v1841 = vld [vmem:[%s1833 + $0x38] sm:$0xff]
    %v1842 = vld [vmem:[%s1833 + $0x40] sm:$0xff]
    %v1843 = vld [vmem:[%s1833 + $0x48] sm:$0xff]
    %v1844 = vld [vmem:[%s1833 + $0x50] sm:$0xff]
    %v1845 = vld [vmem:[%s1833 + $0x58] sm:$0xff]
    %v1846 = vld [vmem:[%s1833 + $0x60] sm:$0xff]
    %v1847 = vld [vmem:[%s1833 + $0x68] sm:$0xff]
    %v1848 = vld [vmem:[%s1833 + $0x70] sm:$0xff]
    %v1849 = vld [vmem:[%s1833 + $0x78] sm:$0xff]
    %1850 = vset.pattern.permute.xlu0 12
    %1851 = vperm.xlu0 %1850, %v462
    %v1852 = vpop.permute.xlu0 %1851
    %1854 = vset.pattern.permute.xlu0 12
    %1855 = vperm.xlu0 %1854, %v463
    %v1856 = vpop.permute.xlu0 %1855
    %1858 = vset.pattern.permute.xlu0 12
    %1859 = vperm.xlu0 %1858, %v464
    %v1860 = vpop.permute.xlu0 %1859
    %1862 = vset.pattern.permute.xlu0 12
    %1863 = vperm.xlu0 %1862, %v465
    %v1864 = vpop.permute.xlu0 %1863
    %1866 = vset.pattern.permute.xlu0 12
    %1867 = vperm.xlu0 %1866, %v466
    %v1868 = vpop.permute.xlu0 %1867
    %1870 = vset.pattern.permute.xlu0 12
    %1871 = vperm.xlu0 %1870, %v467
    %v1872 = vpop.permute.xlu0 %1871
    %1874 = vset.pattern.permute.xlu0 12
    %1875 = vperm.xlu0 %1874, %v468
    %v1876 = vpop.permute.xlu0 %1875
    %1878 = vset.pattern.permute.xlu0 12
    %1879 = vperm.xlu0 %1878, %v469
    %v1880 = vpop.permute.xlu0 %1879
    %1882 = vset.pattern.permute.xlu0 12
    %1883 = vperm.xlu0 %1882, %v470
    %v1884 = vpop.permute.xlu0 %1883
    %1886 = vset.pattern.permute.xlu0 12
    %1887 = vperm.xlu0 %1886, %v471
    %v1888 = vpop.permute.xlu0 %1887
    %1890 = vset.pattern.permute.xlu0 12
    %1891 = vperm.xlu0 %1890, %v472
    %v1892 = vpop.permute.xlu0 %1891
    %1894 = vset.pattern.permute.xlu0 12
    %1895 = vperm.xlu0 %1894, %v473
    %v1896 = vpop.permute.xlu0 %1895
    %1898 = vset.pattern.permute.xlu0 12
    %1899 = vperm.xlu0 %1898, %v474
    %v1900 = vpop.permute.xlu0 %1899
    %1902 = vset.pattern.permute.xlu0 12
    %1903 = vperm.xlu0 %1902, %v475
    %v1904 = vpop.permute.xlu0 %1903
    %1906 = vset.pattern.permute.xlu0 12
    %1907 = vperm.xlu0 %1906, %v476
    %v1908 = vpop.permute.xlu0 %1907
    %1910 = vset.pattern.permute.xlu0 12
    %1911 = vperm.xlu0 %1910, %v477
    %v1912 = vpop.permute.xlu0 %1911
    %v1914 = vmul.f32 %v1852, %v1834
    %v1915 = vmul.f32 %v1856, %v1835
    %v1916 = vmul.f32 %v1860, %v1836
    %v1917 = vmul.f32 %v1864, %v1837
    %v1918 = vmul.f32 %v1868, %v1838
    %v1919 = vmul.f32 %v1872, %v1839
    %v1920 = vmul.f32 %v1876, %v1840
    %v1921 = vmul.f32 %v1880, %v1841
    %v1922 = vmul.f32 %v1884, %v1842
    %v1923 = vmul.f32 %v1888, %v1843
    %v1924 = vmul.f32 %v1892, %v1844
    %v1925 = vmul.f32 %v1896, %v1845
    %v1926 = vmul.f32 %v1900, %v1846
    %v1927 = vmul.f32 %v1904, %v1847
    %v1928 = vmul.f32 %v1908, %v1848
    %v1929 = vmul.f32 %v1912, %v1849
    %v1930 = vadd.f32 %v1817, %v1914
    %v1931 = vadd.f32 %v1818, %v1915
    %v1932 = vadd.f32 %v1819, %v1916
    %v1933 = vadd.f32 %v1820, %v1917
    %v1934 = vadd.f32 %v1821, %v1918
    %v1935 = vadd.f32 %v1822, %v1919
    %v1936 = vadd.f32 %v1823, %v1920
    %v1937 = vadd.f32 %v1824, %v1921
    %v1938 = vadd.f32 %v1825, %v1922
    %v1939 = vadd.f32 %v1826, %v1923
    %v1940 = vadd.f32 %v1827, %v1924
    %v1941 = vadd.f32 %v1828, %v1925
    %v1942 = vadd.f32 %v1829, %v1926
    %v1943 = vadd.f32 %v1830, %v1927
    %v1944 = vadd.f32 %v1831, %v1928
    %v1945 = vadd.f32 %v1832, %v1929
    %s1946 = scalar_lea.vmem %s5, 1664
    %v1947 = vld [vmem:[%s1946] sm:$0xff]
    %v1948 = vld [vmem:[%s1946 + $0x8] sm:$0xff]
    %v1949 = vld [vmem:[%s1946 + $0x10] sm:$0xff]
    %v1950 = vld [vmem:[%s1946 + $0x18] sm:$0xff]
    %v1951 = vld [vmem:[%s1946 + $0x20] sm:$0xff]
    %v1952 = vld [vmem:[%s1946 + $0x28] sm:$0xff]
    %v1953 = vld [vmem:[%s1946 + $0x30] sm:$0xff]
    %v1954 = vld [vmem:[%s1946 + $0x38] sm:$0xff]
    %v1955 = vld [vmem:[%s1946 + $0x40] sm:$0xff]
    %v1956 = vld [vmem:[%s1946 + $0x48] sm:$0xff]
    %v1957 = vld [vmem:[%s1946 + $0x50] sm:$0xff]
    %v1958 = vld [vmem:[%s1946 + $0x58] sm:$0xff]
    %v1959 = vld [vmem:[%s1946 + $0x60] sm:$0xff]
    %v1960 = vld [vmem:[%s1946 + $0x68] sm:$0xff]
    %v1961 = vld [vmem:[%s1946 + $0x70] sm:$0xff]
    %v1962 = vld [vmem:[%s1946 + $0x78] sm:$0xff]
    %1963 = vset.pattern.permute.xlu0 13
    %1964 = vperm.xlu0 %1963, %v462
    %v1965 = vpop.permute.xlu0 %1964
    %1967 = vset.pattern.permute.xlu0 13
    %1968 = vperm.xlu0 %1967, %v463
    %v1969 = vpop.permute.xlu0 %1968
    %1971 = vset.pattern.permute.xlu0 13
    %1972 = vperm.xlu0 %1971, %v464
    %v1973 = vpop.permute.xlu0 %1972
    %1975 = vset.pattern.permute.xlu0 13
    %1976 = vperm.xlu0 %1975, %v465
    %v1977 = vpop.permute.xlu0 %1976
    %1979 = vset.pattern.permute.xlu0 13
    %1980 = vperm.xlu0 %1979, %v466
    %v1981 = vpop.permute.xlu0 %1980
    %1983 = vset.pattern.permute.xlu0 13
    %1984 = vperm.xlu0 %1983, %v467
    %v1985 = vpop.permute.xlu0 %1984
    %1987 = vset.pattern.permute.xlu0 13
    %1988 = vperm.xlu0 %1987, %v468
    %v1989 = vpop.permute.xlu0 %1988
    %1991 = vset.pattern.permute.xlu0 13
    %1992 = vperm.xlu0 %1991, %v469
    %v1993 = vpop.permute.xlu0 %1992
    %1995 = vset.pattern.permute.xlu0 13
    %1996 = vperm.xlu0 %1995, %v470
    %v1997 = vpop.permute.xlu0 %1996
    %1999 = vset.pattern.permute.xlu0 13
    %2000 = vperm.xlu0 %1999, %v471
    %v2001 = vpop.permute.xlu0 %2000
    %2003 = vset.pattern.permute.xlu0 13
    %2004 = vperm.xlu0 %2003, %v472
    %v2005 = vpop.permute.xlu0 %2004
    %2007 = vset.pattern.permute.xlu0 13
    %2008 = vperm.xlu0 %2007, %v473
    %v2009 = vpop.permute.xlu0 %2008
    %2011 = vset.pattern.permute.xlu0 13
    %2012 = vperm.xlu0 %2011, %v474
    %v2013 = vpop.permute.xlu0 %2012
    %2015 = vset.pattern.permute.xlu0 13
    %2016 = vperm.xlu0 %2015, %v475
    %v2017 = vpop.permute.xlu0 %2016
    %2019 = vset.pattern.permute.xlu0 13
    %2020 = vperm.xlu0 %2019, %v476
    %v2021 = vpop.permute.xlu0 %2020
    %2023 = vset.pattern.permute.xlu0 13
    %2024 = vperm.xlu0 %2023, %v477
    %v2025 = vpop.permute.xlu0 %2024
    %v2027 = vmul.f32 %v1965, %v1947
    %v2028 = vmul.f32 %v1969, %v1948
    %v2029 = vmul.f32 %v1973, %v1949
    %v2030 = vmul.f32 %v1977, %v1950
    %v2031 = vmul.f32 %v1981, %v1951
    %v2032 = vmul.f32 %v1985, %v1952
    %v2033 = vmul.f32 %v1989, %v1953
    %v2034 = vmul.f32 %v1993, %v1954
    %v2035 = vmul.f32 %v1997, %v1955
    %v2036 = vmul.f32 %v2001, %v1956
    %v2037 = vmul.f32 %v2005, %v1957
    %v2038 = vmul.f32 %v2009, %v1958
    %v2039 = vmul.f32 %v2013, %v1959
    %v2040 = vmul.f32 %v2017, %v1960
    %v2041 = vmul.f32 %v2021, %v1961
    %v2042 = vmul.f32 %v2025, %v1962
    %v2043 = vadd.f32 %v1930, %v2027
    %v2044 = vadd.f32 %v1931, %v2028
    %v2045 = vadd.f32 %v1932, %v2029
    %v2046 = vadd.f32 %v1933, %v2030
    %v2047 = vadd.f32 %v1934, %v2031
    %v2048 = vadd.f32 %v1935, %v2032
    %v2049 = vadd.f32 %v1936, %v2033
    %v2050 = vadd.f32 %v1937, %v2034
    %v2051 = vadd.f32 %v1938, %v2035
    %v2052 = vadd.f32 %v1939, %v2036
    %v2053 = vadd.f32 %v1940, %v2037
    %v2054 = vadd.f32 %v1941, %v2038
    %v2055 = vadd.f32 %v1942, %v2039
    %v2056 = vadd.f32 %v1943, %v2040
    %v2057 = vadd.f32 %v1944, %v2041
    %v2058 = vadd.f32 %v1945, %v2042
    %s2059 = scalar_lea.vmem %s5, 1792
    %v2060 = vld [vmem:[%s2059] sm:$0xff]
    %v2061 = vld [vmem:[%s2059 + $0x8] sm:$0xff]
    %v2062 = vld [vmem:[%s2059 + $0x10] sm:$0xff]
    %v2063 = vld [vmem:[%s2059 + $0x18] sm:$0xff]
    %v2064 = vld [vmem:[%s2059 + $0x20] sm:$0xff]
    %v2065 = vld [vmem:[%s2059 + $0x28] sm:$0xff]
    %v2066 = vld [vmem:[%s2059 + $0x30] sm:$0xff]
    %v2067 = vld [vmem:[%s2059 + $0x38] sm:$0xff]
    %v2068 = vld [vmem:[%s2059 + $0x40] sm:$0xff]
    %v2069 = vld [vmem:[%s2059 + $0x48] sm:$0xff]
    %v2070 = vld [vmem:[%s2059 + $0x50] sm:$0xff]
    %v2071 = vld [vmem:[%s2059 + $0x58] sm:$0xff]
    %v2072 = vld [vmem:[%s2059 + $0x60] sm:$0xff]
    %v2073 = vld [vmem:[%s2059 + $0x68] sm:$0xff]
    %v2074 = vld [vmem:[%s2059 + $0x70] sm:$0xff]
    %v2075 = vld [vmem:[%s2059 + $0x78] sm:$0xff]
    %2076 = vset.pattern.permute.xlu0 14
    %2077 = vperm.xlu0 %2076, %v462
    %v2078 = vpop.permute.xlu0 %2077
    %2080 = vset.pattern.permute.xlu0 14
    %2081 = vperm.xlu0 %2080, %v463
    %v2082 = vpop.permute.xlu0 %2081
    %2084 = vset.pattern.permute.xlu0 14
    %2085 = vperm.xlu0 %2084, %v464
    %v2086 = vpop.permute.xlu0 %2085
    %2088 = vset.pattern.permute.xlu0 14
    %2089 = vperm.xlu0 %2088, %v465
    %v2090 = vpop.permute.xlu0 %2089
    %2092 = vset.pattern.permute.xlu0 14
    %2093 = vperm.xlu0 %2092, %v466
    %v2094 = vpop.permute.xlu0 %2093
    %2096 = vset.pattern.permute.xlu0 14
    %2097 = vperm.xlu0 %2096, %v467
    %v2098 = vpop.permute.xlu0 %2097
    %2100 = vset.pattern.permute.xlu0 14
    %2101 = vperm.xlu0 %2100, %v468
    %v2102 = vpop.permute.xlu0 %2101
    %2104 = vset.pattern.permute.xlu0 14
    %2105 = vperm.xlu0 %2104, %v469
    %v2106 = vpop.permute.xlu0 %2105
    %2108 = vset.pattern.permute.xlu0 14
    %2109 = vperm.xlu0 %2108, %v470
    %v2110 = vpop.permute.xlu0 %2109
    %2112 = vset.pattern.permute.xlu0 14
    %2113 = vperm.xlu0 %2112, %v471
    %v2114 = vpop.permute.xlu0 %2113
    %2116 = vset.pattern.permute.xlu0 14
    %2117 = vperm.xlu0 %2116, %v472
    %v2118 = vpop.permute.xlu0 %2117
    %2120 = vset.pattern.permute.xlu0 14
    %2121 = vperm.xlu0 %2120, %v473
    %v2122 = vpop.permute.xlu0 %2121
    %2124 = vset.pattern.permute.xlu0 14
    %2125 = vperm.xlu0 %2124, %v474
    %v2126 = vpop.permute.xlu0 %2125
    %2128 = vset.pattern.permute.xlu0 14
    %2129 = vperm.xlu0 %2128, %v475
    %v2130 = vpop.permute.xlu0 %2129
    %2132 = vset.pattern.permute.xlu0 14
    %2133 = vperm.xlu0 %2132, %v476
    %v2134 = vpop.permute.xlu0 %2133
    %2136 = vset.pattern.permute.xlu0 14
    %2137 = vperm.xlu0 %2136, %v477
    %v2138 = vpop.permute.xlu0 %2137
    %v2140 = vmul.f32 %v2078, %v2060
    %v2141 = vmul.f32 %v2082, %v2061
    %v2142 = vmul.f32 %v2086, %v2062
    %v2143 = vmul.f32 %v2090, %v2063
    %v2144 = vmul.f32 %v2094, %v2064
    %v2145 = vmul.f32 %v2098, %v2065
    %v2146 = vmul.f32 %v2102, %v2066
    %v2147 = vmul.f32 %v2106, %v2067
    %v2148 = vmul.f32 %v2110, %v2068
    %v2149 = vmul.f32 %v2114, %v2069
    %v2150 = vmul.f32 %v2118, %v2070
    %v2151 = vmul.f32 %v2122, %v2071
    %v2152 = vmul.f32 %v2126, %v2072
    %v2153 = vmul.f32 %v2130, %v2073
    %v2154 = vmul.f32 %v2134, %v2074
    %v2155 = vmul.f32 %v2138, %v2075
    %v2156 = vadd.f32 %v2043, %v2140
    %v2157 = vadd.f32 %v2044, %v2141
    %v2158 = vadd.f32 %v2045, %v2142
    %v2159 = vadd.f32 %v2046, %v2143
    %v2160 = vadd.f32 %v2047, %v2144
    %v2161 = vadd.f32 %v2048, %v2145
    %v2162 = vadd.f32 %v2049, %v2146
    %v2163 = vadd.f32 %v2050, %v2147
    %v2164 = vadd.f32 %v2051, %v2148
    %v2165 = vadd.f32 %v2052, %v2149
    %v2166 = vadd.f32 %v2053, %v2150
    %v2167 = vadd.f32 %v2054, %v2151
    %v2168 = vadd.f32 %v2055, %v2152
    %v2169 = vadd.f32 %v2056, %v2153
    %v2170 = vadd.f32 %v2057, %v2154
    %v2171 = vadd.f32 %v2058, %v2155
    %s2172 = scalar_lea.vmem %s5, 1920
    %v2173 = vld [vmem:[%s2172] sm:$0xff]
    %v2174 = vld [vmem:[%s2172 + $0x8] sm:$0xff]
    %v2175 = vld [vmem:[%s2172 + $0x10] sm:$0xff]
    %v2176 = vld [vmem:[%s2172 + $0x18] sm:$0xff]
    %v2177 = vld [vmem:[%s2172 + $0x20] sm:$0xff]
    %v2178 = vld [vmem:[%s2172 + $0x28] sm:$0xff]
    %v2179 = vld [vmem:[%s2172 + $0x30] sm:$0xff]
    %v2180 = vld [vmem:[%s2172 + $0x38] sm:$0xff]
    %v2181 = vld [vmem:[%s2172 + $0x40] sm:$0xff]
    %v2182 = vld [vmem:[%s2172 + $0x48] sm:$0xff]
    %v2183 = vld [vmem:[%s2172 + $0x50] sm:$0xff]
    %v2184 = vld [vmem:[%s2172 + $0x58] sm:$0xff]
    %v2185 = vld [vmem:[%s2172 + $0x60] sm:$0xff]
    %v2186 = vld [vmem:[%s2172 + $0x68] sm:$0xff]
    %v2187 = vld [vmem:[%s2172 + $0x70] sm:$0xff]
    %v2188 = vld [vmem:[%s2172 + $0x78] sm:$0xff]
    %2189 = vset.pattern.permute.xlu0 15
    %2190 = vperm.xlu0 %2189, %v462
    %v2191 = vpop.permute.xlu0 %2190
    %2193 = vset.pattern.permute.xlu0 15
    %2194 = vperm.xlu0 %2193, %v463
    %v2195 = vpop.permute.xlu0 %2194
    %2197 = vset.pattern.permute.xlu0 15
    %2198 = vperm.xlu0 %2197, %v464
    %v2199 = vpop.permute.xlu0 %2198
    %2201 = vset.pattern.permute.xlu0 15
    %2202 = vperm.xlu0 %2201, %v465
    %v2203 = vpop.permute.xlu0 %2202
    %2205 = vset.pattern.permute.xlu0 15
    %2206 = vperm.xlu0 %2205, %v466
    %v2207 = vpop.permute.xlu0 %2206
    %2209 = vset.pattern.permute.xlu0 15
    %2210 = vperm.xlu0 %2209, %v467
    %v2211 = vpop.permute.xlu0 %2210
    %2213 = vset.pattern.permute.xlu0 15
    %2214 = vperm.xlu0 %2213, %v468
    %v2215 = vpop.permute.xlu0 %2214
    %2217 = vset.pattern.permute.xlu0 15
    %2218 = vperm.xlu0 %2217, %v469
    %v2219 = vpop.permute.xlu0 %2218
    %2221 = vset.pattern.permute.xlu0 15
    %2222 = vperm.xlu0 %2221, %v470
    %v2223 = vpop.permute.xlu0 %2222
    %2225 = vset.pattern.permute.xlu0 15
    %2226 = vperm.xlu0 %2225, %v471
    %v2227 = vpop.permute.xlu0 %2226
    %2229 = vset.pattern.permute.xlu0 15
    %2230 = vperm.xlu0 %2229, %v472
    %v2231 = vpop.permute.xlu0 %2230
    %2233 = vset.pattern.permute.xlu0 15
    %2234 = vperm.xlu0 %2233, %v473
    %v2235 = vpop.permute.xlu0 %2234
    %2237 = vset.pattern.permute.xlu0 15
    %2238 = vperm.xlu0 %2237, %v474
    %v2239 = vpop.permute.xlu0 %2238
    %2241 = vset.pattern.permute.xlu0 15
    %2242 = vperm.xlu0 %2241, %v475
    %v2243 = vpop.permute.xlu0 %2242
    %2245 = vset.pattern.permute.xlu0 15
    %2246 = vperm.xlu0 %2245, %v476
    %v2247 = vpop.permute.xlu0 %2246
    %2249 = vset.pattern.permute.xlu0 15
    %2250 = vperm.xlu0 %2249, %v477
    %v2251 = vpop.permute.xlu0 %2250
    %v2253 = vmul.f32 %v2191, %v2173
    %v2254 = vmul.f32 %v2195, %v2174
    %v2255 = vmul.f32 %v2199, %v2175
    %v2256 = vmul.f32 %v2203, %v2176
    %v2257 = vmul.f32 %v2207, %v2177
    %v2258 = vmul.f32 %v2211, %v2178
    %v2259 = vmul.f32 %v2215, %v2179
    %v2260 = vmul.f32 %v2219, %v2180
    %v2261 = vmul.f32 %v2223, %v2181
    %v2262 = vmul.f32 %v2227, %v2182
    %v2263 = vmul.f32 %v2231, %v2183
    %v2264 = vmul.f32 %v2235, %v2184
    %v2265 = vmul.f32 %v2239, %v2185
    %v2266 = vmul.f32 %v2243, %v2186
    %v2267 = vmul.f32 %v2247, %v2187
    %v2268 = vmul.f32 %v2251, %v2188
    %v2269 = vadd.f32 %v2156, %v2253
    %v2270 = vadd.f32 %v2157, %v2254
    %v2271 = vadd.f32 %v2158, %v2255
    %v2272 = vadd.f32 %v2159, %v2256
    %v2273 = vadd.f32 %v2160, %v2257
    %v2274 = vadd.f32 %v2161, %v2258
    %v2275 = vadd.f32 %v2162, %v2259
    %v2276 = vadd.f32 %v2163, %v2260
    %v2277 = vadd.f32 %v2164, %v2261
    %v2278 = vadd.f32 %v2165, %v2262
    %v2279 = vadd.f32 %v2166, %v2263
    %v2280 = vadd.f32 %v2167, %v2264
    %v2281 = vadd.f32 %v2168, %v2265
    %v2282 = vadd.f32 %v2169, %v2266
    %v2283 = vadd.f32 %v2170, %v2267
    %v2284 = vadd.f32 %v2171, %v2268
    %v2285 = vld [vmem:[%s6] sm:$0x3]
    %v2286 = vld [vmem:[%s7] sm:$0x1]
    %v2288 = vlaneseq
    %v2289 = vshrl.u32 %v2288, 7
    %v2290 = vsub.s32 0, %v2289
    %v2291 = vrot.slane %v2286, %v2290
    %2293 = vmatprep.subr.mxu0 0.0
    %2294 = vmatpush1.msra.mxu0 %v2284
    %2295 = vmatprep.subr.mxu0 0.0
    %2296 = vmatpush1.msra.mxu0 %v2283
    %2297 = vmatprep.subr.mxu0 0.0
    %2298 = vmatpush1.msra.mxu0 %v2282
    %2299 = vmatprep.subr.mxu0 0.0
    %2300 = vmatpush1.msra.mxu0 %v2281
    %2301 = vmatprep.subr.mxu0 0.0
    %2302 = vmatpush1.msra.mxu0 %v2280
    %2303 = vmatprep.subr.mxu0 0.0
    %2304 = vmatpush1.msra.mxu0 %v2279
    %2305 = vmatprep.subr.mxu0 0.0
    %2306 = vmatpush1.msra.mxu0 %v2278
    %2307 = vmatprep.subr.mxu0 0.0
    %2308 = vmatpush1.msra.mxu0 %v2277
    %2309 = vmatprep.subr.mxu0 0.0
    %2310 = vmatpush1.msra.mxu0 %v2276
    %2311 = vmatprep.subr.mxu0 0.0
    %2312 = vmatpush1.msra.mxu0 %v2275
    %2313 = vmatprep.subr.mxu0 0.0
    %2314 = vmatpush1.msra.mxu0 %v2274
    %2315 = vmatprep.subr.mxu0 0.0
    %2316 = vmatpush1.msra.mxu0 %v2273
    %2317 = vmatprep.subr.mxu0 0.0
    %2318 = vmatpush1.msra.mxu0 %v2272
    %2319 = vmatprep.subr.mxu0 0.0
    %2320 = vmatpush1.msra.mxu0 %v2271
    %2321 = vmatprep.subr.mxu0 0.0
    %2322 = vmatpush1.msra.mxu0 %v2270
    %2323 = vmatprep.subr.mxu0 0.0
    %2324 = vmatpush1.msra.mxu0 %v2269
    %2325 = vmatprep.subr.mxu0 0.0
    %2326 = vmatpush2.msra.mxu0 0.0
    %2327 = vmatprep.subr.mxu0 0.0
    %2328 = vmatpush2.msra.mxu0 0.0
    %2329 = vmatprep.subr.mxu0 0.0
    %2330 = vmatpush2.msra.mxu0 0.0
    %2331 = vmatprep.subr.mxu0 0.0
    %2332 = vmatpush2.msra.mxu0 0.0
    %2333 = vmatprep.subr.mxu0 0.0
    %2334 = vmatpush2.msra.mxu0 0.0
    %2335 = vmatprep.subr.mxu0 0.0
    %2336 = vmatpush2.msra.mxu0 0.0
    %2337 = vmatprep.subr.mxu0 0.0
    %2338 = vmatpush2.msra.mxu0 0.0
    %2339 = vmatprep.subr.mxu0 0.0
    %2340 = vmatpush2.msra.mxu0 0.0
    %2341 = vmatprep.subr.mxu0 0.0
    %2342 = vmatpush2.msra.mxu0 0.0
    %2343 = vmatprep.subr.mxu0 0.0
    %2344 = vmatpush2.msra.mxu0 0.0
    %2345 = vmatprep.subr.mxu0 0.0
    %2346 = vmatpush2.msra.mxu0 0.0
    %2347 = vmatprep.subr.mxu0 0.0
    %2348 = vmatpush2.msra.mxu0 0.0
    %2349 = vmatprep.subr.mxu0 0.0
    %2350 = vmatpush2.msra.mxu0 0.0
    %2351 = vmatprep.subr.mxu0 0.0
    %2352 = vmatpush2.msra.mxu0 0.0
    %2353 = vmatprep.subr.mxu0 0.0
    %2354 = vmatpush2.msra.mxu0 0.0
    %2355 = vmatprep.subr.mxu0 0.0
    %2356 = vmatpush2.msra.mxu0 0.0
    %2357 = vmatprep.mubr.f32.mxu0 0.0
    %2358 = vmatmul.mubr.f32.gmra.mxu0 %v2285
    %v2359 = vpop.f32.mrf.mxu0
    %v2360 = vadd.f32 %v2291, %v2359
    %v2361 = vpop.f32.mrf.mxu0
    %2362 = vdwg.mxu0
    %v2363 = vmax.f32 %v2360, 0.0
    %s2364 = sld [smem:[#allocation2]]
    %v2365 = vld [vmem:[%s9] sm:$0x1]
    %v2366 = vld [vmem:[%s10] sm:$0xff]
    %v2367 = vld [vmem:[%s10 + $0x8] sm:$0xff]
    %v2368 = vld [vmem:[%s10 + $0x10] sm:$0xff]
    %v2369 = vld [vmem:[%s10 + $0x18] sm:$0xff]
    %v2370 = vld [vmem:[%s10 + $0x20] sm:$0xff]
    %v2371 = vld [vmem:[%s10 + $0x28] sm:$0xff]
    %v2372 = vld [vmem:[%s10 + $0x30] sm:$0xff]
    %v2373 = vld [vmem:[%s10 + $0x38] sm:$0xff]
    %v2374 = vld [vmem:[%s10 + $0x40] sm:$0xff]
    %v2375 = vld [vmem:[%s10 + $0x48] sm:$0xff]
    %v2376 = vld [vmem:[%s10 + $0x50] sm:$0xff]
    %v2377 = vld [vmem:[%s10 + $0x58] sm:$0xff]
    %v2378 = vld [vmem:[%s10 + $0x60] sm:$0xff]
    %v2379 = vld [vmem:[%s10 + $0x68] sm:$0xff]
    %v2380 = vld [vmem:[%s10 + $0x70] sm:$0xff]
    %v2381 = vld [vmem:[%s10 + $0x78] sm:$0xff]
    %v2382 = vld [vmem:[%s8] sm:$0xff]
    %v2383 = vld [vmem:[%s8 + $0x8] sm:$0xff]
    %v2384 = vld [vmem:[%s8 + $0x10] sm:$0xff]
    %v2385 = vld [vmem:[%s8 + $0x18] sm:$0xff]
    %vm2386 = vcmask 261120
    %v2388 = vsel %vm2386, %v2363, 0
    %2390 = vmatprep.subr.mxu0 0.0
    %2391 = vmatpush1.msra.mxu0 0.0
    %2392 = vmatprep.subr.mxu0 0.0
    %2393 = vmatpush1.msra.mxu0 0.0
    %2394 = vmatprep.subr.mxu0 0.0
    %2395 = vmatpush1.msra.mxu0 0.0
    %2396 = vmatprep.subr.mxu0 0.0
    %2397 = vmatpush1.msra.mxu0 0.0
    %2398 = vmatprep.subr.mxu0 0.0
    %2399 = vmatpush1.msra.mxu0 0.0
    %2400 = vmatprep.subr.mxu0 0.0
    %2401 = vmatpush1.msra.mxu0 0.0
    %2402 = vmatprep.subr.mxu0 0.0
    %2403 = vmatpush1.msra.mxu0 0.0
    %2404 = vmatprep.subr.mxu0 0.0
    %2405 = vmatpush1.msra.mxu0 0.0
    %2406 = vmatprep.subr.mxu0 0.0
    %2407 = vmatpush1.msra.mxu0 0.0
    %2408 = vmatprep.subr.mxu0 0.0
    %2409 = vmatpush1.msra.mxu0 0.0
    %2410 = vmatprep.subr.mxu0 0.0
    %2411 = vmatpush1.msra.mxu0 0.0
    %2412 = vmatprep.subr.mxu0 0.0
    %2413 = vmatpush1.msra.mxu0 0.0
    %2414 = vmatprep.subr.mxu0 0.0
    %2415 = vmatpush1.msra.mxu0 %v2385
    %2416 = vmatprep.subr.mxu0 0.0
    %2417 = vmatpush1.msra.mxu0 %v2384
    %2418 = vmatprep.subr.mxu0 0.0
    %2419 = vmatpush1.msra.mxu0 %v2383
    %2420 = vmatprep.subr.mxu0 0.0
    %2421 = vmatpush1.msra.mxu0 %v2382
    %2422 = vmatprep.subr.mxu0 0.0
    %2423 = vmatpush2.msra.mxu0 0.0
    %2424 = vmatprep.subr.mxu0 0.0
    %2425 = vmatpush2.msra.mxu0 0.0
    %2426 = vmatprep.subr.mxu0 0.0
    %2427 = vmatpush2.msra.mxu0 0.0
    %2428 = vmatprep.subr.mxu0 0.0
    %2429 = vmatpush2.msra.mxu0 0.0
    %2430 = vmatprep.subr.mxu0 0.0
    %2431 = vmatpush2.msra.mxu0 0.0
    %2432 = vmatprep.subr.mxu0 0.0
    %2433 = vmatpush2.msra.mxu0 0.0
    %2434 = vmatprep.subr.mxu0 0.0
    %2435 = vmatpush2.msra.mxu0 0.0
    %2436 = vmatprep.subr.mxu0 0.0
    %2437 = vmatpush2.msra.mxu0 0.0
    %2438 = vmatprep.subr.mxu0 0.0
    %2439 = vmatpush2.msra.mxu0 0.0
    %2440 = vmatprep.subr.mxu0 0.0
    %2441 = vmatpush2.msra.mxu0 0.0
    %2442 = vmatprep.subr.mxu0 0.0
    %2443 = vmatpush2.msra.mxu0 0.0
    %2444 = vmatprep.subr.mxu0 0.0
    %2445 = vmatpush2.msra.mxu0 0.0
    %2446 = vmatprep.subr.mxu0 0.0
    %2447 = vmatpush2.msra.mxu0 0.0
    %2448 = vmatprep.subr.mxu0 0.0
    %2449 = vmatpush2.msra.mxu0 0.0
    %2450 = vmatprep.subr.mxu0 0.0
    %2451 = vmatpush2.msra.mxu0 0.0
    %2452 = vmatprep.subr.mxu0 0.0
    %2453 = vmatpush2.msra.mxu0 0.0
    %2454 = vmatprep.mubr.f32.mxu0 0.0
    %2455 = vmatmul.mubr.f32.gmra.mxu0 %v2388
    %v2456 = vpop.f32.mrf.mxu0
    %v2457 = vadd.f32 0.0, %v2456
    %v2458 = vpop.f32.mrf.mxu0
    %2459 = vdwg.mxu0
    %v2461 = vlaneseq
    %v2462 = vshrl.u32 %v2461, 7
    %v2463 = vsub.s32 0, %v2462
    %v2464 = vrot.slane %v2365, %v2463
    %v2466 = vsub.f32 %v2457, %v2464
    %v2467 = vmul.f32 %v2466, %v2466
    %2468 = vmatprep.subr.mxu0 0.0
    %2469 = vmatpush1.msra.mxu0 %v2381
    %2470 = vmatprep.subr.mxu0 0.0
    %2471 = vmatpush1.msra.mxu0 %v2380
    %2472 = vmatprep.subr.mxu0 0.0
    %2473 = vmatpush1.msra.mxu0 %v2379
    %2474 = vmatprep.subr.mxu0 0.0
    %2475 = vmatpush1.msra.mxu0 %v2378
    %2476 = vmatprep.subr.mxu0 0.0
    %2477 = vmatpush1.msra.mxu0 %v2377
    %2478 = vmatprep.subr.mxu0 0.0
    %2479 = vmatpush1.msra.mxu0 %v2376
    %2480 = vmatprep.subr.mxu0 0.0
    %2481 = vmatpush1.msra.mxu0 %v2375
    %2482 = vmatprep.subr.mxu0 0.0
    %2483 = vmatpush1.msra.mxu0 %v2374
    %2484 = vmatprep.subr.mxu0 0.0
    %2485 = vmatpush1.msra.mxu0 %v2373
    %2486 = vmatprep.subr.mxu0 0.0
    %2487 = vmatpush1.msra.mxu0 %v2372
    %2488 = vmatprep.subr.mxu0 0.0
    %2489 = vmatpush1.msra.mxu0 %v2371
    %2490 = vmatprep.subr.mxu0 0.0
    %2491 = vmatpush1.msra.mxu0 %v2370
    %2492 = vmatprep.subr.mxu0 0.0
    %2493 = vmatpush1.msra.mxu0 %v2369
    %2494 = vmatprep.subr.mxu0 0.0
    %2495 = vmatpush1.msra.mxu0 %v2368
    %2496 = vmatprep.subr.mxu0 0.0
    %2497 = vmatpush1.msra.mxu0 %v2367
    %2498 = vmatprep.subr.mxu0 0.0
    %2499 = vmatpush1.msra.mxu0 %v2366
    %2500 = vmatprep.subr.mxu0 0.0
    %2501 = vmatpush2.msra.mxu0 0.0
    %2502 = vmatprep.subr.mxu0 0.0
    %2503 = vmatpush2.msra.mxu0 0.0
    %2504 = vmatprep.subr.mxu0 0.0
    %2505 = vmatpush2.msra.mxu0 0.0
    %2506 = vmatprep.subr.mxu0 0.0
    %2507 = vmatpush2.msra.mxu0 0.0
    %2508 = vmatprep.subr.mxu0 0.0
    %2509 = vmatpush2.msra.mxu0 0.0
    %2510 = vmatprep.subr.mxu0 0.0
    %2511 = vmatpush2.msra.mxu0 0.0
    %2512 = vmatprep.subr.mxu0 0.0
    %2513 = vmatpush2.msra.mxu0 0.0
    %2514 = vmatprep.subr.mxu0 0.0
    %2515 = vmatpush2.msra.mxu0 0.0
    %2516 = vmatprep.subr.mxu0 0.0
    %2517 = vmatpush2.msra.mxu0 0.0
    %2518 = vmatprep.subr.mxu0 0.0
    %2519 = vmatpush2.msra.mxu0 0.0
    %2520 = vmatprep.subr.mxu0 0.0
    %2521 = vmatpush2.msra.mxu0 0.0
    %2522 = vmatprep.subr.mxu0 0.0
    %2523 = vmatpush2.msra.mxu0 0.0
    %2524 = vmatprep.subr.mxu0 0.0
    %2525 = vmatpush2.msra.mxu0 0.0
    %2526 = vmatprep.subr.mxu0 0.0
    %2527 = vmatpush2.msra.mxu0 0.0
    %2528 = vmatprep.subr.mxu0 0.0
    %2529 = vmatpush2.msra.mxu0 0.0
    %2530 = vmatprep.subr.mxu0 0.0
    %2531 = vmatpush2.msra.mxu0 0.0
    %2532 = vmatprep.mubr.f32.mxu0 0.0
    %2533 = vmatmul.mubr.f32.gmra.mxu0 %v2467
    %v2534 = vpop.f32.mrf.mxu0
    %v2535 = vadd.f32 0.0, %v2534
    %v2536 = vpop.f32.mrf.mxu0
    %2537 = vdwg.mxu0
    %v2538 = vrsqrt.pop %v2535
    %v2539 = vmul.f32 %v2535, %v2538
    %vm2540 = vcmp.eq.f32.partialorder %v2535, inf
    %v2541 = vsel %vm2540, %v2535, %v2539
    %vm2542 = vcmp.eq.f32.partialorder %v2535, 0.0
    %v2543 = vand.u32 %v2535, 2147483648
    %v2544 = vsel %vm2542, %v2543, %v2541
    %v2545 = vsub.f32 0.0, %v2544
    %v2546 = vstv %s2364
    %v2547 = vmul.f32 %v2545, %v2546
    %v2549 = vrot.slane %v2457, 6
    %2550 = vrot.lane.b32.xlu0 %v2549, 96
    %v2551 = vpop.permute.xlu0 %2550
    %v2553 = vrot.slane %v2457, 4
    %2554 = vrot.lane.b32.xlu0 %v2553, 64
    %v2555 = vpop.permute.xlu0 %2554
    %v2557 = vrot.slane %v2457, 2
    %2558 = vrot.lane.b32.xlu0 %v2557, 32
    %v2559 = vpop.permute.xlu0 %2558
    %vm2561 = vcmask 1041408
    %v2562 = vsel %vm2561, %v2457, %v2551
    %v2563 = vsel %vm139, %v2562, %v2555
    %vm2564 = vcmask 1045504
    %v2565 = vsel %vm2564, %v2563, %v2559
    %v2567 = vsel %vm2386, %v2565, 0
    %2569 = vmatprep.subr.mxu0 0.0
    %2570 = vmatpush1.msra.mxu0 0.0
    %2571 = vmatprep.subr.mxu0 0.0
    %2572 = vmatpush1.msra.mxu0 0.0
    %2573 = vmatprep.subr.mxu0 0.0
    %2574 = vmatpush1.msra.mxu0 0.0
    %2575 = vmatprep.subr.mxu0 0.0
    %2576 = vmatpush1.msra.mxu0 0.0
    %2577 = vmatprep.subr.mxu0 0.0
    %2578 = vmatpush1.msra.mxu0 0.0
    %2579 = vmatprep.subr.mxu0 0.0
    %2580 = vmatpush1.msra.mxu0 0.0
    %2581 = vmatprep.subr.mxu0 0.0
    %2582 = vmatpush1.msra.mxu0 0.0
    %2583 = vmatprep.subr.mxu0 0.0
    %2584 = vmatpush1.msra.mxu0 0.0
    %2585 = vmatprep.subr.mxu0 0.0
    %2586 = vmatpush1.msra.mxu0 0.0
    %2587 = vmatprep.subr.mxu0 0.0
    %2588 = vmatpush1.msra.mxu0 0.0
    %2589 = vmatprep.subr.mxu0 0.0
    %2590 = vmatpush1.msra.mxu0 0.0
    %2591 = vmatprep.subr.mxu0 0.0
    %2592 = vmatpush1.msra.mxu0 0.0
    %2593 = vmatprep.subr.mxu0 0.0
    %2594 = vmatpush1.msra.mxu0 %v2385
    %2595 = vmatprep.subr.mxu0 0.0
    %2596 = vmatpush1.msra.mxu0 %v2384
    %2597 = vmatprep.subr.mxu0 0.0
    %2598 = vmatpush1.msra.mxu0 %v2383
    %2599 = vmatprep.subr.mxu0 0.0
    %2600 = vmatpush1.msra.mxu0 %v2382
    %2601 = vmatprep.subr.mxu0 0.0
    %2602 = vmatpush2.msra.mxu0 0.0
    %2603 = vmatprep.subr.mxu0 0.0
    %2604 = vmatpush2.msra.mxu0 0.0
    %2605 = vmatprep.subr.mxu0 0.0
    %2606 = vmatpush2.msra.mxu0 0.0
    %2607 = vmatprep.subr.mxu0 0.0
    %2608 = vmatpush2.msra.mxu0 0.0
    %2609 = vmatprep.subr.mxu0 0.0
    %2610 = vmatpush2.msra.mxu0 0.0
    %2611 = vmatprep.subr.mxu0 0.0
    %2612 = vmatpush2.msra.mxu0 0.0
    %2613 = vmatprep.subr.mxu0 0.0
    %2614 = vmatpush2.msra.mxu0 0.0
    %2615 = vmatprep.subr.mxu0 0.0
    %2616 = vmatpush2.msra.mxu0 0.0
    %2617 = vmatprep.subr.mxu0 0.0
    %2618 = vmatpush2.msra.mxu0 0.0
    %2619 = vmatprep.subr.mxu0 0.0
    %2620 = vmatpush2.msra.mxu0 0.0
    %2621 = vmatprep.subr.mxu0 0.0
    %2622 = vmatpush2.msra.mxu0 0.0
    %2623 = vmatprep.subr.mxu0 0.0
    %2624 = vmatpush2.msra.mxu0 0.0
    %2625 = vmatprep.subr.mxu0 0.0
    %2626 = vmatpush2.msra.mxu0 0.0
    %2627 = vmatprep.subr.mxu0 0.0
    %2628 = vmatpush2.msra.mxu0 0.0
    %2629 = vmatprep.subr.mxu0 0.0
    %2630 = vmatpush2.msra.mxu0 0.0
    %2631 = vmatprep.subr.mxu0 0.0
    %2632 = vmatpush2.msra.mxu0 0.0
    %2633 = vmatprep.mubr.f32.mxu0 0.0
    %2634 = vmatmul.mubr.f32.gmra.mxu0 %v2567
    %v2635 = vpop.f32.mrf.mxu0
    %v2636 = vadd.f32 0.0, %v2635
    %v2637 = vpop.f32.mrf.mxu0
    %2638 = vdwg.mxu0
    %v2639 = vsub.f32 %v2636, %v2464
    %v2640 = vmul.f32 %v2639, %v2639
    %2641 = vmatprep.subr.mxu0 0.0
    %2642 = vmatpush1.msra.mxu0 %v2381
    %2643 = vmatprep.subr.mxu0 0.0
    %2644 = vmatpush1.msra.mxu0 %v2380
    %2645 = vmatprep.subr.mxu0 0.0
    %2646 = vmatpush1.msra.mxu0 %v2379
    %2647 = vmatprep.subr.mxu0 0.0
    %2648 = vmatpush1.msra.mxu0 %v2378
    %2649 = vmatprep.subr.mxu0 0.0
    %2650 = vmatpush1.msra.mxu0 %v2377
    %2651 = vmatprep.subr.mxu0 0.0
    %2652 = vmatpush1.msra.mxu0 %v2376
    %2653 = vmatprep.subr.mxu0 0.0
    %2654 = vmatpush1.msra.mxu0 %v2375
    %2655 = vmatprep.subr.mxu0 0.0
    %2656 = vmatpush1.msra.mxu0 %v2374
    %2657 = vmatprep.subr.mxu0 0.0
    %2658 = vmatpush1.msra.mxu0 %v2373
    %2659 = vmatprep.subr.mxu0 0.0
    %2660 = vmatpush1.msra.mxu0 %v2372
    %2661 = vmatprep.subr.mxu0 0.0
    %2662 = vmatpush1.msra.mxu0 %v2371
    %2663 = vmatprep.subr.mxu0 0.0
    %2664 = vmatpush1.msra.mxu0 %v2370
    %2665 = vmatprep.subr.mxu0 0.0
    %2666 = vmatpush1.msra.mxu0 %v2369
    %2667 = vmatprep.subr.mxu0 0.0
    %2668 = vmatpush1.msra.mxu0 %v2368
    %2669 = vmatprep.subr.mxu0 0.0
    %2670 = vmatpush1.msra.mxu0 %v2367
    %2671 = vmatprep.subr.mxu0 0.0
    %2672 = vmatpush1.msra.mxu0 %v2366
    %2673 = vmatprep.subr.mxu0 0.0
    %2674 = vmatpush2.msra.mxu0 0.0
    %2675 = vmatprep.subr.mxu0 0.0
    %2676 = vmatpush2.msra.mxu0 0.0
    %2677 = vmatprep.subr.mxu0 0.0
    %2678 = vmatpush2.msra.mxu0 0.0
    %2679 = vmatprep.subr.mxu0 0.0
    %2680 = vmatpush2.msra.mxu0 0.0
    %2681 = vmatprep.subr.mxu0 0.0
    %2682 = vmatpush2.msra.mxu0 0.0
    %2683 = vmatprep.subr.mxu0 0.0
    %2684 = vmatpush2.msra.mxu0 0.0
    %2685 = vmatprep.subr.mxu0 0.0
    %2686 = vmatpush2.msra.mxu0 0.0
    %2687 = vmatprep.subr.mxu0 0.0
    %2688 = vmatpush2.msra.mxu0 0.0
    %2689 = vmatprep.subr.mxu0 0.0
    %2690 = vmatpush2.msra.mxu0 0.0
    %2691 = vmatprep.subr.mxu0 0.0
    %2692 = vmatpush2.msra.mxu0 0.0
    %2693 = vmatprep.subr.mxu0 0.0
    %2694 = vmatpush2.msra.mxu0 0.0
    %2695 = vmatprep.subr.mxu0 0.0
    %2696 = vmatpush2.msra.mxu0 0.0
    %2697 = vmatprep.subr.mxu0 0.0
    %2698 = vmatpush2.msra.mxu0 0.0
    %2699 = vmatprep.subr.mxu0 0.0
    %2700 = vmatpush2.msra.mxu0 0.0
    %2701 = vmatprep.subr.mxu0 0.0
    %2702 = vmatpush2.msra.mxu0 0.0
    %2703 = vmatprep.subr.mxu0 0.0
    %2704 = vmatpush2.msra.mxu0 0.0
    %2705 = vmatprep.mubr.f32.mxu0 0.0
    %2706 = vmatmul.mubr.f32.gmra.mxu0 %v2640
    %v2707 = vpop.f32.mrf.mxu0
    %v2708 = vadd.f32 0.0, %v2707
    %v2709 = vpop.f32.mrf.mxu0
    %2710 = vdwg.mxu0
    %v2711 = vrsqrt.pop %v2708
    %v2712 = vmul.f32 %v2708, %v2711
    %vm2713 = vcmp.eq.f32.partialorder %v2708, inf
    %v2714 = vsel %vm2713, %v2708, %v2712
    %vm2715 = vcmp.eq.f32.partialorder %v2708, 0.0
    %v2716 = vand.u32 %v2708, 2147483648
    %v2717 = vsel %vm2715, %v2716, %v2714
    %v2718 = vsub.f32 0.0, %v2717
    %v2719 = vmul.f32 %v2718, %v2546
    %2721 = vrot.lane.b32.xlu0 %v2636, 96
    %v2722 = vpop.permute.xlu0 %2721
    %2723 = vrot.lane.b32.xlu0 %v2636, 64
    %v2724 = vpop.permute.xlu0 %2723
    %2725 = vrot.lane.b32.xlu0 %v2636, 32
    %v2726 = vpop.permute.xlu0 %2725
    %v2727 = vsel %vm2386, %v2636, 0
    %v2729 = vsel %vm2386, %v2722, 0
    %v2731 = vsel %vm2386, %v2724, 0
    %v2733 = vsel %vm2386, %v2726, 0
    %2735 = vmatprep.subr.mxu0 0.0
    %2736 = vmatpush1.msra.mxu0 0.0
    %2737 = vmatprep.subr.mxu0 0.0
    %2738 = vmatpush1.msra.mxu0 0.0
    %2739 = vmatprep.subr.mxu0 0.0
    %2740 = vmatpush1.msra.mxu0 0.0
    %2741 = vmatprep.subr.mxu0 0.0
    %2742 = vmatpush1.msra.mxu0 0.0
    %2743 = vmatprep.subr.mxu0 0.0
    %2744 = vmatpush1.msra.mxu0 0.0
    %2745 = vmatprep.subr.mxu0 0.0
    %2746 = vmatpush1.msra.mxu0 0.0
    %2747 = vmatprep.subr.mxu0 0.0
    %2748 = vmatpush1.msra.mxu0 0.0
    %2749 = vmatprep.subr.mxu0 0.0
    %2750 = vmatpush1.msra.mxu0 0.0
    %2751 = vmatprep.subr.mxu0 0.0
    %2752 = vmatpush1.msra.mxu0 0.0
    %2753 = vmatprep.subr.mxu0 0.0
    %2754 = vmatpush1.msra.mxu0 0.0
    %2755 = vmatprep.subr.mxu0 0.0
    %2756 = vmatpush1.msra.mxu0 0.0
    %2757 = vmatprep.subr.mxu0 0.0
    %2758 = vmatpush1.msra.mxu0 0.0
    %2759 = vmatprep.subr.mxu0 0.0
    %2760 = vmatpush1.msra.mxu0 %v2385
    %2761 = vmatprep.subr.mxu0 0.0
    %2762 = vmatpush1.msra.mxu0 %v2384
    %2763 = vmatprep.subr.mxu0 0.0
    %2764 = vmatpush1.msra.mxu0 %v2383
    %2765 = vmatprep.subr.mxu0 0.0
    %2766 = vmatpush1.msra.mxu0 %v2382
    %2767 = vmatprep.subr.mxu0 0.0
    %2768 = vmatpush2.msra.mxu0 0.0
    %2769 = vmatprep.subr.mxu0 0.0
    %2770 = vmatpush2.msra.mxu0 0.0
    %2771 = vmatprep.subr.mxu0 0.0
    %2772 = vmatpush2.msra.mxu0 0.0
    %2773 = vmatprep.subr.mxu0 0.0
    %2774 = vmatpush2.msra.mxu0 0.0
    %2775 = vmatprep.subr.mxu0 0.0
    %2776 = vmatpush2.msra.mxu0 0.0
    %2777 = vmatprep.subr.mxu0 0.0
    %2778 = vmatpush2.msra.mxu0 0.0
    %2779 = vmatprep.subr.mxu0 0.0
    %2780 = vmatpush2.msra.mxu0 0.0
    %2781 = vmatprep.subr.mxu0 0.0
    %2782 = vmatpush2.msra.mxu0 0.0
    %2783 = vmatprep.subr.mxu0 0.0
    %2784 = vmatpush2.msra.mxu0 0.0
    %2785 = vmatprep.subr.mxu0 0.0
    %2786 = vmatpush2.msra.mxu0 0.0
    %2787 = vmatprep.subr.mxu0 0.0
    %2788 = vmatpush2.msra.mxu0 0.0
    %2789 = vmatprep.subr.mxu0 0.0
    %2790 = vmatpush2.msra.mxu0 0.0
    %2791 = vmatprep.subr.mxu0 0.0
    %2792 = vmatpush2.msra.mxu0 0.0
    %2793 = vmatprep.subr.mxu0 0.0
    %2794 = vmatpush2.msra.mxu0 0.0
    %2795 = vmatprep.subr.mxu0 0.0
    %2796 = vmatpush2.msra.mxu0 0.0
    %2797 = vmatprep.subr.mxu0 0.0
    %2798 = vmatpush2.msra.mxu0 0.0
    %2799 = vmatprep.mubr.f32.mxu0 0.0
    %2800 = vmatmul.mubr.f32.gmra.mxu0 %v2727
    %v2801 = vpop.f32.mrf.mxu0
    %v2802 = vadd.f32 0.0, %v2801
    %v2803 = vpop.f32.mrf.mxu0
    %2804 = vmatprep.mubr.f32.mxu0 0.0
    %2805 = vmatmul.mubr.f32.gmra.mxu0 %v2729
    %v2806 = vpop.f32.mrf.mxu0
    %v2807 = vadd.f32 0.0, %v2806
    %v2808 = vpop.f32.mrf.mxu0
    %2809 = vmatprep.mubr.f32.mxu0 0.0
    %2810 = vmatmul.mubr.f32.gmra.mxu0 %v2731
    %v2811 = vpop.f32.mrf.mxu0
    %v2812 = vadd.f32 0.0, %v2811
    %v2813 = vpop.f32.mrf.mxu0
    %2814 = vmatprep.mubr.f32.mxu0 0.0
    %2815 = vmatmul.mubr.f32.gmra.mxu0 %v2733
    %v2816 = vpop.f32.mrf.mxu0
    %v2817 = vadd.f32 0.0, %v2816
    %v2818 = vpop.f32.mrf.mxu0
    %2819 = vdwg.mxu0
    %v2820 = vsub.f32 %v2802, %v2464
    %v2821 = vsub.f32 %v2807, %v2464
    %v2822 = vsub.f32 %v2812, %v2464
    %v2823 = vsub.f32 %v2817, %v2464
    %v2824 = vmul.f32 %v2820, %v2820
    %v2825 = vmul.f32 %v2821, %v2821
    %v2826 = vmul.f32 %v2822, %v2822
    %v2827 = vmul.f32 %v2823, %v2823
    %2828 = vmatprep.subr.mxu0 0.0
    %2829 = vmatpush1.msra.mxu0 %v2381
    %2830 = vmatprep.subr.mxu0 0.0
    %2831 = vmatpush1.msra.mxu0 %v2380
    %2832 = vmatprep.subr.mxu0 0.0
    %2833 = vmatpush1.msra.mxu0 %v2379
    %2834 = vmatprep.subr.mxu0 0.0
    %2835 = vmatpush1.msra.mxu0 %v2378
    %2836 = vmatprep.subr.mxu0 0.0
    %2837 = vmatpush1.msra.mxu0 %v2377
    %2838 = vmatprep.subr.mxu0 0.0
    %2839 = vmatpush1.msra.mxu0 %v2376
    %2840 = vmatprep.subr.mxu0 0.0
    %2841 = vmatpush1.msra.mxu0 %v2375
    %2842 = vmatprep.subr.mxu0 0.0
    %2843 = vmatpush1.msra.mxu0 %v2374
    %2844 = vmatprep.subr.mxu0 0.0
    %2845 = vmatpush1.msra.mxu0 %v2373
    %2846 = vmatprep.subr.mxu0 0.0
    %2847 = vmatpush1.msra.mxu0 %v2372
    %2848 = vmatprep.subr.mxu0 0.0
    %2849 = vmatpush1.msra.mxu0 %v2371
    %2850 = vmatprep.subr.mxu0 0.0
    %2851 = vmatpush1.msra.mxu0 %v2370
    %2852 = vmatprep.subr.mxu0 0.0
    %2853 = vmatpush1.msra.mxu0 %v2369
    %2854 = vmatprep.subr.mxu0 0.0
    %2855 = vmatpush1.msra.mxu0 %v2368
    %2856 = vmatprep.subr.mxu0 0.0
    %2857 = vmatpush1.msra.mxu0 %v2367
    %2858 = vmatprep.subr.mxu0 0.0
    %2859 = vmatpush1.msra.mxu0 %v2366
    %2860 = vmatprep.subr.mxu0 0.0
    %2861 = vmatpush2.msra.mxu0 0.0
    %2862 = vmatprep.subr.mxu0 0.0
    %2863 = vmatpush2.msra.mxu0 0.0
    %2864 = vmatprep.subr.mxu0 0.0
    %2865 = vmatpush2.msra.mxu0 0.0
    %2866 = vmatprep.subr.mxu0 0.0
    %2867 = vmatpush2.msra.mxu0 0.0
    %2868 = vmatprep.subr.mxu0 0.0
    %2869 = vmatpush2.msra.mxu0 0.0
    %2870 = vmatprep.subr.mxu0 0.0
    %2871 = vmatpush2.msra.mxu0 0.0
    %2872 = vmatprep.subr.mxu0 0.0
    %2873 = vmatpush2.msra.mxu0 0.0
    %2874 = vmatprep.subr.mxu0 0.0
    %2875 = vmatpush2.msra.mxu0 0.0
    %2876 = vmatprep.subr.mxu0 0.0
    %2877 = vmatpush2.msra.mxu0 0.0
    %2878 = vmatprep.subr.mxu0 0.0
    %2879 = vmatpush2.msra.mxu0 0.0
    %2880 = vmatprep.subr.mxu0 0.0
    %2881 = vmatpush2.msra.mxu0 0.0
    %2882 = vmatprep.subr.mxu0 0.0
    %2883 = vmatpush2.msra.mxu0 0.0
    %2884 = vmatprep.subr.mxu0 0.0
    %2885 = vmatpush2.msra.mxu0 0.0
    %2886 = vmatprep.subr.mxu0 0.0
    %2887 = vmatpush2.msra.mxu0 0.0
    %2888 = vmatprep.subr.mxu0 0.0
    %2889 = vmatpush2.msra.mxu0 0.0
    %2890 = vmatprep.subr.mxu0 0.0
    %2891 = vmatpush2.msra.mxu0 0.0
    %2892 = vmatprep.mubr.f32.mxu0 0.0
    %2893 = vmatmul.mubr.f32.gmra.mxu0 %v2824
    %v2894 = vpop.f32.mrf.mxu0
    %v2895 = vadd.f32 0.0, %v2894
    %v2896 = vpop.f32.mrf.mxu0
    %2897 = vmatprep.mubr.f32.mxu0 0.0
    %2898 = vmatmul.mubr.f32.gmra.mxu0 %v2825
    %v2899 = vpop.f32.mrf.mxu0
    %v2900 = vadd.f32 0.0, %v2899
    %v2901 = vpop.f32.mrf.mxu0
    %2902 = vmatprep.mubr.f32.mxu0 0.0
    %2903 = vmatmul.mubr.f32.gmra.mxu0 %v2826
    %v2904 = vpop.f32.mrf.mxu0
    %v2905 = vadd.f32 0.0, %v2904
    %v2906 = vpop.f32.mrf.mxu0
    %2907 = vmatprep.mubr.f32.mxu0 0.0
    %2908 = vmatmul.mubr.f32.gmra.mxu0 %v2827
    %v2909 = vpop.f32.mrf.mxu0
    %v2910 = vadd.f32 0.0, %v2909
    %v2911 = vpop.f32.mrf.mxu0
    %2912 = vdwg.mxu0
    %v2913 = vrsqrt.pop %v2895
    %v2914 = vmul.f32 %v2895, %v2913
    %vm2915 = vcmp.eq.f32.partialorder %v2895, inf
    %v2916 = vsel %vm2915, %v2895, %v2914
    %vm2917 = vcmp.eq.f32.partialorder %v2895, 0.0
    %v2918 = vand.u32 %v2895, 2147483648
    %v2919 = vsel %vm2917, %v2918, %v2916
    %v2920 = vrsqrt.pop %v2900
    %v2921 = vmul.f32 %v2900, %v2920
    %vm2922 = vcmp.eq.f32.partialorder %v2900, inf
    %v2923 = vsel %vm2922, %v2900, %v2921
    %vm2924 = vcmp.eq.f32.partialorder %v2900, 0.0
    %v2925 = vand.u32 %v2900, 2147483648
    %v2926 = vsel %vm2924, %v2925, %v2923
    %v2927 = vrsqrt.pop %v2905
    %v2928 = vmul.f32 %v2905, %v2927
    %vm2929 = vcmp.eq.f32.partialorder %v2905, inf
    %v2930 = vsel %vm2929, %v2905, %v2928
    %vm2931 = vcmp.eq.f32.partialorder %v2905, 0.0
    %v2932 = vand.u32 %v2905, 2147483648
    %v2933 = vsel %vm2931, %v2932, %v2930
    %v2934 = vrsqrt.pop %v2910
    %v2935 = vmul.f32 %v2910, %v2934
    %vm2936 = vcmp.eq.f32.partialorder %v2910, inf
    %v2937 = vsel %vm2936, %v2910, %v2935
    %vm2938 = vcmp.eq.f32.partialorder %v2910, 0.0
    %v2939 = vand.u32 %v2910, 2147483648
    %v2940 = vsel %vm2938, %v2939, %v2937
    %v2941 = vsub.f32 0.0, %v2919
    %v2942 = vsub.f32 0.0, %v2926
    %v2943 = vsub.f32 0.0, %v2933
    %v2944 = vsub.f32 0.0, %v2940
    %v2945 = vmul.f32 %v2941, %v2546
    %v2946 = vmul.f32 %v2942, %v2546
    %v2947 = vmul.f32 %v2943, %v2546
    %v2948 = vmul.f32 %v2944, %v2546
    %2953 = vrot.lane.b32.xlu0 %v2802, 96
    %v2954 = vpop.permute.xlu0 %2953
    %2955 = vrot.lane.b32.xlu0 %v2807, 96
    %v2956 = vpop.permute.xlu0 %2955
    %2957 = vrot.lane.b32.xlu0 %v2812, 96
    %v2958 = vpop.permute.xlu0 %2957
    %2959 = vrot.lane.b32.xlu0 %v2817, 96
    %v2960 = vpop.permute.xlu0 %2959
    %2961 = vrot.lane.b32.xlu0 %v2802, 64
    %v2962 = vpop.permute.xlu0 %2961
    %2963 = vrot.lane.b32.xlu0 %v2807, 64
    %v2964 = vpop.permute.xlu0 %2963
    %2965 = vrot.lane.b32.xlu0 %v2812, 64
    %v2966 = vpop.permute.xlu0 %2965
    %2967 = vrot.lane.b32.xlu0 %v2817, 64
    %v2968 = vpop.permute.xlu0 %2967
    %2969 = vrot.lane.b32.xlu0 %v2802, 32
    %v2970 = vpop.permute.xlu0 %2969
    %2971 = vrot.lane.b32.xlu0 %v2807, 32
    %v2972 = vpop.permute.xlu0 %2971
    %2973 = vrot.lane.b32.xlu0 %v2812, 32
    %v2974 = vpop.permute.xlu0 %2973
    %2975 = vrot.lane.b32.xlu0 %v2817, 32
    %v2976 = vpop.permute.xlu0 %2975
    %v2977 = vsel %vm2386, %v2802, 0
    %v2979 = vsel %vm2386, %v2807, 0
    %v2981 = vsel %vm2386, %v2812, 0
    %v2983 = vsel %vm2386, %v2817, 0
    %v2985 = vsel %vm2386, %v2954, 0
    %v2987 = vsel %vm2386, %v2956, 0
    %v2989 = vsel %vm2386, %v2958, 0
    %v2991 = vsel %vm2386, %v2960, 0
    %v2993 = vsel %vm2386, %v2962, 0
    %v2995 = vsel %vm2386, %v2964, 0
    %v2997 = vsel %vm2386, %v2966, 0
    %v2999 = vsel %vm2386, %v2968, 0
    %v3001 = vsel %vm2386, %v2970, 0
    %v3003 = vsel %vm2386, %v2972, 0
    %v3005 = vsel %vm2386, %v2974, 0
    %v3007 = vsel %vm2386, %v2976, 0
    %3009 = vmatprep.subr.mxu0 0.0
    %3010 = vmatpush1.msra.mxu0 0.0
    %3011 = vmatprep.subr.mxu0 0.0
    %3012 = vmatpush1.msra.mxu0 0.0
    %3013 = vmatprep.subr.mxu0 0.0
    %3014 = vmatpush1.msra.mxu0 0.0
    %3015 = vmatprep.subr.mxu0 0.0
    %3016 = vmatpush1.msra.mxu0 0.0
    %3017 = vmatprep.subr.mxu0 0.0
    %3018 = vmatpush1.msra.mxu0 0.0
    %3019 = vmatprep.subr.mxu0 0.0
    %3020 = vmatpush1.msra.mxu0 0.0
    %3021 = vmatprep.subr.mxu0 0.0
    %3022 = vmatpush1.msra.mxu0 0.0
    %3023 = vmatprep.subr.mxu0 0.0
    %3024 = vmatpush1.msra.mxu0 0.0
    %3025 = vmatprep.subr.mxu0 0.0
    %3026 = vmatpush1.msra.mxu0 0.0
    %3027 = vmatprep.subr.mxu0 0.0
    %3028 = vmatpush1.msra.mxu0 0.0
    %3029 = vmatprep.subr.mxu0 0.0
    %3030 = vmatpush1.msra.mxu0 0.0
    %3031 = vmatprep.subr.mxu0 0.0
    %3032 = vmatpush1.msra.mxu0 0.0
    %3033 = vmatprep.subr.mxu0 0.0
    %3034 = vmatpush1.msra.mxu0 %v2385
    %3035 = vmatprep.subr.mxu0 0.0
    %3036 = vmatpush1.msra.mxu0 %v2384
    %3037 = vmatprep.subr.mxu0 0.0
    %3038 = vmatpush1.msra.mxu0 %v2383
    %3039 = vmatprep.subr.mxu0 0.0
    %3040 = vmatpush1.msra.mxu0 %v2382
    %3041 = vmatprep.subr.mxu0 0.0
    %3042 = vmatpush2.msra.mxu0 0.0
    %3043 = vmatprep.subr.mxu0 0.0
    %3044 = vmatpush2.msra.mxu0 0.0
    %3045 = vmatprep.subr.mxu0 0.0
    %3046 = vmatpush2.msra.mxu0 0.0
    %3047 = vmatprep.subr.mxu0 0.0
    %3048 = vmatpush2.msra.mxu0 0.0
    %3049 = vmatprep.subr.mxu0 0.0
    %3050 = vmatpush2.msra.mxu0 0.0
    %3051 = vmatprep.subr.mxu0 0.0
    %3052 = vmatpush2.msra.mxu0 0.0
    %3053 = vmatprep.subr.mxu0 0.0
    %3054 = vmatpush2.msra.mxu0 0.0
    %3055 = vmatprep.subr.mxu0 0.0
    %3056 = vmatpush2.msra.mxu0 0.0
    %3057 = vmatprep.subr.mxu0 0.0
    %3058 = vmatpush2.msra.mxu0 0.0
    %3059 = vmatprep.subr.mxu0 0.0
    %3060 = vmatpush2.msra.mxu0 0.0
    %3061 = vmatprep.subr.mxu0 0.0
    %3062 = vmatpush2.msra.mxu0 0.0
    %3063 = vmatprep.subr.mxu0 0.0
    %3064 = vmatpush2.msra.mxu0 0.0
    %3065 = vmatprep.subr.mxu0 0.0
    %3066 = vmatpush2.msra.mxu0 0.0
    %3067 = vmatprep.subr.mxu0 0.0
    %3068 = vmatpush2.msra.mxu0 0.0
    %3069 = vmatprep.subr.mxu0 0.0
    %3070 = vmatpush2.msra.mxu0 0.0
    %3071 = vmatprep.subr.mxu0 0.0
    %3072 = vmatpush2.msra.mxu0 0.0
    %3073 = vmatprep.mubr.f32.mxu0 0.0
    %3074 = vmatmul.mubr.f32.gmra.mxu0 %v2977
    %v3075 = vpop.f32.mrf.mxu0
    %v3076 = vadd.f32 0.0, %v3075
    %v3077 = vpop.f32.mrf.mxu0
    %3078 = vmatprep.mubr.f32.mxu0 0.0
    %3079 = vmatmul.mubr.f32.gmra.mxu0 %v2979
    %v3080 = vpop.f32.mrf.mxu0
    %v3081 = vadd.f32 0.0, %v3080
    %v3082 = vpop.f32.mrf.mxu0
    %3083 = vmatprep.mubr.f32.mxu0 0.0
    %3084 = vmatmul.mubr.f32.gmra.mxu0 %v2981
    %v3085 = vpop.f32.mrf.mxu0
    %v3086 = vadd.f32 0.0, %v3085
    %v3087 = vpop.f32.mrf.mxu0
    %3088 = vmatprep.mubr.f32.mxu0 0.0
    %3089 = vmatmul.mubr.f32.gmra.mxu0 %v2983
    %v3090 = vpop.f32.mrf.mxu0
    %v3091 = vadd.f32 0.0, %v3090
    %v3092 = vpop.f32.mrf.mxu0
    %3093 = vmatprep.mubr.f32.mxu0 0.0
    %3094 = vmatmul.mubr.f32.gmra.mxu0 %v2985
    %v3095 = vpop.f32.mrf.mxu0
    %v3096 = vadd.f32 0.0, %v3095
    %v3097 = vpop.f32.mrf.mxu0
    %3098 = vmatprep.mubr.f32.mxu0 0.0
    %3099 = vmatmul.mubr.f32.gmra.mxu0 %v2987
    %v3100 = vpop.f32.mrf.mxu0
    %v3101 = vadd.f32 0.0, %v3100
    %v3102 = vpop.f32.mrf.mxu0
    %3103 = vmatprep.mubr.f32.mxu0 0.0
    %3104 = vmatmul.mubr.f32.gmra.mxu0 %v2989
    %v3105 = vpop.f32.mrf.mxu0
    %v3106 = vadd.f32 0.0, %v3105
    %v3107 = vpop.f32.mrf.mxu0
    %3108 = vmatprep.mubr.f32.mxu0 0.0
    %3109 = vmatmul.mubr.f32.gmra.mxu0 %v2991
    %v3110 = vpop.f32.mrf.mxu0
    %v3111 = vadd.f32 0.0, %v3110
    %v3112 = vpop.f32.mrf.mxu0
    %3113 = vmatprep.mubr.f32.mxu0 0.0
    %3114 = vmatmul.mubr.f32.gmra.mxu0 %v2993
    %v3115 = vpop.f32.mrf.mxu0
    %v3116 = vadd.f32 0.0, %v3115
    %v3117 = vpop.f32.mrf.mxu0
    %3118 = vmatprep.mubr.f32.mxu0 0.0
    %3119 = vmatmul.mubr.f32.gmra.mxu0 %v2995
    %v3120 = vpop.f32.mrf.mxu0
    %v3121 = vadd.f32 0.0, %v3120
    %v3122 = vpop.f32.mrf.mxu0
    %3123 = vmatprep.mubr.f32.mxu0 0.0
    %3124 = vmatmul.mubr.f32.gmra.mxu0 %v2997
    %v3125 = vpop.f32.mrf.mxu0
    %v3126 = vadd.f32 0.0, %v3125
    %v3127 = vpop.f32.mrf.mxu0
    %3128 = vmatprep.mubr.f32.mxu0 0.0
    %3129 = vmatmul.mubr.f32.gmra.mxu0 %v2999
    %v3130 = vpop.f32.mrf.mxu0
    %v3131 = vadd.f32 0.0, %v3130
    %v3132 = vpop.f32.mrf.mxu0
    %3133 = vmatprep.mubr.f32.mxu0 0.0
    %3134 = vmatmul.mubr.f32.gmra.mxu0 %v3001
    %v3135 = vpop.f32.mrf.mxu0
    %v3136 = vadd.f32 0.0, %v3135
    %v3137 = vpop.f32.mrf.mxu0
    %3138 = vmatprep.mubr.f32.mxu0 0.0
    %3139 = vmatmul.mubr.f32.gmra.mxu0 %v3003
    %v3140 = vpop.f32.mrf.mxu0
    %v3141 = vadd.f32 0.0, %v3140
    %v3142 = vpop.f32.mrf.mxu0
    %3143 = vmatprep.mubr.f32.mxu0 0.0
    %3144 = vmatmul.mubr.f32.gmra.mxu0 %v3005
    %v3145 = vpop.f32.mrf.mxu0
    %v3146 = vadd.f32 0.0, %v3145
    %v3147 = vpop.f32.mrf.mxu0
    %3148 = vmatprep.mubr.f32.mxu0 0.0
    %3149 = vmatmul.mubr.f32.gmra.mxu0 %v3007
    %v3150 = vpop.f32.mrf.mxu0
    %v3151 = vadd.f32 0.0, %v3150
    %v3152 = vpop.f32.mrf.mxu0
    %3153 = vdwg.mxu0
    %v3154 = vsub.f32 %v3076, %v2464
    %v3155 = vsub.f32 %v3081, %v2464
    %v3156 = vsub.f32 %v3086, %v2464
    %v3157 = vsub.f32 %v3091, %v2464
    %v3158 = vsub.f32 %v3096, %v2464
    %v3159 = vsub.f32 %v3101, %v2464
    %v3160 = vsub.f32 %v3106, %v2464
    %v3161 = vsub.f32 %v3111, %v2464
    %v3162 = vsub.f32 %v3116, %v2464
    %v3163 = vsub.f32 %v3121, %v2464
    %v3164 = vsub.f32 %v3126, %v2464
    %v3165 = vsub.f32 %v3131, %v2464
    %v3166 = vsub.f32 %v3136, %v2464
    %v3167 = vsub.f32 %v3141, %v2464
    %v3168 = vsub.f32 %v3146, %v2464
    %v3169 = vsub.f32 %v3151, %v2464
    %v3170 = vmul.f32 %v3154, %v3154
    %v3171 = vmul.f32 %v3155, %v3155
    %v3172 = vmul.f32 %v3156, %v3156
    %v3173 = vmul.f32 %v3157, %v3157
    %v3174 = vmul.f32 %v3158, %v3158
    %v3175 = vmul.f32 %v3159, %v3159
    %v3176 = vmul.f32 %v3160, %v3160
    %v3177 = vmul.f32 %v3161, %v3161
    %v3178 = vmul.f32 %v3162, %v3162
    %v3179 = vmul.f32 %v3163, %v3163
    %v3180 = vmul.f32 %v3164, %v3164
    %v3181 = vmul.f32 %v3165, %v3165
    %v3182 = vmul.f32 %v3166, %v3166
    %v3183 = vmul.f32 %v3167, %v3167
    %v3184 = vmul.f32 %v3168, %v3168
    %v3185 = vmul.f32 %v3169, %v3169
    %3186 = vmatprep.subr.mxu0 0.0
    %3187 = vmatpush1.msra.mxu0 %v2381
    %3188 = vmatprep.subr.mxu0 0.0
    %3189 = vmatpush1.msra.mxu0 %v2380
    %3190 = vmatprep.subr.mxu0 0.0
    %3191 = vmatpush1.msra.mxu0 %v2379
    %3192 = vmatprep.subr.mxu0 0.0
    %3193 = vmatpush1.msra.mxu0 %v2378
    %3194 = vmatprep.subr.mxu0 0.0
    %3195 = vmatpush1.msra.mxu0 %v2377
    %3196 = vmatprep.subr.mxu0 0.0
    %3197 = vmatpush1.msra.mxu0 %v2376
    %3198 = vmatprep.subr.mxu0 0.0
    %3199 = vmatpush1.msra.mxu0 %v2375
    %3200 = vmatprep.subr.mxu0 0.0
    %3201 = vmatpush1.msra.mxu0 %v2374
    %3202 = vmatprep.subr.mxu0 0.0
    %3203 = vmatpush1.msra.mxu0 %v2373
    %3204 = vmatprep.subr.mxu0 0.0
    %3205 = vmatpush1.msra.mxu0 %v2372
    %3206 = vmatprep.subr.mxu0 0.0
    %3207 = vmatpush1.msra.mxu0 %v2371
    %3208 = vmatprep.subr.mxu0 0.0
    %3209 = vmatpush1.msra.mxu0 %v2370
    %3210 = vmatprep.subr.mxu0 0.0
    %3211 = vmatpush1.msra.mxu0 %v2369
    %3212 = vmatprep.subr.mxu0 0.0
    %3213 = vmatpush1.msra.mxu0 %v2368
    %3214 = vmatprep.subr.mxu0 0.0
    %3215 = vmatpush1.msra.mxu0 %v2367
    %3216 = vmatprep.subr.mxu0 0.0
    %3217 = vmatpush1.msra.mxu0 %v2366
    %3218 = vmatprep.subr.mxu0 0.0
    %3219 = vmatpush2.msra.mxu0 0.0
    %3220 = vmatprep.subr.mxu0 0.0
    %3221 = vmatpush2.msra.mxu0 0.0
    %3222 = vmatprep.subr.mxu0 0.0
    %3223 = vmatpush2.msra.mxu0 0.0
    %3224 = vmatprep.subr.mxu0 0.0
    %3225 = vmatpush2.msra.mxu0 0.0
    %3226 = vmatprep.subr.mxu0 0.0
    %3227 = vmatpush2.msra.mxu0 0.0
    %3228 = vmatprep.subr.mxu0 0.0
    %3229 = vmatpush2.msra.mxu0 0.0
    %3230 = vmatprep.subr.mxu0 0.0
    %3231 = vmatpush2.msra.mxu0 0.0
    %3232 = vmatprep.subr.mxu0 0.0
    %3233 = vmatpush2.msra.mxu0 0.0
    %3234 = vmatprep.subr.mxu0 0.0
    %3235 = vmatpush2.msra.mxu0 0.0
    %3236 = vmatprep.subr.mxu0 0.0
    %3237 = vmatpush2.msra.mxu0 0.0
    %3238 = vmatprep.subr.mxu0 0.0
    %3239 = vmatpush2.msra.mxu0 0.0
    %3240 = vmatprep.subr.mxu0 0.0
    %3241 = vmatpush2.msra.mxu0 0.0
    %3242 = vmatprep.subr.mxu0 0.0
    %3243 = vmatpush2.msra.mxu0 0.0
    %3244 = vmatprep.subr.mxu0 0.0
    %3245 = vmatpush2.msra.mxu0 0.0
    %3246 = vmatprep.subr.mxu0 0.0
    %3247 = vmatpush2.msra.mxu0 0.0
    %3248 = vmatprep.subr.mxu0 0.0
    %3249 = vmatpush2.msra.mxu0 0.0
    %3250 = vmatprep.mubr.f32.mxu0 0.0
    %3251 = vmatmul.mubr.f32.gmra.mxu0 %v3170
    %v3252 = vpop.f32.mrf.mxu0
    %v3253 = vadd.f32 0.0, %v3252
    %v3254 = vpop.f32.mrf.mxu0
    %3255 = vmatprep.mubr.f32.mxu0 0.0
    %3256 = vmatmul.mubr.f32.gmra.mxu0 %v3171
    %v3257 = vpop.f32.mrf.mxu0
    %v3258 = vadd.f32 0.0, %v3257
    %v3259 = vpop.f32.mrf.mxu0
    %3260 = vmatprep.mubr.f32.mxu0 0.0
    %3261 = vmatmul.mubr.f32.gmra.mxu0 %v3172
    %v3262 = vpop.f32.mrf.mxu0
    %v3263 = vadd.f32 0.0, %v3262
    %v3264 = vpop.f32.mrf.mxu0
    %3265 = vmatprep.mubr.f32.mxu0 0.0
    %3266 = vmatmul.mubr.f32.gmra.mxu0 %v3173
    %v3267 = vpop.f32.mrf.mxu0
    %v3268 = vadd.f32 0.0, %v3267
    %v3269 = vpop.f32.mrf.mxu0
    %3270 = vmatprep.mubr.f32.mxu0 0.0
    %3271 = vmatmul.mubr.f32.gmra.mxu0 %v3174
    %v3272 = vpop.f32.mrf.mxu0
    %v3273 = vadd.f32 0.0, %v3272
    %v3274 = vpop.f32.mrf.mxu0
    %3275 = vmatprep.mubr.f32.mxu0 0.0
    %3276 = vmatmul.mubr.f32.gmra.mxu0 %v3175
    %v3277 = vpop.f32.mrf.mxu0
    %v3278 = vadd.f32 0.0, %v3277
    %v3279 = vpop.f32.mrf.mxu0
    %3280 = vmatprep.mubr.f32.mxu0 0.0
    %3281 = vmatmul.mubr.f32.gmra.mxu0 %v3176
    %v3282 = vpop.f32.mrf.mxu0
    %v3283 = vadd.f32 0.0, %v3282
    %v3284 = vpop.f32.mrf.mxu0
    %3285 = vmatprep.mubr.f32.mxu0 0.0
    %3286 = vmatmul.mubr.f32.gmra.mxu0 %v3177
    %v3287 = vpop.f32.mrf.mxu0
    %v3288 = vadd.f32 0.0, %v3287
    %v3289 = vpop.f32.mrf.mxu0
    %3290 = vmatprep.mubr.f32.mxu0 0.0
    %3291 = vmatmul.mubr.f32.gmra.mxu0 %v3178
    %v3292 = vpop.f32.mrf.mxu0
    %v3293 = vadd.f32 0.0, %v3292
    %v3294 = vpop.f32.mrf.mxu0
    %3295 = vmatprep.mubr.f32.mxu0 0.0
    %3296 = vmatmul.mubr.f32.gmra.mxu0 %v3179
    %v3297 = vpop.f32.mrf.mxu0
    %v3298 = vadd.f32 0.0, %v3297
    %v3299 = vpop.f32.mrf.mxu0
    %3300 = vmatprep.mubr.f32.mxu0 0.0
    %3301 = vmatmul.mubr.f32.gmra.mxu0 %v3180
    %v3302 = vpop.f32.mrf.mxu0
    %v3303 = vadd.f32 0.0, %v3302
    %v3304 = vpop.f32.mrf.mxu0
    %3305 = vmatprep.mubr.f32.mxu0 0.0
    %3306 = vmatmul.mubr.f32.gmra.mxu0 %v3181
    %v3307 = vpop.f32.mrf.mxu0
    %v3308 = vadd.f32 0.0, %v3307
    %v3309 = vpop.f32.mrf.mxu0
    %3310 = vmatprep.mubr.f32.mxu0 0.0
    %3311 = vmatmul.mubr.f32.gmra.mxu0 %v3182
    %v3312 = vpop.f32.mrf.mxu0
    %v3313 = vadd.f32 0.0, %v3312
    %v3314 = vpop.f32.mrf.mxu0
    %3315 = vmatprep.mubr.f32.mxu0 0.0
    %3316 = vmatmul.mubr.f32.gmra.mxu0 %v3183
    %v3317 = vpop.f32.mrf.mxu0
    %v3318 = vadd.f32 0.0, %v3317
    %v3319 = vpop.f32.mrf.mxu0
    %3320 = vmatprep.mubr.f32.mxu0 0.0
    %3321 = vmatmul.mubr.f32.gmra.mxu0 %v3184
    %v3322 = vpop.f32.mrf.mxu0
    %v3323 = vadd.f32 0.0, %v3322
    %v3324 = vpop.f32.mrf.mxu0
    %3325 = vmatprep.mubr.f32.mxu0 0.0
    %3326 = vmatmul.mubr.f32.gmra.mxu0 %v3185
    %v3327 = vpop.f32.mrf.mxu0
    %v3328 = vadd.f32 0.0, %v3327
    %v3329 = vpop.f32.mrf.mxu0
    %3330 = vdwg.mxu0
    %v3331 = vrsqrt.pop %v3253
    %v3332 = vmul.f32 %v3253, %v3331
    %vm3333 = vcmp.eq.f32.partialorder %v3253, inf
    %v3334 = vsel %vm3333, %v3253, %v3332
    %vm3335 = vcmp.eq.f32.partialorder %v3253, 0.0
    %v3336 = vand.u32 %v3253, 2147483648
    %v3337 = vsel %vm3335, %v3336, %v3334
    %v3338 = vrsqrt.pop %v3258
    %v3339 = vmul.f32 %v3258, %v3338
    %vm3340 = vcmp.eq.f32.partialorder %v3258, inf
    %v3341 = vsel %vm3340, %v3258, %v3339
    %vm3342 = vcmp.eq.f32.partialorder %v3258, 0.0
    %v3343 = vand.u32 %v3258, 2147483648
    %v3344 = vsel %vm3342, %v3343, %v3341
    %v3345 = vrsqrt.pop %v3263
    %v3346 = vmul.f32 %v3263, %v3345
    %vm3347 = vcmp.eq.f32.partialorder %v3263, inf
    %v3348 = vsel %vm3347, %v3263, %v3346
    %vm3349 = vcmp.eq.f32.partialorder %v3263, 0.0
    %v3350 = vand.u32 %v3263, 2147483648
    %v3351 = vsel %vm3349, %v3350, %v3348
    %v3352 = vrsqrt.pop %v3268
    %v3353 = vmul.f32 %v3268, %v3352
    %vm3354 = vcmp.eq.f32.partialorder %v3268, inf
    %v3355 = vsel %vm3354, %v3268, %v3353
    %vm3356 = vcmp.eq.f32.partialorder %v3268, 0.0
    %v3357 = vand.u32 %v3268, 2147483648
    %v3358 = vsel %vm3356, %v3357, %v3355
    %v3359 = vrsqrt.pop %v3273
    %v3360 = vmul.f32 %v3273, %v3359
    %vm3361 = vcmp.eq.f32.partialorder %v3273, inf
    %v3362 = vsel %vm3361, %v3273, %v3360
    %vm3363 = vcmp.eq.f32.partialorder %v3273, 0.0
    %v3364 = vand.u32 %v3273, 2147483648
    %v3365 = vsel %vm3363, %v3364, %v3362
    %v3366 = vrsqrt.pop %v3278
    %v3367 = vmul.f32 %v3278, %v3366
    %vm3368 = vcmp.eq.f32.partialorder %v3278, inf
    %v3369 = vsel %vm3368, %v3278, %v3367
    %vm3370 = vcmp.eq.f32.partialorder %v3278, 0.0
    %v3371 = vand.u32 %v3278, 2147483648
    %v3372 = vsel %vm3370, %v3371, %v3369
    %v3373 = vrsqrt.pop %v3283
    %v3374 = vmul.f32 %v3283, %v3373
    %vm3375 = vcmp.eq.f32.partialorder %v3283, inf
    %v3376 = vsel %vm3375, %v3283, %v3374
    %vm3377 = vcmp.eq.f32.partialorder %v3283, 0.0
    %v3378 = vand.u32 %v3283, 2147483648
    %v3379 = vsel %vm3377, %v3378, %v3376
    %v3380 = vrsqrt.pop %v3288
    %v3381 = vmul.f32 %v3288, %v3380
    %vm3382 = vcmp.eq.f32.partialorder %v3288, inf
    %v3383 = vsel %vm3382, %v3288, %v3381
    %vm3384 = vcmp.eq.f32.partialorder %v3288, 0.0
    %v3385 = vand.u32 %v3288, 2147483648
    %v3386 = vsel %vm3384, %v3385, %v3383
    %v3387 = vrsqrt.pop %v3293
    %v3388 = vmul.f32 %v3293, %v3387
    %vm3389 = vcmp.eq.f32.partialorder %v3293, inf
    %v3390 = vsel %vm3389, %v3293, %v3388
    %vm3391 = vcmp.eq.f32.partialorder %v3293, 0.0
    %v3392 = vand.u32 %v3293, 2147483648
    %v3393 = vsel %vm3391, %v3392, %v3390
    %v3394 = vrsqrt.pop %v3298
    %v3395 = vmul.f32 %v3298, %v3394
    %vm3396 = vcmp.eq.f32.partialorder %v3298, inf
    %v3397 = vsel %vm3396, %v3298, %v3395
    %vm3398 = vcmp.eq.f32.partialorder %v3298, 0.0
    %v3399 = vand.u32 %v3298, 2147483648
    %v3400 = vsel %vm3398, %v3399, %v3397
    %v3401 = vrsqrt.pop %v3303
    %v3402 = vmul.f32 %v3303, %v3401
    %vm3403 = vcmp.eq.f32.partialorder %v3303, inf
    %v3404 = vsel %vm3403, %v3303, %v3402
    %vm3405 = vcmp.eq.f32.partialorder %v3303, 0.0
    %v3406 = vand.u32 %v3303, 2147483648
    %v3407 = vsel %vm3405, %v3406, %v3404
    %v3408 = vrsqrt.pop %v3308
    %v3409 = vmul.f32 %v3308, %v3408
    %vm3410 = vcmp.eq.f32.partialorder %v3308, inf
    %v3411 = vsel %vm3410, %v3308, %v3409
    %vm3412 = vcmp.eq.f32.partialorder %v3308, 0.0
    %v3413 = vand.u32 %v3308, 2147483648
    %v3414 = vsel %vm3412, %v3413, %v3411
    %v3415 = vrsqrt.pop %v3313
    %v3416 = vmul.f32 %v3313, %v3415
    %vm3417 = vcmp.eq.f32.partialorder %v3313, inf
    %v3418 = vsel %vm3417, %v3313, %v3416
    %vm3419 = vcmp.eq.f32.partialorder %v3313, 0.0
    %v3420 = vand.u32 %v3313, 2147483648
    %v3421 = vsel %vm3419, %v3420, %v3418
    %v3422 = vrsqrt.pop %v3318
    %v3423 = vmul.f32 %v3318, %v3422
    %vm3424 = vcmp.eq.f32.partialorder %v3318, inf
    %v3425 = vsel %vm3424, %v3318, %v3423
    %vm3426 = vcmp.eq.f32.partialorder %v3318, 0.0
    %v3427 = vand.u32 %v3318, 2147483648
    %v3428 = vsel %vm3426, %v3427, %v3425
    %v3429 = vrsqrt.pop %v3323
    %v3430 = vmul.f32 %v3323, %v3429
    %vm3431 = vcmp.eq.f32.partialorder %v3323, inf
    %v3432 = vsel %vm3431, %v3323, %v3430
    %vm3433 = vcmp.eq.f32.partialorder %v3323, 0.0
    %v3434 = vand.u32 %v3323, 2147483648
    %v3435 = vsel %vm3433, %v3434, %v3432
    %v3436 = vrsqrt.pop %v3328
    %v3437 = vmul.f32 %v3328, %v3436
    %vm3438 = vcmp.eq.f32.partialorder %v3328, inf
    %v3439 = vsel %vm3438, %v3328, %v3437
    %vm3440 = vcmp.eq.f32.partialorder %v3328, 0.0
    %v3441 = vand.u32 %v3328, 2147483648
    %v3442 = vsel %vm3440, %v3441, %v3439
    %v3443 = vsub.f32 0.0, %v3337
    %v3444 = vsub.f32 0.0, %v3344
    %v3445 = vsub.f32 0.0, %v3351
    %v3446 = vsub.f32 0.0, %v3358
    %v3447 = vsub.f32 0.0, %v3365
    %v3448 = vsub.f32 0.0, %v3372
    %v3449 = vsub.f32 0.0, %v3379
    %v3450 = vsub.f32 0.0, %v3386
    %v3451 = vsub.f32 0.0, %v3393
    %v3452 = vsub.f32 0.0, %v3400
    %v3453 = vsub.f32 0.0, %v3407
    %v3454 = vsub.f32 0.0, %v3414
    %v3455 = vsub.f32 0.0, %v3421
    %v3456 = vsub.f32 0.0, %v3428
    %v3457 = vsub.f32 0.0, %v3435
    %v3458 = vsub.f32 0.0, %v3442
    %v3459 = vmul.f32 %v3443, %v2546
    %v3460 = vmul.f32 %v3444, %v2546
    %v3461 = vmul.f32 %v3445, %v2546
    %v3462 = vmul.f32 %v3446, %v2546
    %v3463 = vmul.f32 %v3447, %v2546
    %v3464 = vmul.f32 %v3448, %v2546
    %v3465 = vmul.f32 %v3449, %v2546
    %v3466 = vmul.f32 %v3450, %v2546
    %v3467 = vmul.f32 %v3451, %v2546
    %v3468 = vmul.f32 %v3452, %v2546
    %v3469 = vmul.f32 %v3453, %v2546
    %v3470 = vmul.f32 %v3454, %v2546
    %v3471 = vmul.f32 %v3455, %v2546
    %v3472 = vmul.f32 %v3456, %v2546
    %v3473 = vmul.f32 %v3457, %v2546
    %v3474 = vmul.f32 %v3458, %v2546
    %3491 = vrot.lane.b32.xlu0 %v3076, 96
    %v3492 = vpop.permute.xlu0 %3491
    %3493 = vrot.lane.b32.xlu0 %v3081, 96
    %v3494 = vpop.permute.xlu0 %3493
    %3495 = vrot.lane.b32.xlu0 %v3086, 96
    %v3496 = vpop.permute.xlu0 %3495
    %3497 = vrot.lane.b32.xlu0 %v3091, 96
    %v3498 = vpop.permute.xlu0 %3497
    %3499 = vrot.lane.b32.xlu0 %v3096, 96
    %v3500 = vpop.permute.xlu0 %3499
    %3501 = vrot.lane.b32.xlu0 %v3101, 96
    %v3502 = vpop.permute.xlu0 %3501
    %3503 = vrot.lane.b32.xlu0 %v3106, 96
    %v3504 = vpop.permute.xlu0 %3503
    %3505 = vrot.lane.b32.xlu0 %v3111, 96
    %v3506 = vpop.permute.xlu0 %3505
    %3507 = vrot.lane.b32.xlu0 %v3116, 96
    %v3508 = vpop.permute.xlu0 %3507
    %3509 = vrot.lane.b32.xlu0 %v3121, 96
    %v3510 = vpop.permute.xlu0 %3509
    %3511 = vrot.lane.b32.xlu0 %v3126, 96
    %v3512 = vpop.permute.xlu0 %3511
    %3513 = vrot.lane.b32.xlu0 %v3131, 96
    %v3514 = vpop.permute.xlu0 %3513
    %3515 = vrot.lane.b32.xlu0 %v3136, 96
    %v3516 = vpop.permute.xlu0 %3515
    %3517 = vrot.lane.b32.xlu0 %v3141, 96
    %v3518 = vpop.permute.xlu0 %3517
    %3519 = vrot.lane.b32.xlu0 %v3146, 96
    %v3520 = vpop.permute.xlu0 %3519
    %3521 = vrot.lane.b32.xlu0 %v3151, 96
    %v3522 = vpop.permute.xlu0 %3521
    %3523 = vrot.lane.b32.xlu0 %v3076, 64
    %v3524 = vpop.permute.xlu0 %3523
    %3525 = vrot.lane.b32.xlu0 %v3081, 64
    %v3526 = vpop.permute.xlu0 %3525
    %3527 = vrot.lane.b32.xlu0 %v3086, 64
    %v3528 = vpop.permute.xlu0 %3527
    %3529 = vrot.lane.b32.xlu0 %v3091, 64
    %v3530 = vpop.permute.xlu0 %3529
    %3531 = vrot.lane.b32.xlu0 %v3096, 64
    %v3532 = vpop.permute.xlu0 %3531
    %3533 = vrot.lane.b32.xlu0 %v3101, 64
    %v3534 = vpop.permute.xlu0 %3533
    %3535 = vrot.lane.b32.xlu0 %v3106, 64
    %v3536 = vpop.permute.xlu0 %3535
    %3537 = vrot.lane.b32.xlu0 %v3111, 64
    %v3538 = vpop.permute.xlu0 %3537
    %3539 = vrot.lane.b32.xlu0 %v3116, 64
    %v3540 = vpop.permute.xlu0 %3539
    %3541 = vrot.lane.b32.xlu0 %v3121, 64
    %v3542 = vpop.permute.xlu0 %3541
    %3543 = vrot.lane.b32.xlu0 %v3126, 64
    %v3544 = vpop.permute.xlu0 %3543
    %3545 = vrot.lane.b32.xlu0 %v3131, 64
    %v3546 = vpop.permute.xlu0 %3545
    %3547 = vrot.lane.b32.xlu0 %v3136, 64
    %v3548 = vpop.permute.xlu0 %3547
    %3549 = vrot.lane.b32.xlu0 %v3141, 64
    %v3550 = vpop.permute.xlu0 %3549
    %3551 = vrot.lane.b32.xlu0 %v3146, 64
    %v3552 = vpop.permute.xlu0 %3551
    %3553 = vrot.lane.b32.xlu0 %v3151, 64
    %v3554 = vpop.permute.xlu0 %3553
    %3555 = vrot.lane.b32.xlu0 %v3076, 32
    %v3556 = vpop.permute.xlu0 %3555
    %3557 = vrot.lane.b32.xlu0 %v3081, 32
    %v3558 = vpop.permute.xlu0 %3557
    %3559 = vrot.lane.b32.xlu0 %v3086, 32
    %v3560 = vpop.permute.xlu0 %3559
    %3561 = vrot.lane.b32.xlu0 %v3091, 32
    %v3562 = vpop.permute.xlu0 %3561
    %3563 = vrot.lane.b32.xlu0 %v3096, 32
    %v3564 = vpop.permute.xlu0 %3563
    %3565 = vrot.lane.b32.xlu0 %v3101, 32
    %v3566 = vpop.permute.xlu0 %3565
    %3567 = vrot.lane.b32.xlu0 %v3106, 32
    %v3568 = vpop.permute.xlu0 %3567
    %3569 = vrot.lane.b32.xlu0 %v3111, 32
    %v3570 = vpop.permute.xlu0 %3569
    %3571 = vrot.lane.b32.xlu0 %v3116, 32
    %v3572 = vpop.permute.xlu0 %3571
    %3573 = vrot.lane.b32.xlu0 %v3121, 32
    %v3574 = vpop.permute.xlu0 %3573
    %3575 = vrot.lane.b32.xlu0 %v3126, 32
    %v3576 = vpop.permute.xlu0 %3575
    %3577 = vrot.lane.b32.xlu0 %v3131, 32
    %v3578 = vpop.permute.xlu0 %3577
    %3579 = vrot.lane.b32.xlu0 %v3136, 32
    %v3580 = vpop.permute.xlu0 %3579
    %3581 = vrot.lane.b32.xlu0 %v3141, 32
    %v3582 = vpop.permute.xlu0 %3581
    %3583 = vrot.lane.b32.xlu0 %v3146, 32
    %v3584 = vpop.permute.xlu0 %3583
    %3585 = vrot.lane.b32.xlu0 %v3151, 32
    %v3586 = vpop.permute.xlu0 %3585
    %vm3587 = vcmask 31744
    %v3588 = vsel %vm3587, %v3459, 0.0
    %3589 = vadd.xlane.f32.xlu0 %v3588
    %v3590 = vpop.xlane.xlu0 %3589
    %v3591 = vsel %vm3587, %v3460, 0.0
    %3592 = vadd.xlane.f32.xlu0 %v3591
    %v3593 = vpop.xlane.xlu0 %3592
    %v3594 = vsel %vm3587, %v3461, 0.0
    %3595 = vadd.xlane.f32.xlu0 %v3594
    %v3596 = vpop.xlane.xlu0 %3595
    %v3597 = vsel %vm3587, %v3462, 0.0
    %3598 = vadd.xlane.f32.xlu0 %v3597
    %v3599 = vpop.xlane.xlu0 %3598
    %v3600 = vsel %vm3587, %v3463, 0.0
    %3601 = vadd.xlane.f32.xlu0 %v3600
    %v3602 = vpop.xlane.xlu0 %3601
    %v3603 = vsel %vm3587, %v3464, 0.0
    %3604 = vadd.xlane.f32.xlu0 %v3603
    %v3605 = vpop.xlane.xlu0 %3604
    %v3606 = vsel %vm3587, %v3465, 0.0
    %3607 = vadd.xlane.f32.xlu0 %v3606
    %v3608 = vpop.xlane.xlu0 %3607
    %v3609 = vsel %vm3587, %v3466, 0.0
    %3610 = vadd.xlane.f32.xlu0 %v3609
    %v3611 = vpop.xlane.xlu0 %3610
    %v3612 = vsel %vm3587, %v3467, 0.0
    %3613 = vadd.xlane.f32.xlu0 %v3612
    %v3614 = vpop.xlane.xlu0 %3613
    %v3615 = vsel %vm3587, %v3468, 0.0
    %3616 = vadd.xlane.f32.xlu0 %v3615
    %v3617 = vpop.xlane.xlu0 %3616
    %v3618 = vsel %vm3587, %v3469, 0.0
    %3619 = vadd.xlane.f32.xlu0 %v3618
    %v3620 = vpop.xlane.xlu0 %3619
    %v3621 = vsel %vm3587, %v3470, 0.0
    %3622 = vadd.xlane.f32.xlu0 %v3621
    %v3623 = vpop.xlane.xlu0 %3622
    %v3624 = vsel %vm3587, %v3471, 0.0
    %3625 = vadd.xlane.f32.xlu0 %v3624
    %v3626 = vpop.xlane.xlu0 %3625
    %v3627 = vsel %vm3587, %v3472, 0.0
    %3628 = vadd.xlane.f32.xlu0 %v3627
    %v3629 = vpop.xlane.xlu0 %3628
    %v3630 = vsel %vm3587, %v3473, 0.0
    %3631 = vadd.xlane.f32.xlu0 %v3630
    %v3632 = vpop.xlane.xlu0 %3631
    %v3633 = vsel %vm3587, %v3474, 0.0
    %3634 = vadd.xlane.f32.xlu0 %v3633
    %v3635 = vpop.xlane.xlu0 %3634
    %vm3636 = vcmask 7168
    %v3637 = vsel %vm3636, %v3590, %v3602
    %v3638 = vsel %vm3636, %v3593, %v3605
    %v3639 = vsel %vm3636, %v3596, %v3608
    %v3640 = vsel %vm3636, %v3599, %v3611
    %vm3641 = vcmask 15360
    %v3642 = vsel %vm3641, %v3637, %v3614
    %v3643 = vsel %vm3641, %v3638, %v3617
    %v3644 = vsel %vm3641, %v3639, %v3620
    %v3645 = vsel %vm3641, %v3640, %v3623
    %vm3646 = vcmask 23552
    %v3647 = vsel %vm3646, %v3642, %v3626
    %v3648 = vsel %vm3646, %v3643, %v3629
    %v3649 = vsel %vm3646, %v3644, %v3632
    %v3650 = vsel %vm3646, %v3645, %v3635
    %v3651 = vmul.f32 %v3647, 0.99
    %v3652 = vmul.f32 %v3648, 0.99
    %v3653 = vmul.f32 %v3649, 0.99
    %v3654 = vmul.f32 %v3650, 0.99
    %v3655 = vadd.f32 %v2945, %v3651
    %v3656 = vadd.f32 %v2946, %v3652
    %v3657 = vadd.f32 %v2947, %v3653
    %v3658 = vadd.f32 %v2948, %v3654
    %v3659 = vsel %vm3587, %v3655, 0.0
    %3660 = vadd.xlane.f32.xlu0 %v3659
    %v3661 = vpop.xlane.xlu0 %3660
    %v3662 = vsel %vm3587, %v3656, 0.0
    %3663 = vadd.xlane.f32.xlu0 %v3662
    %v3664 = vpop.xlane.xlu0 %3663
    %v3665 = vsel %vm3587, %v3657, 0.0
    %3666 = vadd.xlane.f32.xlu0 %v3665
    %v3667 = vpop.xlane.xlu0 %3666
    %v3668 = vsel %vm3587, %v3658, 0.0
    %3669 = vadd.xlane.f32.xlu0 %v3668
    %v3670 = vpop.xlane.xlu0 %3669
    %v3671 = vsel %vm3636, %v3661, %v3664
    %v3672 = vsel %vm3641, %v3671, %v3667
    %v3673 = vsel %vm3646, %v3672, %v3670
    %v3674 = vmul.f32 %v3673, 0.99
    %v3675 = vadd.f32 %v2719, %v3674
    %v3676 = vsel %vm3587, %v3675, 0.0
    %3677 = vadd.xlane.f32.xlu0 %v3676
    %v3678 = vpop.xlane.xlu0 %3677
    %v3680 = vrot.slane %v3678, 2
    %v3682 = vrot.slane %v3678, 4
    %v3684 = vrot.slane %v3678, 6
    %v3686 = vsel %vm3636, %v3678, %v3680
    %v3687 = vsel %vm3641, %v3686, %v3682
    %v3688 = vsel %vm3646, %v3687, %v3684
    %v3689 = vmul.f32 %v3688, 0.99
    %v3690 = vadd.f32 %v2547, %v3689
    %vm3691 = vcmask 25600
    %v3692 = vsel %vm3691, %v3690, -inf
    %3693 = vmax.xlane.f32.xlu0 %v3692
    %v3694 = vpop.xlane.xlu0 %3693
    %v3695 = vsel %vm2561, %v3694, -inf
    %v3696 = vrot.slane %v3695, 4
    %v3697 = vmax.f32 %v3695, %v3696
    %v3698 = vrot.slane %v3697, 2
    %v3699 = vmax.f32 %v3697, %v3698
    %v3700 = vrot.slane %v3699, 1
    %v3701 = vmax.f32 %v3699, %v3700
    %v3702 = vsub.f32 %v3690, %v3701
    %v3703 = vmul.f32 %v3702, 1.442695
    %v3704 = vpow.pop %v3703
    %v3705 = vsel %vm3691, %v3704, 0.0
    %3706 = vadd.xlane.f32.xlu0 %v3705
    %v3707 = vpop.xlane.xlu0 %3706
    %v3708 = vsel %vm2561, %v3707, 0.0
    %v3709 = vrot.slane %v3708, 4
    %v3710 = vadd.f32 %v3708, %v3709
    %v3711 = vrot.slane %v3710, 2
    %v3712 = vadd.f32 %v3710, %v3711
    %v3713 = vrot.slane %v3712, 1
    %v3714 = vadd.f32 %v3712, %v3713
    %v3715 = vrcp.pop %v3714
    %v3716 = vmul.f32 %v3704, %v3715
    %v3717 = vsel %vm3587, %v3675, -inf
    %3718 = vmax.xlane.f32.xlu0 %v3717
    %v3719 = vpop.xlane.xlu0 %3718
    %v3720 = vsub.f32 %v3675, %v3719
    %v3721 = vmul.f32 %v3720, 1.442695
    %v3722 = vpow.pop %v3721
    %v3723 = vsel %vm3587, %v3722, 0.0
    %3724 = vadd.xlane.f32.xlu0 %v3723
    %v3725 = vpop.xlane.xlu0 %3724
    %v3726 = vrcp.pop %v3725
    %v3727 = vmul.f32 %v3722, %v3726
    %v3729 = vrot.slane %v3716, 6
    %3730 = vrot.lane.b32.xlu0 %v3729, 127
    %v3731 = vpop.permute.xlu0 %3730
    %v3733 = vrot.slane %v3716, 4
    %3734 = vrot.lane.b32.xlu0 %v3733, 126
    %v3735 = vpop.permute.xlu0 %3734
    %v3737 = vrot.slane %v3716, 2
    %3738 = vrot.lane.b32.xlu0 %v3737, 125
    %v3739 = vpop.permute.xlu0 %3738
    %v3741 = vsel %vm2561, %v3716, %v3731
    %v3742 = vsel %vm139, %v3741, %v3735
    %v3743 = vsel %vm2564, %v3742, %v3739
    %3745 = vset.pattern.permute.xlu0 0
    %3746 = vperm.xlu0 %3745, %v3743
    %v3747 = vpop.permute.xlu0 %3746
    %v3749 = vmul.f32 %v3727, %v3747
    %v3750 = vsel %vm3587, %v3655, -inf
    %3751 = vmax.xlane.f32.xlu0 %v3750
    %v3752 = vpop.xlane.xlu0 %3751
    %v3753 = vsel %vm3587, %v3656, -inf
    %3754 = vmax.xlane.f32.xlu0 %v3753
    %v3755 = vpop.xlane.xlu0 %3754
    %v3756 = vsel %vm3587, %v3657, -inf
    %3757 = vmax.xlane.f32.xlu0 %v3756
    %v3758 = vpop.xlane.xlu0 %3757
    %v3759 = vsel %vm3587, %v3658, -inf
    %3760 = vmax.xlane.f32.xlu0 %v3759
    %v3761 = vpop.xlane.xlu0 %3760
    %v3762 = vsub.f32 %v3655, %v3752
    %v3763 = vsub.f32 %v3656, %v3755
    %v3764 = vsub.f32 %v3657, %v3758
    %v3765 = vsub.f32 %v3658, %v3761
    %v3766 = vmul.f32 %v3762, 1.442695
    %v3767 = vpow.pop %v3766
    %v3768 = vmul.f32 %v3763, 1.442695
    %v3769 = vpow.pop %v3768
    %v3770 = vmul.f32 %v3764, 1.442695
    %v3771 = vpow.pop %v3770
    %v3772 = vmul.f32 %v3765, 1.442695
    %v3773 = vpow.pop %v3772
    %v3774 = vsel %vm3587, %v3767, 0.0
    %3775 = vadd.xlane.f32.xlu0 %v3774
    %v3776 = vpop.xlane.xlu0 %3775
    %v3777 = vsel %vm3587, %v3769, 0.0
    %3778 = vadd.xlane.f32.xlu0 %v3777
    %v3779 = vpop.xlane.xlu0 %3778
    %v3780 = vsel %vm3587, %v3771, 0.0
    %3781 = vadd.xlane.f32.xlu0 %v3780
    %v3782 = vpop.xlane.xlu0 %3781
    %v3783 = vsel %vm3587, %v3773, 0.0
    %3784 = vadd.xlane.f32.xlu0 %v3783
    %v3785 = vpop.xlane.xlu0 %3784
    %v3786 = vrcp.pop %v3776
    %v3787 = vmul.f32 %v3767, %v3786
    %v3788 = vrcp.pop %v3779
    %v3789 = vmul.f32 %v3769, %v3788
    %v3790 = vrcp.pop %v3782
    %v3791 = vmul.f32 %v3771, %v3790
    %v3792 = vrcp.pop %v3785
    %v3793 = vmul.f32 %v3773, %v3792
    %3795 = vrot.lane.b32.xlu0 %v3749, 127
    %v3796 = vpop.permute.xlu0 %3795
    %3797 = vrot.lane.b32.xlu0 %v3749, 126
    %v3798 = vpop.permute.xlu0 %3797
    %3799 = vrot.lane.b32.xlu0 %v3749, 125
    %v3800 = vpop.permute.xlu0 %3799
    %3801 = vset.pattern.permute.xlu0 0
    %3802 = vperm.xlu0 %3801, %v3749
    %v3803 = vpop.permute.xlu0 %3802
    %3805 = vset.pattern.permute.xlu0 0
    %3806 = vperm.xlu0 %3805, %v3796
    %v3807 = vpop.permute.xlu0 %3806
    %3809 = vset.pattern.permute.xlu0 0
    %3810 = vperm.xlu0 %3809, %v3798
    %v3811 = vpop.permute.xlu0 %3810
    %3813 = vset.pattern.permute.xlu0 0
    %3814 = vperm.xlu0 %3813, %v3800
    %v3815 = vpop.permute.xlu0 %3814
    %v3817 = vmul.f32 %v3787, %v3803
    %v3818 = vmul.f32 %v3789, %v3807
    %v3819 = vmul.f32 %v3791, %v3811
    %v3820 = vmul.f32 %v3793, %v3815
    %v3821 = vsel %vm3587, %v3459, -inf
    %3822 = vmax.xlane.f32.xlu0 %v3821
    %v3823 = vpop.xlane.xlu0 %3822
    %v3824 = vsel %vm3587, %v3460, -inf
    %3825 = vmax.xlane.f32.xlu0 %v3824
    %v3826 = vpop.xlane.xlu0 %3825
    %v3827 = vsel %vm3587, %v3461, -inf
    %3828 = vmax.xlane.f32.xlu0 %v3827
    %v3829 = vpop.xlane.xlu0 %3828
    %v3830 = vsel %vm3587, %v3462, -inf
    %3831 = vmax.xlane.f32.xlu0 %v3830
    %v3832 = vpop.xlane.xlu0 %3831
    %v3833 = vsel %vm3587, %v3463, -inf
    %3834 = vmax.xlane.f32.xlu0 %v3833
    %v3835 = vpop.xlane.xlu0 %3834
    %v3836 = vsel %vm3587, %v3464, -inf
    %3837 = vmax.xlane.f32.xlu0 %v3836
    %v3838 = vpop.xlane.xlu0 %3837
    %v3839 = vsel %vm3587, %v3465, -inf
    %3840 = vmax.xlane.f32.xlu0 %v3839
    %v3841 = vpop.xlane.xlu0 %3840
    %v3842 = vsel %vm3587, %v3466, -inf
    %3843 = vmax.xlane.f32.xlu0 %v3842
    %v3844 = vpop.xlane.xlu0 %3843
    %v3845 = vsel %vm3587, %v3467, -inf
    %3846 = vmax.xlane.f32.xlu0 %v3845
    %v3847 = vpop.xlane.xlu0 %3846
    %v3848 = vsel %vm3587, %v3468, -inf
    %3849 = vmax.xlane.f32.xlu0 %v3848
    %v3850 = vpop.xlane.xlu0 %3849
    %v3851 = vsel %vm3587, %v3469, -inf
    %3852 = vmax.xlane.f32.xlu0 %v3851
    %v3853 = vpop.xlane.xlu0 %3852
    %v3854 = vsel %vm3587, %v3470, -inf
    %3855 = vmax.xlane.f32.xlu0 %v3854
    %v3856 = vpop.xlane.xlu0 %3855
    %v3857 = vsel %vm3587, %v3471, -inf
    %3858 = vmax.xlane.f32.xlu0 %v3857
    %v3859 = vpop.xlane.xlu0 %3858
    %v3860 = vsel %vm3587, %v3472, -inf
    %3861 = vmax.xlane.f32.xlu0 %v3860
    %v3862 = vpop.xlane.xlu0 %3861
    %v3863 = vsel %vm3587, %v3473, -inf
    %3864 = vmax.xlane.f32.xlu0 %v3863
    %v3865 = vpop.xlane.xlu0 %3864
    %v3866 = vsel %vm3587, %v3474, -inf
    %3867 = vmax.xlane.f32.xlu0 %v3866
    %v3868 = vpop.xlane.xlu0 %3867
    %v3869 = vsub.f32 %v3459, %v3823
    %v3870 = vsub.f32 %v3460, %v3826
    %v3871 = vsub.f32 %v3461, %v3829
    %v3872 = vsub.f32 %v3462, %v3832
    %v3873 = vsub.f32 %v3463, %v3835
    %v3874 = vsub.f32 %v3464, %v3838
    %v3875 = vsub.f32 %v3465, %v3841
    %v3876 = vsub.f32 %v3466, %v3844
    %v3877 = vsub.f32 %v3467, %v3847
    %v3878 = vsub.f32 %v3468, %v3850
    %v3879 = vsub.f32 %v3469, %v3853
    %v3880 = vsub.f32 %v3470, %v3856
    %v3881 = vsub.f32 %v3471, %v3859
    %v3882 = vsub.f32 %v3472, %v3862
    %v3883 = vsub.f32 %v3473, %v3865
    %v3884 = vsub.f32 %v3474, %v3868
    %v3885 = vmul.f32 %v3869, 1.442695
    %v3886 = vpow.pop %v3885
    %v3887 = vmul.f32 %v3870, 1.442695
    %v3888 = vpow.pop %v3887
    %v3889 = vmul.f32 %v3871, 1.442695
    %v3890 = vpow.pop %v3889
    %v3891 = vmul.f32 %v3872, 1.442695
    %v3892 = vpow.pop %v3891
    %v3893 = vmul.f32 %v3873, 1.442695
    %v3894 = vpow.pop %v3893
    %v3895 = vmul.f32 %v3874, 1.442695
    %v3896 = vpow.pop %v3895
    %v3897 = vmul.f32 %v3875, 1.442695
    %v3898 = vpow.pop %v3897
    %v3899 = vmul.f32 %v3876, 1.442695
    %v3900 = vpow.pop %v3899
    %v3901 = vmul.f32 %v3877, 1.442695
    %v3902 = vpow.pop %v3901
    %v3903 = vmul.f32 %v3878, 1.442695
    %v3904 = vpow.pop %v3903
    %v3905 = vmul.f32 %v3879, 1.442695
    %v3906 = vpow.pop %v3905
    %v3907 = vmul.f32 %v3880, 1.442695
    %v3908 = vpow.pop %v3907
    %v3909 = vmul.f32 %v3881, 1.442695
    %v3910 = vpow.pop %v3909
    %v3911 = vmul.f32 %v3882, 1.442695
    %v3912 = vpow.pop %v3911
    %v3913 = vmul.f32 %v3883, 1.442695
    %v3914 = vpow.pop %v3913
    %v3915 = vmul.f32 %v3884, 1.442695
    %v3916 = vpow.pop %v3915
    %v3917 = vsel %vm3587, %v3886, 0.0
    %3918 = vadd.xlane.f32.xlu0 %v3917
    %v3919 = vpop.xlane.xlu0 %3918
    %v3920 = vsel %vm3587, %v3888, 0.0
    %3921 = vadd.xlane.f32.xlu0 %v3920
    %v3922 = vpop.xlane.xlu0 %3921
    %v3923 = vsel %vm3587, %v3890, 0.0
    %3924 = vadd.xlane.f32.xlu0 %v3923
    %v3925 = vpop.xlane.xlu0 %3924
    %v3926 = vsel %vm3587, %v3892, 0.0
    %3927 = vadd.xlane.f32.xlu0 %v3926
    %v3928 = vpop.xlane.xlu0 %3927
    %v3929 = vsel %vm3587, %v3894, 0.0
    %3930 = vadd.xlane.f32.xlu0 %v3929
    %v3931 = vpop.xlane.xlu0 %3930
    %v3932 = vsel %vm3587, %v3896, 0.0
    %3933 = vadd.xlane.f32.xlu0 %v3932
    %v3934 = vpop.xlane.xlu0 %3933
    %v3935 = vsel %vm3587, %v3898, 0.0
    %3936 = vadd.xlane.f32.xlu0 %v3935
    %v3937 = vpop.xlane.xlu0 %3936
    %v3938 = vsel %vm3587, %v3900, 0.0
    %3939 = vadd.xlane.f32.xlu0 %v3938
    %v3940 = vpop.xlane.xlu0 %3939
    %v3941 = vsel %vm3587, %v3902, 0.0
    %3942 = vadd.xlane.f32.xlu0 %v3941
    %v3943 = vpop.xlane.xlu0 %3942
    %v3944 = vsel %vm3587, %v3904, 0.0
    %3945 = vadd.xlane.f32.xlu0 %v3944
    %v3946 = vpop.xlane.xlu0 %3945
    %v3947 = vsel %vm3587, %v3906, 0.0
    %3948 = vadd.xlane.f32.xlu0 %v3947
    %v3949 = vpop.xlane.xlu0 %3948
    %v3950 = vsel %vm3587, %v3908, 0.0
    %3951 = vadd.xlane.f32.xlu0 %v3950
    %v3952 = vpop.xlane.xlu0 %3951
    %v3953 = vsel %vm3587, %v3910, 0.0
    %3954 = vadd.xlane.f32.xlu0 %v3953
    %v3955 = vpop.xlane.xlu0 %3954
    %v3956 = vsel %vm3587, %v3912, 0.0
    %3957 = vadd.xlane.f32.xlu0 %v3956
    %v3958 = vpop.xlane.xlu0 %3957
    %v3959 = vsel %vm3587, %v3914, 0.0
    %3960 = vadd.xlane.f32.xlu0 %v3959
    %v3961 = vpop.xlane.xlu0 %3960
    %v3962 = vsel %vm3587, %v3916, 0.0
    %3963 = vadd.xlane.f32.xlu0 %v3962
    %v3964 = vpop.xlane.xlu0 %3963
    %v3965 = vrcp.pop %v3919
    %v3966 = vmul.f32 %v3886, %v3965
    %v3967 = vrcp.pop %v3922
    %v3968 = vmul.f32 %v3888, %v3967
    %v3969 = vrcp.pop %v3925
    %v3970 = vmul.f32 %v3890, %v3969
    %v3971 = vrcp.pop %v3928
    %v3972 = vmul.f32 %v3892, %v3971
    %v3973 = vrcp.pop %v3931
    %v3974 = vmul.f32 %v3894, %v3973
    %v3975 = vrcp.pop %v3934
    %v3976 = vmul.f32 %v3896, %v3975
    %v3977 = vrcp.pop %v3937
    %v3978 = vmul.f32 %v3898, %v3977
    %v3979 = vrcp.pop %v3940
    %v3980 = vmul.f32 %v3900, %v3979
    %v3981 = vrcp.pop %v3943
    %v3982 = vmul.f32 %v3902, %v3981
    %v3983 = vrcp.pop %v3946
    %v3984 = vmul.f32 %v3904, %v3983
    %v3985 = vrcp.pop %v3949
    %v3986 = vmul.f32 %v3906, %v3985
    %v3987 = vrcp.pop %v3952
    %v3988 = vmul.f32 %v3908, %v3987
    %v3989 = vrcp.pop %v3955
    %v3990 = vmul.f32 %v3910, %v3989
    %v3991 = vrcp.pop %v3958
    %v3992 = vmul.f32 %v3912, %v3991
    %v3993 = vrcp.pop %v3961
    %v3994 = vmul.f32 %v3914, %v3993
    %v3995 = vrcp.pop %v3964
    %v3996 = vmul.f32 %v3916, %v3995
    %4001 = vrot.lane.b32.xlu0 %v3817, 127
    %v4002 = vpop.permute.xlu0 %4001
    %4003 = vrot.lane.b32.xlu0 %v3818, 127
    %v4004 = vpop.permute.xlu0 %4003
    %4005 = vrot.lane.b32.xlu0 %v3819, 127
    %v4006 = vpop.permute.xlu0 %4005
    %4007 = vrot.lane.b32.xlu0 %v3820, 127
    %v4008 = vpop.permute.xlu0 %4007
    %4009 = vrot.lane.b32.xlu0 %v3817, 126
    %v4010 = vpop.permute.xlu0 %4009
    %4011 = vrot.lane.b32.xlu0 %v3818, 126
    %v4012 = vpop.permute.xlu0 %4011
    %4013 = vrot.lane.b32.xlu0 %v3819, 126
    %v4014 = vpop.permute.xlu0 %4013
    %4015 = vrot.lane.b32.xlu0 %v3820, 126
    %v4016 = vpop.permute.xlu0 %4015
    %4017 = vrot.lane.b32.xlu0 %v3817, 125
    %v4018 = vpop.permute.xlu0 %4017
    %4019 = vrot.lane.b32.xlu0 %v3818, 125
    %v4020 = vpop.permute.xlu0 %4019
    %4021 = vrot.lane.b32.xlu0 %v3819, 125
    %v4022 = vpop.permute.xlu0 %4021
    %4023 = vrot.lane.b32.xlu0 %v3820, 125
    %v4024 = vpop.permute.xlu0 %4023
    %4025 = vset.pattern.permute.xlu0 0
    %4026 = vperm.xlu0 %4025, %v3817
    %v4027 = vpop.permute.xlu0 %4026
    %4029 = vset.pattern.permute.xlu0 0
    %4030 = vperm.xlu0 %4029, %v3818
    %v4031 = vpop.permute.xlu0 %4030
    %4033 = vset.pattern.permute.xlu0 0
    %4034 = vperm.xlu0 %4033, %v3819
    %v4035 = vpop.permute.xlu0 %4034
    %4037 = vset.pattern.permute.xlu0 0
    %4038 = vperm.xlu0 %4037, %v3820
    %v4039 = vpop.permute.xlu0 %4038
    %4041 = vset.pattern.permute.xlu0 0
    %4042 = vperm.xlu0 %4041, %v4002
    %v4043 = vpop.permute.xlu0 %4042
    %4045 = vset.pattern.permute.xlu0 0
    %4046 = vperm.xlu0 %4045, %v4004
    %v4047 = vpop.permute.xlu0 %4046
    %4049 = vset.pattern.permute.xlu0 0
    %4050 = vperm.xlu0 %4049, %v4006
    %v4051 = vpop.permute.xlu0 %4050
    %4053 = vset.pattern.permute.xlu0 0
    %4054 = vperm.xlu0 %4053, %v4008
    %v4055 = vpop.permute.xlu0 %4054
    %4057 = vset.pattern.permute.xlu0 0
    %4058 = vperm.xlu0 %4057, %v4010
    %v4059 = vpop.permute.xlu0 %4058
    %4061 = vset.pattern.permute.xlu0 0
    %4062 = vperm.xlu0 %4061, %v4012
    %v4063 = vpop.permute.xlu0 %4062
    %4065 = vset.pattern.permute.xlu0 0
    %4066 = vperm.xlu0 %4065, %v4014
    %v4067 = vpop.permute.xlu0 %4066
    %4069 = vset.pattern.permute.xlu0 0
    %4070 = vperm.xlu0 %4069, %v4016
    %v4071 = vpop.permute.xlu0 %4070
    %4073 = vset.pattern.permute.xlu0 0
    %4074 = vperm.xlu0 %4073, %v4018
    %v4075 = vpop.permute.xlu0 %4074
    %4077 = vset.pattern.permute.xlu0 0
    %4078 = vperm.xlu0 %4077, %v4020
    %v4079 = vpop.permute.xlu0 %4078
    %4081 = vset.pattern.permute.xlu0 0
    %4082 = vperm.xlu0 %4081, %v4022
    %v4083 = vpop.permute.xlu0 %4082
    %4085 = vset.pattern.permute.xlu0 0
    %4086 = vperm.xlu0 %4085, %v4024
    %v4087 = vpop.permute.xlu0 %4086
    %v4089 = vmul.f32 %v3966, %v4027
    %v4090 = vmul.f32 %v3968, %v4031
    %v4091 = vmul.f32 %v3970, %v4035
    %v4092 = vmul.f32 %v3972, %v4039
    %v4093 = vmul.f32 %v3974, %v4043
    %v4094 = vmul.f32 %v3976, %v4047
    %v4095 = vmul.f32 %v3978, %v4051
    %v4096 = vmul.f32 %v3980, %v4055
    %v4097 = vmul.f32 %v3982, %v4059
    %v4098 = vmul.f32 %v3984, %v4063
    %v4099 = vmul.f32 %v3986, %v4067
    %v4100 = vmul.f32 %v3988, %v4071
    %v4101 = vmul.f32 %v3990, %v4075
    %v4102 = vmul.f32 %v3992, %v4079
    %v4103 = vmul.f32 %v3994, %v4083
    %v4104 = vmul.f32 %v3996, %v4087
    %v4105 = vsel %vm3587, %v3716, 0.0
    %4106 = vst [vmem:[%s21] sm:$0x3] %v4105
    %v4107 = vsel %vm3587, %v3749, 0.0
    %4108 = vst [vmem:[%s22] sm:$0xff] %v4107
    %v4109 = vsel %vm3587, %v3817, 0.0
    %v4110 = vsel %vm3587, %v3818, 0.0
    %v4111 = vsel %vm3587, %v3819, 0.0
    %v4112 = vsel %vm3587, %v3820, 0.0
    %4113 = vst [vmem:[%s23] sm:$0xff] %v4109
    %4114 = vst [vmem:[%s23 + $0x8] sm:$0xff] %v4110
    %4115 = vst [vmem:[%s23 + $0x10] sm:$0xff] %v4111
    %4116 = vst [vmem:[%s23 + $0x18] sm:$0xff] %v4112
    %v4117 = vsel %vm3587, %v4089, 0.0
    %v4118 = vsel %vm3587, %v4090, 0.0
    %v4119 = vsel %vm3587, %v4091, 0.0
    %v4120 = vsel %vm3587, %v4092, 0.0
    %v4121 = vsel %vm3587, %v4093, 0.0
    %v4122 = vsel %vm3587, %v4094, 0.0
    %v4123 = vsel %vm3587, %v4095, 0.0
    %v4124 = vsel %vm3587, %v4096, 0.0
    %v4125 = vsel %vm3587, %v4097, 0.0
    %v4126 = vsel %vm3587, %v4098, 0.0
    %v4127 = vsel %vm3587, %v4099, 0.0
    %v4128 = vsel %vm3587, %v4100, 0.0
    %v4129 = vsel %vm3587, %v4101, 0.0
    %v4130 = vsel %vm3587, %v4102, 0.0
    %v4131 = vsel %vm3587, %v4103, 0.0
    %v4132 = vsel %vm3587, %v4104, 0.0
    %4133 = vst [vmem:[%s24] sm:$0xff] %v4117
    %4134 = vst [vmem:[%s24 + $0x8] sm:$0xff] %v4118
    %4135 = vst [vmem:[%s24 + $0x10] sm:$0xff] %v4119
    %4136 = vst [vmem:[%s24 + $0x18] sm:$0xff] %v4120
    %4137 = vst [vmem:[%s24 + $0x20] sm:$0xff] %v4121
    %4138 = vst [vmem:[%s24 + $0x28] sm:$0xff] %v4122
    %4139 = vst [vmem:[%s24 + $0x30] sm:$0xff] %v4123
    %4140 = vst [vmem:[%s24 + $0x38] sm:$0xff] %v4124
    %4141 = vst [vmem:[%s24 + $0x40] sm:$0xff] %v4125
    %4142 = vst [vmem:[%s24 + $0x48] sm:$0xff] %v4126
    %4143 = vst [vmem:[%s24 + $0x50] sm:$0xff] %v4127
    %4144 = vst [vmem:[%s24 + $0x58] sm:$0xff] %v4128
    %4145 = vst [vmem:[%s24 + $0x60] sm:$0xff] %v4129
    %4146 = vst [vmem:[%s24 + $0x68] sm:$0xff] %v4130
    %4147 = vst [vmem:[%s24 + $0x70] sm:$0xff] %v4131
    %4148 = vst [vmem:[%s24 + $0x78] sm:$0xff] %v4132
    %v4149 = vmul.f32 %v2565, %v2565
    %v4150 = vsel %vm2386, %v4149, 0.0
    %4151 = vadd.xlane.f32.xlu0 %v4150
    %v4152 = vpop.xlane.xlu0 %4151
    %v4153 = vmax.f32 %v4152, 1e-16
    %v4154 = vrsqrt.pop %v4153
    %v4155 = vmul.f32 %v2565, %v4154
    %v4156 = vsel %vm2386, %v4155, 0.0
    %v4157 = vrot.slane %v4156, 4
    %v4158 = vadd.f32 %v4156, %v4157
    %v4159 = vrot.slane %v4158, 2
    %v4160 = vadd.f32 %v4158, %v4159
    %v4161 = vrot.slane %v4160, 1
    %v4162 = vadd.f32 %v4160, %v4161
    %v4163 = vmul.f32 %v4162, %v4162
    %v4164 = vsel %vm2386, %v4163, 0.0
    %4165 = vadd.xlane.f32.xlu0 %v4164
    %v4166 = vpop.xlane.xlu0 %4165
    %v4167 = vrcp.pop 64.0
    %v4168 = vmul.f32 %v4166, %v4167
    %vm4169 = vcmask 0
    %4170 = vst.msk [vmem:[#allocation3] sm:$0x1] %vm4169, %v4168
    %v4171 = vld [vmem:[%s12] sm:$0xff]
    %v4172 = vld [vmem:[%s12 + $0x8] sm:$0xff]
    %v4173 = vld [vmem:[%s12 + $0x10] sm:$0xff]
    %v4174 = vld [vmem:[%s12 + $0x18] sm:$0xff]
    %v4175 = vld [vmem:[%s12 + $0x20] sm:$0xff]
    %v4176 = vld [vmem:[%s12 + $0x28] sm:$0xff]
    %v4177 = vld [vmem:[%s12 + $0x30] sm:$0xff]
    %v4178 = vld [vmem:[%s12 + $0x38] sm:$0xff]
    %v4179 = vld [vmem:[%s12 + $0x40] sm:$0xff]
    %v4180 = vld [vmem:[%s12 + $0x48] sm:$0xff]
    %v4181 = vld [vmem:[%s12 + $0x50] sm:$0xff]
    %v4182 = vld [vmem:[%s12 + $0x58] sm:$0xff]
    %v4183 = vld [vmem:[%s12 + $0x60] sm:$0xff]
    %v4184 = vld [vmem:[%s12 + $0x68] sm:$0xff]
    %v4185 = vld [vmem:[%s12 + $0x70] sm:$0xff]
    %v4186 = vld [vmem:[%s12 + $0x78] sm:$0xff]
    %v4187 = vld [vmem:[%s13] sm:$0xf]
    %v4188 = vld [vmem:[%s14] sm:$0xff]
    %v4189 = vld [vmem:[%s14 + $0x8] sm:$0xff]
    %v4190 = vld [vmem:[%s14 + $0x10] sm:$0xff]
    %v4191 = vld [vmem:[%s14 + $0x18] sm:$0xff]
    %v4192 = vld [vmem:[%s14 + $0x20] sm:$0xff]
    %v4193 = vld [vmem:[%s14 + $0x28] sm:$0xff]
    %v4194 = vld [vmem:[%s14 + $0x30] sm:$0xff]
    %v4195 = vld [vmem:[%s14 + $0x38] sm:$0xff]
    %v4196 = vld [vmem:[%s14 + $0x40] sm:$0xff]
    %v4197 = vld [vmem:[%s14 + $0x48] sm:$0xff]
    %v4198 = vld [vmem:[%s14 + $0x50] sm:$0xff]
    %v4199 = vld [vmem:[%s14 + $0x58] sm:$0xff]
    %v4200 = vld [vmem:[%s14 + $0x60] sm:$0xff]
    %v4201 = vld [vmem:[%s14 + $0x68] sm:$0xff]
    %v4202 = vld [vmem:[%s14 + $0x70] sm:$0xff]
    %v4203 = vld [vmem:[%s14 + $0x78] sm:$0xff]
    %v4204 = vld [vmem:[%s14 + $0x80] sm:$0xff]
    %v4205 = vld [vmem:[%s14 + $0x88] sm:$0xff]
    %v4206 = vld [vmem:[%s14 + $0x90] sm:$0xff]
    %v4207 = vld [vmem:[%s14 + $0x98] sm:$0xff]
    %v4208 = vld [vmem:[%s14 + $0xa0] sm:$0xff]
    %v4209 = vld [vmem:[%s14 + $0xa8] sm:$0xff]
    %v4210 = vld [vmem:[%s14 + $0xb0] sm:$0xff]
    %v4211 = vld [vmem:[%s14 + $0xb8] sm:$0xff]
    %v4212 = vld [vmem:[%s14 + $0xc0] sm:$0xff]
    %v4213 = vld [vmem:[%s14 + $0xc8] sm:$0xff]
    %v4214 = vld [vmem:[%s14 + $0xd0] sm:$0xff]
    %v4215 = vld [vmem:[%s14 + $0xd8] sm:$0xff]
    %v4216 = vld [vmem:[%s14 + $0xe0] sm:$0xff]
    %v4217 = vld [vmem:[%s14 + $0xe8] sm:$0xff]
    %v4218 = vld [vmem:[%s14 + $0xf0] sm:$0xff]
    %v4219 = vld [vmem:[%s14 + $0xf8] sm:$0xff]
    %v4220 = vld [vmem:[%s14 + $0x100] sm:$0xff]
    %v4221 = vld [vmem:[%s14 + $0x108] sm:$0xff]
    %v4222 = vld [vmem:[%s14 + $0x110] sm:$0xff]
    %v4223 = vld [vmem:[%s14 + $0x118] sm:$0xff]
    %v4224 = vld [vmem:[%s14 + $0x120] sm:$0xff]
    %v4225 = vld [vmem:[%s14 + $0x128] sm:$0xff]
    %v4226 = vld [vmem:[%s14 + $0x130] sm:$0xff]
    %v4227 = vld [vmem:[%s14 + $0x138] sm:$0xff]
    %v4228 = vld [vmem:[%s14 + $0x140] sm:$0xff]
    %v4229 = vld [vmem:[%s14 + $0x148] sm:$0xff]
    %v4230 = vld [vmem:[%s14 + $0x150] sm:$0xff]
    %v4231 = vld [vmem:[%s14 + $0x158] sm:$0xff]
    %v4232 = vld [vmem:[%s14 + $0x160] sm:$0xff]
    %v4233 = vld [vmem:[%s14 + $0x168] sm:$0xff]
    %v4234 = vld [vmem:[%s14 + $0x170] sm:$0xff]
    %v4235 = vld [vmem:[%s14 + $0x178] sm:$0xff]
    %v4236 = vld [vmem:[%s14 + $0x180] sm:$0xff]
    %v4237 = vld [vmem:[%s14 + $0x188] sm:$0xff]
    %v4238 = vld [vmem:[%s14 + $0x190] sm:$0xff]
    %v4239 = vld [vmem:[%s14 + $0x198] sm:$0xff]
    %v4240 = vld [vmem:[%s14 + $0x1a0] sm:$0xff]
    %v4241 = vld [vmem:[%s14 + $0x1a8] sm:$0xff]
    %v4242 = vld [vmem:[%s14 + $0x1b0] sm:$0xff]
    %v4243 = vld [vmem:[%s14 + $0x1b8] sm:$0xff]
    %v4244 = vld [vmem:[%s14 + $0x1c0] sm:$0xff]
    %v4245 = vld [vmem:[%s14 + $0x1c8] sm:$0xff]
    %v4246 = vld [vmem:[%s14 + $0x1d0] sm:$0xff]
    %v4247 = vld [vmem:[%s14 + $0x1d8] sm:$0xff]
    %v4248 = vld [vmem:[%s14 + $0x1e0] sm:$0xff]
    %v4249 = vld [vmem:[%s14 + $0x1e8] sm:$0xff]
    %v4250 = vld [vmem:[%s14 + $0x1f0] sm:$0xff]
    %v4251 = vld [vmem:[%s14 + $0x1f8] sm:$0xff]
    %v4252 = vld [vmem:[%s15] sm:$0x1]
    %v4254 = vlaneseq
    %v4255 = vshrl.u32 %v4254, 7
    %v4256 = vsub.s32 0, %v4255
    %v4257 = vrot.slane %v4187, %v4256
    %v4258 = vlaneseq
    %v4259 = vshrl.u32 %v4258, 7
    %v4260 = vsub.s32 1, %v4259
    %v4261 = vrot.slane %v4187, %v4260
    %v4262 = vlaneseq
    %v4263 = vshrl.u32 %v4262, 7
    %v4264 = vsub.s32 2, %v4263
    %v4265 = vrot.slane %v4187, %v4264
    %v4266 = vlaneseq
    %v4267 = vshrl.u32 %v4266, 7
    %v4268 = vsub.s32 3, %v4267
    %v4269 = vrot.slane %v4187, %v4268
    %4274 = vmatprep.subr.mxu0 0.0
    %4275 = vmatpush1.msra.mxu0 0.0
    %4276 = vmatprep.subr.mxu0 0.0
    %4277 = vmatpush1.msra.mxu0 0.0
    %4278 = vmatprep.subr.mxu0 0.0
    %4279 = vmatpush1.msra.mxu0 0.0
    %4280 = vmatprep.subr.mxu0 0.0
    %4281 = vmatpush1.msra.mxu0 0.0
    %4282 = vmatprep.subr.mxu0 0.0
    %4283 = vmatpush1.msra.mxu0 0.0
    %4284 = vmatprep.subr.mxu0 0.0
    %4285 = vmatpush1.msra.mxu0 0.0
    %4286 = vmatprep.subr.mxu0 0.0
    %4287 = vmatpush1.msra.mxu0 0.0
    %4288 = vmatprep.subr.mxu0 0.0
    %4289 = vmatpush1.msra.mxu0 0.0
    %4290 = vmatprep.subr.mxu0 0.0
    %4291 = vmatpush1.msra.mxu0 0.0
    %4292 = vmatprep.subr.mxu0 0.0
    %4293 = vmatpush1.msra.mxu0 0.0
    %4294 = vmatprep.subr.mxu0 0.0
    %4295 = vmatpush1.msra.mxu0 0.0
    %4296 = vmatprep.subr.mxu0 0.0
    %4297 = vmatpush1.msra.mxu0 0.0
    %4298 = vmatprep.subr.mxu0 %v4184
    %4299 = vmatpush1.msra.mxu0 %v4183
    %4300 = vmatprep.subr.mxu0 %v4180
    %4301 = vmatpush1.msra.mxu0 %v4179
    %4302 = vmatprep.subr.mxu0 %v4176
    %4303 = vmatpush1.msra.mxu0 %v4175
    %4304 = vmatprep.subr.mxu0 %v4172
    %4305 = vmatpush1.msra.mxu0 %v4171
    %4306 = vmatprep.subr.mxu0 0.0
    %4307 = vmatpush2.msra.mxu0 0.0
    %4308 = vmatprep.subr.mxu0 0.0
    %4309 = vmatpush2.msra.mxu0 0.0
    %4310 = vmatprep.subr.mxu0 0.0
    %4311 = vmatpush2.msra.mxu0 0.0
    %4312 = vmatprep.subr.mxu0 0.0
    %4313 = vmatpush2.msra.mxu0 0.0
    %4314 = vmatprep.subr.mxu0 0.0
    %4315 = vmatpush2.msra.mxu0 0.0
    %4316 = vmatprep.subr.mxu0 0.0
    %4317 = vmatpush2.msra.mxu0 0.0
    %4318 = vmatprep.subr.mxu0 0.0
    %4319 = vmatpush2.msra.mxu0 0.0
    %4320 = vmatprep.subr.mxu0 0.0
    %4321 = vmatpush2.msra.mxu0 0.0
    %4322 = vmatprep.subr.mxu0 0.0
    %4323 = vmatpush2.msra.mxu0 0.0
    %4324 = vmatprep.subr.mxu0 0.0
    %4325 = vmatpush2.msra.mxu0 0.0
    %4326 = vmatprep.subr.mxu0 0.0
    %4327 = vmatpush2.msra.mxu0 0.0
    %4328 = vmatprep.subr.mxu0 0.0
    %4329 = vmatpush2.msra.mxu0 0.0
    %4330 = vmatprep.subr.mxu0 0.0
    %4331 = vmatpush2.msra.mxu0 0.0
    %4332 = vmatprep.subr.mxu0 0.0
    %4333 = vmatpush2.msra.mxu0 0.0
    %4334 = vmatprep.subr.mxu0 0.0
    %4335 = vmatpush2.msra.mxu0 0.0
    %4336 = vmatprep.subr.mxu0 0.0
    %4337 = vmatpush2.msra.mxu0 0.0
    %4338 = vmatprep.mubr.f32.mxu0 0.0
    %4339 = vmatmul.mubr.f32.gmra.mxu0 %v2388
    %v4340 = vpop.f32.mrf.mxu0
    %v4341 = vadd.f32 %v4257, %v4340
    %v4342 = vpop.f32.mrf.mxu0
    %v4343 = vadd.f32 %v4261, %v4342
    %4344 = vdwg.mxu0
    %4345 = vmatprep.subr.mxu0 0.0
    %4346 = vmatpush1.msra.mxu0 0.0
    %4347 = vmatprep.subr.mxu0 0.0
    %4348 = vmatpush1.msra.mxu0 0.0
    %4349 = vmatprep.subr.mxu0 0.0
    %4350 = vmatpush1.msra.mxu0 0.0
    %4351 = vmatprep.subr.mxu0 0.0
    %4352 = vmatpush1.msra.mxu0 0.0
    %4353 = vmatprep.subr.mxu0 0.0
    %4354 = vmatpush1.msra.mxu0 0.0
    %4355 = vmatprep.subr.mxu0 0.0
    %4356 = vmatpush1.msra.mxu0 0.0
    %4357 = vmatprep.subr.mxu0 0.0
    %4358 = vmatpush1.msra.mxu0 0.0
    %4359 = vmatprep.subr.mxu0 0.0
    %4360 = vmatpush1.msra.mxu0 0.0
    %4361 = vmatprep.subr.mxu0 0.0
    %4362 = vmatpush1.msra.mxu0 0.0
    %4363 = vmatprep.subr.mxu0 0.0
    %4364 = vmatpush1.msra.mxu0 0.0
    %4365 = vmatprep.subr.mxu0 0.0
    %4366 = vmatpush1.msra.mxu0 0.0
    %4367 = vmatprep.subr.mxu0 0.0
    %4368 = vmatpush1.msra.mxu0 0.0
    %4369 = vmatprep.subr.mxu0 %v4186
    %4370 = vmatpush1.msra.mxu0 %v4185
    %4371 = vmatprep.subr.mxu0 %v4182
    %4372 = vmatpush1.msra.mxu0 %v4181
    %4373 = vmatprep.subr.mxu0 %v4178
    %4374 = vmatpush1.msra.mxu0 %v4177
    %4375 = vmatprep.subr.mxu0 %v4174
    %4376 = vmatpush1.msra.mxu0 %v4173
    %4377 = vmatprep.subr.mxu0 0.0
    %4378 = vmatpush2.msra.mxu0 0.0
    %4379 = vmatprep.subr.mxu0 0.0
    %4380 = vmatpush2.msra.mxu0 0.0
    %4381 = vmatprep.subr.mxu0 0.0
    %4382 = vmatpush2.msra.mxu0 0.0
    %4383 = vmatprep.subr.mxu0 0.0
    %4384 = vmatpush2.msra.mxu0 0.0
    %4385 = vmatprep.subr.mxu0 0.0
    %4386 = vmatpush2.msra.mxu0 0.0
    %4387 = vmatprep.subr.mxu0 0.0
    %4388 = vmatpush2.msra.mxu0 0.0
    %4389 = vmatprep.subr.mxu0 0.0
    %4390 = vmatpush2.msra.mxu0 0.0
    %4391 = vmatprep.subr.mxu0 0.0
    %4392 = vmatpush2.msra.mxu0 0.0
    %4393 = vmatprep.subr.mxu0 0.0
    %4394 = vmatpush2.msra.mxu0 0.0
    %4395 = vmatprep.subr.mxu0 0.0
    %4396 = vmatpush2.msra.mxu0 0.0
    %4397 = vmatprep.subr.mxu0 0.0
    %4398 = vmatpush2.msra.mxu0 0.0
    %4399 = vmatprep.subr.mxu0 0.0
    %4400 = vmatpush2.msra.mxu0 0.0
    %4401 = vmatprep.subr.mxu0 0.0
    %4402 = vmatpush2.msra.mxu0 0.0
    %4403 = vmatprep.subr.mxu0 0.0
    %4404 = vmatpush2.msra.mxu0 0.0
    %4405 = vmatprep.subr.mxu0 0.0
    %4406 = vmatpush2.msra.mxu0 0.0
    %4407 = vmatprep.subr.mxu0 0.0
    %4408 = vmatpush2.msra.mxu0 0.0
    %4409 = vmatprep.mubr.f32.mxu0 0.0
    %4410 = vmatmul.mubr.f32.gmra.mxu0 %v2388
    %v4411 = vpop.f32.mrf.mxu0
    %v4412 = vadd.f32 %v4265, %v4411
    %v4413 = vpop.f32.mrf.mxu0
    %v4414 = vadd.f32 %v4269, %v4413
    %4415 = vdwg.mxu0
    %v4416 = vmax.f32 %v4341, 0.0
    %v4417 = vmax.f32 %v4343, 0.0
    %v4418 = vmax.f32 %v4412, 0.0
    %v4419 = vmax.f32 %v4414, 0.0
    %v4421 = vlaneseq
    %v4422 = vshrl.u32 %v4421, 7
    %v4423 = vsub.s32 0, %v4422
    %v4424 = vrot.slane %v4252, %v4423
    %4426 = vmatprep.subr.mxu0 0.0
    %4427 = vmatpush1.msra.mxu0 %v4203
    %4428 = vmatprep.subr.mxu0 0.0
    %4429 = vmatpush1.msra.mxu0 %v4202
    %4430 = vmatprep.subr.mxu0 0.0
    %4431 = vmatpush1.msra.mxu0 %v4201
    %4432 = vmatprep.subr.mxu0 0.0
    %4433 = vmatpush1.msra.mxu0 %v4200
    %4434 = vmatprep.subr.mxu0 0.0
    %4435 = vmatpush1.msra.mxu0 %v4199
    %4436 = vmatprep.subr.mxu0 0.0
    %4437 = vmatpush1.msra.mxu0 %v4198
    %4438 = vmatprep.subr.mxu0 0.0
    %4439 = vmatpush1.msra.mxu0 %v4197
    %4440 = vmatprep.subr.mxu0 0.0
    %4441 = vmatpush1.msra.mxu0 %v4196
    %4442 = vmatprep.subr.mxu0 0.0
    %4443 = vmatpush1.msra.mxu0 %v4195
    %4444 = vmatprep.subr.mxu0 0.0
    %4445 = vmatpush1.msra.mxu0 %v4194
    %4446 = vmatprep.subr.mxu0 0.0
    %4447 = vmatpush1.msra.mxu0 %v4193
    %4448 = vmatprep.subr.mxu0 0.0
    %4449 = vmatpush1.msra.mxu0 %v4192
    %4450 = vmatprep.subr.mxu0 0.0
    %4451 = vmatpush1.msra.mxu0 %v4191
    %4452 = vmatprep.subr.mxu0 0.0
    %4453 = vmatpush1.msra.mxu0 %v4190
    %4454 = vmatprep.subr.mxu0 0.0
    %4455 = vmatpush1.msra.mxu0 %v4189
    %4456 = vmatprep.subr.mxu0 0.0
    %4457 = vmatpush1.msra.mxu0 %v4188
    %4458 = vmatprep.subr.mxu0 0.0
    %4459 = vmatpush2.msra.mxu0 %v4219
    %4460 = vmatprep.subr.mxu0 0.0
    %4461 = vmatpush2.msra.mxu0 %v4218
    %4462 = vmatprep.subr.mxu0 0.0
    %4463 = vmatpush2.msra.mxu0 %v4217
    %4464 = vmatprep.subr.mxu0 0.0
    %4465 = vmatpush2.msra.mxu0 %v4216
    %4466 = vmatprep.subr.mxu0 0.0
    %4467 = vmatpush2.msra.mxu0 %v4215
    %4468 = vmatprep.subr.mxu0 0.0
    %4469 = vmatpush2.msra.mxu0 %v4214
    %4470 = vmatprep.subr.mxu0 0.0
    %4471 = vmatpush2.msra.mxu0 %v4213
    %4472 = vmatprep.subr.mxu0 0.0
    %4473 = vmatpush2.msra.mxu0 %v4212
    %4474 = vmatprep.subr.mxu0 0.0
    %4475 = vmatpush2.msra.mxu0 %v4211
    %4476 = vmatprep.subr.mxu0 0.0
    %4477 = vmatpush2.msra.mxu0 %v4210
    %4478 = vmatprep.subr.mxu0 0.0
    %4479 = vmatpush2.msra.mxu0 %v4209
    %4480 = vmatprep.subr.mxu0 0.0
    %4481 = vmatpush2.msra.mxu0 %v4208
    %4482 = vmatprep.subr.mxu0 0.0
    %4483 = vmatpush2.msra.mxu0 %v4207
    %4484 = vmatprep.subr.mxu0 0.0
    %4485 = vmatpush2.msra.mxu0 %v4206
    %4486 = vmatprep.subr.mxu0 0.0
    %4487 = vmatpush2.msra.mxu0 %v4205
    %4488 = vmatprep.subr.mxu0 0.0
    %4489 = vmatpush2.msra.mxu0 %v4204
    %4490 = vmatprep.mubr.f32.mxu0 %v4417
    %4491 = vmatmul.mubr.f32.gmra.mxu0 %v4416
    %v4492 = vpop.f32.mrf.mxu0
    %v4493 = vadd.f32 %v4424, %v4492
    %v4494 = vpop.f32.mrf.mxu0
    %4495 = vdwg.mxu0
    %4496 = vmatprep.subr.mxu0 0.0
    %4497 = vmatpush1.msra.mxu0 %v4235
    %4498 = vmatprep.subr.mxu0 0.0
    %4499 = vmatpush1.msra.mxu0 %v4234
    %4500 = vmatprep.subr.mxu0 0.0
    %4501 = vmatpush1.msra.mxu0 %v4233
    %4502 = vmatprep.subr.mxu0 0.0
    %4503 = vmatpush1.msra.mxu0 %v4232
    %4504 = vmatprep.subr.mxu0 0.0
    %4505 = vmatpush1.msra.mxu0 %v4231
    %4506 = vmatprep.subr.mxu0 0.0
    %4507 = vmatpush1.msra.mxu0 %v4230
    %4508 = vmatprep.subr.mxu0 0.0
    %4509 = vmatpush1.msra.mxu0 %v4229
    %4510 = vmatprep.subr.mxu0 0.0
    %4511 = vmatpush1.msra.mxu0 %v4228
    %4512 = vmatprep.subr.mxu0 0.0
    %4513 = vmatpush1.msra.mxu0 %v4227
    %4514 = vmatprep.subr.mxu0 0.0
    %4515 = vmatpush1.msra.mxu0 %v4226
    %4516 = vmatprep.subr.mxu0 0.0
    %4517 = vmatpush1.msra.mxu0 %v4225
    %4518 = vmatprep.subr.mxu0 0.0
    %4519 = vmatpush1.msra.mxu0 %v4224
    %4520 = vmatprep.subr.mxu0 0.0
    %4521 = vmatpush1.msra.mxu0 %v4223
    %4522 = vmatprep.subr.mxu0 0.0
    %4523 = vmatpush1.msra.mxu0 %v4222
    %4524 = vmatprep.subr.mxu0 0.0
    %4525 = vmatpush1.msra.mxu0 %v4221
    %4526 = vmatprep.subr.mxu0 0.0
    %4527 = vmatpush1.msra.mxu0 %v4220
    %4528 = vmatprep.subr.mxu0 0.0
    %4529 = vmatpush2.msra.mxu0 %v4251
    %4530 = vmatprep.subr.mxu0 0.0
    %4531 = vmatpush2.msra.mxu0 %v4250
    %4532 = vmatprep.subr.mxu0 0.0
    %4533 = vmatpush2.msra.mxu0 %v4249
    %4534 = vmatprep.subr.mxu0 0.0
    %4535 = vmatpush2.msra.mxu0 %v4248
    %4536 = vmatprep.subr.mxu0 0.0
    %4537 = vmatpush2.msra.mxu0 %v4247
    %4538 = vmatprep.subr.mxu0 0.0
    %4539 = vmatpush2.msra.mxu0 %v4246
    %4540 = vmatprep.subr.mxu0 0.0
    %4541 = vmatpush2.msra.mxu0 %v4245
    %4542 = vmatprep.subr.mxu0 0.0
    %4543 = vmatpush2.msra.mxu0 %v4244
    %4544 = vmatprep.subr.mxu0 0.0
    %4545 = vmatpush2.msra.mxu0 %v4243
    %4546 = vmatprep.subr.mxu0 0.0
    %4547 = vmatpush2.msra.mxu0 %v4242
    %4548 = vmatprep.subr.mxu0 0.0
    %4549 = vmatpush2.msra.mxu0 %v4241
    %4550 = vmatprep.subr.mxu0 0.0
    %4551 = vmatpush2.msra.mxu0 %v4240
    %4552 = vmatprep.subr.mxu0 0.0
    %4553 = vmatpush2.msra.mxu0 %v4239
    %4554 = vmatprep.subr.mxu0 0.0
    %4555 = vmatpush2.msra.mxu0 %v4238
    %4556 = vmatprep.subr.mxu0 0.0
    %4557 = vmatpush2.msra.mxu0 %v4237
    %4558 = vmatprep.subr.mxu0 0.0
    %4559 = vmatpush2.msra.mxu0 %v4236
    %4560 = vmatprep.mubr.f32.mxu0 %v4419
    %4561 = vmatmul.mubr.f32.gmra.mxu0 %v4418
    %v4562 = vpop.f32.mrf.mxu0
    %v4563 = vadd.f32 %v4493, %v4562
    %v4564 = vpop.f32.mrf.mxu0
    %4565 = vdwg.mxu0
    %4566 = vst [vmem:[%s16] sm:$0x3] %v4563
    %4567 = vmatprep.subr.mxu0 0.0
    %4568 = vmatpush1.msra.mxu0 0.0
    %4569 = vmatprep.subr.mxu0 0.0
    %4570 = vmatpush1.msra.mxu0 0.0
    %4571 = vmatprep.subr.mxu0 0.0
    %4572 = vmatpush1.msra.mxu0 0.0
    %4573 = vmatprep.subr.mxu0 0.0
    %4574 = vmatpush1.msra.mxu0 0.0
    %4575 = vmatprep.subr.mxu0 0.0
    %4576 = vmatpush1.msra.mxu0 0.0
    %4577 = vmatprep.subr.mxu0 0.0
    %4578 = vmatpush1.msra.mxu0 0.0
    %4579 = vmatprep.subr.mxu0 0.0
    %4580 = vmatpush1.msra.mxu0 0.0
    %4581 = vmatprep.subr.mxu0 0.0
    %4582 = vmatpush1.msra.mxu0 0.0
    %4583 = vmatprep.subr.mxu0 0.0
    %4584 = vmatpush1.msra.mxu0 0.0
    %4585 = vmatprep.subr.mxu0 0.0
    %4586 = vmatpush1.msra.mxu0 0.0
    %4587 = vmatprep.subr.mxu0 0.0
    %4588 = vmatpush1.msra.mxu0 0.0
    %4589 = vmatprep.subr.mxu0 0.0
    %4590 = vmatpush1.msra.mxu0 0.0
    %4591 = vmatprep.subr.mxu0 %v4184
    %4592 = vmatpush1.msra.mxu0 %v4183
    %4593 = vmatprep.subr.mxu0 %v4180
    %4594 = vmatpush1.msra.mxu0 %v4179
    %4595 = vmatprep.subr.mxu0 %v4176
    %4596 = vmatpush1.msra.mxu0 %v4175
    %4597 = vmatprep.subr.mxu0 %v4172
    %4598 = vmatpush1.msra.mxu0 %v4171
    %4599 = vmatprep.subr.mxu0 0.0
    %4600 = vmatpush2.msra.mxu0 0.0
    %4601 = vmatprep.subr.mxu0 0.0
    %4602 = vmatpush2.msra.mxu0 0.0
    %4603 = vmatprep.subr.mxu0 0.0
    %4604 = vmatpush2.msra.mxu0 0.0
    %4605 = vmatprep.subr.mxu0 0.0
    %4606 = vmatpush2.msra.mxu0 0.0
    %4607 = vmatprep.subr.mxu0 0.0
    %4608 = vmatpush2.msra.mxu0 0.0
    %4609 = vmatprep.subr.mxu0 0.0
    %4610 = vmatpush2.msra.mxu0 0.0
    %4611 = vmatprep.subr.mxu0 0.0
    %4612 = vmatpush2.msra.mxu0 0.0
    %4613 = vmatprep.subr.mxu0 0.0
    %4614 = vmatpush2.msra.mxu0 0.0
    %4615 = vmatprep.subr.mxu0 0.0
    %4616 = vmatpush2.msra.mxu0 0.0
    %4617 = vmatprep.subr.mxu0 0.0
    %4618 = vmatpush2.msra.mxu0 0.0
    %4619 = vmatprep.subr.mxu0 0.0
    %4620 = vmatpush2.msra.mxu0 0.0
    %4621 = vmatprep.subr.mxu0 0.0
    %4622 = vmatpush2.msra.mxu0 0.0
    %4623 = vmatprep.subr.mxu0 0.0
    %4624 = vmatpush2.msra.mxu0 0.0
    %4625 = vmatprep.subr.mxu0 0.0
    %4626 = vmatpush2.msra.mxu0 0.0
    %4627 = vmatprep.subr.mxu0 0.0
    %4628 = vmatpush2.msra.mxu0 0.0
    %4629 = vmatprep.subr.mxu0 0.0
    %4630 = vmatpush2.msra.mxu0 0.0
    %4631 = vmatprep.mubr.f32.mxu0 0.0
    %4632 = vmatmul.mubr.f32.gmra.mxu0 %v2567
    %v4633 = vpop.f32.mrf.mxu0
    %v4634 = vadd.f32 %v4257, %v4633
    %v4635 = vpop.f32.mrf.mxu0
    %v4636 = vadd.f32 %v4261, %v4635
    %4637 = vdwg.mxu0
    %4638 = vmatprep.subr.mxu0 0.0
    %4639 = vmatpush1.msra.mxu0 0.0
    %4640 = vmatprep.subr.mxu0 0.0
    %4641 = vmatpush1.msra.mxu0 0.0
    %4642 = vmatprep.subr.mxu0 0.0
    %4643 = vmatpush1.msra.mxu0 0.0
    %4644 = vmatprep.subr.mxu0 0.0
    %4645 = vmatpush1.msra.mxu0 0.0
    %4646 = vmatprep.subr.mxu0 0.0
    %4647 = vmatpush1.msra.mxu0 0.0
    %4648 = vmatprep.subr.mxu0 0.0
    %4649 = vmatpush1.msra.mxu0 0.0
    %4650 = vmatprep.subr.mxu0 0.0
    %4651 = vmatpush1.msra.mxu0 0.0
    %4652 = vmatprep.subr.mxu0 0.0
    %4653 = vmatpush1.msra.mxu0 0.0
    %4654 = vmatprep.subr.mxu0 0.0
    %4655 = vmatpush1.msra.mxu0 0.0
    %4656 = vmatprep.subr.mxu0 0.0
    %4657 = vmatpush1.msra.mxu0 0.0
    %4658 = vmatprep.subr.mxu0 0.0
    %4659 = vmatpush1.msra.mxu0 0.0
    %4660 = vmatprep.subr.mxu0 0.0
    %4661 = vmatpush1.msra.mxu0 0.0
    %4662 = vmatprep.subr.mxu0 %v4186
    %4663 = vmatpush1.msra.mxu0 %v4185
    %4664 = vmatprep.subr.mxu0 %v4182
    %4665 = vmatpush1.msra.mxu0 %v4181
    %4666 = vmatprep.subr.mxu0 %v4178
    %4667 = vmatpush1.msra.mxu0 %v4177
    %4668 = vmatprep.subr.mxu0 %v4174
    %4669 = vmatpush1.msra.mxu0 %v4173
    %4670 = vmatprep.subr.mxu0 0.0
    %4671 = vmatpush2.msra.mxu0 0.0
    %4672 = vmatprep.subr.mxu0 0.0
    %4673 = vmatpush2.msra.mxu0 0.0
    %4674 = vmatprep.subr.mxu0 0.0
    %4675 = vmatpush2.msra.mxu0 0.0
    %4676 = vmatprep.subr.mxu0 0.0
    %4677 = vmatpush2.msra.mxu0 0.0
    %4678 = vmatprep.subr.mxu0 0.0
    %4679 = vmatpush2.msra.mxu0 0.0
    %4680 = vmatprep.subr.mxu0 0.0
    %4681 = vmatpush2.msra.mxu0 0.0
    %4682 = vmatprep.subr.mxu0 0.0
    %4683 = vmatpush2.msra.mxu0 0.0
    %4684 = vmatprep.subr.mxu0 0.0
    %4685 = vmatpush2.msra.mxu0 0.0
    %4686 = vmatprep.subr.mxu0 0.0
    %4687 = vmatpush2.msra.mxu0 0.0
    %4688 = vmatprep.subr.mxu0 0.0
    %4689 = vmatpush2.msra.mxu0 0.0
    %4690 = vmatprep.subr.mxu0 0.0
    %4691 = vmatpush2.msra.mxu0 0.0
    %4692 = vmatprep.subr.mxu0 0.0
    %4693 = vmatpush2.msra.mxu0 0.0
    %4694 = vmatprep.subr.mxu0 0.0
    %4695 = vmatpush2.msra.mxu0 0.0
    %4696 = vmatprep.subr.mxu0 0.0
    %4697 = vmatpush2.msra.mxu0 0.0
    %4698 = vmatprep.subr.mxu0 0.0
    %4699 = vmatpush2.msra.mxu0 0.0
    %4700 = vmatprep.subr.mxu0 0.0
    %4701 = vmatpush2.msra.mxu0 0.0
    %4702 = vmatprep.mubr.f32.mxu0 0.0
    %4703 = vmatmul.mubr.f32.gmra.mxu0 %v2567
    %v4704 = vpop.f32.mrf.mxu0
    %v4705 = vadd.f32 %v4265, %v4704
    %v4706 = vpop.f32.mrf.mxu0
    %v4707 = vadd.f32 %v4269, %v4706
    %4708 = vdwg.mxu0
    %v4709 = vmax.f32 %v4634, 0.0
    %v4710 = vmax.f32 %v4636, 0.0
    %v4711 = vmax.f32 %v4705, 0.0
    %v4712 = vmax.f32 %v4707, 0.0
    %4713 = vmatprep.subr.mxu0 0.0
    %4714 = vmatpush1.msra.mxu0 %v4203
    %4715 = vmatprep.subr.mxu0 0.0
    %4716 = vmatpush1.msra.mxu0 %v4202
    %4717 = vmatprep.subr.mxu0 0.0
    %4718 = vmatpush1.msra.mxu0 %v4201
    %4719 = vmatprep.subr.mxu0 0.0
    %4720 = vmatpush1.msra.mxu0 %v4200
    %4721 = vmatprep.subr.mxu0 0.0
    %4722 = vmatpush1.msra.mxu0 %v4199
    %4723 = vmatprep.subr.mxu0 0.0
    %4724 = vmatpush1.msra.mxu0 %v4198
    %4725 = vmatprep.subr.mxu0 0.0
    %4726 = vmatpush1.msra.mxu0 %v4197
    %4727 = vmatprep.subr.mxu0 0.0
    %4728 = vmatpush1.msra.mxu0 %v4196
    %4729 = vmatprep.subr.mxu0 0.0
    %4730 = vmatpush1.msra.mxu0 %v4195
    %4731 = vmatprep.subr.mxu0 0.0
    %4732 = vmatpush1.msra.mxu0 %v4194
    %4733 = vmatprep.subr.mxu0 0.0
    %4734 = vmatpush1.msra.mxu0 %v4193
    %4735 = vmatprep.subr.mxu0 0.0
    %4736 = vmatpush1.msra.mxu0 %v4192
    %4737 = vmatprep.subr.mxu0 0.0
    %4738 = vmatpush1.msra.mxu0 %v4191
    %4739 = vmatprep.subr.mxu0 0.0
    %4740 = vmatpush1.msra.mxu0 %v4190
    %4741 = vmatprep.subr.mxu0 0.0
    %4742 = vmatpush1.msra.mxu0 %v4189
    %4743 = vmatprep.subr.mxu0 0.0
    %4744 = vmatpush1.msra.mxu0 %v4188
    %4745 = vmatprep.subr.mxu0 0.0
    %4746 = vmatpush2.msra.mxu0 %v4219
    %4747 = vmatprep.subr.mxu0 0.0
    %4748 = vmatpush2.msra.mxu0 %v4218
    %4749 = vmatprep.subr.mxu0 0.0
    %4750 = vmatpush2.msra.mxu0 %v4217
    %4751 = vmatprep.subr.mxu0 0.0
    %4752 = vmatpush2.msra.mxu0 %v4216
    %4753 = vmatprep.subr.mxu0 0.0
    %4754 = vmatpush2.msra.mxu0 %v4215
    %4755 = vmatprep.subr.mxu0 0.0
    %4756 = vmatpush2.msra.mxu0 %v4214
    %4757 = vmatprep.subr.mxu0 0.0
    %4758 = vmatpush2.msra.mxu0 %v4213
    %4759 = vmatprep.subr.mxu0 0.0
    %4760 = vmatpush2.msra.mxu0 %v4212
    %4761 = vmatprep.subr.mxu0 0.0
    %4762 = vmatpush2.msra.mxu0 %v4211
    %4763 = vmatprep.subr.mxu0 0.0
    %4764 = vmatpush2.msra.mxu0 %v4210
    %4765 = vmatprep.subr.mxu0 0.0
    %4766 = vmatpush2.msra.mxu0 %v4209
    %4767 = vmatprep.subr.mxu0 0.0
    %4768 = vmatpush2.msra.mxu0 %v4208
    %4769 = vmatprep.subr.mxu0 0.0
    %4770 = vmatpush2.msra.mxu0 %v4207
    %4771 = vmatprep.subr.mxu0 0.0
    %4772 = vmatpush2.msra.mxu0 %v4206
    %4773 = vmatprep.subr.mxu0 0.0
    %4774 = vmatpush2.msra.mxu0 %v4205
    %4775 = vmatprep.subr.mxu0 0.0
    %4776 = vmatpush2.msra.mxu0 %v4204
    %4777 = vmatprep.mubr.f32.mxu0 %v4710
    %4778 = vmatmul.mubr.f32.gmra.mxu0 %v4709
    %v4779 = vpop.f32.mrf.mxu0
    %v4780 = vadd.f32 %v4424, %v4779
    %v4781 = vpop.f32.mrf.mxu0
    %4782 = vdwg.mxu0
    %4783 = vmatprep.subr.mxu0 0.0
    %4784 = vmatpush1.msra.mxu0 %v4235
    %4785 = vmatprep.subr.mxu0 0.0
    %4786 = vmatpush1.msra.mxu0 %v4234
    %4787 = vmatprep.subr.mxu0 0.0
    %4788 = vmatpush1.msra.mxu0 %v4233
    %4789 = vmatprep.subr.mxu0 0.0
    %4790 = vmatpush1.msra.mxu0 %v4232
    %4791 = vmatprep.subr.mxu0 0.0
    %4792 = vmatpush1.msra.mxu0 %v4231
    %4793 = vmatprep.subr.mxu0 0.0
    %4794 = vmatpush1.msra.mxu0 %v4230
    %4795 = vmatprep.subr.mxu0 0.0
    %4796 = vmatpush1.msra.mxu0 %v4229
    %4797 = vmatprep.subr.mxu0 0.0
    %4798 = vmatpush1.msra.mxu0 %v4228
    %4799 = vmatprep.subr.mxu0 0.0
    %4800 = vmatpush1.msra.mxu0 %v4227
    %4801 = vmatprep.subr.mxu0 0.0
    %4802 = vmatpush1.msra.mxu0 %v4226
    %4803 = vmatprep.subr.mxu0 0.0
    %4804 = vmatpush1.msra.mxu0 %v4225
    %4805 = vmatprep.subr.mxu0 0.0
    %4806 = vmatpush1.msra.mxu0 %v4224
    %4807 = vmatprep.subr.mxu0 0.0
    %4808 = vmatpush1.msra.mxu0 %v4223
    %4809 = vmatprep.subr.mxu0 0.0
    %4810 = vmatpush1.msra.mxu0 %v4222
    %4811 = vmatprep.subr.mxu0 0.0
    %4812 = vmatpush1.msra.mxu0 %v4221
    %4813 = vmatprep.subr.mxu0 0.0
    %4814 = vmatpush1.msra.mxu0 %v4220
    %4815 = vmatprep.subr.mxu0 0.0
    %4816 = vmatpush2.msra.mxu0 %v4251
    %4817 = vmatprep.subr.mxu0 0.0
    %4818 = vmatpush2.msra.mxu0 %v4250
    %4819 = vmatprep.subr.mxu0 0.0
    %4820 = vmatpush2.msra.mxu0 %v4249
    %4821 = vmatprep.subr.mxu0 0.0
    %4822 = vmatpush2.msra.mxu0 %v4248
    %4823 = vmatprep.subr.mxu0 0.0
    %4824 = vmatpush2.msra.mxu0 %v4247
    %4825 = vmatprep.subr.mxu0 0.0
    %4826 = vmatpush2.msra.mxu0 %v4246
    %4827 = vmatprep.subr.mxu0 0.0
    %4828 = vmatpush2.msra.mxu0 %v4245
    %4829 = vmatprep.subr.mxu0 0.0
    %4830 = vmatpush2.msra.mxu0 %v4244
    %4831 = vmatprep.subr.mxu0 0.0
    %4832 = vmatpush2.msra.mxu0 %v4243
    %4833 = vmatprep.subr.mxu0 0.0
    %4834 = vmatpush2.msra.mxu0 %v4242
    %4835 = vmatprep.subr.mxu0 0.0
    %4836 = vmatpush2.msra.mxu0 %v4241
    %4837 = vmatprep.subr.mxu0 0.0
    %4838 = vmatpush2.msra.mxu0 %v4240
    %4839 = vmatprep.subr.mxu0 0.0
    %4840 = vmatpush2.msra.mxu0 %v4239
    %4841 = vmatprep.subr.mxu0 0.0
    %4842 = vmatpush2.msra.mxu0 %v4238
    %4843 = vmatprep.subr.mxu0 0.0
    %4844 = vmatpush2.msra.mxu0 %v4237
    %4845 = vmatprep.subr.mxu0 0.0
    %4846 = vmatpush2.msra.mxu0 %v4236
    %4847 = vmatprep.mubr.f32.mxu0 %v4712
    %4848 = vmatmul.mubr.f32.gmra.mxu0 %v4711
    %v4849 = vpop.f32.mrf.mxu0
    %v4850 = vadd.f32 %v4780, %v4849
    %v4851 = vpop.f32.mrf.mxu0
    %4852 = vdwg.mxu0
    %4853 = vst [vmem:[%s17] sm:$0xff] %v4850
    %4854 = vmatprep.subr.mxu0 0.0
    %4855 = vmatpush1.msra.mxu0 0.0
    %4856 = vmatprep.subr.mxu0 0.0
    %4857 = vmatpush1.msra.mxu0 0.0
    %4858 = vmatprep.subr.mxu0 0.0
    %4859 = vmatpush1.msra.mxu0 0.0
    %4860 = vmatprep.subr.mxu0 0.0
    %4861 = vmatpush1.msra.mxu0 0.0
    %4862 = vmatprep.subr.mxu0 0.0
    %4863 = vmatpush1.msra.mxu0 0.0
    %4864 = vmatprep.subr.mxu0 0.0
    %4865 = vmatpush1.msra.mxu0 0.0
    %4866 = vmatprep.subr.mxu0 0.0
    %4867 = vmatpush1.msra.mxu0 0.0
    %4868 = vmatprep.subr.mxu0 0.0
    %4869 = vmatpush1.msra.mxu0 0.0
    %4870 = vmatprep.subr.mxu0 0.0
    %4871 = vmatpush1.msra.mxu0 0.0
    %4872 = vmatprep.subr.mxu0 0.0
    %4873 = vmatpush1.msra.mxu0 0.0
    %4874 = vmatprep.subr.mxu0 0.0
    %4875 = vmatpush1.msra.mxu0 0.0
    %4876 = vmatprep.subr.mxu0 0.0
    %4877 = vmatpush1.msra.mxu0 0.0
    %4878 = vmatprep.subr.mxu0 %v4184
    %4879 = vmatpush1.msra.mxu0 %v4183
    %4880 = vmatprep.subr.mxu0 %v4180
    %4881 = vmatpush1.msra.mxu0 %v4179
    %4882 = vmatprep.subr.mxu0 %v4176
    %4883 = vmatpush1.msra.mxu0 %v4175
    %4884 = vmatprep.subr.mxu0 %v4172
    %4885 = vmatpush1.msra.mxu0 %v4171
    %4886 = vmatprep.subr.mxu0 0.0
    %4887 = vmatpush2.msra.mxu0 0.0
    %4888 = vmatprep.subr.mxu0 0.0
    %4889 = vmatpush2.msra.mxu0 0.0
    %4890 = vmatprep.subr.mxu0 0.0
    %4891 = vmatpush2.msra.mxu0 0.0
    %4892 = vmatprep.subr.mxu0 0.0
    %4893 = vmatpush2.msra.mxu0 0.0
    %4894 = vmatprep.subr.mxu0 0.0
    %4895 = vmatpush2.msra.mxu0 0.0
    %4896 = vmatprep.subr.mxu0 0.0
    %4897 = vmatpush2.msra.mxu0 0.0
    %4898 = vmatprep.subr.mxu0 0.0
    %4899 = vmatpush2.msra.mxu0 0.0
    %4900 = vmatprep.subr.mxu0 0.0
    %4901 = vmatpush2.msra.mxu0 0.0
    %4902 = vmatprep.subr.mxu0 0.0
    %4903 = vmatpush2.msra.mxu0 0.0
    %4904 = vmatprep.subr.mxu0 0.0
    %4905 = vmatpush2.msra.mxu0 0.0
    %4906 = vmatprep.subr.mxu0 0.0
    %4907 = vmatpush2.msra.mxu0 0.0
    %4908 = vmatprep.subr.mxu0 0.0
    %4909 = vmatpush2.msra.mxu0 0.0
    %4910 = vmatprep.subr.mxu0 0.0
    %4911 = vmatpush2.msra.mxu0 0.0
    %4912 = vmatprep.subr.mxu0 0.0
    %4913 = vmatpush2.msra.mxu0 0.0
    %4914 = vmatprep.subr.mxu0 0.0
    %4915 = vmatpush2.msra.mxu0 0.0
    %4916 = vmatprep.subr.mxu0 0.0
    %4917 = vmatpush2.msra.mxu0 0.0
    %4918 = vmatprep.mubr.f32.mxu0 0.0
    %4919 = vmatmul.mubr.f32.gmra.mxu0 %v2727
    %v4920 = vpop.f32.mrf.mxu0
    %v4921 = vadd.f32 %v4257, %v4920
    %v4922 = vpop.f32.mrf.mxu0
    %v4923 = vadd.f32 %v4261, %v4922
    %4924 = vmatprep.mubr.f32.mxu0 0.0
    %4925 = vmatmul.mubr.f32.gmra.mxu0 %v2729
    %v4926 = vpop.f32.mrf.mxu0
    %v4927 = vadd.f32 %v4257, %v4926
    %v4928 = vpop.f32.mrf.mxu0
    %v4929 = vadd.f32 %v4261, %v4928
    %4930 = vmatprep.mubr.f32.mxu0 0.0
    %4931 = vmatmul.mubr.f32.gmra.mxu0 %v2731
    %v4932 = vpop.f32.mrf.mxu0
    %v4933 = vadd.f32 %v4257, %v4932
    %v4934 = vpop.f32.mrf.mxu0
    %v4935 = vadd.f32 %v4261, %v4934
    %4936 = vmatprep.mubr.f32.mxu0 0.0
    %4937 = vmatmul.mubr.f32.gmra.mxu0 %v2733
    %v4938 = vpop.f32.mrf.mxu0
    %v4939 = vadd.f32 %v4257, %v4938
    %v4940 = vpop.f32.mrf.mxu0
    %v4941 = vadd.f32 %v4261, %v4940
    %4942 = vdwg.mxu0
    %4943 = vmatprep.subr.mxu0 0.0
    %4944 = vmatpush1.msra.mxu0 0.0
    %4945 = vmatprep.subr.mxu0 0.0
    %4946 = vmatpush1.msra.mxu0 0.0
    %4947 = vmatprep.subr.mxu0 0.0
    %4948 = vmatpush1.msra.mxu0 0.0
    %4949 = vmatprep.subr.mxu0 0.0
    %4950 = vmatpush1.msra.mxu0 0.0
    %4951 = vmatprep.subr.mxu0 0.0
    %4952 = vmatpush1.msra.mxu0 0.0
    %4953 = vmatprep.subr.mxu0 0.0
    %4954 = vmatpush1.msra.mxu0 0.0
    %4955 = vmatprep.subr.mxu0 0.0
    %4956 = vmatpush1.msra.mxu0 0.0
    %4957 = vmatprep.subr.mxu0 0.0
    %4958 = vmatpush1.msra.mxu0 0.0
    %4959 = vmatprep.subr.mxu0 0.0
    %4960 = vmatpush1.msra.mxu0 0.0
    %4961 = vmatprep.subr.mxu0 0.0
    %4962 = vmatpush1.msra.mxu0 0.0
    %4963 = vmatprep.subr.mxu0 0.0
    %4964 = vmatpush1.msra.mxu0 0.0
    %4965 = vmatprep.subr.mxu0 0.0
    %4966 = vmatpush1.msra.mxu0 0.0
    %4967 = vmatprep.subr.mxu0 %v4186
    %4968 = vmatpush1.msra.mxu0 %v4185
    %4969 = vmatprep.subr.mxu0 %v4182
    %4970 = vmatpush1.msra.mxu0 %v4181
    %4971 = vmatprep.subr.mxu0 %v4178
    %4972 = vmatpush1.msra.mxu0 %v4177
    %4973 = vmatprep.subr.mxu0 %v4174
    %4974 = vmatpush1.msra.mxu0 %v4173
    %4975 = vmatprep.subr.mxu0 0.0
    %4976 = vmatpush2.msra.mxu0 0.0
    %4977 = vmatprep.subr.mxu0 0.0
    %4978 = vmatpush2.msra.mxu0 0.0
    %4979 = vmatprep.subr.mxu0 0.0
    %4980 = vmatpush2.msra.mxu0 0.0
    %4981 = vmatprep.subr.mxu0 0.0
    %4982 = vmatpush2.msra.mxu0 0.0
    %4983 = vmatprep.subr.mxu0 0.0
    %4984 = vmatpush2.msra.mxu0 0.0
    %4985 = vmatprep.subr.mxu0 0.0
    %4986 = vmatpush2.msra.mxu0 0.0
    %4987 = vmatprep.subr.mxu0 0.0
    %4988 = vmatpush2.msra.mxu0 0.0
    %4989 = vmatprep.subr.mxu0 0.0
    %4990 = vmatpush2.msra.mxu0 0.0
    %4991 = vmatprep.subr.mxu0 0.0
    %4992 = vmatpush2.msra.mxu0 0.0
    %4993 = vmatprep.subr.mxu0 0.0
    %4994 = vmatpush2.msra.mxu0 0.0
    %4995 = vmatprep.subr.mxu0 0.0
    %4996 = vmatpush2.msra.mxu0 0.0
    %4997 = vmatprep.subr.mxu0 0.0
    %4998 = vmatpush2.msra.mxu0 0.0
    %4999 = vmatprep.subr.mxu0 0.0
    %5000 = vmatpush2.msra.mxu0 0.0
    %5001 = vmatprep.subr.mxu0 0.0
    %5002 = vmatpush2.msra.mxu0 0.0
    %5003 = vmatprep.subr.mxu0 0.0
    %5004 = vmatpush2.msra.mxu0 0.0
    %5005 = vmatprep.subr.mxu0 0.0
    %5006 = vmatpush2.msra.mxu0 0.0
    %5007 = vmatprep.mubr.f32.mxu0 0.0
    %5008 = vmatmul.mubr.f32.gmra.mxu0 %v2727
    %v5009 = vpop.f32.mrf.mxu0
    %v5010 = vadd.f32 %v4265, %v5009
    %v5011 = vpop.f32.mrf.mxu0
    %v5012 = vadd.f32 %v4269, %v5011
    %5013 = vmatprep.mubr.f32.mxu0 0.0
    %5014 = vmatmul.mubr.f32.gmra.mxu0 %v2729
    %v5015 = vpop.f32.mrf.mxu0
    %v5016 = vadd.f32 %v4265, %v5015
    %v5017 = vpop.f32.mrf.mxu0
    %v5018 = vadd.f32 %v4269, %v5017
    %5019 = vmatprep.mubr.f32.mxu0 0.0
    %5020 = vmatmul.mubr.f32.gmra.mxu0 %v2731
    %v5021 = vpop.f32.mrf.mxu0
    %v5022 = vadd.f32 %v4265, %v5021
    %v5023 = vpop.f32.mrf.mxu0
    %v5024 = vadd.f32 %v4269, %v5023
    %5025 = vmatprep.mubr.f32.mxu0 0.0
    %5026 = vmatmul.mubr.f32.gmra.mxu0 %v2733
    %v5027 = vpop.f32.mrf.mxu0
    %v5028 = vadd.f32 %v4265, %v5027
    %v5029 = vpop.f32.mrf.mxu0
    %v5030 = vadd.f32 %v4269, %v5029
    %5031 = vdwg.mxu0
    %v5032 = vmax.f32 %v4921, 0.0
    %v5033 = vmax.f32 %v4923, 0.0
    %v5034 = vmax.f32 %v5010, 0.0
    %v5035 = vmax.f32 %v5012, 0.0
    %v5036 = vmax.f32 %v4927, 0.0
    %v5037 = vmax.f32 %v4929, 0.0
    %v5038 = vmax.f32 %v5016, 0.0
    %v5039 = vmax.f32 %v5018, 0.0
    %v5040 = vmax.f32 %v4933, 0.0
    %v5041 = vmax.f32 %v4935, 0.0
    %v5042 = vmax.f32 %v5022, 0.0
    %v5043 = vmax.f32 %v5024, 0.0
    %v5044 = vmax.f32 %v4939, 0.0
    %v5045 = vmax.f32 %v4941, 0.0
    %v5046 = vmax.f32 %v5028, 0.0
    %v5047 = vmax.f32 %v5030, 0.0
    %5048 = vmatprep.subr.mxu0 0.0
    %5049 = vmatpush1.msra.mxu0 %v4203
    %5050 = vmatprep.subr.mxu0 0.0
    %5051 = vmatpush1.msra.mxu0 %v4202
    %5052 = vmatprep.subr.mxu0 0.0
    %5053 = vmatpush1.msra.mxu0 %v4201
    %5054 = vmatprep.subr.mxu0 0.0
    %5055 = vmatpush1.msra.mxu0 %v4200
    %5056 = vmatprep.subr.mxu0 0.0
    %5057 = vmatpush1.msra.mxu0 %v4199
    %5058 = vmatprep.subr.mxu0 0.0
    %5059 = vmatpush1.msra.mxu0 %v4198
    %5060 = vmatprep.subr.mxu0 0.0
    %5061 = vmatpush1.msra.mxu0 %v4197
    %5062 = vmatprep.subr.mxu0 0.0
    %5063 = vmatpush1.msra.mxu0 %v4196
    %5064 = vmatprep.subr.mxu0 0.0
    %5065 = vmatpush1.msra.mxu0 %v4195
    %5066 = vmatprep.subr.mxu0 0.0
    %5067 = vmatpush1.msra.mxu0 %v4194
    %5068 = vmatprep.subr.mxu0 0.0
    %5069 = vmatpush1.msra.mxu0 %v4193
    %5070 = vmatprep.subr.mxu0 0.0
    %5071 = vmatpush1.msra.mxu0 %v4192
    %5072 = vmatprep.subr.mxu0 0.0
    %5073 = vmatpush1.msra.mxu0 %v4191
    %5074 = vmatprep.subr.mxu0 0.0
    %5075 = vmatpush1.msra.mxu0 %v4190
    %5076 = vmatprep.subr.mxu0 0.0
    %5077 = vmatpush1.msra.mxu0 %v4189
    %5078 = vmatprep.subr.mxu0 0.0
    %5079 = vmatpush1.msra.mxu0 %v4188
    %5080 = vmatprep.subr.mxu0 0.0
    %5081 = vmatpush2.msra.mxu0 %v4219
    %5082 = vmatprep.subr.mxu0 0.0
    %5083 = vmatpush2.msra.mxu0 %v4218
    %5084 = vmatprep.subr.mxu0 0.0
    %5085 = vmatpush2.msra.mxu0 %v4217
    %5086 = vmatprep.subr.mxu0 0.0
    %5087 = vmatpush2.msra.mxu0 %v4216
    %5088 = vmatprep.subr.mxu0 0.0
    %5089 = vmatpush2.msra.mxu0 %v4215
    %5090 = vmatprep.subr.mxu0 0.0
    %5091 = vmatpush2.msra.mxu0 %v4214
    %5092 = vmatprep.subr.mxu0 0.0
    %5093 = vmatpush2.msra.mxu0 %v4213
    %5094 = vmatprep.subr.mxu0 0.0
    %5095 = vmatpush2.msra.mxu0 %v4212
    %5096 = vmatprep.subr.mxu0 0.0
    %5097 = vmatpush2.msra.mxu0 %v4211
    %5098 = vmatprep.subr.mxu0 0.0
    %5099 = vmatpush2.msra.mxu0 %v4210
    %5100 = vmatprep.subr.mxu0 0.0
    %5101 = vmatpush2.msra.mxu0 %v4209
    %5102 = vmatprep.subr.mxu0 0.0
    %5103 = vmatpush2.msra.mxu0 %v4208
    %5104 = vmatprep.subr.mxu0 0.0
    %5105 = vmatpush2.msra.mxu0 %v4207
    %5106 = vmatprep.subr.mxu0 0.0
    %5107 = vmatpush2.msra.mxu0 %v4206
    %5108 = vmatprep.subr.mxu0 0.0
    %5109 = vmatpush2.msra.mxu0 %v4205
    %5110 = vmatprep.subr.mxu0 0.0
    %5111 = vmatpush2.msra.mxu0 %v4204
    %5112 = vmatprep.mubr.f32.mxu0 %v5033
    %5113 = vmatmul.mubr.f32.gmra.mxu0 %v5032
    %v5114 = vpop.f32.mrf.mxu0
    %v5115 = vadd.f32 %v4424, %v5114
    %v5116 = vpop.f32.mrf.mxu0
    %5117 = vmatprep.mubr.f32.mxu0 %v5037
    %5118 = vmatmul.mubr.f32.gmra.mxu0 %v5036
    %v5119 = vpop.f32.mrf.mxu0
    %v5120 = vadd.f32 %v4424, %v5119
    %v5121 = vpop.f32.mrf.mxu0
    %5122 = vmatprep.mubr.f32.mxu0 %v5041
    %5123 = vmatmul.mubr.f32.gmra.mxu0 %v5040
    %v5124 = vpop.f32.mrf.mxu0
    %v5125 = vadd.f32 %v4424, %v5124
    %v5126 = vpop.f32.mrf.mxu0
    %5127 = vmatprep.mubr.f32.mxu0 %v5045
    %5128 = vmatmul.mubr.f32.gmra.mxu0 %v5044
    %v5129 = vpop.f32.mrf.mxu0
    %v5130 = vadd.f32 %v4424, %v5129
    %v5131 = vpop.f32.mrf.mxu0
    %5132 = vdwg.mxu0
    %5133 = vmatprep.subr.mxu0 0.0
    %5134 = vmatpush1.msra.mxu0 %v4235
    %5135 = vmatprep.subr.mxu0 0.0
    %5136 = vmatpush1.msra.mxu0 %v4234
    %5137 = vmatprep.subr.mxu0 0.0
    %5138 = vmatpush1.msra.mxu0 %v4233
    %5139 = vmatprep.subr.mxu0 0.0
    %5140 = vmatpush1.msra.mxu0 %v4232
    %5141 = vmatprep.subr.mxu0 0.0
    %5142 = vmatpush1.msra.mxu0 %v4231
    %5143 = vmatprep.subr.mxu0 0.0
    %5144 = vmatpush1.msra.mxu0 %v4230
    %5145 = vmatprep.subr.mxu0 0.0
    %5146 = vmatpush1.msra.mxu0 %v4229
    %5147 = vmatprep.subr.mxu0 0.0
    %5148 = vmatpush1.msra.mxu0 %v4228
    %5149 = vmatprep.subr.mxu0 0.0
    %5150 = vmatpush1.msra.mxu0 %v4227
    %5151 = vmatprep.subr.mxu0 0.0
    %5152 = vmatpush1.msra.mxu0 %v4226
    %5153 = vmatprep.subr.mxu0 0.0
    %5154 = vmatpush1.msra.mxu0 %v4225
    %5155 = vmatprep.subr.mxu0 0.0
    %5156 = vmatpush1.msra.mxu0 %v4224
    %5157 = vmatprep.subr.mxu0 0.0
    %5158 = vmatpush1.msra.mxu0 %v4223
    %5159 = vmatprep.subr.mxu0 0.0
    %5160 = vmatpush1.msra.mxu0 %v4222
    %5161 = vmatprep.subr.mxu0 0.0
    %5162 = vmatpush1.msra.mxu0 %v4221
    %5163 = vmatprep.subr.mxu0 0.0
    %5164 = vmatpush1.msra.mxu0 %v4220
    %5165 = vmatprep.subr.mxu0 0.0
    %5166 = vmatpush2.msra.mxu0 %v4251
    %5167 = vmatprep.subr.mxu0 0.0
    %5168 = vmatpush2.msra.mxu0 %v4250
    %5169 = vmatprep.subr.mxu0 0.0
    %5170 = vmatpush2.msra.mxu0 %v4249
    %5171 = vmatprep.subr.mxu0 0.0
    %5172 = vmatpush2.msra.mxu0 %v4248
    %5173 = vmatprep.subr.mxu0 0.0
    %5174 = vmatpush2.msra.mxu0 %v4247
    %5175 = vmatprep.subr.mxu0 0.0
    %5176 = vmatpush2.msra.mxu0 %v4246
    %5177 = vmatprep.subr.mxu0 0.0
    %5178 = vmatpush2.msra.mxu0 %v4245
    %5179 = vmatprep.subr.mxu0 0.0
    %5180 = vmatpush2.msra.mxu0 %v4244
    %5181 = vmatprep.subr.mxu0 0.0
    %5182 = vmatpush2.msra.mxu0 %v4243
    %5183 = vmatprep.subr.mxu0 0.0
    %5184 = vmatpush2.msra.mxu0 %v4242
    %5185 = vmatprep.subr.mxu0 0.0
    %5186 = vmatpush2.msra.mxu0 %v4241
    %5187 = vmatprep.subr.mxu0 0.0
    %5188 = vmatpush2.msra.mxu0 %v4240
    %5189 = vmatprep.subr.mxu0 0.0
    %5190 = vmatpush2.msra.mxu0 %v4239
    %5191 = vmatprep.subr.mxu0 0.0
    %5192 = vmatpush2.msra.mxu0 %v4238
    %5193 = vmatprep.subr.mxu0 0.0
    %5194 = vmatpush2.msra.mxu0 %v4237
    %5195 = vmatprep.subr.mxu0 0.0
    %5196 = vmatpush2.msra.mxu0 %v4236
    %5197 = vmatprep.mubr.f32.mxu0 %v5035
    %5198 = vmatmul.mubr.f32.gmra.mxu0 %v5034
    %v5199 = vpop.f32.mrf.mxu0
    %v5200 = vadd.f32 %v5115, %v5199
    %v5201 = vpop.f32.mrf.mxu0
    %5202 = vmatprep.mubr.f32.mxu0 %v5039
    %5203 = vmatmul.mubr.f32.gmra.mxu0 %v5038
    %v5204 = vpop.f32.mrf.mxu0
    %v5205 = vadd.f32 %v5120, %v5204
    %v5206 = vpop.f32.mrf.mxu0
    %5207 = vmatprep.mubr.f32.mxu0 %v5043
    %5208 = vmatmul.mubr.f32.gmra.mxu0 %v5042
    %v5209 = vpop.f32.mrf.mxu0
    %v5210 = vadd.f32 %v5125, %v5209
    %v5211 = vpop.f32.mrf.mxu0
    %5212 = vmatprep.mubr.f32.mxu0 %v5047
    %5213 = vmatmul.mubr.f32.gmra.mxu0 %v5046
    %v5214 = vpop.f32.mrf.mxu0
    %v5215 = vadd.f32 %v5130, %v5214
    %v5216 = vpop.f32.mrf.mxu0
    %5217 = vdwg.mxu0
    %5218 = vst [vmem:[%s18] sm:$0xff] %v5200
    %5219 = vst [vmem:[%s18 + $0x8] sm:$0xff] %v5205
    %5220 = vst [vmem:[%s18 + $0x10] sm:$0xff] %v5210
    %5221 = vst [vmem:[%s18 + $0x18] sm:$0xff] %v5215
    %5222 = vmatprep.subr.mxu0 0.0
    %5223 = vmatpush1.msra.mxu0 0.0
    %5224 = vmatprep.subr.mxu0 0.0
    %5225 = vmatpush1.msra.mxu0 0.0
    %5226 = vmatprep.subr.mxu0 0.0
    %5227 = vmatpush1.msra.mxu0 0.0
    %5228 = vmatprep.subr.mxu0 0.0
    %5229 = vmatpush1.msra.mxu0 0.0
    %5230 = vmatprep.subr.mxu0 0.0
    %5231 = vmatpush1.msra.mxu0 0.0
    %5232 = vmatprep.subr.mxu0 0.0
    %5233 = vmatpush1.msra.mxu0 0.0
    %5234 = vmatprep.subr.mxu0 0.0
    %5235 = vmatpush1.msra.mxu0 0.0
    %5236 = vmatprep.subr.mxu0 0.0
    %5237 = vmatpush1.msra.mxu0 0.0
    %5238 = vmatprep.subr.mxu0 0.0
    %5239 = vmatpush1.msra.mxu0 0.0
    %5240 = vmatprep.subr.mxu0 0.0
    %5241 = vmatpush1.msra.mxu0 0.0
    %5242 = vmatprep.subr.mxu0 0.0
    %5243 = vmatpush1.msra.mxu0 0.0
    %5244 = vmatprep.subr.mxu0 0.0
    %5245 = vmatpush1.msra.mxu0 0.0
    %5246 = vmatprep.subr.mxu0 %v4184
    %5247 = vmatpush1.msra.mxu0 %v4183
    %5248 = vmatprep.subr.mxu0 %v4180
    %5249 = vmatpush1.msra.mxu0 %v4179
    %5250 = vmatprep.subr.mxu0 %v4176
    %5251 = vmatpush1.msra.mxu0 %v4175
    %5252 = vmatprep.subr.mxu0 %v4172
    %5253 = vmatpush1.msra.mxu0 %v4171
    %5254 = vmatprep.subr.mxu0 0.0
    %5255 = vmatpush2.msra.mxu0 0.0
    %5256 = vmatprep.subr.mxu0 0.0
    %5257 = vmatpush2.msra.mxu0 0.0
    %5258 = vmatprep.subr.mxu0 0.0
    %5259 = vmatpush2.msra.mxu0 0.0
    %5260 = vmatprep.subr.mxu0 0.0
    %5261 = vmatpush2.msra.mxu0 0.0
    %5262 = vmatprep.subr.mxu0 0.0
    %5263 = vmatpush2.msra.mxu0 0.0
    %5264 = vmatprep.subr.mxu0 0.0
    %5265 = vmatpush2.msra.mxu0 0.0
    %5266 = vmatprep.subr.mxu0 0.0
    %5267 = vmatpush2.msra.mxu0 0.0
    %5268 = vmatprep.subr.mxu0 0.0
    %5269 = vmatpush2.msra.mxu0 0.0
    %5270 = vmatprep.subr.mxu0 0.0
    %5271 = vmatpush2.msra.mxu0 0.0
    %5272 = vmatprep.subr.mxu0 0.0
    %5273 = vmatpush2.msra.mxu0 0.0
    %5274 = vmatprep.subr.mxu0 0.0
    %5275 = vmatpush2.msra.mxu0 0.0
    %5276 = vmatprep.subr.mxu0 0.0
    %5277 = vmatpush2.msra.mxu0 0.0
    %5278 = vmatprep.subr.mxu0 0.0
    %5279 = vmatpush2.msra.mxu0 0.0
    %5280 = vmatprep.subr.mxu0 0.0
    %5281 = vmatpush2.msra.mxu0 0.0
    %5282 = vmatprep.subr.mxu0 0.0
    %5283 = vmatpush2.msra.mxu0 0.0
    %5284 = vmatprep.subr.mxu0 0.0
    %5285 = vmatpush2.msra.mxu0 0.0
    %5286 = vmatprep.mubr.f32.mxu0 0.0
    %5287 = vmatmul.mubr.f32.gmra.mxu0 %v2977
    %v5288 = vpop.f32.mrf.mxu0
    %v5289 = vadd.f32 %v4257, %v5288
    %v5290 = vpop.f32.mrf.mxu0
    %v5291 = vadd.f32 %v4261, %v5290
    %5292 = vmatprep.mubr.f32.mxu0 0.0
    %5293 = vmatmul.mubr.f32.gmra.mxu0 %v2979
    %v5294 = vpop.f32.mrf.mxu0
    %v5295 = vadd.f32 %v4257, %v5294
    %v5296 = vpop.f32.mrf.mxu0
    %v5297 = vadd.f32 %v4261, %v5296
    %5298 = vmatprep.mubr.f32.mxu0 0.0
    %5299 = vmatmul.mubr.f32.gmra.mxu0 %v2981
    %v5300 = vpop.f32.mrf.mxu0
    %v5301 = vadd.f32 %v4257, %v5300
    %v5302 = vpop.f32.mrf.mxu0
    %v5303 = vadd.f32 %v4261, %v5302
    %5304 = vmatprep.mubr.f32.mxu0 0.0
    %5305 = vmatmul.mubr.f32.gmra.mxu0 %v2983
    %v5306 = vpop.f32.mrf.mxu0
    %v5307 = vadd.f32 %v4257, %v5306
    %v5308 = vpop.f32.mrf.mxu0
    %v5309 = vadd.f32 %v4261, %v5308
    %5310 = vmatprep.mubr.f32.mxu0 0.0
    %5311 = vmatmul.mubr.f32.gmra.mxu0 %v2985
    %v5312 = vpop.f32.mrf.mxu0
    %v5313 = vadd.f32 %v4257, %v5312
    %v5314 = vpop.f32.mrf.mxu0
    %v5315 = vadd.f32 %v4261, %v5314
    %5316 = vmatprep.mubr.f32.mxu0 0.0
    %5317 = vmatmul.mubr.f32.gmra.mxu0 %v2987
    %v5318 = vpop.f32.mrf.mxu0
    %v5319 = vadd.f32 %v4257, %v5318
    %v5320 = vpop.f32.mrf.mxu0
    %v5321 = vadd.f32 %v4261, %v5320
    %5322 = vmatprep.mubr.f32.mxu0 0.0
    %5323 = vmatmul.mubr.f32.gmra.mxu0 %v2989
    %v5324 = vpop.f32.mrf.mxu0
    %v5325 = vadd.f32 %v4257, %v5324
    %v5326 = vpop.f32.mrf.mxu0
    %v5327 = vadd.f32 %v4261, %v5326
    %5328 = vmatprep.mubr.f32.mxu0 0.0
    %5329 = vmatmul.mubr.f32.gmra.mxu0 %v2991
    %v5330 = vpop.f32.mrf.mxu0
    %v5331 = vadd.f32 %v4257, %v5330
    %v5332 = vpop.f32.mrf.mxu0
    %v5333 = vadd.f32 %v4261, %v5332
    %5334 = vmatprep.mubr.f32.mxu0 0.0
    %5335 = vmatmul.mubr.f32.gmra.mxu0 %v2993
    %v5336 = vpop.f32.mrf.mxu0
    %v5337 = vadd.f32 %v4257, %v5336
    %v5338 = vpop.f32.mrf.mxu0
    %v5339 = vadd.f32 %v4261, %v5338
    %5340 = vmatprep.mubr.f32.mxu0 0.0
    %5341 = vmatmul.mubr.f32.gmra.mxu0 %v2995
    %v5342 = vpop.f32.mrf.mxu0
    %v5343 = vadd.f32 %v4257, %v5342
    %v5344 = vpop.f32.mrf.mxu0
    %v5345 = vadd.f32 %v4261, %v5344
    %5346 = vmatprep.mubr.f32.mxu0 0.0
    %5347 = vmatmul.mubr.f32.gmra.mxu0 %v2997
    %v5348 = vpop.f32.mrf.mxu0
    %v5349 = vadd.f32 %v4257, %v5348
    %v5350 = vpop.f32.mrf.mxu0
    %v5351 = vadd.f32 %v4261, %v5350
    %5352 = vmatprep.mubr.f32.mxu0 0.0
    %5353 = vmatmul.mubr.f32.gmra.mxu0 %v2999
    %v5354 = vpop.f32.mrf.mxu0
    %v5355 = vadd.f32 %v4257, %v5354
    %v5356 = vpop.f32.mrf.mxu0
    %v5357 = vadd.f32 %v4261, %v5356
    %5358 = vmatprep.mubr.f32.mxu0 0.0
    %5359 = vmatmul.mubr.f32.gmra.mxu0 %v3001
    %v5360 = vpop.f32.mrf.mxu0
    %v5361 = vadd.f32 %v4257, %v5360
    %v5362 = vpop.f32.mrf.mxu0
    %v5363 = vadd.f32 %v4261, %v5362
    %5364 = vmatprep.mubr.f32.mxu0 0.0
    %5365 = vmatmul.mubr.f32.gmra.mxu0 %v3003
    %v5366 = vpop.f32.mrf.mxu0
    %v5367 = vadd.f32 %v4257, %v5366
    %v5368 = vpop.f32.mrf.mxu0
    %v5369 = vadd.f32 %v4261, %v5368
    %5370 = vmatprep.mubr.f32.mxu0 0.0
    %5371 = vmatmul.mubr.f32.gmra.mxu0 %v3005
    %v5372 = vpop.f32.mrf.mxu0
    %v5373 = vadd.f32 %v4257, %v5372
    %v5374 = vpop.f32.mrf.mxu0
    %v5375 = vadd.f32 %v4261, %v5374
    %5376 = vmatprep.mubr.f32.mxu0 0.0
    %5377 = vmatmul.mubr.f32.gmra.mxu0 %v3007
    %v5378 = vpop.f32.mrf.mxu0
    %v5379 = vadd.f32 %v4257, %v5378
    %v5380 = vpop.f32.mrf.mxu0
    %v5381 = vadd.f32 %v4261, %v5380
    %5382 = vdwg.mxu0
    %5383 = vmatprep.subr.mxu0 0.0
    %5384 = vmatpush1.msra.mxu0 0.0
    %5385 = vmatprep.subr.mxu0 0.0
    %5386 = vmatpush1.msra.mxu0 0.0
    %5387 = vmatprep.subr.mxu0 0.0
    %5388 = vmatpush1.msra.mxu0 0.0
    %5389 = vmatprep.subr.mxu0 0.0
    %5390 = vmatpush1.msra.mxu0 0.0
    %5391 = vmatprep.subr.mxu0 0.0
    %5392 = vmatpush1.msra.mxu0 0.0
    %5393 = vmatprep.subr.mxu0 0.0
    %5394 = vmatpush1.msra.mxu0 0.0
    %5395 = vmatprep.subr.mxu0 0.0
    %5396 = vmatpush1.msra.mxu0 0.0
    %5397 = vmatprep.subr.mxu0 0.0
    %5398 = vmatpush1.msra.mxu0 0.0
    %5399 = vmatprep.subr.mxu0 0.0
    %5400 = vmatpush1.msra.mxu0 0.0
    %5401 = vmatprep.subr.mxu0 0.0
    %5402 = vmatpush1.msra.mxu0 0.0
    %5403 = vmatprep.subr.mxu0 0.0
    %5404 = vmatpush1.msra.mxu0 0.0
    %5405 = vmatprep.subr.mxu0 0.0
    %5406 = vmatpush1.msra.mxu0 0.0
    %5407 = vmatprep.subr.mxu0 %v4186
    %5408 = vmatpush1.msra.mxu0 %v4185
    %5409 = vmatprep.subr.mxu0 %v4182
    %5410 = vmatpush1.msra.mxu0 %v4181
    %5411 = vmatprep.subr.mxu0 %v4178
    %5412 = vmatpush1.msra.mxu0 %v4177
    %5413 = vmatprep.subr.mxu0 %v4174
    %5414 = vmatpush1.msra.mxu0 %v4173
    %5415 = vmatprep.subr.mxu0 0.0
    %5416 = vmatpush2.msra.mxu0 0.0
    %5417 = vmatprep.subr.mxu0 0.0
    %5418 = vmatpush2.msra.mxu0 0.0
    %5419 = vmatprep.subr.mxu0 0.0
    %5420 = vmatpush2.msra.mxu0 0.0
    %5421 = vmatprep.subr.mxu0 0.0
    %5422 = vmatpush2.msra.mxu0 0.0
    %5423 = vmatprep.subr.mxu0 0.0
    %5424 = vmatpush2.msra.mxu0 0.0
    %5425 = vmatprep.subr.mxu0 0.0
    %5426 = vmatpush2.msra.mxu0 0.0
    %5427 = vmatprep.subr.mxu0 0.0
    %5428 = vmatpush2.msra.mxu0 0.0
    %5429 = vmatprep.subr.mxu0 0.0
    %5430 = vmatpush2.msra.mxu0 0.0
    %5431 = vmatprep.subr.mxu0 0.0
    %5432 = vmatpush2.msra.mxu0 0.0
    %5433 = vmatprep.subr.mxu0 0.0
    %5434 = vmatpush2.msra.mxu0 0.0
    %5435 = vmatprep.subr.mxu0 0.0
    %5436 = vmatpush2.msra.mxu0 0.0
    %5437 = vmatprep.subr.mxu0 0.0
    %5438 = vmatpush2.msra.mxu0 0.0
    %5439 = vmatprep.subr.mxu0 0.0
    %5440 = vmatpush2.msra.mxu0 0.0
    %5441 = vmatprep.subr.mxu0 0.0
    %5442 = vmatpush2.msra.mxu0 0.0
    %5443 = vmatprep.subr.mxu0 0.0
    %5444 = vmatpush2.msra.mxu0 0.0
    %5445 = vmatprep.subr.mxu0 0.0
    %5446 = vmatpush2.msra.mxu0 0.0
    %5447 = vmatprep.mubr.f32.mxu0 0.0
    %5448 = vmatmul.mubr.f32.gmra.mxu0 %v2977
    %v5449 = vpop.f32.mrf.mxu0
    %v5450 = vadd.f32 %v4265, %v5449
    %v5451 = vpop.f32.mrf.mxu0
    %v5452 = vadd.f32 %v4269, %v5451
    %5453 = vmatprep.mubr.f32.mxu0 0.0
    %5454 = vmatmul.mubr.f32.gmra.mxu0 %v2979
    %v5455 = vpop.f32.mrf.mxu0
    %v5456 = vadd.f32 %v4265, %v5455
    %v5457 = vpop.f32.mrf.mxu0
    %v5458 = vadd.f32 %v4269, %v5457
    %5459 = vmatprep.mubr.f32.mxu0 0.0
    %5460 = vmatmul.mubr.f32.gmra.mxu0 %v2981
    %v5461 = vpop.f32.mrf.mxu0
    %v5462 = vadd.f32 %v4265, %v5461
    %v5463 = vpop.f32.mrf.mxu0
    %v5464 = vadd.f32 %v4269, %v5463
    %5465 = vmatprep.mubr.f32.mxu0 0.0
    %5466 = vmatmul.mubr.f32.gmra.mxu0 %v2983
    %v5467 = vpop.f32.mrf.mxu0
    %v5468 = vadd.f32 %v4265, %v5467
    %v5469 = vpop.f32.mrf.mxu0
    %v5470 = vadd.f32 %v4269, %v5469
    %5471 = vmatprep.mubr.f32.mxu0 0.0
    %5472 = vmatmul.mubr.f32.gmra.mxu0 %v2985
    %v5473 = vpop.f32.mrf.mxu0
    %v5474 = vadd.f32 %v4265, %v5473
    %v5475 = vpop.f32.mrf.mxu0
    %v5476 = vadd.f32 %v4269, %v5475
    %5477 = vmatprep.mubr.f32.mxu0 0.0
    %5478 = vmatmul.mubr.f32.gmra.mxu0 %v2987
    %v5479 = vpop.f32.mrf.mxu0
    %v5480 = vadd.f32 %v4265, %v5479
    %v5481 = vpop.f32.mrf.mxu0
    %v5482 = vadd.f32 %v4269, %v5481
    %5483 = vmatprep.mubr.f32.mxu0 0.0
    %5484 = vmatmul.mubr.f32.gmra.mxu0 %v2989
    %v5485 = vpop.f32.mrf.mxu0
    %v5486 = vadd.f32 %v4265, %v5485
    %v5487 = vpop.f32.mrf.mxu0
    %v5488 = vadd.f32 %v4269, %v5487
    %5489 = vmatprep.mubr.f32.mxu0 0.0
    %5490 = vmatmul.mubr.f32.gmra.mxu0 %v2991
    %v5491 = vpop.f32.mrf.mxu0
    %v5492 = vadd.f32 %v4265, %v5491
    %v5493 = vpop.f32.mrf.mxu0
    %v5494 = vadd.f32 %v4269, %v5493
    %5495 = vmatprep.mubr.f32.mxu0 0.0
    %5496 = vmatmul.mubr.f32.gmra.mxu0 %v2993
    %v5497 = vpop.f32.mrf.mxu0
    %v5498 = vadd.f32 %v4265, %v5497
    %v5499 = vpop.f32.mrf.mxu0
    %v5500 = vadd.f32 %v4269, %v5499
    %5501 = vmatprep.mubr.f32.mxu0 0.0
    %5502 = vmatmul.mubr.f32.gmra.mxu0 %v2995
    %v5503 = vpop.f32.mrf.mxu0
    %v5504 = vadd.f32 %v4265, %v5503
    %v5505 = vpop.f32.mrf.mxu0
    %v5506 = vadd.f32 %v4269, %v5505
    %5507 = vmatprep.mubr.f32.mxu0 0.0
    %5508 = vmatmul.mubr.f32.gmra.mxu0 %v2997
    %v5509 = vpop.f32.mrf.mxu0
    %v5510 = vadd.f32 %v4265, %v5509
    %v5511 = vpop.f32.mrf.mxu0
    %v5512 = vadd.f32 %v4269, %v5511
    %5513 = vmatprep.mubr.f32.mxu0 0.0
    %5514 = vmatmul.mubr.f32.gmra.mxu0 %v2999
    %v5515 = vpop.f32.mrf.mxu0
    %v5516 = vadd.f32 %v4265, %v5515
    %v5517 = vpop.f32.mrf.mxu0
    %v5518 = vadd.f32 %v4269, %v5517
    %5519 = vmatprep.mubr.f32.mxu0 0.0
    %5520 = vmatmul.mubr.f32.gmra.mxu0 %v3001
    %v5521 = vpop.f32.mrf.mxu0
    %v5522 = vadd.f32 %v4265, %v5521
    %v5523 = vpop.f32.mrf.mxu0
    %v5524 = vadd.f32 %v4269, %v5523
    %5525 = vmatprep.mubr.f32.mxu0 0.0
    %5526 = vmatmul.mubr.f32.gmra.mxu0 %v3003
    %v5527 = vpop.f32.mrf.mxu0
    %v5528 = vadd.f32 %v4265, %v5527
    %v5529 = vpop.f32.mrf.mxu0
    %v5530 = vadd.f32 %v4269, %v5529
    %5531 = vmatprep.mubr.f32.mxu0 0.0
    %5532 = vmatmul.mubr.f32.gmra.mxu0 %v3005
    %v5533 = vpop.f32.mrf.mxu0
    %v5534 = vadd.f32 %v4265, %v5533
    %v5535 = vpop.f32.mrf.mxu0
    %v5536 = vadd.f32 %v4269, %v5535
    %5537 = vmatprep.mubr.f32.mxu0 0.0
    %5538 = vmatmul.mubr.f32.gmra.mxu0 %v3007
    %v5539 = vpop.f32.mrf.mxu0
    %v5540 = vadd.f32 %v4265, %v5539
    %v5541 = vpop.f32.mrf.mxu0
    %v5542 = vadd.f32 %v4269, %v5541
    %5543 = vdwg.mxu0
    %v5544 = vmax.f32 %v5289, 0.0
    %v5545 = vmax.f32 %v5291, 0.0
    %v5546 = vmax.f32 %v5450, 0.0
    %v5547 = vmax.f32 %v5452, 0.0
    %v5548 = vmax.f32 %v5295, 0.0
    %v5549 = vmax.f32 %v5297, 0.0
    %v5550 = vmax.f32 %v5456, 0.0
    %v5551 = vmax.f32 %v5458, 0.0
    %v5552 = vmax.f32 %v5301, 0.0
    %v5553 = vmax.f32 %v5303, 0.0
    %v5554 = vmax.f32 %v5462, 0.0
    %v5555 = vmax.f32 %v5464, 0.0
    %v5556 = vmax.f32 %v5307, 0.0
    %v5557 = vmax.f32 %v5309, 0.0
    %v5558 = vmax.f32 %v5468, 0.0
    %v5559 = vmax.f32 %v5470, 0.0
    %v5560 = vmax.f32 %v5313, 0.0
    %v5561 = vmax.f32 %v5315, 0.0
    %v5562 = vmax.f32 %v5474, 0.0
    %v5563 = vmax.f32 %v5476, 0.0
    %v5564 = vmax.f32 %v5319, 0.0
    %v5565 = vmax.f32 %v5321, 0.0
    %v5566 = vmax.f32 %v5480, 0.0
    %v5567 = vmax.f32 %v5482, 0.0
    %v5568 = vmax.f32 %v5325, 0.0
    %v5569 = vmax.f32 %v5327, 0.0
    %v5570 = vmax.f32 %v5486, 0.0
    %v5571 = vmax.f32 %v5488, 0.0
    %v5572 = vmax.f32 %v5331, 0.0
    %v5573 = vmax.f32 %v5333, 0.0
    %v5574 = vmax.f32 %v5492, 0.0
    %v5575 = vmax.f32 %v5494, 0.0
    %v5576 = vmax.f32 %v5337, 0.0
    %v5577 = vmax.f32 %v5339, 0.0
    %v5578 = vmax.f32 %v5498, 0.0
    %v5579 = vmax.f32 %v5500, 0.0
    %v5580 = vmax.f32 %v5343, 0.0
    %v5581 = vmax.f32 %v5345, 0.0
    %v5582 = vmax.f32 %v5504, 0.0
    %v5583 = vmax.f32 %v5506, 0.0
    %v5584 = vmax.f32 %v5349, 0.0
    %v5585 = vmax.f32 %v5351, 0.0
    %v5586 = vmax.f32 %v5510, 0.0
    %v5587 = vmax.f32 %v5512, 0.0
    %v5588 = vmax.f32 %v5355, 0.0
    %v5589 = vmax.f32 %v5357, 0.0
    %v5590 = vmax.f32 %v5516, 0.0
    %v5591 = vmax.f32 %v5518, 0.0
    %v5592 = vmax.f32 %v5361, 0.0
    %v5593 = vmax.f32 %v5363, 0.0
    %v5594 = vmax.f32 %v5522, 0.0
    %v5595 = vmax.f32 %v5524, 0.0
    %v5596 = vmax.f32 %v5367, 0.0
    %v5597 = vmax.f32 %v5369, 0.0
    %v5598 = vmax.f32 %v5528, 0.0
    %v5599 = vmax.f32 %v5530, 0.0
    %v5600 = vmax.f32 %v5373, 0.0
    %v5601 = vmax.f32 %v5375, 0.0
    %v5602 = vmax.f32 %v5534, 0.0
    %v5603 = vmax.f32 %v5536, 0.0
    %v5604 = vmax.f32 %v5379, 0.0
    %v5605 = vmax.f32 %v5381, 0.0
    %v5606 = vmax.f32 %v5540, 0.0
    %v5607 = vmax.f32 %v5542, 0.0
    %5608 = vmatprep.subr.mxu0 0.0
    %5609 = vmatpush1.msra.mxu0 %v4203
    %5610 = vmatprep.subr.mxu0 0.0
    %5611 = vmatpush1.msra.mxu0 %v4202
    %5612 = vmatprep.subr.mxu0 0.0
    %5613 = vmatpush1.msra.mxu0 %v4201
    %5614 = vmatprep.subr.mxu0 0.0
    %5615 = vmatpush1.msra.mxu0 %v4200
    %5616 = vmatprep.subr.mxu0 0.0
    %5617 = vmatpush1.msra.mxu0 %v4199
    %5618 = vmatprep.subr.mxu0 0.0
    %5619 = vmatpush1.msra.mxu0 %v4198
    %5620 = vmatprep.subr.mxu0 0.0
    %5621 = vmatpush1.msra.mxu0 %v4197
    %5622 = vmatprep.subr.mxu0 0.0
    %5623 = vmatpush1.msra.mxu0 %v4196
    %5624 = vmatprep.subr.mxu0 0.0
    %5625 = vmatpush1.msra.mxu0 %v4195
    %5626 = vmatprep.subr.mxu0 0.0
    %5627 = vmatpush1.msra.mxu0 %v4194
    %5628 = vmatprep.subr.mxu0 0.0
    %5629 = vmatpush1.msra.mxu0 %v4193
    %5630 = vmatprep.subr.mxu0 0.0
    %5631 = vmatpush1.msra.mxu0 %v4192
    %5632 = vmatprep.subr.mxu0 0.0
    %5633 = vmatpush1.msra.mxu0 %v4191
    %5634 = vmatprep.subr.mxu0 0.0
    %5635 = vmatpush1.msra.mxu0 %v4190
    %5636 = vmatprep.subr.mxu0 0.0
    %5637 = vmatpush1.msra.mxu0 %v4189
    %5638 = vmatprep.subr.mxu0 0.0
    %5639 = vmatpush1.msra.mxu0 %v4188
    %5640 = vmatprep.subr.mxu0 0.0
    %5641 = vmatpush2.msra.mxu0 %v4219
    %5642 = vmatprep.subr.mxu0 0.0
    %5643 = vmatpush2.msra.mxu0 %v4218
    %5644 = vmatprep.subr.mxu0 0.0
    %5645 = vmatpush2.msra.mxu0 %v4217
    %5646 = vmatprep.subr.mxu0 0.0
    %5647 = vmatpush2.msra.mxu0 %v4216
    %5648 = vmatprep.subr.mxu0 0.0
    %5649 = vmatpush2.msra.mxu0 %v4215
    %5650 = vmatprep.subr.mxu0 0.0
    %5651 = vmatpush2.msra.mxu0 %v4214
    %5652 = vmatprep.subr.mxu0 0.0
    %5653 = vmatpush2.msra.mxu0 %v4213
    %5654 = vmatprep.subr.mxu0 0.0
    %5655 = vmatpush2.msra.mxu0 %v4212
    %5656 = vmatprep.subr.mxu0 0.0
    %5657 = vmatpush2.msra.mxu0 %v4211
    %5658 = vmatprep.subr.mxu0 0.0
    %5659 = vmatpush2.msra.mxu0 %v4210
    %5660 = vmatprep.subr.mxu0 0.0
    %5661 = vmatpush2.msra.mxu0 %v4209
    %5662 = vmatprep.subr.mxu0 0.0
    %5663 = vmatpush2.msra.mxu0 %v4208
    %5664 = vmatprep.subr.mxu0 0.0
    %5665 = vmatpush2.msra.mxu0 %v4207
    %5666 = vmatprep.subr.mxu0 0.0
    %5667 = vmatpush2.msra.mxu0 %v4206
    %5668 = vmatprep.subr.mxu0 0.0
    %5669 = vmatpush2.msra.mxu0 %v4205
    %5670 = vmatprep.subr.mxu0 0.0
    %5671 = vmatpush2.msra.mxu0 %v4204
    %5672 = vmatprep.mubr.f32.mxu0 %v5545
    %5673 = vmatmul.mubr.f32.gmra.mxu0 %v5544
    %v5674 = vpop.f32.mrf.mxu0
    %v5675 = vadd.f32 %v4424, %v5674
    %v5676 = vpop.f32.mrf.mxu0
    %5677 = vmatprep.mubr.f32.mxu0 %v5549
    %5678 = vmatmul.mubr.f32.gmra.mxu0 %v5548
    %v5679 = vpop.f32.mrf.mxu0
    %v5680 = vadd.f32 %v4424, %v5679
    %v5681 = vpop.f32.mrf.mxu0
    %5682 = vmatprep.mubr.f32.mxu0 %v5553
    %5683 = vmatmul.mubr.f32.gmra.mxu0 %v5552
    %v5684 = vpop.f32.mrf.mxu0
    %v5685 = vadd.f32 %v4424, %v5684
    %v5686 = vpop.f32.mrf.mxu0
    %5687 = vmatprep.mubr.f32.mxu0 %v5557
    %5688 = vmatmul.mubr.f32.gmra.mxu0 %v5556
    %v5689 = vpop.f32.mrf.mxu0
    %v5690 = vadd.f32 %v4424, %v5689
    %v5691 = vpop.f32.mrf.mxu0
    %5692 = vmatprep.mubr.f32.mxu0 %v5561
    %5693 = vmatmul.mubr.f32.gmra.mxu0 %v5560
    %v5694 = vpop.f32.mrf.mxu0
    %v5695 = vadd.f32 %v4424, %v5694
    %v5696 = vpop.f32.mrf.mxu0
    %5697 = vmatprep.mubr.f32.mxu0 %v5565
    %5698 = vmatmul.mubr.f32.gmra.mxu0 %v5564
    %v5699 = vpop.f32.mrf.mxu0
    %v5700 = vadd.f32 %v4424, %v5699
    %v5701 = vpop.f32.mrf.mxu0
    %5702 = vmatprep.mubr.f32.mxu0 %v5569
    %5703 = vmatmul.mubr.f32.gmra.mxu0 %v5568
    %v5704 = vpop.f32.mrf.mxu0
    %v5705 = vadd.f32 %v4424, %v5704
    %v5706 = vpop.f32.mrf.mxu0
    %5707 = vmatprep.mubr.f32.mxu0 %v5573
    %5708 = vmatmul.mubr.f32.gmra.mxu0 %v5572
    %v5709 = vpop.f32.mrf.mxu0
    %v5710 = vadd.f32 %v4424, %v5709
    %v5711 = vpop.f32.mrf.mxu0
    %5712 = vmatprep.mubr.f32.mxu0 %v5577
    %5713 = vmatmul.mubr.f32.gmra.mxu0 %v5576
    %v5714 = vpop.f32.mrf.mxu0
    %v5715 = vadd.f32 %v4424, %v5714
    %v5716 = vpop.f32.mrf.mxu0
    %5717 = vmatprep.mubr.f32.mxu0 %v5581
    %5718 = vmatmul.mubr.f32.gmra.mxu0 %v5580
    %v5719 = vpop.f32.mrf.mxu0
    %v5720 = vadd.f32 %v4424, %v5719
    %v5721 = vpop.f32.mrf.mxu0
    %5722 = vmatprep.mubr.f32.mxu0 %v5585
    %5723 = vmatmul.mubr.f32.gmra.mxu0 %v5584
    %v5724 = vpop.f32.mrf.mxu0
    %v5725 = vadd.f32 %v4424, %v5724
    %v5726 = vpop.f32.mrf.mxu0
    %5727 = vmatprep.mubr.f32.mxu0 %v5589
    %5728 = vmatmul.mubr.f32.gmra.mxu0 %v5588
    %v5729 = vpop.f32.mrf.mxu0
    %v5730 = vadd.f32 %v4424, %v5729
    %v5731 = vpop.f32.mrf.mxu0
    %5732 = vmatprep.mubr.f32.mxu0 %v5593
    %5733 = vmatmul.mubr.f32.gmra.mxu0 %v5592
    %v5734 = vpop.f32.mrf.mxu0
    %v5735 = vadd.f32 %v4424, %v5734
    %v5736 = vpop.f32.mrf.mxu0
    %5737 = vmatprep.mubr.f32.mxu0 %v5597
    %5738 = vmatmul.mubr.f32.gmra.mxu0 %v5596
    %v5739 = vpop.f32.mrf.mxu0
    %v5740 = vadd.f32 %v4424, %v5739
    %v5741 = vpop.f32.mrf.mxu0
    %5742 = vmatprep.mubr.f32.mxu0 %v5601
    %5743 = vmatmul.mubr.f32.gmra.mxu0 %v5600
    %v5744 = vpop.f32.mrf.mxu0
    %v5745 = vadd.f32 %v4424, %v5744
    %v5746 = vpop.f32.mrf.mxu0
    %5747 = vmatprep.mubr.f32.mxu0 %v5605
    %5748 = vmatmul.mubr.f32.gmra.mxu0 %v5604
    %v5749 = vpop.f32.mrf.mxu0
    %v5750 = vadd.f32 %v4424, %v5749
    %v5751 = vpop.f32.mrf.mxu0
    %5752 = vdwg.mxu0
    %5753 = vmatprep.subr.mxu0 0.0
    %5754 = vmatpush1.msra.mxu0 %v4235
    %5755 = vmatprep.subr.mxu0 0.0
    %5756 = vmatpush1.msra.mxu0 %v4234
    %5757 = vmatprep.subr.mxu0 0.0
    %5758 = vmatpush1.msra.mxu0 %v4233
    %5759 = vmatprep.subr.mxu0 0.0
    %5760 = vmatpush1.msra.mxu0 %v4232
    %5761 = vmatprep.subr.mxu0 0.0
    %5762 = vmatpush1.msra.mxu0 %v4231
    %5763 = vmatprep.subr.mxu0 0.0
    %5764 = vmatpush1.msra.mxu0 %v4230
    %5765 = vmatprep.subr.mxu0 0.0
    %5766 = vmatpush1.msra.mxu0 %v4229
    %5767 = vmatprep.subr.mxu0 0.0
    %5768 = vmatpush1.msra.mxu0 %v4228
    %5769 = vmatprep.subr.mxu0 0.0
    %5770 = vmatpush1.msra.mxu0 %v4227
    %5771 = vmatprep.subr.mxu0 0.0
    %5772 = vmatpush1.msra.mxu0 %v4226
    %5773 = vmatprep.subr.mxu0 0.0
    %5774 = vmatpush1.msra.mxu0 %v4225
    %5775 = vmatprep.subr.mxu0 0.0
    %5776 = vmatpush1.msra.mxu0 %v4224
    %5777 = vmatprep.subr.mxu0 0.0
    %5778 = vmatpush1.msra.mxu0 %v4223
    %5779 = vmatprep.subr.mxu0 0.0
    %5780 = vmatpush1.msra.mxu0 %v4222
    %5781 = vmatprep.subr.mxu0 0.0
    %5782 = vmatpush1.msra.mxu0 %v4221
    %5783 = vmatprep.subr.mxu0 0.0
    %5784 = vmatpush1.msra.mxu0 %v4220
    %5785 = vmatprep.subr.mxu0 0.0
    %5786 = vmatpush2.msra.mxu0 %v4251
    %5787 = vmatprep.subr.mxu0 0.0
    %5788 = vmatpush2.msra.mxu0 %v4250
    %5789 = vmatprep.subr.mxu0 0.0
    %5790 = vmatpush2.msra.mxu0 %v4249
    %5791 = vmatprep.subr.mxu0 0.0
    %5792 = vmatpush2.msra.mxu0 %v4248
    %5793 = vmatprep.subr.mxu0 0.0
    %5794 = vmatpush2.msra.mxu0 %v4247
    %5795 = vmatprep.subr.mxu0 0.0
    %5796 = vmatpush2.msra.mxu0 %v4246
    %5797 = vmatprep.subr.mxu0 0.0
    %5798 = vmatpush2.msra.mxu0 %v4245
    %5799 = vmatprep.subr.mxu0 0.0
    %5800 = vmatpush2.msra.mxu0 %v4244
    %5801 = vmatprep.subr.mxu0 0.0
    %5802 = vmatpush2.msra.mxu0 %v4243
    %5803 = vmatprep.subr.mxu0 0.0
    %5804 = vmatpush2.msra.mxu0 %v4242
    %5805 = vmatprep.subr.mxu0 0.0
    %5806 = vmatpush2.msra.mxu0 %v4241
    %5807 = vmatprep.subr.mxu0 0.0
    %5808 = vmatpush2.msra.mxu0 %v4240
    %5809 = vmatprep.subr.mxu0 0.0
    %5810 = vmatpush2.msra.mxu0 %v4239
    %5811 = vmatprep.subr.mxu0 0.0
    %5812 = vmatpush2.msra.mxu0 %v4238
    %5813 = vmatprep.subr.mxu0 0.0
    %5814 = vmatpush2.msra.mxu0 %v4237
    %5815 = vmatprep.subr.mxu0 0.0
    %5816 = vmatpush2.msra.mxu0 %v4236
    %5817 = vmatprep.mubr.f32.mxu0 %v5547
    %5818 = vmatmul.mubr.f32.gmra.mxu0 %v5546
    %v5819 = vpop.f32.mrf.mxu0
    %v5820 = vadd.f32 %v5675, %v5819
    %v5821 = vpop.f32.mrf.mxu0
    %5822 = vmatprep.mubr.f32.mxu0 %v5551
    %5823 = vmatmul.mubr.f32.gmra.mxu0 %v5550
    %v5824 = vpop.f32.mrf.mxu0
    %v5825 = vadd.f32 %v5680, %v5824
    %v5826 = vpop.f32.mrf.mxu0
    %5827 = vmatprep.mubr.f32.mxu0 %v5555
    %5828 = vmatmul.mubr.f32.gmra.mxu0 %v5554
    %v5829 = vpop.f32.mrf.mxu0
    %v5830 = vadd.f32 %v5685, %v5829
    %v5831 = vpop.f32.mrf.mxu0
    %5832 = vmatprep.mubr.f32.mxu0 %v5559
    %5833 = vmatmul.mubr.f32.gmra.mxu0 %v5558
    %v5834 = vpop.f32.mrf.mxu0
    %v5835 = vadd.f32 %v5690, %v5834
    %v5836 = vpop.f32.mrf.mxu0
    %5837 = vmatprep.mubr.f32.mxu0 %v5563
    %5838 = vmatmul.mubr.f32.gmra.mxu0 %v5562
    %v5839 = vpop.f32.mrf.mxu0
    %v5840 = vadd.f32 %v5695, %v5839
    %v5841 = vpop.f32.mrf.mxu0
    %5842 = vmatprep.mubr.f32.mxu0 %v5567
    %5843 = vmatmul.mubr.f32.gmra.mxu0 %v5566
    %v5844 = vpop.f32.mrf.mxu0
    %v5845 = vadd.f32 %v5700, %v5844
    %v5846 = vpop.f32.mrf.mxu0
    %5847 = vmatprep.mubr.f32.mxu0 %v5571
    %5848 = vmatmul.mubr.f32.gmra.mxu0 %v5570
    %v5849 = vpop.f32.mrf.mxu0
    %v5850 = vadd.f32 %v5705, %v5849
    %v5851 = vpop.f32.mrf.mxu0
    %5852 = vmatprep.mubr.f32.mxu0 %v5575
    %5853 = vmatmul.mubr.f32.gmra.mxu0 %v5574
    %v5854 = vpop.f32.mrf.mxu0
    %v5855 = vadd.f32 %v5710, %v5854
    %v5856 = vpop.f32.mrf.mxu0
    %5857 = vmatprep.mubr.f32.mxu0 %v5579
    %5858 = vmatmul.mubr.f32.gmra.mxu0 %v5578
    %v5859 = vpop.f32.mrf.mxu0
    %v5860 = vadd.f32 %v5715, %v5859
    %v5861 = vpop.f32.mrf.mxu0
    %5862 = vmatprep.mubr.f32.mxu0 %v5583
    %5863 = vmatmul.mubr.f32.gmra.mxu0 %v5582
    %v5864 = vpop.f32.mrf.mxu0
    %v5865 = vadd.f32 %v5720, %v5864
    %v5866 = vpop.f32.mrf.mxu0
    %5867 = vmatprep.mubr.f32.mxu0 %v5587
    %5868 = vmatmul.mubr.f32.gmra.mxu0 %v5586
    %v5869 = vpop.f32.mrf.mxu0
    %v5870 = vadd.f32 %v5725, %v5869
    %v5871 = vpop.f32.mrf.mxu0
    %5872 = vmatprep.mubr.f32.mxu0 %v5591
    %5873 = vmatmul.mubr.f32.gmra.mxu0 %v5590
    %v5874 = vpop.f32.mrf.mxu0
    %v5875 = vadd.f32 %v5730, %v5874
    %v5876 = vpop.f32.mrf.mxu0
    %5877 = vmatprep.mubr.f32.mxu0 %v5595
    %5878 = vmatmul.mubr.f32.gmra.mxu0 %v5594
    %v5879 = vpop.f32.mrf.mxu0
    %v5880 = vadd.f32 %v5735, %v5879
    %v5881 = vpop.f32.mrf.mxu0
    %5882 = vmatprep.mubr.f32.mxu0 %v5599
    %5883 = vmatmul.mubr.f32.gmra.mxu0 %v5598
    %v5884 = vpop.f32.mrf.mxu0
    %v5885 = vadd.f32 %v5740, %v5884
    %v5886 = vpop.f32.mrf.mxu0
    %5887 = vmatprep.mubr.f32.mxu0 %v5603
    %5888 = vmatmul.mubr.f32.gmra.mxu0 %v5602
    %v5889 = vpop.f32.mrf.mxu0
    %v5890 = vadd.f32 %v5745, %v5889
    %v5891 = vpop.f32.mrf.mxu0
    %5892 = vmatprep.mubr.f32.mxu0 %v5607
    %5893 = vmatmul.mubr.f32.gmra.mxu0 %v5606
    %v5894 = vpop.f32.mrf.mxu0
    %v5895 = vadd.f32 %v5750, %v5894
    %v5896 = vpop.f32.mrf.mxu0
    %5897 = vdwg.mxu0
    %5898 = vst [vmem:[%s19] sm:$0xff] %v5820
    %5899 = vst [vmem:[%s19 + $0x8] sm:$0xff] %v5825
    %5900 = vst [vmem:[%s19 + $0x10] sm:$0xff] %v5830
    %5901 = vst [vmem:[%s19 + $0x18] sm:$0xff] %v5835
    %5902 = vst [vmem:[%s19 + $0x20] sm:$0xff] %v5840
    %5903 = vst [vmem:[%s19 + $0x28] sm:$0xff] %v5845
    %5904 = vst [vmem:[%s19 + $0x30] sm:$0xff] %v5850
    %5905 = vst [vmem:[%s19 + $0x38] sm:$0xff] %v5855
    %5906 = vst [vmem:[%s19 + $0x40] sm:$0xff] %v5860
    %5907 = vst [vmem:[%s19 + $0x48] sm:$0xff] %v5865
    %5908 = vst [vmem:[%s19 + $0x50] sm:$0xff] %v5870
    %5909 = vst [vmem:[%s19 + $0x58] sm:$0xff] %v5875
    %5910 = vst [vmem:[%s19 + $0x60] sm:$0xff] %v5880
    %5911 = vst [vmem:[%s19 + $0x68] sm:$0xff] %v5885
    %5912 = vst [vmem:[%s19 + $0x70] sm:$0xff] %v5890
    %5913 = vst [vmem:[%s19 + $0x78] sm:$0xff] %v5895
    %v5914 = vsel %vm2386, %v3076, 0
    %v5916 = vsel %vm2386, %v3081, 0
    %v5918 = vsel %vm2386, %v3086, 0
    %v5920 = vsel %vm2386, %v3091, 0
    %v5922 = vsel %vm2386, %v3096, 0
    %v5924 = vsel %vm2386, %v3101, 0
    %v5926 = vsel %vm2386, %v3106, 0
    %v5928 = vsel %vm2386, %v3111, 0
    %v5930 = vsel %vm2386, %v3116, 0
    %v5932 = vsel %vm2386, %v3121, 0
    %v5934 = vsel %vm2386, %v3126, 0
    %v5936 = vsel %vm2386, %v3131, 0
    %v5938 = vsel %vm2386, %v3136, 0
    %v5940 = vsel %vm2386, %v3141, 0
    %v5942 = vsel %vm2386, %v3146, 0
    %v5944 = vsel %vm2386, %v3151, 0
    %v5946 = vsel %vm2386, %v3492, 0
    %v5948 = vsel %vm2386, %v3494, 0
    %v5950 = vsel %vm2386, %v3496, 0
    %v5952 = vsel %vm2386, %v3498, 0
    %v5954 = vsel %vm2386, %v3500, 0
    %v5956 = vsel %vm2386, %v3502, 0
    %v5958 = vsel %vm2386, %v3504, 0
    %v5960 = vsel %vm2386, %v3506, 0
    %v5962 = vsel %vm2386, %v3508, 0
    %v5964 = vsel %vm2386, %v3510, 0
    %v5966 = vsel %vm2386, %v3512, 0
    %v5968 = vsel %vm2386, %v3514, 0
    %v5970 = vsel %vm2386, %v3516, 0
    %v5972 = vsel %vm2386, %v3518, 0
    %v5974 = vsel %vm2386, %v3520, 0
    %v5976 = vsel %vm2386, %v3522, 0
    %v5978 = vsel %vm2386, %v3524, 0
    %v5980 = vsel %vm2386, %v3526, 0
    %v5982 = vsel %vm2386, %v3528, 0
    %v5984 = vsel %vm2386, %v3530, 0
    %v5986 = vsel %vm2386, %v3532, 0
    %v5988 = vsel %vm2386, %v3534, 0
    %v5990 = vsel %vm2386, %v3536, 0
    %v5992 = vsel %vm2386, %v3538, 0
    %v5994 = vsel %vm2386, %v3540, 0
    %v5996 = vsel %vm2386, %v3542, 0
    %v5998 = vsel %vm2386, %v3544, 0
    %v6000 = vsel %vm2386, %v3546, 0
    %v6002 = vsel %vm2386, %v3548, 0
    %v6004 = vsel %vm2386, %v3550, 0
    %v6006 = vsel %vm2386, %v3552, 0
    %v6008 = vsel %vm2386, %v3554, 0
    %v6010 = vsel %vm2386, %v3556, 0
    %v6012 = vsel %vm2386, %v3558, 0
    %v6014 = vsel %vm2386, %v3560, 0
    %v6016 = vsel %vm2386, %v3562, 0
    %v6018 = vsel %vm2386, %v3564, 0
    %v6020 = vsel %vm2386, %v3566, 0
    %v6022 = vsel %vm2386, %v3568, 0
    %v6024 = vsel %vm2386, %v3570, 0
    %v6026 = vsel %vm2386, %v3572, 0
    %v6028 = vsel %vm2386, %v3574, 0
    %v6030 = vsel %vm2386, %v3576, 0
    %v6032 = vsel %vm2386, %v3578, 0
    %v6034 = vsel %vm2386, %v3580, 0
    %v6036 = vsel %vm2386, %v3582, 0
    %v6038 = vsel %vm2386, %v3584, 0
    %v6040 = vsel %vm2386, %v3586, 0
    %6042 = vmatprep.subr.mxu0 0.0
    %6043 = vmatpush1.msra.mxu0 0.0
    %6044 = vmatprep.subr.mxu0 0.0
    %6045 = vmatpush1.msra.mxu0 0.0
    %6046 = vmatprep.subr.mxu0 0.0
    %6047 = vmatpush1.msra.mxu0 0.0
    %6048 = vmatprep.subr.mxu0 0.0
    %6049 = vmatpush1.msra.mxu0 0.0
    %6050 = vmatprep.subr.mxu0 0.0
    %6051 = vmatpush1.msra.mxu0 0.0
    %6052 = vmatprep.subr.mxu0 0.0
    %6053 = vmatpush1.msra.mxu0 0.0
    %6054 = vmatprep.subr.mxu0 0.0
    %6055 = vmatpush1.msra.mxu0 0.0
    %6056 = vmatprep.subr.mxu0 0.0
    %6057 = vmatpush1.msra.mxu0 0.0
    %6058 = vmatprep.subr.mxu0 0.0
    %6059 = vmatpush1.msra.mxu0 0.0
    %6060 = vmatprep.subr.mxu0 0.0
    %6061 = vmatpush1.msra.mxu0 0.0
    %6062 = vmatprep.subr.mxu0 0.0
    %6063 = vmatpush1.msra.mxu0 0.0
    %6064 = vmatprep.subr.mxu0 0.0
    %6065 = vmatpush1.msra.mxu0 0.0
    %6066 = vmatprep.subr.mxu0 %v4184
    %6067 = vmatpush1.msra.mxu0 %v4183
    %6068 = vmatprep.subr.mxu0 %v4180
    %6069 = vmatpush1.msra.mxu0 %v4179
    %6070 = vmatprep.subr.mxu0 %v4176
    %6071 = vmatpush1.msra.mxu0 %v4175
    %6072 = vmatprep.subr.mxu0 %v4172
    %6073 = vmatpush1.msra.mxu0 %v4171
    %6074 = vmatprep.subr.mxu0 0.0
    %6075 = vmatpush2.msra.mxu0 0.0
    %6076 = vmatprep.subr.mxu0 0.0
    %6077 = vmatpush2.msra.mxu0 0.0
    %6078 = vmatprep.subr.mxu0 0.0
    %6079 = vmatpush2.msra.mxu0 0.0
    %6080 = vmatprep.subr.mxu0 0.0
    %6081 = vmatpush2.msra.mxu0 0.0
    %6082 = vmatprep.subr.mxu0 0.0
    %6083 = vmatpush2.msra.mxu0 0.0
    %6084 = vmatprep.subr.mxu0 0.0
    %6085 = vmatpush2.msra.mxu0 0.0
    %6086 = vmatprep.subr.mxu0 0.0
    %6087 = vmatpush2.msra.mxu0 0.0
    %6088 = vmatprep.subr.mxu0 0.0
    %6089 = vmatpush2.msra.mxu0 0.0
    %6090 = vmatprep.subr.mxu0 0.0
    %6091 = vmatpush2.msra.mxu0 0.0
    %6092 = vmatprep.subr.mxu0 0.0
    %6093 = vmatpush2.msra.mxu0 0.0
    %6094 = vmatprep.subr.mxu0 0.0
    %6095 = vmatpush2.msra.mxu0 0.0
    %6096 = vmatprep.subr.mxu0 0.0
    %6097 = vmatpush2.msra.mxu0 0.0
    %6098 = vmatprep.subr.mxu0 0.0
    %6099 = vmatpush2.msra.mxu0 0.0
    %6100 = vmatprep.subr.mxu0 0.0
    %6101 = vmatpush2.msra.mxu0 0.0
    %6102 = vmatprep.subr.mxu0 0.0
    %6103 = vmatpush2.msra.mxu0 0.0
    %6104 = vmatprep.subr.mxu0 0.0
    %6105 = vmatpush2.msra.mxu0 0.0
    %6106 = vmatprep.mubr.f32.mxu0 0.0
    %6107 = vmatmul.mubr.f32.gmra.mxu0 %v5914
    %v6108 = vpop.f32.mrf.mxu0
    %v6109 = vadd.f32 %v4257, %v6108
    %v6110 = vpop.f32.mrf.mxu0
    %v6111 = vadd.f32 %v4261, %v6110
    %6112 = vmatprep.mubr.f32.mxu0 0.0
    %6113 = vmatmul.mubr.f32.gmra.mxu0 %v5916
    %v6114 = vpop.f32.mrf.mxu0
    %v6115 = vadd.f32 %v4257, %v6114
    %v6116 = vpop.f32.mrf.mxu0
    %v6117 = vadd.f32 %v4261, %v6116
    %6118 = vmatprep.mubr.f32.mxu0 0.0
    %6119 = vmatmul.mubr.f32.gmra.mxu0 %v5918
    %v6120 = vpop.f32.mrf.mxu0
    %v6121 = vadd.f32 %v4257, %v6120
    %v6122 = vpop.f32.mrf.mxu0
    %v6123 = vadd.f32 %v4261, %v6122
    %6124 = vmatprep.mubr.f32.mxu0 0.0
    %6125 = vmatmul.mubr.f32.gmra.mxu0 %v5920
    %v6126 = vpop.f32.mrf.mxu0
    %v6127 = vadd.f32 %v4257, %v6126
    %v6128 = vpop.f32.mrf.mxu0
    %v6129 = vadd.f32 %v4261, %v6128
    %6130 = vmatprep.mubr.f32.mxu0 0.0
    %6131 = vmatmul.mubr.f32.gmra.mxu0 %v5922
    %v6132 = vpop.f32.mrf.mxu0
    %v6133 = vadd.f32 %v4257, %v6132
    %v6134 = vpop.f32.mrf.mxu0
    %v6135 = vadd.f32 %v4261, %v6134
    %6136 = vmatprep.mubr.f32.mxu0 0.0
    %6137 = vmatmul.mubr.f32.gmra.mxu0 %v5924
    %v6138 = vpop.f32.mrf.mxu0
    %v6139 = vadd.f32 %v4257, %v6138
    %v6140 = vpop.f32.mrf.mxu0
    %v6141 = vadd.f32 %v4261, %v6140
    %6142 = vmatprep.mubr.f32.mxu0 0.0
    %6143 = vmatmul.mubr.f32.gmra.mxu0 %v5926
    %v6144 = vpop.f32.mrf.mxu0
    %v6145 = vadd.f32 %v4257, %v6144
    %v6146 = vpop.f32.mrf.mxu0
    %v6147 = vadd.f32 %v4261, %v6146
    %6148 = vmatprep.mubr.f32.mxu0 0.0
    %6149 = vmatmul.mubr.f32.gmra.mxu0 %v5928
    %v6150 = vpop.f32.mrf.mxu0
    %v6151 = vadd.f32 %v4257, %v6150
    %v6152 = vpop.f32.mrf.mxu0
    %v6153 = vadd.f32 %v4261, %v6152
    %6154 = vmatprep.mubr.f32.mxu0 0.0
    %6155 = vmatmul.mubr.f32.gmra.mxu0 %v5930
    %v6156 = vpop.f32.mrf.mxu0
    %v6157 = vadd.f32 %v4257, %v6156
    %v6158 = vpop.f32.mrf.mxu0
    %v6159 = vadd.f32 %v4261, %v6158
    %6160 = vmatprep.mubr.f32.mxu0 0.0
    %6161 = vmatmul.mubr.f32.gmra.mxu0 %v5932
    %v6162 = vpop.f32.mrf.mxu0
    %v6163 = vadd.f32 %v4257, %v6162
    %v6164 = vpop.f32.mrf.mxu0
    %v6165 = vadd.f32 %v4261, %v6164
    %6166 = vmatprep.mubr.f32.mxu0 0.0
    %6167 = vmatmul.mubr.f32.gmra.mxu0 %v5934
    %v6168 = vpop.f32.mrf.mxu0
    %v6169 = vadd.f32 %v4257, %v6168
    %v6170 = vpop.f32.mrf.mxu0
    %v6171 = vadd.f32 %v4261, %v6170
    %6172 = vmatprep.mubr.f32.mxu0 0.0
    %6173 = vmatmul.mubr.f32.gmra.mxu0 %v5936
    %v6174 = vpop.f32.mrf.mxu0
    %v6175 = vadd.f32 %v4257, %v6174
    %v6176 = vpop.f32.mrf.mxu0
    %v6177 = vadd.f32 %v4261, %v6176
    %6178 = vmatprep.mubr.f32.mxu0 0.0
    %6179 = vmatmul.mubr.f32.gmra.mxu0 %v5938
    %v6180 = vpop.f32.mrf.mxu0
    %v6181 = vadd.f32 %v4257, %v6180
    %v6182 = vpop.f32.mrf.mxu0
    %v6183 = vadd.f32 %v4261, %v6182
    %6184 = vmatprep.mubr.f32.mxu0 0.0
    %6185 = vmatmul.mubr.f32.gmra.mxu0 %v5940
    %v6186 = vpop.f32.mrf.mxu0
    %v6187 = vadd.f32 %v4257, %v6186
    %v6188 = vpop.f32.mrf.mxu0
    %v6189 = vadd.f32 %v4261, %v6188
    %6190 = vmatprep.mubr.f32.mxu0 0.0
    %6191 = vmatmul.mubr.f32.gmra.mxu0 %v5942
    %v6192 = vpop.f32.mrf.mxu0
    %v6193 = vadd.f32 %v4257, %v6192
    %v6194 = vpop.f32.mrf.mxu0
    %v6195 = vadd.f32 %v4261, %v6194
    %6196 = vmatprep.mubr.f32.mxu0 0.0
    %6197 = vmatmul.mubr.f32.gmra.mxu0 %v5944
    %v6198 = vpop.f32.mrf.mxu0
    %v6199 = vadd.f32 %v4257, %v6198
    %v6200 = vpop.f32.mrf.mxu0
    %v6201 = vadd.f32 %v4261, %v6200
    %6202 = vmatprep.mubr.f32.mxu0 0.0
    %6203 = vmatmul.mubr.f32.gmra.mxu0 %v5946
    %v6204 = vpop.f32.mrf.mxu0
    %v6205 = vadd.f32 %v4257, %v6204
    %v6206 = vpop.f32.mrf.mxu0
    %v6207 = vadd.f32 %v4261, %v6206
    %6208 = vmatprep.mubr.f32.mxu0 0.0
    %6209 = vmatmul.mubr.f32.gmra.mxu0 %v5948
    %v6210 = vpop.f32.mrf.mxu0
    %v6211 = vadd.f32 %v4257, %v6210
    %v6212 = vpop.f32.mrf.mxu0
    %v6213 = vadd.f32 %v4261, %v6212
    %6214 = vmatprep.mubr.f32.mxu0 0.0
    %6215 = vmatmul.mubr.f32.gmra.mxu0 %v5950
    %v6216 = vpop.f32.mrf.mxu0
    %v6217 = vadd.f32 %v4257, %v6216
    %v6218 = vpop.f32.mrf.mxu0
    %v6219 = vadd.f32 %v4261, %v6218
    %6220 = vmatprep.mubr.f32.mxu0 0.0
    %6221 = vmatmul.mubr.f32.gmra.mxu0 %v5952
    %v6222 = vpop.f32.mrf.mxu0
    %v6223 = vadd.f32 %v4257, %v6222
    %v6224 = vpop.f32.mrf.mxu0
    %v6225 = vadd.f32 %v4261, %v6224
    %6226 = vmatprep.mubr.f32.mxu0 0.0
    %6227 = vmatmul.mubr.f32.gmra.mxu0 %v5954
    %v6228 = vpop.f32.mrf.mxu0
    %v6229 = vadd.f32 %v4257, %v6228
    %v6230 = vpop.f32.mrf.mxu0
    %v6231 = vadd.f32 %v4261, %v6230
    %6232 = vmatprep.mubr.f32.mxu0 0.0
    %6233 = vmatmul.mubr.f32.gmra.mxu0 %v5956
    %v6234 = vpop.f32.mrf.mxu0
    %v6235 = vadd.f32 %v4257, %v6234
    %v6236 = vpop.f32.mrf.mxu0
    %v6237 = vadd.f32 %v4261, %v6236
    %6238 = vmatprep.mubr.f32.mxu0 0.0
    %6239 = vmatmul.mubr.f32.gmra.mxu0 %v5958
    %v6240 = vpop.f32.mrf.mxu0
    %v6241 = vadd.f32 %v4257, %v6240
    %v6242 = vpop.f32.mrf.mxu0
    %v6243 = vadd.f32 %v4261, %v6242
    %6244 = vmatprep.mubr.f32.mxu0 0.0
    %6245 = vmatmul.mubr.f32.gmra.mxu0 %v5960
    %v6246 = vpop.f32.mrf.mxu0
    %v6247 = vadd.f32 %v4257, %v6246
    %v6248 = vpop.f32.mrf.mxu0
    %v6249 = vadd.f32 %v4261, %v6248
    %6250 = vmatprep.mubr.f32.mxu0 0.0
    %6251 = vmatmul.mubr.f32.gmra.mxu0 %v5962
    %v6252 = vpop.f32.mrf.mxu0
    %v6253 = vadd.f32 %v4257, %v6252
    %v6254 = vpop.f32.mrf.mxu0
    %v6255 = vadd.f32 %v4261, %v6254
    %6256 = vmatprep.mubr.f32.mxu0 0.0
    %6257 = vmatmul.mubr.f32.gmra.mxu0 %v5964
    %v6258 = vpop.f32.mrf.mxu0
    %v6259 = vadd.f32 %v4257, %v6258
    %v6260 = vpop.f32.mrf.mxu0
    %v6261 = vadd.f32 %v4261, %v6260
    %6262 = vmatprep.mubr.f32.mxu0 0.0
    %6263 = vmatmul.mubr.f32.gmra.mxu0 %v5966
    %v6264 = vpop.f32.mrf.mxu0
    %v6265 = vadd.f32 %v4257, %v6264
    %v6266 = vpop.f32.mrf.mxu0
    %v6267 = vadd.f32 %v4261, %v6266
    %6268 = vmatprep.mubr.f32.mxu0 0.0
    %6269 = vmatmul.mubr.f32.gmra.mxu0 %v5968
    %v6270 = vpop.f32.mrf.mxu0
    %v6271 = vadd.f32 %v4257, %v6270
    %v6272 = vpop.f32.mrf.mxu0
    %v6273 = vadd.f32 %v4261, %v6272
    %6274 = vmatprep.mubr.f32.mxu0 0.0
    %6275 = vmatmul.mubr.f32.gmra.mxu0 %v5970
    %v6276 = vpop.f32.mrf.mxu0
    %v6277 = vadd.f32 %v4257, %v6276
    %v6278 = vpop.f32.mrf.mxu0
    %v6279 = vadd.f32 %v4261, %v6278
    %6280 = vmatprep.mubr.f32.mxu0 0.0
    %6281 = vmatmul.mubr.f32.gmra.mxu0 %v5972
    %v6282 = vpop.f32.mrf.mxu0
    %v6283 = vadd.f32 %v4257, %v6282
    %v6284 = vpop.f32.mrf.mxu0
    %v6285 = vadd.f32 %v4261, %v6284
    %6286 = vmatprep.mubr.f32.mxu0 0.0
    %6287 = vmatmul.mubr.f32.gmra.mxu0 %v5974
    %v6288 = vpop.f32.mrf.mxu0
    %v6289 = vadd.f32 %v4257, %v6288
    %v6290 = vpop.f32.mrf.mxu0
    %v6291 = vadd.f32 %v4261, %v6290
    %6292 = vmatprep.mubr.f32.mxu0 0.0
    %6293 = vmatmul.mubr.f32.gmra.mxu0 %v5976
    %v6294 = vpop.f32.mrf.mxu0
    %v6295 = vadd.f32 %v4257, %v6294
    %v6296 = vpop.f32.mrf.mxu0
    %v6297 = vadd.f32 %v4261, %v6296
    %6298 = vmatprep.mubr.f32.mxu0 0.0
    %6299 = vmatmul.mubr.f32.gmra.mxu0 %v5978
    %v6300 = vpop.f32.mrf.mxu0
    %v6301 = vadd.f32 %v4257, %v6300
    %v6302 = vpop.f32.mrf.mxu0
    %v6303 = vadd.f32 %v4261, %v6302
    %6304 = vmatprep.mubr.f32.mxu0 0.0
    %6305 = vmatmul.mubr.f32.gmra.mxu0 %v5980
    %v6306 = vpop.f32.mrf.mxu0
    %v6307 = vadd.f32 %v4257, %v6306
    %v6308 = vpop.f32.mrf.mxu0
    %v6309 = vadd.f32 %v4261, %v6308
    %6310 = vmatprep.mubr.f32.mxu0 0.0
    %6311 = vmatmul.mubr.f32.gmra.mxu0 %v5982
    %v6312 = vpop.f32.mrf.mxu0
    %v6313 = vadd.f32 %v4257, %v6312
    %v6314 = vpop.f32.mrf.mxu0
    %v6315 = vadd.f32 %v4261, %v6314
    %6316 = vmatprep.mubr.f32.mxu0 0.0
    %6317 = vmatmul.mubr.f32.gmra.mxu0 %v5984
    %v6318 = vpop.f32.mrf.mxu0
    %v6319 = vadd.f32 %v4257, %v6318
    %v6320 = vpop.f32.mrf.mxu0
    %v6321 = vadd.f32 %v4261, %v6320
    %6322 = vmatprep.mubr.f32.mxu0 0.0
    %6323 = vmatmul.mubr.f32.gmra.mxu0 %v5986
    %v6324 = vpop.f32.mrf.mxu0
    %v6325 = vadd.f32 %v4257, %v6324
    %v6326 = vpop.f32.mrf.mxu0
    %v6327 = vadd.f32 %v4261, %v6326
    %6328 = vmatprep.mubr.f32.mxu0 0.0
    %6329 = vmatmul.mubr.f32.gmra.mxu0 %v5988
    %v6330 = vpop.f32.mrf.mxu0
    %v6331 = vadd.f32 %v4257, %v6330
    %v6332 = vpop.f32.mrf.mxu0
    %v6333 = vadd.f32 %v4261, %v6332
    %6334 = vmatprep.mubr.f32.mxu0 0.0
    %6335 = vmatmul.mubr.f32.gmra.mxu0 %v5990
    %v6336 = vpop.f32.mrf.mxu0
    %v6337 = vadd.f32 %v4257, %v6336
    %v6338 = vpop.f32.mrf.mxu0
    %v6339 = vadd.f32 %v4261, %v6338
    %6340 = vmatprep.mubr.f32.mxu0 0.0
    %6341 = vmatmul.mubr.f32.gmra.mxu0 %v5992
    %v6342 = vpop.f32.mrf.mxu0
    %v6343 = vadd.f32 %v4257, %v6342
    %v6344 = vpop.f32.mrf.mxu0
    %v6345 = vadd.f32 %v4261, %v6344
    %6346 = vmatprep.mubr.f32.mxu0 0.0
    %6347 = vmatmul.mubr.f32.gmra.mxu0 %v5994
    %v6348 = vpop.f32.mrf.mxu0
    %v6349 = vadd.f32 %v4257, %v6348
    %v6350 = vpop.f32.mrf.mxu0
    %v6351 = vadd.f32 %v4261, %v6350
    %6352 = vmatprep.mubr.f32.mxu0 0.0
    %6353 = vmatmul.mubr.f32.gmra.mxu0 %v5996
    %v6354 = vpop.f32.mrf.mxu0
    %v6355 = vadd.f32 %v4257, %v6354
    %v6356 = vpop.f32.mrf.mxu0
    %v6357 = vadd.f32 %v4261, %v6356
    %6358 = vmatprep.mubr.f32.mxu0 0.0
    %6359 = vmatmul.mubr.f32.gmra.mxu0 %v5998
    %v6360 = vpop.f32.mrf.mxu0
    %v6361 = vadd.f32 %v4257, %v6360
    %v6362 = vpop.f32.mrf.mxu0
    %v6363 = vadd.f32 %v4261, %v6362
    %6364 = vmatprep.mubr.f32.mxu0 0.0
    %6365 = vmatmul.mubr.f32.gmra.mxu0 %v6000
    %v6366 = vpop.f32.mrf.mxu0
    %v6367 = vadd.f32 %v4257, %v6366
    %v6368 = vpop.f32.mrf.mxu0
    %v6369 = vadd.f32 %v4261, %v6368
    %6370 = vmatprep.mubr.f32.mxu0 0.0
    %6371 = vmatmul.mubr.f32.gmra.mxu0 %v6002
    %v6372 = vpop.f32.mrf.mxu0
    %v6373 = vadd.f32 %v4257, %v6372
    %v6374 = vpop.f32.mrf.mxu0
    %v6375 = vadd.f32 %v4261, %v6374
    %6376 = vmatprep.mubr.f32.mxu0 0.0
    %6377 = vmatmul.mubr.f32.gmra.mxu0 %v6004
    %v6378 = vpop.f32.mrf.mxu0
    %v6379 = vadd.f32 %v4257, %v6378
    %v6380 = vpop.f32.mrf.mxu0
    %v6381 = vadd.f32 %v4261, %v6380
    %6382 = vmatprep.mubr.f32.mxu0 0.0
    %6383 = vmatmul.mubr.f32.gmra.mxu0 %v6006
    %v6384 = vpop.f32.mrf.mxu0
    %v6385 = vadd.f32 %v4257, %v6384
    %v6386 = vpop.f32.mrf.mxu0
    %v6387 = vadd.f32 %v4261, %v6386
    %6388 = vmatprep.mubr.f32.mxu0 0.0
    %6389 = vmatmul.mubr.f32.gmra.mxu0 %v6008
    %v6390 = vpop.f32.mrf.mxu0
    %v6391 = vadd.f32 %v4257, %v6390
    %v6392 = vpop.f32.mrf.mxu0
    %v6393 = vadd.f32 %v4261, %v6392
    %6394 = vmatprep.mubr.f32.mxu0 0.0
    %6395 = vmatmul.mubr.f32.gmra.mxu0 %v6010
    %v6396 = vpop.f32.mrf.mxu0
    %v6397 = vadd.f32 %v4257, %v6396
    %v6398 = vpop.f32.mrf.mxu0
    %v6399 = vadd.f32 %v4261, %v6398
    %6400 = vmatprep.mubr.f32.mxu0 0.0
    %6401 = vmatmul.mubr.f32.gmra.mxu0 %v6012
    %v6402 = vpop.f32.mrf.mxu0
    %v6403 = vadd.f32 %v4257, %v6402
    %v6404 = vpop.f32.mrf.mxu0
    %v6405 = vadd.f32 %v4261, %v6404
    %6406 = vmatprep.mubr.f32.mxu0 0.0
    %6407 = vmatmul.mubr.f32.gmra.mxu0 %v6014
    %v6408 = vpop.f32.mrf.mxu0
    %v6409 = vadd.f32 %v4257, %v6408
    %v6410 = vpop.f32.mrf.mxu0
    %v6411 = vadd.f32 %v4261, %v6410
    %6412 = vmatprep.mubr.f32.mxu0 0.0
    %6413 = vmatmul.mubr.f32.gmra.mxu0 %v6016
    %v6414 = vpop.f32.mrf.mxu0
    %v6415 = vadd.f32 %v4257, %v6414
    %v6416 = vpop.f32.mrf.mxu0
    %v6417 = vadd.f32 %v4261, %v6416
    %6418 = vmatprep.mubr.f32.mxu0 0.0
    %6419 = vmatmul.mubr.f32.gmra.mxu0 %v6018
    %v6420 = vpop.f32.mrf.mxu0
    %v6421 = vadd.f32 %v4257, %v6420
    %v6422 = vpop.f32.mrf.mxu0
    %v6423 = vadd.f32 %v4261, %v6422
    %6424 = vmatprep.mubr.f32.mxu0 0.0
    %6425 = vmatmul.mubr.f32.gmra.mxu0 %v6020
    %v6426 = vpop.f32.mrf.mxu0
    %v6427 = vadd.f32 %v4257, %v6426
    %v6428 = vpop.f32.mrf.mxu0
    %v6429 = vadd.f32 %v4261, %v6428
    %6430 = vmatprep.mubr.f32.mxu0 0.0
    %6431 = vmatmul.mubr.f32.gmra.mxu0 %v6022
    %v6432 = vpop.f32.mrf.mxu0
    %v6433 = vadd.f32 %v4257, %v6432
    %v6434 = vpop.f32.mrf.mxu0
    %v6435 = vadd.f32 %v4261, %v6434
    %6436 = vmatprep.mubr.f32.mxu0 0.0
    %6437 = vmatmul.mubr.f32.gmra.mxu0 %v6024
    %v6438 = vpop.f32.mrf.mxu0
    %v6439 = vadd.f32 %v4257, %v6438
    %v6440 = vpop.f32.mrf.mxu0
    %v6441 = vadd.f32 %v4261, %v6440
    %6442 = vmatprep.mubr.f32.mxu0 0.0
    %6443 = vmatmul.mubr.f32.gmra.mxu0 %v6026
    %v6444 = vpop.f32.mrf.mxu0
    %v6445 = vadd.f32 %v4257, %v6444
    %v6446 = vpop.f32.mrf.mxu0
    %v6447 = vadd.f32 %v4261, %v6446
    %6448 = vmatprep.mubr.f32.mxu0 0.0
    %6449 = vmatmul.mubr.f32.gmra.mxu0 %v6028
    %v6450 = vpop.f32.mrf.mxu0
    %v6451 = vadd.f32 %v4257, %v6450
    %v6452 = vpop.f32.mrf.mxu0
    %v6453 = vadd.f32 %v4261, %v6452
    %6454 = vmatprep.mubr.f32.mxu0 0.0
    %6455 = vmatmul.mubr.f32.gmra.mxu0 %v6030
    %v6456 = vpop.f32.mrf.mxu0
    %v6457 = vadd.f32 %v4257, %v6456
    %v6458 = vpop.f32.mrf.mxu0
    %v6459 = vadd.f32 %v4261, %v6458
    %6460 = vmatprep.mubr.f32.mxu0 0.0
    %6461 = vmatmul.mubr.f32.gmra.mxu0 %v6032
    %v6462 = vpop.f32.mrf.mxu0
    %v6463 = vadd.f32 %v4257, %v6462
    %v6464 = vpop.f32.mrf.mxu0
    %v6465 = vadd.f32 %v4261, %v6464
    %6466 = vmatprep.mubr.f32.mxu0 0.0
    %6467 = vmatmul.mubr.f32.gmra.mxu0 %v6034
    %v6468 = vpop.f32.mrf.mxu0
    %v6469 = vadd.f32 %v4257, %v6468
    %v6470 = vpop.f32.mrf.mxu0
    %v6471 = vadd.f32 %v4261, %v6470
    %6472 = vmatprep.mubr.f32.mxu0 0.0
    %6473 = vmatmul.mubr.f32.gmra.mxu0 %v6036
    %v6474 = vpop.f32.mrf.mxu0
    %v6475 = vadd.f32 %v4257, %v6474
    %v6476 = vpop.f32.mrf.mxu0
    %v6477 = vadd.f32 %v4261, %v6476
    %6478 = vmatprep.mubr.f32.mxu0 0.0
    %6479 = vmatmul.mubr.f32.gmra.mxu0 %v6038
    %v6480 = vpop.f32.mrf.mxu0
    %v6481 = vadd.f32 %v4257, %v6480
    %v6482 = vpop.f32.mrf.mxu0
    %v6483 = vadd.f32 %v4261, %v6482
    %6484 = vmatprep.mubr.f32.mxu0 0.0
    %6485 = vmatmul.mubr.f32.gmra.mxu0 %v6040
    %v6486 = vpop.f32.mrf.mxu0
    %v6487 = vadd.f32 %v4257, %v6486
    %v6488 = vpop.f32.mrf.mxu0
    %v6489 = vadd.f32 %v4261, %v6488
    %6490 = vdwg.mxu0
    %6491 = vmatprep.subr.mxu0 0.0
    %6492 = vmatpush1.msra.mxu0 0.0
    %6493 = vmatprep.subr.mxu0 0.0
    %6494 = vmatpush1.msra.mxu0 0.0
    %6495 = vmatprep.subr.mxu0 0.0
    %6496 = vmatpush1.msra.mxu0 0.0
    %6497 = vmatprep.subr.mxu0 0.0
    %6498 = vmatpush1.msra.mxu0 0.0
    %6499 = vmatprep.subr.mxu0 0.0
    %6500 = vmatpush1.msra.mxu0 0.0
    %6501 = vmatprep.subr.mxu0 0.0
    %6502 = vmatpush1.msra.mxu0 0.0
    %6503 = vmatprep.subr.mxu0 0.0
    %6504 = vmatpush1.msra.mxu0 0.0
    %6505 = vmatprep.subr.mxu0 0.0
    %6506 = vmatpush1.msra.mxu0 0.0
    %6507 = vmatprep.subr.mxu0 0.0
    %6508 = vmatpush1.msra.mxu0 0.0
    %6509 = vmatprep.subr.mxu0 0.0
    %6510 = vmatpush1.msra.mxu0 0.0
    %6511 = vmatprep.subr.mxu0 0.0
    %6512 = vmatpush1.msra.mxu0 0.0
    %6513 = vmatprep.subr.mxu0 0.0
    %6514 = vmatpush1.msra.mxu0 0.0
    %6515 = vmatprep.subr.mxu0 %v4186
    %6516 = vmatpush1.msra.mxu0 %v4185
    %6517 = vmatprep.subr.mxu0 %v4182
    %6518 = vmatpush1.msra.mxu0 %v4181
    %6519 = vmatprep.subr.mxu0 %v4178
    %6520 = vmatpush1.msra.mxu0 %v4177
    %6521 = vmatprep.subr.mxu0 %v4174
    %6522 = vmatpush1.msra.mxu0 %v4173
    %6523 = vmatprep.subr.mxu0 0.0
    %6524 = vmatpush2.msra.mxu0 0.0
    %6525 = vmatprep.subr.mxu0 0.0
    %6526 = vmatpush2.msra.mxu0 0.0
    %6527 = vmatprep.subr.mxu0 0.0
    %6528 = vmatpush2.msra.mxu0 0.0
    %6529 = vmatprep.subr.mxu0 0.0
    %6530 = vmatpush2.msra.mxu0 0.0
    %6531 = vmatprep.subr.mxu0 0.0
    %6532 = vmatpush2.msra.mxu0 0.0
    %6533 = vmatprep.subr.mxu0 0.0
    %6534 = vmatpush2.msra.mxu0 0.0
    %6535 = vmatprep.subr.mxu0 0.0
    %6536 = vmatpush2.msra.mxu0 0.0
    %6537 = vmatprep.subr.mxu0 0.0
    %6538 = vmatpush2.msra.mxu0 0.0
    %6539 = vmatprep.subr.mxu0 0.0
    %6540 = vmatpush2.msra.mxu0 0.0
    %6541 = vmatprep.subr.mxu0 0.0
    %6542 = vmatpush2.msra.mxu0 0.0
    %6543 = vmatprep.subr.mxu0 0.0
    %6544 = vmatpush2.msra.mxu0 0.0
    %6545 = vmatprep.subr.mxu0 0.0
    %6546 = vmatpush2.msra.mxu0 0.0
    %6547 = vmatprep.subr.mxu0 0.0
    %6548 = vmatpush2.msra.mxu0 0.0
    %6549 = vmatprep.subr.mxu0 0.0
    %6550 = vmatpush2.msra.mxu0 0.0
    %6551 = vmatprep.subr.mxu0 0.0
    %6552 = vmatpush2.msra.mxu0 0.0
    %6553 = vmatprep.subr.mxu0 0.0
    %6554 = vmatpush2.msra.mxu0 0.0
    %6555 = vmatprep.mubr.f32.mxu0 0.0
    %6556 = vmatmul.mubr.f32.gmra.mxu0 %v5914
    %v6557 = vpop.f32.mrf.mxu0
    %v6558 = vadd.f32 %v4265, %v6557
    %v6559 = vpop.f32.mrf.mxu0
    %v6560 = vadd.f32 %v4269, %v6559
    %6561 = vmatprep.mubr.f32.mxu0 0.0
    %6562 = vmatmul.mubr.f32.gmra.mxu0 %v5916
    %v6563 = vpop.f32.mrf.mxu0
    %v6564 = vadd.f32 %v4265, %v6563
    %v6565 = vpop.f32.mrf.mxu0
    %v6566 = vadd.f32 %v4269, %v6565
    %6567 = vmatprep.mubr.f32.mxu0 0.0
    %6568 = vmatmul.mubr.f32.gmra.mxu0 %v5918
    %v6569 = vpop.f32.mrf.mxu0
    %v6570 = vadd.f32 %v4265, %v6569
    %v6571 = vpop.f32.mrf.mxu0
    %v6572 = vadd.f32 %v4269, %v6571
    %6573 = vmatprep.mubr.f32.mxu0 0.0
    %6574 = vmatmul.mubr.f32.gmra.mxu0 %v5920
    %v6575 = vpop.f32.mrf.mxu0
    %v6576 = vadd.f32 %v4265, %v6575
    %v6577 = vpop.f32.mrf.mxu0
    %v6578 = vadd.f32 %v4269, %v6577
    %6579 = vmatprep.mubr.f32.mxu0 0.0
    %6580 = vmatmul.mubr.f32.gmra.mxu0 %v5922
    %v6581 = vpop.f32.mrf.mxu0
    %v6582 = vadd.f32 %v4265, %v6581
    %v6583 = vpop.f32.mrf.mxu0
    %v6584 = vadd.f32 %v4269, %v6583
    %6585 = vmatprep.mubr.f32.mxu0 0.0
    %6586 = vmatmul.mubr.f32.gmra.mxu0 %v5924
    %v6587 = vpop.f32.mrf.mxu0
    %v6588 = vadd.f32 %v4265, %v6587
    %v6589 = vpop.f32.mrf.mxu0
    %v6590 = vadd.f32 %v4269, %v6589
    %6591 = vmatprep.mubr.f32.mxu0 0.0
    %6592 = vmatmul.mubr.f32.gmra.mxu0 %v5926
    %v6593 = vpop.f32.mrf.mxu0
    %v6594 = vadd.f32 %v4265, %v6593
    %v6595 = vpop.f32.mrf.mxu0
    %v6596 = vadd.f32 %v4269, %v6595
    %6597 = vmatprep.mubr.f32.mxu0 0.0
    %6598 = vmatmul.mubr.f32.gmra.mxu0 %v5928
    %v6599 = vpop.f32.mrf.mxu0
    %v6600 = vadd.f32 %v4265, %v6599
    %v6601 = vpop.f32.mrf.mxu0
    %v6602 = vadd.f32 %v4269, %v6601
    %6603 = vmatprep.mubr.f32.mxu0 0.0
    %6604 = vmatmul.mubr.f32.gmra.mxu0 %v5930
    %v6605 = vpop.f32.mrf.mxu0
    %v6606 = vadd.f32 %v4265, %v6605
    %v6607 = vpop.f32.mrf.mxu0
    %v6608 = vadd.f32 %v4269, %v6607
    %6609 = vmatprep.mubr.f32.mxu0 0.0
    %6610 = vmatmul.mubr.f32.gmra.mxu0 %v5932
    %v6611 = vpop.f32.mrf.mxu0
    %v6612 = vadd.f32 %v4265, %v6611
    %v6613 = vpop.f32.mrf.mxu0
    %v6614 = vadd.f32 %v4269, %v6613
    %6615 = vmatprep.mubr.f32.mxu0 0.0
    %6616 = vmatmul.mubr.f32.gmra.mxu0 %v5934
    %v6617 = vpop.f32.mrf.mxu0
    %v6618 = vadd.f32 %v4265, %v6617
    %v6619 = vpop.f32.mrf.mxu0
    %v6620 = vadd.f32 %v4269, %v6619
    %6621 = vmatprep.mubr.f32.mxu0 0.0
    %6622 = vmatmul.mubr.f32.gmra.mxu0 %v5936
    %v6623 = vpop.f32.mrf.mxu0
    %v6624 = vadd.f32 %v4265, %v6623
    %v6625 = vpop.f32.mrf.mxu0
    %v6626 = vadd.f32 %v4269, %v6625
    %6627 = vmatprep.mubr.f32.mxu0 0.0
    %6628 = vmatmul.mubr.f32.gmra.mxu0 %v5938
    %v6629 = vpop.f32.mrf.mxu0
    %v6630 = vadd.f32 %v4265, %v6629
    %v6631 = vpop.f32.mrf.mxu0
    %v6632 = vadd.f32 %v4269, %v6631
    %6633 = vmatprep.mubr.f32.mxu0 0.0
    %6634 = vmatmul.mubr.f32.gmra.mxu0 %v5940
    %v6635 = vpop.f32.mrf.mxu0
    %v6636 = vadd.f32 %v4265, %v6635
    %v6637 = vpop.f32.mrf.mxu0
    %v6638 = vadd.f32 %v4269, %v6637
    %6639 = vmatprep.mubr.f32.mxu0 0.0
    %6640 = vmatmul.mubr.f32.gmra.mxu0 %v5942
    %v6641 = vpop.f32.mrf.mxu0
    %v6642 = vadd.f32 %v4265, %v6641
    %v6643 = vpop.f32.mrf.mxu0
    %v6644 = vadd.f32 %v4269, %v6643
    %6645 = vmatprep.mubr.f32.mxu0 0.0
    %6646 = vmatmul.mubr.f32.gmra.mxu0 %v5944
    %v6647 = vpop.f32.mrf.mxu0
    %v6648 = vadd.f32 %v4265, %v6647
    %v6649 = vpop.f32.mrf.mxu0
    %v6650 = vadd.f32 %v4269, %v6649
    %6651 = vmatprep.mubr.f32.mxu0 0.0
    %6652 = vmatmul.mubr.f32.gmra.mxu0 %v5946
    %v6653 = vpop.f32.mrf.mxu0
    %v6654 = vadd.f32 %v4265, %v6653
    %v6655 = vpop.f32.mrf.mxu0
    %v6656 = vadd.f32 %v4269, %v6655
    %6657 = vmatprep.mubr.f32.mxu0 0.0
    %6658 = vmatmul.mubr.f32.gmra.mxu0 %v5948
    %v6659 = vpop.f32.mrf.mxu0
    %v6660 = vadd.f32 %v4265, %v6659
    %v6661 = vpop.f32.mrf.mxu0
    %v6662 = vadd.f32 %v4269, %v6661
    %6663 = vmatprep.mubr.f32.mxu0 0.0
    %6664 = vmatmul.mubr.f32.gmra.mxu0 %v5950
    %v6665 = vpop.f32.mrf.mxu0
    %v6666 = vadd.f32 %v4265, %v6665
    %v6667 = vpop.f32.mrf.mxu0
    %v6668 = vadd.f32 %v4269, %v6667
    %6669 = vmatprep.mubr.f32.mxu0 0.0
    %6670 = vmatmul.mubr.f32.gmra.mxu0 %v5952
    %v6671 = vpop.f32.mrf.mxu0
    %v6672 = vadd.f32 %v4265, %v6671
    %v6673 = vpop.f32.mrf.mxu0
    %v6674 = vadd.f32 %v4269, %v6673
    %6675 = vmatprep.mubr.f32.mxu0 0.0
    %6676 = vmatmul.mubr.f32.gmra.mxu0 %v5954
    %v6677 = vpop.f32.mrf.mxu0
    %v6678 = vadd.f32 %v4265, %v6677
    %v6679 = vpop.f32.mrf.mxu0
    %v6680 = vadd.f32 %v4269, %v6679
    %6681 = vmatprep.mubr.f32.mxu0 0.0
    %6682 = vmatmul.mubr.f32.gmra.mxu0 %v5956
    %v6683 = vpop.f32.mrf.mxu0
    %v6684 = vadd.f32 %v4265, %v6683
    %v6685 = vpop.f32.mrf.mxu0
    %v6686 = vadd.f32 %v4269, %v6685
    %6687 = vmatprep.mubr.f32.mxu0 0.0
    %6688 = vmatmul.mubr.f32.gmra.mxu0 %v5958
    %v6689 = vpop.f32.mrf.mxu0
    %v6690 = vadd.f32 %v4265, %v6689
    %v6691 = vpop.f32.mrf.mxu0
    %v6692 = vadd.f32 %v4269, %v6691
    %6693 = vmatprep.mubr.f32.mxu0 0.0
    %6694 = vmatmul.mubr.f32.gmra.mxu0 %v5960
    %v6695 = vpop.f32.mrf.mxu0
    %v6696 = vadd.f32 %v4265, %v6695
    %v6697 = vpop.f32.mrf.mxu0
    %v6698 = vadd.f32 %v4269, %v6697
    %6699 = vmatprep.mubr.f32.mxu0 0.0
    %6700 = vmatmul.mubr.f32.gmra.mxu0 %v5962
    %v6701 = vpop.f32.mrf.mxu0
    %v6702 = vadd.f32 %v4265, %v6701
    %v6703 = vpop.f32.mrf.mxu0
    %v6704 = vadd.f32 %v4269, %v6703
    %6705 = vmatprep.mubr.f32.mxu0 0.0
    %6706 = vmatmul.mubr.f32.gmra.mxu0 %v5964
    %v6707 = vpop.f32.mrf.mxu0
    %v6708 = vadd.f32 %v4265, %v6707
    %v6709 = vpop.f32.mrf.mxu0
    %v6710 = vadd.f32 %v4269, %v6709
    %6711 = vmatprep.mubr.f32.mxu0 0.0
    %6712 = vmatmul.mubr.f32.gmra.mxu0 %v5966
    %v6713 = vpop.f32.mrf.mxu0
    %v6714 = vadd.f32 %v4265, %v6713
    %v6715 = vpop.f32.mrf.mxu0
    %v6716 = vadd.f32 %v4269, %v6715
    %6717 = vmatprep.mubr.f32.mxu0 0.0
    %6718 = vmatmul.mubr.f32.gmra.mxu0 %v5968
    %v6719 = vpop.f32.mrf.mxu0
    %v6720 = vadd.f32 %v4265, %v6719
    %v6721 = vpop.f32.mrf.mxu0
    %v6722 = vadd.f32 %v4269, %v6721
    %6723 = vmatprep.mubr.f32.mxu0 0.0
    %6724 = vmatmul.mubr.f32.gmra.mxu0 %v5970
    %v6725 = vpop.f32.mrf.mxu0
    %v6726 = vadd.f32 %v4265, %v6725
    %v6727 = vpop.f32.mrf.mxu0
    %v6728 = vadd.f32 %v4269, %v6727
    %6729 = vmatprep.mubr.f32.mxu0 0.0
    %6730 = vmatmul.mubr.f32.gmra.mxu0 %v5972
    %v6731 = vpop.f32.mrf.mxu0
    %v6732 = vadd.f32 %v4265, %v6731
    %v6733 = vpop.f32.mrf.mxu0
    %v6734 = vadd.f32 %v4269, %v6733
    %6735 = vmatprep.mubr.f32.mxu0 0.0
    %6736 = vmatmul.mubr.f32.gmra.mxu0 %v5974
    %v6737 = vpop.f32.mrf.mxu0
    %v6738 = vadd.f32 %v4265, %v6737
    %v6739 = vpop.f32.mrf.mxu0
    %v6740 = vadd.f32 %v4269, %v6739
    %6741 = vmatprep.mubr.f32.mxu0 0.0
    %6742 = vmatmul.mubr.f32.gmra.mxu0 %v5976
    %v6743 = vpop.f32.mrf.mxu0
    %v6744 = vadd.f32 %v4265, %v6743
    %v6745 = vpop.f32.mrf.mxu0
    %v6746 = vadd.f32 %v4269, %v6745
    %6747 = vmatprep.mubr.f32.mxu0 0.0
    %6748 = vmatmul.mubr.f32.gmra.mxu0 %v5978
    %v6749 = vpop.f32.mrf.mxu0
    %v6750 = vadd.f32 %v4265, %v6749
    %v6751 = vpop.f32.mrf.mxu0
    %v6752 = vadd.f32 %v4269, %v6751
    %6753 = vmatprep.mubr.f32.mxu0 0.0
    %6754 = vmatmul.mubr.f32.gmra.mxu0 %v5980
    %v6755 = vpop.f32.mrf.mxu0
    %v6756 = vadd.f32 %v4265, %v6755
    %v6757 = vpop.f32.mrf.mxu0
    %v6758 = vadd.f32 %v4269, %v6757
    %6759 = vmatprep.mubr.f32.mxu0 0.0
    %6760 = vmatmul.mubr.f32.gmra.mxu0 %v5982
    %v6761 = vpop.f32.mrf.mxu0
    %v6762 = vadd.f32 %v4265, %v6761
    %v6763 = vpop.f32.mrf.mxu0
    %v6764 = vadd.f32 %v4269, %v6763
    %6765 = vmatprep.mubr.f32.mxu0 0.0
    %6766 = vmatmul.mubr.f32.gmra.mxu0 %v5984
    %v6767 = vpop.f32.mrf.mxu0
    %v6768 = vadd.f32 %v4265, %v6767
    %v6769 = vpop.f32.mrf.mxu0
    %v6770 = vadd.f32 %v4269, %v6769
    %6771 = vmatprep.mubr.f32.mxu0 0.0
    %6772 = vmatmul.mubr.f32.gmra.mxu0 %v5986
    %v6773 = vpop.f32.mrf.mxu0
    %v6774 = vadd.f32 %v4265, %v6773
    %v6775 = vpop.f32.mrf.mxu0
    %v6776 = vadd.f32 %v4269, %v6775
    %6777 = vmatprep.mubr.f32.mxu0 0.0
    %6778 = vmatmul.mubr.f32.gmra.mxu0 %v5988
    %v6779 = vpop.f32.mrf.mxu0
    %v6780 = vadd.f32 %v4265, %v6779
    %v6781 = vpop.f32.mrf.mxu0
    %v6782 = vadd.f32 %v4269, %v6781
    %6783 = vmatprep.mubr.f32.mxu0 0.0
    %6784 = vmatmul.mubr.f32.gmra.mxu0 %v5990
    %v6785 = vpop.f32.mrf.mxu0
    %v6786 = vadd.f32 %v4265, %v6785
    %v6787 = vpop.f32.mrf.mxu0
    %v6788 = vadd.f32 %v4269, %v6787
    %6789 = vmatprep.mubr.f32.mxu0 0.0
    %6790 = vmatmul.mubr.f32.gmra.mxu0 %v5992
    %v6791 = vpop.f32.mrf.mxu0
    %v6792 = vadd.f32 %v4265, %v6791
    %v6793 = vpop.f32.mrf.mxu0
    %v6794 = vadd.f32 %v4269, %v6793
    %6795 = vmatprep.mubr.f32.mxu0 0.0
    %6796 = vmatmul.mubr.f32.gmra.mxu0 %v5994
    %v6797 = vpop.f32.mrf.mxu0
    %v6798 = vadd.f32 %v4265, %v6797
    %v6799 = vpop.f32.mrf.mxu0
    %v6800 = vadd.f32 %v4269, %v6799
    %6801 = vmatprep.mubr.f32.mxu0 0.0
    %6802 = vmatmul.mubr.f32.gmra.mxu0 %v5996
    %v6803 = vpop.f32.mrf.mxu0
    %v6804 = vadd.f32 %v4265, %v6803
    %v6805 = vpop.f32.mrf.mxu0
    %v6806 = vadd.f32 %v4269, %v6805
    %6807 = vmatprep.mubr.f32.mxu0 0.0
    %6808 = vmatmul.mubr.f32.gmra.mxu0 %v5998
    %v6809 = vpop.f32.mrf.mxu0
    %v6810 = vadd.f32 %v4265, %v6809
    %v6811 = vpop.f32.mrf.mxu0
    %v6812 = vadd.f32 %v4269, %v6811
    %6813 = vmatprep.mubr.f32.mxu0 0.0
    %6814 = vmatmul.mubr.f32.gmra.mxu0 %v6000
    %v6815 = vpop.f32.mrf.mxu0
    %v6816 = vadd.f32 %v4265, %v6815
    %v6817 = vpop.f32.mrf.mxu0
    %v6818 = vadd.f32 %v4269, %v6817
    %6819 = vmatprep.mubr.f32.mxu0 0.0
    %6820 = vmatmul.mubr.f32.gmra.mxu0 %v6002
    %v6821 = vpop.f32.mrf.mxu0
    %v6822 = vadd.f32 %v4265, %v6821
    %v6823 = vpop.f32.mrf.mxu0
    %v6824 = vadd.f32 %v4269, %v6823
    %6825 = vmatprep.mubr.f32.mxu0 0.0
    %6826 = vmatmul.mubr.f32.gmra.mxu0 %v6004
    %v6827 = vpop.f32.mrf.mxu0
    %v6828 = vadd.f32 %v4265, %v6827
    %v6829 = vpop.f32.mrf.mxu0
    %v6830 = vadd.f32 %v4269, %v6829
    %6831 = vmatprep.mubr.f32.mxu0 0.0
    %6832 = vmatmul.mubr.f32.gmra.mxu0 %v6006
    %v6833 = vpop.f32.mrf.mxu0
    %v6834 = vadd.f32 %v4265, %v6833
    %v6835 = vpop.f32.mrf.mxu0
    %v6836 = vadd.f32 %v4269, %v6835
    %6837 = vmatprep.mubr.f32.mxu0 0.0
    %6838 = vmatmul.mubr.f32.gmra.mxu0 %v6008
    %v6839 = vpop.f32.mrf.mxu0
    %v6840 = vadd.f32 %v4265, %v6839
    %v6841 = vpop.f32.mrf.mxu0
    %v6842 = vadd.f32 %v4269, %v6841
    %6843 = vmatprep.mubr.f32.mxu0 0.0
    %6844 = vmatmul.mubr.f32.gmra.mxu0 %v6010
    %v6845 = vpop.f32.mrf.mxu0
    %v6846 = vadd.f32 %v4265, %v6845
    %v6847 = vpop.f32.mrf.mxu0
    %v6848 = vadd.f32 %v4269, %v6847
    %6849 = vmatprep.mubr.f32.mxu0 0.0
    %6850 = vmatmul.mubr.f32.gmra.mxu0 %v6012
    %v6851 = vpop.f32.mrf.mxu0
    %v6852 = vadd.f32 %v4265, %v6851
    %v6853 = vpop.f32.mrf.mxu0
    %v6854 = vadd.f32 %v4269, %v6853
    %6855 = vmatprep.mubr.f32.mxu0 0.0
    %6856 = vmatmul.mubr.f32.gmra.mxu0 %v6014
    %v6857 = vpop.f32.mrf.mxu0
    %v6858 = vadd.f32 %v4265, %v6857
    %v6859 = vpop.f32.mrf.mxu0
    %v6860 = vadd.f32 %v4269, %v6859
    %6861 = vmatprep.mubr.f32.mxu0 0.0
    %6862 = vmatmul.mubr.f32.gmra.mxu0 %v6016
    %v6863 = vpop.f32.mrf.mxu0
    %v6864 = vadd.f32 %v4265, %v6863
    %v6865 = vpop.f32.mrf.mxu0
    %v6866 = vadd.f32 %v4269, %v6865
    %6867 = vmatprep.mubr.f32.mxu0 0.0
    %6868 = vmatmul.mubr.f32.gmra.mxu0 %v6018
    %v6869 = vpop.f32.mrf.mxu0
    %v6870 = vadd.f32 %v4265, %v6869
    %v6871 = vpop.f32.mrf.mxu0
    %v6872 = vadd.f32 %v4269, %v6871
    %6873 = vmatprep.mubr.f32.mxu0 0.0
    %6874 = vmatmul.mubr.f32.gmra.mxu0 %v6020
    %v6875 = vpop.f32.mrf.mxu0
    %v6876 = vadd.f32 %v4265, %v6875
    %v6877 = vpop.f32.mrf.mxu0
    %v6878 = vadd.f32 %v4269, %v6877
    %6879 = vmatprep.mubr.f32.mxu0 0.0
    %6880 = vmatmul.mubr.f32.gmra.mxu0 %v6022
    %v6881 = vpop.f32.mrf.mxu0
    %v6882 = vadd.f32 %v4265, %v6881
    %v6883 = vpop.f32.mrf.mxu0
    %v6884 = vadd.f32 %v4269, %v6883
    %6885 = vmatprep.mubr.f32.mxu0 0.0
    %6886 = vmatmul.mubr.f32.gmra.mxu0 %v6024
    %v6887 = vpop.f32.mrf.mxu0
    %v6888 = vadd.f32 %v4265, %v6887
    %v6889 = vpop.f32.mrf.mxu0
    %v6890 = vadd.f32 %v4269, %v6889
    %6891 = vmatprep.mubr.f32.mxu0 0.0
    %6892 = vmatmul.mubr.f32.gmra.mxu0 %v6026
    %v6893 = vpop.f32.mrf.mxu0
    %v6894 = vadd.f32 %v4265, %v6893
    %v6895 = vpop.f32.mrf.mxu0
    %v6896 = vadd.f32 %v4269, %v6895
    %6897 = vmatprep.mubr.f32.mxu0 0.0
    %6898 = vmatmul.mubr.f32.gmra.mxu0 %v6028
    %v6899 = vpop.f32.mrf.mxu0
    %v6900 = vadd.f32 %v4265, %v6899
    %v6901 = vpop.f32.mrf.mxu0
    %v6902 = vadd.f32 %v4269, %v6901
    %6903 = vmatprep.mubr.f32.mxu0 0.0
    %6904 = vmatmul.mubr.f32.gmra.mxu0 %v6030
    %v6905 = vpop.f32.mrf.mxu0
    %v6906 = vadd.f32 %v4265, %v6905
    %v6907 = vpop.f32.mrf.mxu0
    %v6908 = vadd.f32 %v4269, %v6907
    %6909 = vmatprep.mubr.f32.mxu0 0.0
    %6910 = vmatmul.mubr.f32.gmra.mxu0 %v6032
    %v6911 = vpop.f32.mrf.mxu0
    %v6912 = vadd.f32 %v4265, %v6911
    %v6913 = vpop.f32.mrf.mxu0
    %v6914 = vadd.f32 %v4269, %v6913
    %6915 = vmatprep.mubr.f32.mxu0 0.0
    %6916 = vmatmul.mubr.f32.gmra.mxu0 %v6034
    %v6917 = vpop.f32.mrf.mxu0
    %v6918 = vadd.f32 %v4265, %v6917
    %v6919 = vpop.f32.mrf.mxu0
    %v6920 = vadd.f32 %v4269, %v6919
    %6921 = vmatprep.mubr.f32.mxu0 0.0
    %6922 = vmatmul.mubr.f32.gmra.mxu0 %v6036
    %v6923 = vpop.f32.mrf.mxu0
    %v6924 = vadd.f32 %v4265, %v6923
    %v6925 = vpop.f32.mrf.mxu0
    %v6926 = vadd.f32 %v4269, %v6925
    %6927 = vmatprep.mubr.f32.mxu0 0.0
    %6928 = vmatmul.mubr.f32.gmra.mxu0 %v6038
    %v6929 = vpop.f32.mrf.mxu0
    %v6930 = vadd.f32 %v4265, %v6929
    %v6931 = vpop.f32.mrf.mxu0
    %v6932 = vadd.f32 %v4269, %v6931
    %6933 = vmatprep.mubr.f32.mxu0 0.0
    %6934 = vmatmul.mubr.f32.gmra.mxu0 %v6040
    %v6935 = vpop.f32.mrf.mxu0
    %v6936 = vadd.f32 %v4265, %v6935
    %v6937 = vpop.f32.mrf.mxu0
    %v6938 = vadd.f32 %v4269, %v6937
    %6939 = vdwg.mxu0
    %v6940 = vmax.f32 %v6109, 0.0
    %v6941 = vmax.f32 %v6111, 0.0
    %v6942 = vmax.f32 %v6558, 0.0
    %v6943 = vmax.f32 %v6560, 0.0
    %v6944 = vmax.f32 %v6115, 0.0
    %v6945 = vmax.f32 %v6117, 0.0
    %v6946 = vmax.f32 %v6564, 0.0
    %v6947 = vmax.f32 %v6566, 0.0
    %v6948 = vmax.f32 %v6121, 0.0
    %v6949 = vmax.f32 %v6123, 0.0
    %v6950 = vmax.f32 %v6570, 0.0
    %v6951 = vmax.f32 %v6572, 0.0
    %v6952 = vmax.f32 %v6127, 0.0
    %v6953 = vmax.f32 %v6129, 0.0
    %v6954 = vmax.f32 %v6576, 0.0
    %v6955 = vmax.f32 %v6578, 0.0
    %v6956 = vmax.f32 %v6133, 0.0
    %v6957 = vmax.f32 %v6135, 0.0
    %v6958 = vmax.f32 %v6582, 0.0
    %v6959 = vmax.f32 %v6584, 0.0
    %v6960 = vmax.f32 %v6139, 0.0
    %v6961 = vmax.f32 %v6141, 0.0
    %v6962 = vmax.f32 %v6588, 0.0
    %v6963 = vmax.f32 %v6590, 0.0
    %v6964 = vmax.f32 %v6145, 0.0
    %v6965 = vmax.f32 %v6147, 0.0
    %v6966 = vmax.f32 %v6594, 0.0
    %v6967 = vmax.f32 %v6596, 0.0
    %v6968 = vmax.f32 %v6151, 0.0
    %v6969 = vmax.f32 %v6153, 0.0
    %v6970 = vmax.f32 %v6600, 0.0
    %v6971 = vmax.f32 %v6602, 0.0
    %v6972 = vmax.f32 %v6157, 0.0
    %v6973 = vmax.f32 %v6159, 0.0
    %v6974 = vmax.f32 %v6606, 0.0
    %v6975 = vmax.f32 %v6608, 0.0
    %v6976 = vmax.f32 %v6163, 0.0
    %v6977 = vmax.f32 %v6165, 0.0
    %v6978 = vmax.f32 %v6612, 0.0
    %v6979 = vmax.f32 %v6614, 0.0
    %v6980 = vmax.f32 %v6169, 0.0
    %v6981 = vmax.f32 %v6171, 0.0
    %v6982 = vmax.f32 %v6618, 0.0
    %v6983 = vmax.f32 %v6620, 0.0
    %v6984 = vmax.f32 %v6175, 0.0
    %v6985 = vmax.f32 %v6177, 0.0
    %v6986 = vmax.f32 %v6624, 0.0
    %v6987 = vmax.f32 %v6626, 0.0
    %v6988 = vmax.f32 %v6181, 0.0
    %v6989 = vmax.f32 %v6183, 0.0
    %v6990 = vmax.f32 %v6630, 0.0
    %v6991 = vmax.f32 %v6632, 0.0
    %v6992 = vmax.f32 %v6187, 0.0
    %v6993 = vmax.f32 %v6189, 0.0
    %v6994 = vmax.f32 %v6636, 0.0
    %v6995 = vmax.f32 %v6638, 0.0
    %v6996 = vmax.f32 %v6193, 0.0
    %v6997 = vmax.f32 %v6195, 0.0
    %v6998 = vmax.f32 %v6642, 0.0
    %v6999 = vmax.f32 %v6644, 0.0
    %v7000 = vmax.f32 %v6199, 0.0
    %v7001 = vmax.f32 %v6201, 0.0
    %v7002 = vmax.f32 %v6648, 0.0
    %v7003 = vmax.f32 %v6650, 0.0
    %v7004 = vmax.f32 %v6205, 0.0
    %v7005 = vmax.f32 %v6207, 0.0
    %v7006 = vmax.f32 %v6654, 0.0
    %v7007 = vmax.f32 %v6656, 0.0
    %v7008 = vmax.f32 %v6211, 0.0
    %v7009 = vmax.f32 %v6213, 0.0
    %v7010 = vmax.f32 %v6660, 0.0
    %v7011 = vmax.f32 %v6662, 0.0
    %v7012 = vmax.f32 %v6217, 0.0
    %v7013 = vmax.f32 %v6219, 0.0
    %v7014 = vmax.f32 %v6666, 0.0
    %v7015 = vmax.f32 %v6668, 0.0
    %v7016 = vmax.f32 %v6223, 0.0
    %v7017 = vmax.f32 %v6225, 0.0
    %v7018 = vmax.f32 %v6672, 0.0
    %v7019 = vmax.f32 %v6674, 0.0
    %v7020 = vmax.f32 %v6229, 0.0
    %v7021 = vmax.f32 %v6231, 0.0
    %v7022 = vmax.f32 %v6678, 0.0
    %v7023 = vmax.f32 %v6680, 0.0
    %v7024 = vmax.f32 %v6235, 0.0
    %v7025 = vmax.f32 %v6237, 0.0
    %v7026 = vmax.f32 %v6684, 0.0
    %v7027 = vmax.f32 %v6686, 0.0
    %v7028 = vmax.f32 %v6241, 0.0
    %v7029 = vmax.f32 %v6243, 0.0
    %v7030 = vmax.f32 %v6690, 0.0
    %v7031 = vmax.f32 %v6692, 0.0
    %v7032 = vmax.f32 %v6247, 0.0
    %v7033 = vmax.f32 %v6249, 0.0
    %v7034 = vmax.f32 %v6696, 0.0
    %v7035 = vmax.f32 %v6698, 0.0
    %v7036 = vmax.f32 %v6253, 0.0
    %v7037 = vmax.f32 %v6255, 0.0
    %v7038 = vmax.f32 %v6702, 0.0
    %v7039 = vmax.f32 %v6704, 0.0
    %v7040 = vmax.f32 %v6259, 0.0
    %v7041 = vmax.f32 %v6261, 0.0
    %v7042 = vmax.f32 %v6708, 0.0
    %v7043 = vmax.f32 %v6710, 0.0
    %v7044 = vmax.f32 %v6265, 0.0
    %v7045 = vmax.f32 %v6267, 0.0
    %v7046 = vmax.f32 %v6714, 0.0
    %v7047 = vmax.f32 %v6716, 0.0
    %v7048 = vmax.f32 %v6271, 0.0
    %v7049 = vmax.f32 %v6273, 0.0
    %v7050 = vmax.f32 %v6720, 0.0
    %v7051 = vmax.f32 %v6722, 0.0
    %v7052 = vmax.f32 %v6277, 0.0
    %v7053 = vmax.f32 %v6279, 0.0
    %v7054 = vmax.f32 %v6726, 0.0
    %v7055 = vmax.f32 %v6728, 0.0
    %v7056 = vmax.f32 %v6283, 0.0
    %v7057 = vmax.f32 %v6285, 0.0
    %v7058 = vmax.f32 %v6732, 0.0
    %v7059 = vmax.f32 %v6734, 0.0
    %v7060 = vmax.f32 %v6289, 0.0
    %v7061 = vmax.f32 %v6291, 0.0
    %v7062 = vmax.f32 %v6738, 0.0
    %v7063 = vmax.f32 %v6740, 0.0
    %v7064 = vmax.f32 %v6295, 0.0
    %v7065 = vmax.f32 %v6297, 0.0
    %v7066 = vmax.f32 %v6744, 0.0
    %v7067 = vmax.f32 %v6746, 0.0
    %v7068 = vmax.f32 %v6301, 0.0
    %v7069 = vmax.f32 %v6303, 0.0
    %v7070 = vmax.f32 %v6750, 0.0
    %v7071 = vmax.f32 %v6752, 0.0
    %v7072 = vmax.f32 %v6307, 0.0
    %v7073 = vmax.f32 %v6309, 0.0
    %v7074 = vmax.f32 %v6756, 0.0
    %v7075 = vmax.f32 %v6758, 0.0
    %v7076 = vmax.f32 %v6313, 0.0
    %v7077 = vmax.f32 %v6315, 0.0
    %v7078 = vmax.f32 %v6762, 0.0
    %v7079 = vmax.f32 %v6764, 0.0
    %v7080 = vmax.f32 %v6319, 0.0
    %v7081 = vmax.f32 %v6321, 0.0
    %v7082 = vmax.f32 %v6768, 0.0
    %v7083 = vmax.f32 %v6770, 0.0
    %v7084 = vmax.f32 %v6325, 0.0
    %v7085 = vmax.f32 %v6327, 0.0
    %v7086 = vmax.f32 %v6774, 0.0
    %v7087 = vmax.f32 %v6776, 0.0
    %v7088 = vmax.f32 %v6331, 0.0
    %v7089 = vmax.f32 %v6333, 0.0
    %v7090 = vmax.f32 %v6780, 0.0
    %v7091 = vmax.f32 %v6782, 0.0
    %v7092 = vmax.f32 %v6337, 0.0
    %v7093 = vmax.f32 %v6339, 0.0
    %v7094 = vmax.f32 %v6786, 0.0
    %v7095 = vmax.f32 %v6788, 0.0
    %v7096 = vmax.f32 %v6343, 0.0
    %v7097 = vmax.f32 %v6345, 0.0
    %v7098 = vmax.f32 %v6792, 0.0
    %v7099 = vmax.f32 %v6794, 0.0
    %v7100 = vmax.f32 %v6349, 0.0
    %v7101 = vmax.f32 %v6351, 0.0
    %v7102 = vmax.f32 %v6798, 0.0
    %v7103 = vmax.f32 %v6800, 0.0
    %v7104 = vmax.f32 %v6355, 0.0
    %v7105 = vmax.f32 %v6357, 0.0
    %v7106 = vmax.f32 %v6804, 0.0
    %v7107 = vmax.f32 %v6806, 0.0
    %v7108 = vmax.f32 %v6361, 0.0
    %v7109 = vmax.f32 %v6363, 0.0
    %v7110 = vmax.f32 %v6810, 0.0
    %v7111 = vmax.f32 %v6812, 0.0
    %v7112 = vmax.f32 %v6367, 0.0
    %v7113 = vmax.f32 %v6369, 0.0
    %v7114 = vmax.f32 %v6816, 0.0
    %v7115 = vmax.f32 %v6818, 0.0
    %v7116 = vmax.f32 %v6373, 0.0
    %v7117 = vmax.f32 %v6375, 0.0
    %v7118 = vmax.f32 %v6822, 0.0
    %v7119 = vmax.f32 %v6824, 0.0
    %v7120 = vmax.f32 %v6379, 0.0
    %v7121 = vmax.f32 %v6381, 0.0
    %v7122 = vmax.f32 %v6828, 0.0
    %v7123 = vmax.f32 %v6830, 0.0
    %v7124 = vmax.f32 %v6385, 0.0
    %v7125 = vmax.f32 %v6387, 0.0
    %v7126 = vmax.f32 %v6834, 0.0
    %v7127 = vmax.f32 %v6836, 0.0
    %v7128 = vmax.f32 %v6391, 0.0
    %v7129 = vmax.f32 %v6393, 0.0
    %v7130 = vmax.f32 %v6840, 0.0
    %v7131 = vmax.f32 %v6842, 0.0
    %v7132 = vmax.f32 %v6397, 0.0
    %v7133 = vmax.f32 %v6399, 0.0
    %v7134 = vmax.f32 %v6846, 0.0
    %v7135 = vmax.f32 %v6848, 0.0
    %v7136 = vmax.f32 %v6403, 0.0
    %v7137 = vmax.f32 %v6405, 0.0
    %v7138 = vmax.f32 %v6852, 0.0
    %v7139 = vmax.f32 %v6854, 0.0
    %v7140 = vmax.f32 %v6409, 0.0
    %v7141 = vmax.f32 %v6411, 0.0
    %v7142 = vmax.f32 %v6858, 0.0
    %v7143 = vmax.f32 %v6860, 0.0
    %v7144 = vmax.f32 %v6415, 0.0
    %v7145 = vmax.f32 %v6417, 0.0
    %v7146 = vmax.f32 %v6864, 0.0
    %v7147 = vmax.f32 %v6866, 0.0
    %v7148 = vmax.f32 %v6421, 0.0
    %v7149 = vmax.f32 %v6423, 0.0
    %v7150 = vmax.f32 %v6870, 0.0
    %v7151 = vmax.f32 %v6872, 0.0
    %v7152 = vmax.f32 %v6427, 0.0
    %v7153 = vmax.f32 %v6429, 0.0
    %v7154 = vmax.f32 %v6876, 0.0
    %v7155 = vmax.f32 %v6878, 0.0
    %v7156 = vmax.f32 %v6433, 0.0
    %v7157 = vmax.f32 %v6435, 0.0
    %v7158 = vmax.f32 %v6882, 0.0
    %v7159 = vmax.f32 %v6884, 0.0
    %v7160 = vmax.f32 %v6439, 0.0
    %v7161 = vmax.f32 %v6441, 0.0
    %v7162 = vmax.f32 %v6888, 0.0
    %v7163 = vmax.f32 %v6890, 0.0
    %v7164 = vmax.f32 %v6445, 0.0
    %v7165 = vmax.f32 %v6447, 0.0
    %v7166 = vmax.f32 %v6894, 0.0
    %v7167 = vmax.f32 %v6896, 0.0
    %v7168 = vmax.f32 %v6451, 0.0
    %v7169 = vmax.f32 %v6453, 0.0
    %v7170 = vmax.f32 %v6900, 0.0
    %v7171 = vmax.f32 %v6902, 0.0
    %v7172 = vmax.f32 %v6457, 0.0
    %v7173 = vmax.f32 %v6459, 0.0
    %v7174 = vmax.f32 %v6906, 0.0
    %v7175 = vmax.f32 %v6908, 0.0
    %v7176 = vmax.f32 %v6463, 0.0
    %v7177 = vmax.f32 %v6465, 0.0
    %v7178 = vmax.f32 %v6912, 0.0
    %v7179 = vmax.f32 %v6914, 0.0
    %v7180 = vmax.f32 %v6469, 0.0
    %v7181 = vmax.f32 %v6471, 0.0
    %v7182 = vmax.f32 %v6918, 0.0
    %v7183 = vmax.f32 %v6920, 0.0
    %v7184 = vmax.f32 %v6475, 0.0
    %v7185 = vmax.f32 %v6477, 0.0
    %v7186 = vmax.f32 %v6924, 0.0
    %v7187 = vmax.f32 %v6926, 0.0
    %v7188 = vmax.f32 %v6481, 0.0
    %v7189 = vmax.f32 %v6483, 0.0
    %v7190 = vmax.f32 %v6930, 0.0
    %v7191 = vmax.f32 %v6932, 0.0
    %v7192 = vmax.f32 %v6487, 0.0
    %v7193 = vmax.f32 %v6489, 0.0
    %v7194 = vmax.f32 %v6936, 0.0
    %v7195 = vmax.f32 %v6938, 0.0
    %7196 = vmatprep.subr.mxu0 0.0
    %7197 = vmatpush1.msra.mxu0 %v4203
    %7198 = vmatprep.subr.mxu0 0.0
    %7199 = vmatpush1.msra.mxu0 %v4202
    %7200 = vmatprep.subr.mxu0 0.0
    %7201 = vmatpush1.msra.mxu0 %v4201
    %7202 = vmatprep.subr.mxu0 0.0
    %7203 = vmatpush1.msra.mxu0 %v4200
    %7204 = vmatprep.subr.mxu0 0.0
    %7205 = vmatpush1.msra.mxu0 %v4199
    %7206 = vmatprep.subr.mxu0 0.0
    %7207 = vmatpush1.msra.mxu0 %v4198
    %7208 = vmatprep.subr.mxu0 0.0
    %7209 = vmatpush1.msra.mxu0 %v4197
    %7210 = vmatprep.subr.mxu0 0.0
    %7211 = vmatpush1.msra.mxu0 %v4196
    %7212 = vmatprep.subr.mxu0 0.0
    %7213 = vmatpush1.msra.mxu0 %v4195
    %7214 = vmatprep.subr.mxu0 0.0
    %7215 = vmatpush1.msra.mxu0 %v4194
    %7216 = vmatprep.subr.mxu0 0.0
    %7217 = vmatpush1.msra.mxu0 %v4193
    %7218 = vmatprep.subr.mxu0 0.0
    %7219 = vmatpush1.msra.mxu0 %v4192
    %7220 = vmatprep.subr.mxu0 0.0
    %7221 = vmatpush1.msra.mxu0 %v4191
    %7222 = vmatprep.subr.mxu0 0.0
    %7223 = vmatpush1.msra.mxu0 %v4190
    %7224 = vmatprep.subr.mxu0 0.0
    %7225 = vmatpush1.msra.mxu0 %v4189
    %7226 = vmatprep.subr.mxu0 0.0
    %7227 = vmatpush1.msra.mxu0 %v4188
    %7228 = vmatprep.subr.mxu0 0.0
    %7229 = vmatpush2.msra.mxu0 %v4219
    %7230 = vmatprep.subr.mxu0 0.0
    %7231 = vmatpush2.msra.mxu0 %v4218
    %7232 = vmatprep.subr.mxu0 0.0
    %7233 = vmatpush2.msra.mxu0 %v4217
    %7234 = vmatprep.subr.mxu0 0.0
    %7235 = vmatpush2.msra.mxu0 %v4216
    %7236 = vmatprep.subr.mxu0 0.0
    %7237 = vmatpush2.msra.mxu0 %v4215
    %7238 = vmatprep.subr.mxu0 0.0
    %7239 = vmatpush2.msra.mxu0 %v4214
    %7240 = vmatprep.subr.mxu0 0.0
    %7241 = vmatpush2.msra.mxu0 %v4213
    %7242 = vmatprep.subr.mxu0 0.0
    %7243 = vmatpush2.msra.mxu0 %v4212
    %7244 = vmatprep.subr.mxu0 0.0
    %7245 = vmatpush2.msra.mxu0 %v4211
    %7246 = vmatprep.subr.mxu0 0.0
    %7247 = vmatpush2.msra.mxu0 %v4210
    %7248 = vmatprep.subr.mxu0 0.0
    %7249 = vmatpush2.msra.mxu0 %v4209
    %7250 = vmatprep.subr.mxu0 0.0
    %7251 = vmatpush2.msra.mxu0 %v4208
    %7252 = vmatprep.subr.mxu0 0.0
    %7253 = vmatpush2.msra.mxu0 %v4207
    %7254 = vmatprep.subr.mxu0 0.0
    %7255 = vmatpush2.msra.mxu0 %v4206
    %7256 = vmatprep.subr.mxu0 0.0
    %7257 = vmatpush2.msra.mxu0 %v4205
    %7258 = vmatprep.subr.mxu0 0.0
    %7259 = vmatpush2.msra.mxu0 %v4204
    %7260 = vmatprep.mubr.f32.mxu0 %v6941
    %7261 = vmatmul.mubr.f32.gmra.mxu0 %v6940
    %v7262 = vpop.f32.mrf.mxu0
    %v7263 = vadd.f32 %v4424, %v7262
    %v7264 = vpop.f32.mrf.mxu0
    %7265 = vmatprep.mubr.f32.mxu0 %v6945
    %7266 = vmatmul.mubr.f32.gmra.mxu0 %v6944
    %v7267 = vpop.f32.mrf.mxu0
    %v7268 = vadd.f32 %v4424, %v7267
    %v7269 = vpop.f32.mrf.mxu0
    %7270 = vmatprep.mubr.f32.mxu0 %v6949
    %7271 = vmatmul.mubr.f32.gmra.mxu0 %v6948
    %v7272 = vpop.f32.mrf.mxu0
    %v7273 = vadd.f32 %v4424, %v7272
    %v7274 = vpop.f32.mrf.mxu0
    %7275 = vmatprep.mubr.f32.mxu0 %v6953
    %7276 = vmatmul.mubr.f32.gmra.mxu0 %v6952
    %v7277 = vpop.f32.mrf.mxu0
    %v7278 = vadd.f32 %v4424, %v7277
    %v7279 = vpop.f32.mrf.mxu0
    %7280 = vmatprep.mubr.f32.mxu0 %v6957
    %7281 = vmatmul.mubr.f32.gmra.mxu0 %v6956
    %v7282 = vpop.f32.mrf.mxu0
    %v7283 = vadd.f32 %v4424, %v7282
    %v7284 = vpop.f32.mrf.mxu0
    %7285 = vmatprep.mubr.f32.mxu0 %v6961
    %7286 = vmatmul.mubr.f32.gmra.mxu0 %v6960
    %v7287 = vpop.f32.mrf.mxu0
    %v7288 = vadd.f32 %v4424, %v7287
    %v7289 = vpop.f32.mrf.mxu0
    %7290 = vmatprep.mubr.f32.mxu0 %v6965
    %7291 = vmatmul.mubr.f32.gmra.mxu0 %v6964
    %v7292 = vpop.f32.mrf.mxu0
    %v7293 = vadd.f32 %v4424, %v7292
    %v7294 = vpop.f32.mrf.mxu0
    %7295 = vmatprep.mubr.f32.mxu0 %v6969
    %7296 = vmatmul.mubr.f32.gmra.mxu0 %v6968
    %v7297 = vpop.f32.mrf.mxu0
    %v7298 = vadd.f32 %v4424, %v7297
    %v7299 = vpop.f32.mrf.mxu0
    %7300 = vmatprep.mubr.f32.mxu0 %v6973
    %7301 = vmatmul.mubr.f32.gmra.mxu0 %v6972
    %v7302 = vpop.f32.mrf.mxu0
    %v7303 = vadd.f32 %v4424, %v7302
    %v7304 = vpop.f32.mrf.mxu0
    %7305 = vmatprep.mubr.f32.mxu0 %v6977
    %7306 = vmatmul.mubr.f32.gmra.mxu0 %v6976
    %v7307 = vpop.f32.mrf.mxu0
    %v7308 = vadd.f32 %v4424, %v7307
    %v7309 = vpop.f32.mrf.mxu0
    %7310 = vmatprep.mubr.f32.mxu0 %v6981
    %7311 = vmatmul.mubr.f32.gmra.mxu0 %v6980
    %v7312 = vpop.f32.mrf.mxu0
    %v7313 = vadd.f32 %v4424, %v7312
    %v7314 = vpop.f32.mrf.mxu0
    %7315 = vmatprep.mubr.f32.mxu0 %v6985
    %7316 = vmatmul.mubr.f32.gmra.mxu0 %v6984
    %v7317 = vpop.f32.mrf.mxu0
    %v7318 = vadd.f32 %v4424, %v7317
    %v7319 = vpop.f32.mrf.mxu0
    %7320 = vmatprep.mubr.f32.mxu0 %v6989
    %7321 = vmatmul.mubr.f32.gmra.mxu0 %v6988
    %v7322 = vpop.f32.mrf.mxu0
    %v7323 = vadd.f32 %v4424, %v7322
    %v7324 = vpop.f32.mrf.mxu0
    %7325 = vmatprep.mubr.f32.mxu0 %v6993
    %7326 = vmatmul.mubr.f32.gmra.mxu0 %v6992
    %v7327 = vpop.f32.mrf.mxu0
    %v7328 = vadd.f32 %v4424, %v7327
    %v7329 = vpop.f32.mrf.mxu0
    %7330 = vmatprep.mubr.f32.mxu0 %v6997
    %7331 = vmatmul.mubr.f32.gmra.mxu0 %v6996
    %v7332 = vpop.f32.mrf.mxu0
    %v7333 = vadd.f32 %v4424, %v7332
    %v7334 = vpop.f32.mrf.mxu0
    %7335 = vmatprep.mubr.f32.mxu0 %v7001
    %7336 = vmatmul.mubr.f32.gmra.mxu0 %v7000
    %v7337 = vpop.f32.mrf.mxu0
    %v7338 = vadd.f32 %v4424, %v7337
    %v7339 = vpop.f32.mrf.mxu0
    %7340 = vmatprep.mubr.f32.mxu0 %v7005
    %7341 = vmatmul.mubr.f32.gmra.mxu0 %v7004
    %v7342 = vpop.f32.mrf.mxu0
    %v7343 = vadd.f32 %v4424, %v7342
    %v7344 = vpop.f32.mrf.mxu0
    %7345 = vmatprep.mubr.f32.mxu0 %v7009
    %7346 = vmatmul.mubr.f32.gmra.mxu0 %v7008
    %v7347 = vpop.f32.mrf.mxu0
    %v7348 = vadd.f32 %v4424, %v7347
    %v7349 = vpop.f32.mrf.mxu0
    %7350 = vmatprep.mubr.f32.mxu0 %v7013
    %7351 = vmatmul.mubr.f32.gmra.mxu0 %v7012
    %v7352 = vpop.f32.mrf.mxu0
    %v7353 = vadd.f32 %v4424, %v7352
    %v7354 = vpop.f32.mrf.mxu0
    %7355 = vmatprep.mubr.f32.mxu0 %v7017
    %7356 = vmatmul.mubr.f32.gmra.mxu0 %v7016
    %v7357 = vpop.f32.mrf.mxu0
    %v7358 = vadd.f32 %v4424, %v7357
    %v7359 = vpop.f32.mrf.mxu0
    %7360 = vmatprep.mubr.f32.mxu0 %v7021
    %7361 = vmatmul.mubr.f32.gmra.mxu0 %v7020
    %v7362 = vpop.f32.mrf.mxu0
    %v7363 = vadd.f32 %v4424, %v7362
    %v7364 = vpop.f32.mrf.mxu0
    %7365 = vmatprep.mubr.f32.mxu0 %v7025
    %7366 = vmatmul.mubr.f32.gmra.mxu0 %v7024
    %v7367 = vpop.f32.mrf.mxu0
    %v7368 = vadd.f32 %v4424, %v7367
    %v7369 = vpop.f32.mrf.mxu0
    %7370 = vmatprep.mubr.f32.mxu0 %v7029
    %7371 = vmatmul.mubr.f32.gmra.mxu0 %v7028
    %v7372 = vpop.f32.mrf.mxu0
    %v7373 = vadd.f32 %v4424, %v7372
    %v7374 = vpop.f32.mrf.mxu0
    %7375 = vmatprep.mubr.f32.mxu0 %v7033
    %7376 = vmatmul.mubr.f32.gmra.mxu0 %v7032
    %v7377 = vpop.f32.mrf.mxu0
    %v7378 = vadd.f32 %v4424, %v7377
    %v7379 = vpop.f32.mrf.mxu0
    %7380 = vmatprep.mubr.f32.mxu0 %v7037
    %7381 = vmatmul.mubr.f32.gmra.mxu0 %v7036
    %v7382 = vpop.f32.mrf.mxu0
    %v7383 = vadd.f32 %v4424, %v7382
    %v7384 = vpop.f32.mrf.mxu0
    %7385 = vmatprep.mubr.f32.mxu0 %v7041
    %7386 = vmatmul.mubr.f32.gmra.mxu0 %v7040
    %v7387 = vpop.f32.mrf.mxu0
    %v7388 = vadd.f32 %v4424, %v7387
    %v7389 = vpop.f32.mrf.mxu0
    %7390 = vmatprep.mubr.f32.mxu0 %v7045
    %7391 = vmatmul.mubr.f32.gmra.mxu0 %v7044
    %v7392 = vpop.f32.mrf.mxu0
    %v7393 = vadd.f32 %v4424, %v7392
    %v7394 = vpop.f32.mrf.mxu0
    %7395 = vmatprep.mubr.f32.mxu0 %v7049
    %7396 = vmatmul.mubr.f32.gmra.mxu0 %v7048
    %v7397 = vpop.f32.mrf.mxu0
    %v7398 = vadd.f32 %v4424, %v7397
    %v7399 = vpop.f32.mrf.mxu0
    %7400 = vmatprep.mubr.f32.mxu0 %v7053
    %7401 = vmatmul.mubr.f32.gmra.mxu0 %v7052
    %v7402 = vpop.f32.mrf.mxu0
    %v7403 = vadd.f32 %v4424, %v7402
    %v7404 = vpop.f32.mrf.mxu0
    %7405 = vmatprep.mubr.f32.mxu0 %v7057
    %7406 = vmatmul.mubr.f32.gmra.mxu0 %v7056
    %v7407 = vpop.f32.mrf.mxu0
    %v7408 = vadd.f32 %v4424, %v7407
    %v7409 = vpop.f32.mrf.mxu0
    %7410 = vmatprep.mubr.f32.mxu0 %v7061
    %7411 = vmatmul.mubr.f32.gmra.mxu0 %v7060
    %v7412 = vpop.f32.mrf.mxu0
    %v7413 = vadd.f32 %v4424, %v7412
    %v7414 = vpop.f32.mrf.mxu0
    %7415 = vmatprep.mubr.f32.mxu0 %v7065
    %7416 = vmatmul.mubr.f32.gmra.mxu0 %v7064
    %v7417 = vpop.f32.mrf.mxu0
    %v7418 = vadd.f32 %v4424, %v7417
    %v7419 = vpop.f32.mrf.mxu0
    %7420 = vmatprep.mubr.f32.mxu0 %v7069
    %7421 = vmatmul.mubr.f32.gmra.mxu0 %v7068
    %v7422 = vpop.f32.mrf.mxu0
    %v7423 = vadd.f32 %v4424, %v7422
    %v7424 = vpop.f32.mrf.mxu0
    %7425 = vmatprep.mubr.f32.mxu0 %v7073
    %7426 = vmatmul.mubr.f32.gmra.mxu0 %v7072
    %v7427 = vpop.f32.mrf.mxu0
    %v7428 = vadd.f32 %v4424, %v7427
    %v7429 = vpop.f32.mrf.mxu0
    %7430 = vmatprep.mubr.f32.mxu0 %v7077
    %7431 = vmatmul.mubr.f32.gmra.mxu0 %v7076
    %v7432 = vpop.f32.mrf.mxu0
    %v7433 = vadd.f32 %v4424, %v7432
    %v7434 = vpop.f32.mrf.mxu0
    %7435 = vmatprep.mubr.f32.mxu0 %v7081
    %7436 = vmatmul.mubr.f32.gmra.mxu0 %v7080
    %v7437 = vpop.f32.mrf.mxu0
    %v7438 = vadd.f32 %v4424, %v7437
    %v7439 = vpop.f32.mrf.mxu0
    %7440 = vmatprep.mubr.f32.mxu0 %v7085
    %7441 = vmatmul.mubr.f32.gmra.mxu0 %v7084
    %v7442 = vpop.f32.mrf.mxu0
    %v7443 = vadd.f32 %v4424, %v7442
    %v7444 = vpop.f32.mrf.mxu0
    %7445 = vmatprep.mubr.f32.mxu0 %v7089
    %7446 = vmatmul.mubr.f32.gmra.mxu0 %v7088
    %v7447 = vpop.f32.mrf.mxu0
    %v7448 = vadd.f32 %v4424, %v7447
    %v7449 = vpop.f32.mrf.mxu0
    %7450 = vmatprep.mubr.f32.mxu0 %v7093
    %7451 = vmatmul.mubr.f32.gmra.mxu0 %v7092
    %v7452 = vpop.f32.mrf.mxu0
    %v7453 = vadd.f32 %v4424, %v7452
    %v7454 = vpop.f32.mrf.mxu0
    %7455 = vmatprep.mubr.f32.mxu0 %v7097
    %7456 = vmatmul.mubr.f32.gmra.mxu0 %v7096
    %v7457 = vpop.f32.mrf.mxu0
    %v7458 = vadd.f32 %v4424, %v7457
    %v7459 = vpop.f32.mrf.mxu0
    %7460 = vmatprep.mubr.f32.mxu0 %v7101
    %7461 = vmatmul.mubr.f32.gmra.mxu0 %v7100
    %v7462 = vpop.f32.mrf.mxu0
    %v7463 = vadd.f32 %v4424, %v7462
    %v7464 = vpop.f32.mrf.mxu0
    %7465 = vmatprep.mubr.f32.mxu0 %v7105
    %7466 = vmatmul.mubr.f32.gmra.mxu0 %v7104
    %v7467 = vpop.f32.mrf.mxu0
    %v7468 = vadd.f32 %v4424, %v7467
    %v7469 = vpop.f32.mrf.mxu0
    %7470 = vmatprep.mubr.f32.mxu0 %v7109
    %7471 = vmatmul.mubr.f32.gmra.mxu0 %v7108
    %v7472 = vpop.f32.mrf.mxu0
    %v7473 = vadd.f32 %v4424, %v7472
    %v7474 = vpop.f32.mrf.mxu0
    %7475 = vmatprep.mubr.f32.mxu0 %v7113
    %7476 = vmatmul.mubr.f32.gmra.mxu0 %v7112
    %v7477 = vpop.f32.mrf.mxu0
    %v7478 = vadd.f32 %v4424, %v7477
    %v7479 = vpop.f32.mrf.mxu0
    %7480 = vmatprep.mubr.f32.mxu0 %v7117
    %7481 = vmatmul.mubr.f32.gmra.mxu0 %v7116
    %v7482 = vpop.f32.mrf.mxu0
    %v7483 = vadd.f32 %v4424, %v7482
    %v7484 = vpop.f32.mrf.mxu0
    %7485 = vmatprep.mubr.f32.mxu0 %v7121
    %7486 = vmatmul.mubr.f32.gmra.mxu0 %v7120
    %v7487 = vpop.f32.mrf.mxu0
    %v7488 = vadd.f32 %v4424, %v7487
    %v7489 = vpop.f32.mrf.mxu0
    %7490 = vmatprep.mubr.f32.mxu0 %v7125
    %7491 = vmatmul.mubr.f32.gmra.mxu0 %v7124
    %v7492 = vpop.f32.mrf.mxu0
    %v7493 = vadd.f32 %v4424, %v7492
    %v7494 = vpop.f32.mrf.mxu0
    %7495 = vmatprep.mubr.f32.mxu0 %v7129
    %7496 = vmatmul.mubr.f32.gmra.mxu0 %v7128
    %v7497 = vpop.f32.mrf.mxu0
    %v7498 = vadd.f32 %v4424, %v7497
    %v7499 = vpop.f32.mrf.mxu0
    %7500 = vmatprep.mubr.f32.mxu0 %v7133
    %7501 = vmatmul.mubr.f32.gmra.mxu0 %v7132
    %v7502 = vpop.f32.mrf.mxu0
    %v7503 = vadd.f32 %v4424, %v7502
    %v7504 = vpop.f32.mrf.mxu0
    %7505 = vmatprep.mubr.f32.mxu0 %v7137
    %7506 = vmatmul.mubr.f32.gmra.mxu0 %v7136
    %v7507 = vpop.f32.mrf.mxu0
    %v7508 = vadd.f32 %v4424, %v7507
    %v7509 = vpop.f32.mrf.mxu0
    %7510 = vmatprep.mubr.f32.mxu0 %v7141
    %7511 = vmatmul.mubr.f32.gmra.mxu0 %v7140
    %v7512 = vpop.f32.mrf.mxu0
    %v7513 = vadd.f32 %v4424, %v7512
    %v7514 = vpop.f32.mrf.mxu0
    %7515 = vmatprep.mubr.f32.mxu0 %v7145
    %7516 = vmatmul.mubr.f32.gmra.mxu0 %v7144
    %v7517 = vpop.f32.mrf.mxu0
    %v7518 = vadd.f32 %v4424, %v7517
    %v7519 = vpop.f32.mrf.mxu0
    %7520 = vmatprep.mubr.f32.mxu0 %v7149
    %7521 = vmatmul.mubr.f32.gmra.mxu0 %v7148
    %v7522 = vpop.f32.mrf.mxu0
    %v7523 = vadd.f32 %v4424, %v7522
    %v7524 = vpop.f32.mrf.mxu0
    %7525 = vmatprep.mubr.f32.mxu0 %v7153
    %7526 = vmatmul.mubr.f32.gmra.mxu0 %v7152
    %v7527 = vpop.f32.mrf.mxu0
    %v7528 = vadd.f32 %v4424, %v7527
    %v7529 = vpop.f32.mrf.mxu0
    %7530 = vmatprep.mubr.f32.mxu0 %v7157
    %7531 = vmatmul.mubr.f32.gmra.mxu0 %v7156
    %v7532 = vpop.f32.mrf.mxu0
    %v7533 = vadd.f32 %v4424, %v7532
    %v7534 = vpop.f32.mrf.mxu0
    %7535 = vmatprep.mubr.f32.mxu0 %v7161
    %7536 = vmatmul.mubr.f32.gmra.mxu0 %v7160
    %v7537 = vpop.f32.mrf.mxu0
    %v7538 = vadd.f32 %v4424, %v7537
    %v7539 = vpop.f32.mrf.mxu0
    %7540 = vmatprep.mubr.f32.mxu0 %v7165
    %7541 = vmatmul.mubr.f32.gmra.mxu0 %v7164
    %v7542 = vpop.f32.mrf.mxu0
    %v7543 = vadd.f32 %v4424, %v7542
    %v7544 = vpop.f32.mrf.mxu0
    %7545 = vmatprep.mubr.f32.mxu0 %v7169
    %7546 = vmatmul.mubr.f32.gmra.mxu0 %v7168
    %v7547 = vpop.f32.mrf.mxu0
    %v7548 = vadd.f32 %v4424, %v7547
    %v7549 = vpop.f32.mrf.mxu0
    %7550 = vmatprep.mubr.f32.mxu0 %v7173
    %7551 = vmatmul.mubr.f32.gmra.mxu0 %v7172
    %v7552 = vpop.f32.mrf.mxu0
    %v7553 = vadd.f32 %v4424, %v7552
    %v7554 = vpop.f32.mrf.mxu0
    %7555 = vmatprep.mubr.f32.mxu0 %v7177
    %7556 = vmatmul.mubr.f32.gmra.mxu0 %v7176
    %v7557 = vpop.f32.mrf.mxu0
    %v7558 = vadd.f32 %v4424, %v7557
    %v7559 = vpop.f32.mrf.mxu0
    %7560 = vmatprep.mubr.f32.mxu0 %v7181
    %7561 = vmatmul.mubr.f32.gmra.mxu0 %v7180
    %v7562 = vpop.f32.mrf.mxu0
    %v7563 = vadd.f32 %v4424, %v7562
    %v7564 = vpop.f32.mrf.mxu0
    %7565 = vmatprep.mubr.f32.mxu0 %v7185
    %7566 = vmatmul.mubr.f32.gmra.mxu0 %v7184
    %v7567 = vpop.f32.mrf.mxu0
    %v7568 = vadd.f32 %v4424, %v7567
    %v7569 = vpop.f32.mrf.mxu0
    %7570 = vmatprep.mubr.f32.mxu0 %v7189
    %7571 = vmatmul.mubr.f32.gmra.mxu0 %v7188
    %v7572 = vpop.f32.mrf.mxu0
    %v7573 = vadd.f32 %v4424, %v7572
    %v7574 = vpop.f32.mrf.mxu0
    %7575 = vmatprep.mubr.f32.mxu0 %v7193
    %7576 = vmatmul.mubr.f32.gmra.mxu0 %v7192
    %v7577 = vpop.f32.mrf.mxu0
    %v7578 = vadd.f32 %v4424, %v7577
    %v7579 = vpop.f32.mrf.mxu0
    %7580 = vdwg.mxu0
    %7581 = vmatprep.subr.mxu0 0.0
    %7582 = vmatpush1.msra.mxu0 %v4235
    %7583 = vmatprep.subr.mxu0 0.0
    %7584 = vmatpush1.msra.mxu0 %v4234
    %7585 = vmatprep.subr.mxu0 0.0
    %7586 = vmatpush1.msra.mxu0 %v4233
    %7587 = vmatprep.subr.mxu0 0.0
    %7588 = vmatpush1.msra.mxu0 %v4232
    %7589 = vmatprep.subr.mxu0 0.0
    %7590 = vmatpush1.msra.mxu0 %v4231
    %7591 = vmatprep.subr.mxu0 0.0
    %7592 = vmatpush1.msra.mxu0 %v4230
    %7593 = vmatprep.subr.mxu0 0.0
    %7594 = vmatpush1.msra.mxu0 %v4229
    %7595 = vmatprep.subr.mxu0 0.0
    %7596 = vmatpush1.msra.mxu0 %v4228
    %7597 = vmatprep.subr.mxu0 0.0
    %7598 = vmatpush1.msra.mxu0 %v4227
    %7599 = vmatprep.subr.mxu0 0.0
    %7600 = vmatpush1.msra.mxu0 %v4226
    %7601 = vmatprep.subr.mxu0 0.0
    %7602 = vmatpush1.msra.mxu0 %v4225
    %7603 = vmatprep.subr.mxu0 0.0
    %7604 = vmatpush1.msra.mxu0 %v4224
    %7605 = vmatprep.subr.mxu0 0.0
    %7606 = vmatpush1.msra.mxu0 %v4223
    %7607 = vmatprep.subr.mxu0 0.0
    %7608 = vmatpush1.msra.mxu0 %v4222
    %7609 = vmatprep.subr.mxu0 0.0
    %7610 = vmatpush1.msra.mxu0 %v4221
    %7611 = vmatprep.subr.mxu0 0.0
    %7612 = vmatpush1.msra.mxu0 %v4220
    %7613 = vmatprep.subr.mxu0 0.0
    %7614 = vmatpush2.msra.mxu0 %v4251
    %7615 = vmatprep.subr.mxu0 0.0
    %7616 = vmatpush2.msra.mxu0 %v4250
    %7617 = vmatprep.subr.mxu0 0.0
    %7618 = vmatpush2.msra.mxu0 %v4249
    %7619 = vmatprep.subr.mxu0 0.0
    %7620 = vmatpush2.msra.mxu0 %v4248
    %7621 = vmatprep.subr.mxu0 0.0
    %7622 = vmatpush2.msra.mxu0 %v4247
    %7623 = vmatprep.subr.mxu0 0.0
    %7624 = vmatpush2.msra.mxu0 %v4246
    %7625 = vmatprep.subr.mxu0 0.0
    %7626 = vmatpush2.msra.mxu0 %v4245
    %7627 = vmatprep.subr.mxu0 0.0
    %7628 = vmatpush2.msra.mxu0 %v4244
    %7629 = vmatprep.subr.mxu0 0.0
    %7630 = vmatpush2.msra.mxu0 %v4243
    %7631 = vmatprep.subr.mxu0 0.0
    %7632 = vmatpush2.msra.mxu0 %v4242
    %7633 = vmatprep.subr.mxu0 0.0
    %7634 = vmatpush2.msra.mxu0 %v4241
    %7635 = vmatprep.subr.mxu0 0.0
    %7636 = vmatpush2.msra.mxu0 %v4240
    %7637 = vmatprep.subr.mxu0 0.0
    %7638 = vmatpush2.msra.mxu0 %v4239
    %7639 = vmatprep.subr.mxu0 0.0
    %7640 = vmatpush2.msra.mxu0 %v4238
    %7641 = vmatprep.subr.mxu0 0.0
    %7642 = vmatpush2.msra.mxu0 %v4237
    %7643 = vmatprep.subr.mxu0 0.0
    %7644 = vmatpush2.msra.mxu0 %v4236
    %7645 = vmatprep.mubr.f32.mxu0 %v6943
    %7646 = vmatmul.mubr.f32.gmra.mxu0 %v6942
    %v7647 = vpop.f32.mrf.mxu0
    %v7648 = vadd.f32 %v7263, %v7647
    %v7649 = vpop.f32.mrf.mxu0
    %7650 = vmatprep.mubr.f32.mxu0 %v6947
    %7651 = vmatmul.mubr.f32.gmra.mxu0 %v6946
    %v7652 = vpop.f32.mrf.mxu0
    %v7653 = vadd.f32 %v7268, %v7652
    %v7654 = vpop.f32.mrf.mxu0
    %7655 = vmatprep.mubr.f32.mxu0 %v6951
    %7656 = vmatmul.mubr.f32.gmra.mxu0 %v6950
    %v7657 = vpop.f32.mrf.mxu0
    %v7658 = vadd.f32 %v7273, %v7657
    %v7659 = vpop.f32.mrf.mxu0
    %7660 = vmatprep.mubr.f32.mxu0 %v6955
    %7661 = vmatmul.mubr.f32.gmra.mxu0 %v6954
    %v7662 = vpop.f32.mrf.mxu0
    %v7663 = vadd.f32 %v7278, %v7662
    %v7664 = vpop.f32.mrf.mxu0
    %7665 = vmatprep.mubr.f32.mxu0 %v6959
    %7666 = vmatmul.mubr.f32.gmra.mxu0 %v6958
    %v7667 = vpop.f32.mrf.mxu0
    %v7668 = vadd.f32 %v7283, %v7667
    %v7669 = vpop.f32.mrf.mxu0
    %7670 = vmatprep.mubr.f32.mxu0 %v6963
    %7671 = vmatmul.mubr.f32.gmra.mxu0 %v6962
    %v7672 = vpop.f32.mrf.mxu0
    %v7673 = vadd.f32 %v7288, %v7672
    %v7674 = vpop.f32.mrf.mxu0
    %7675 = vmatprep.mubr.f32.mxu0 %v6967
    %7676 = vmatmul.mubr.f32.gmra.mxu0 %v6966
    %v7677 = vpop.f32.mrf.mxu0
    %v7678 = vadd.f32 %v7293, %v7677
    %v7679 = vpop.f32.mrf.mxu0
    %7680 = vmatprep.mubr.f32.mxu0 %v6971
    %7681 = vmatmul.mubr.f32.gmra.mxu0 %v6970
    %v7682 = vpop.f32.mrf.mxu0
    %v7683 = vadd.f32 %v7298, %v7682
    %v7684 = vpop.f32.mrf.mxu0
    %7685 = vmatprep.mubr.f32.mxu0 %v6975
    %7686 = vmatmul.mubr.f32.gmra.mxu0 %v6974
    %v7687 = vpop.f32.mrf.mxu0
    %v7688 = vadd.f32 %v7303, %v7687
    %v7689 = vpop.f32.mrf.mxu0
    %7690 = vmatprep.mubr.f32.mxu0 %v6979
    %7691 = vmatmul.mubr.f32.gmra.mxu0 %v6978
    %v7692 = vpop.f32.mrf.mxu0
    %v7693 = vadd.f32 %v7308, %v7692
    %v7694 = vpop.f32.mrf.mxu0
    %7695 = vmatprep.mubr.f32.mxu0 %v6983
    %7696 = vmatmul.mubr.f32.gmra.mxu0 %v6982
    %v7697 = vpop.f32.mrf.mxu0
    %v7698 = vadd.f32 %v7313, %v7697
    %v7699 = vpop.f32.mrf.mxu0
    %7700 = vmatprep.mubr.f32.mxu0 %v6987
    %7701 = vmatmul.mubr.f32.gmra.mxu0 %v6986
    %v7702 = vpop.f32.mrf.mxu0
    %v7703 = vadd.f32 %v7318, %v7702
    %v7704 = vpop.f32.mrf.mxu0
    %7705 = vmatprep.mubr.f32.mxu0 %v6991
    %7706 = vmatmul.mubr.f32.gmra.mxu0 %v6990
    %v7707 = vpop.f32.mrf.mxu0
    %v7708 = vadd.f32 %v7323, %v7707
    %v7709 = vpop.f32.mrf.mxu0
    %7710 = vmatprep.mubr.f32.mxu0 %v6995
    %7711 = vmatmul.mubr.f32.gmra.mxu0 %v6994
    %v7712 = vpop.f32.mrf.mxu0
    %v7713 = vadd.f32 %v7328, %v7712
    %v7714 = vpop.f32.mrf.mxu0
    %7715 = vmatprep.mubr.f32.mxu0 %v6999
    %7716 = vmatmul.mubr.f32.gmra.mxu0 %v6998
    %v7717 = vpop.f32.mrf.mxu0
    %v7718 = vadd.f32 %v7333, %v7717
    %v7719 = vpop.f32.mrf.mxu0
    %7720 = vmatprep.mubr.f32.mxu0 %v7003
    %7721 = vmatmul.mubr.f32.gmra.mxu0 %v7002
    %v7722 = vpop.f32.mrf.mxu0
    %v7723 = vadd.f32 %v7338, %v7722
    %v7724 = vpop.f32.mrf.mxu0
    %7725 = vmatprep.mubr.f32.mxu0 %v7007
    %7726 = vmatmul.mubr.f32.gmra.mxu0 %v7006
    %v7727 = vpop.f32.mrf.mxu0
    %v7728 = vadd.f32 %v7343, %v7727
    %v7729 = vpop.f32.mrf.mxu0
    %7730 = vmatprep.mubr.f32.mxu0 %v7011
    %7731 = vmatmul.mubr.f32.gmra.mxu0 %v7010
    %v7732 = vpop.f32.mrf.mxu0
    %v7733 = vadd.f32 %v7348, %v7732
    %v7734 = vpop.f32.mrf.mxu0
    %7735 = vmatprep.mubr.f32.mxu0 %v7015
    %7736 = vmatmul.mubr.f32.gmra.mxu0 %v7014
    %v7737 = vpop.f32.mrf.mxu0
    %v7738 = vadd.f32 %v7353, %v7737
    %v7739 = vpop.f32.mrf.mxu0
    %7740 = vmatprep.mubr.f32.mxu0 %v7019
    %7741 = vmatmul.mubr.f32.gmra.mxu0 %v7018
    %v7742 = vpop.f32.mrf.mxu0
    %v7743 = vadd.f32 %v7358, %v7742
    %v7744 = vpop.f32.mrf.mxu0
    %7745 = vmatprep.mubr.f32.mxu0 %v7023
    %7746 = vmatmul.mubr.f32.gmra.mxu0 %v7022
    %v7747 = vpop.f32.mrf.mxu0
    %v7748 = vadd.f32 %v7363, %v7747
    %v7749 = vpop.f32.mrf.mxu0
    %7750 = vmatprep.mubr.f32.mxu0 %v7027
    %7751 = vmatmul.mubr.f32.gmra.mxu0 %v7026
    %v7752 = vpop.f32.mrf.mxu0
    %v7753 = vadd.f32 %v7368, %v7752
    %v7754 = vpop.f32.mrf.mxu0
    %7755 = vmatprep.mubr.f32.mxu0 %v7031
    %7756 = vmatmul.mubr.f32.gmra.mxu0 %v7030
    %v7757 = vpop.f32.mrf.mxu0
    %v7758 = vadd.f32 %v7373, %v7757
    %v7759 = vpop.f32.mrf.mxu0
    %7760 = vmatprep.mubr.f32.mxu0 %v7035
    %7761 = vmatmul.mubr.f32.gmra.mxu0 %v7034
    %v7762 = vpop.f32.mrf.mxu0
    %v7763 = vadd.f32 %v7378, %v7762
    %v7764 = vpop.f32.mrf.mxu0
    %7765 = vmatprep.mubr.f32.mxu0 %v7039
    %7766 = vmatmul.mubr.f32.gmra.mxu0 %v7038
    %v7767 = vpop.f32.mrf.mxu0
    %v7768 = vadd.f32 %v7383, %v7767
    %v7769 = vpop.f32.mrf.mxu0
    %7770 = vmatprep.mubr.f32.mxu0 %v7043
    %7771 = vmatmul.mubr.f32.gmra.mxu0 %v7042
    %v7772 = vpop.f32.mrf.mxu0
    %v7773 = vadd.f32 %v7388, %v7772
    %v7774 = vpop.f32.mrf.mxu0
    %7775 = vmatprep.mubr.f32.mxu0 %v7047
    %7776 = vmatmul.mubr.f32.gmra.mxu0 %v7046
    %v7777 = vpop.f32.mrf.mxu0
    %v7778 = vadd.f32 %v7393, %v7777
    %v7779 = vpop.f32.mrf.mxu0
    %7780 = vmatprep.mubr.f32.mxu0 %v7051
    %7781 = vmatmul.mubr.f32.gmra.mxu0 %v7050
    %v7782 = vpop.f32.mrf.mxu0
    %v7783 = vadd.f32 %v7398, %v7782
    %v7784 = vpop.f32.mrf.mxu0
    %7785 = vmatprep.mubr.f32.mxu0 %v7055
    %7786 = vmatmul.mubr.f32.gmra.mxu0 %v7054
    %v7787 = vpop.f32.mrf.mxu0
    %v7788 = vadd.f32 %v7403, %v7787
    %v7789 = vpop.f32.mrf.mxu0
    %7790 = vmatprep.mubr.f32.mxu0 %v7059
    %7791 = vmatmul.mubr.f32.gmra.mxu0 %v7058
    %v7792 = vpop.f32.mrf.mxu0
    %v7793 = vadd.f32 %v7408, %v7792
    %v7794 = vpop.f32.mrf.mxu0
    %7795 = vmatprep.mubr.f32.mxu0 %v7063
    %7796 = vmatmul.mubr.f32.gmra.mxu0 %v7062
    %v7797 = vpop.f32.mrf.mxu0
    %v7798 = vadd.f32 %v7413, %v7797
    %v7799 = vpop.f32.mrf.mxu0
    %7800 = vmatprep.mubr.f32.mxu0 %v7067
    %7801 = vmatmul.mubr.f32.gmra.mxu0 %v7066
    %v7802 = vpop.f32.mrf.mxu0
    %v7803 = vadd.f32 %v7418, %v7802
    %v7804 = vpop.f32.mrf.mxu0
    %7805 = vmatprep.mubr.f32.mxu0 %v7071
    %7806 = vmatmul.mubr.f32.gmra.mxu0 %v7070
    %v7807 = vpop.f32.mrf.mxu0
    %v7808 = vadd.f32 %v7423, %v7807
    %v7809 = vpop.f32.mrf.mxu0
    %7810 = vmatprep.mubr.f32.mxu0 %v7075
    %7811 = vmatmul.mubr.f32.gmra.mxu0 %v7074
    %v7812 = vpop.f32.mrf.mxu0
    %v7813 = vadd.f32 %v7428, %v7812
    %v7814 = vpop.f32.mrf.mxu0
    %7815 = vmatprep.mubr.f32.mxu0 %v7079
    %7816 = vmatmul.mubr.f32.gmra.mxu0 %v7078
    %v7817 = vpop.f32.mrf.mxu0
    %v7818 = vadd.f32 %v7433, %v7817
    %v7819 = vpop.f32.mrf.mxu0
    %7820 = vmatprep.mubr.f32.mxu0 %v7083
    %7821 = vmatmul.mubr.f32.gmra.mxu0 %v7082
    %v7822 = vpop.f32.mrf.mxu0
    %v7823 = vadd.f32 %v7438, %v7822
    %v7824 = vpop.f32.mrf.mxu0
    %7825 = vmatprep.mubr.f32.mxu0 %v7087
    %7826 = vmatmul.mubr.f32.gmra.mxu0 %v7086
    %v7827 = vpop.f32.mrf.mxu0
    %v7828 = vadd.f32 %v7443, %v7827
    %v7829 = vpop.f32.mrf.mxu0
    %7830 = vmatprep.mubr.f32.mxu0 %v7091
    %7831 = vmatmul.mubr.f32.gmra.mxu0 %v7090
    %v7832 = vpop.f32.mrf.mxu0
    %v7833 = vadd.f32 %v7448, %v7832
    %v7834 = vpop.f32.mrf.mxu0
    %7835 = vmatprep.mubr.f32.mxu0 %v7095
    %7836 = vmatmul.mubr.f32.gmra.mxu0 %v7094
    %v7837 = vpop.f32.mrf.mxu0
    %v7838 = vadd.f32 %v7453, %v7837
    %v7839 = vpop.f32.mrf.mxu0
    %7840 = vmatprep.mubr.f32.mxu0 %v7099
    %7841 = vmatmul.mubr.f32.gmra.mxu0 %v7098
    %v7842 = vpop.f32.mrf.mxu0
    %v7843 = vadd.f32 %v7458, %v7842
    %v7844 = vpop.f32.mrf.mxu0
    %7845 = vmatprep.mubr.f32.mxu0 %v7103
    %7846 = vmatmul.mubr.f32.gmra.mxu0 %v7102
    %v7847 = vpop.f32.mrf.mxu0
    %v7848 = vadd.f32 %v7463, %v7847
    %v7849 = vpop.f32.mrf.mxu0
    %7850 = vmatprep.mubr.f32.mxu0 %v7107
    %7851 = vmatmul.mubr.f32.gmra.mxu0 %v7106
    %v7852 = vpop.f32.mrf.mxu0
    %v7853 = vadd.f32 %v7468, %v7852
    %v7854 = vpop.f32.mrf.mxu0
    %7855 = vmatprep.mubr.f32.mxu0 %v7111
    %7856 = vmatmul.mubr.f32.gmra.mxu0 %v7110
    %v7857 = vpop.f32.mrf.mxu0
    %v7858 = vadd.f32 %v7473, %v7857
    %v7859 = vpop.f32.mrf.mxu0
    %7860 = vmatprep.mubr.f32.mxu0 %v7115
    %7861 = vmatmul.mubr.f32.gmra.mxu0 %v7114
    %v7862 = vpop.f32.mrf.mxu0
    %v7863 = vadd.f32 %v7478, %v7862
    %v7864 = vpop.f32.mrf.mxu0
    %7865 = vmatprep.mubr.f32.mxu0 %v7119
    %7866 = vmatmul.mubr.f32.gmra.mxu0 %v7118
    %v7867 = vpop.f32.mrf.mxu0
    %v7868 = vadd.f32 %v7483, %v7867
    %v7869 = vpop.f32.mrf.mxu0
    %7870 = vmatprep.mubr.f32.mxu0 %v7123
    %7871 = vmatmul.mubr.f32.gmra.mxu0 %v7122
    %v7872 = vpop.f32.mrf.mxu0
    %v7873 = vadd.f32 %v7488, %v7872
    %v7874 = vpop.f32.mrf.mxu0
    %7875 = vmatprep.mubr.f32.mxu0 %v7127
    %7876 = vmatmul.mubr.f32.gmra.mxu0 %v7126
    %v7877 = vpop.f32.mrf.mxu0
    %v7878 = vadd.f32 %v7493, %v7877
    %v7879 = vpop.f32.mrf.mxu0
    %7880 = vmatprep.mubr.f32.mxu0 %v7131
    %7881 = vmatmul.mubr.f32.gmra.mxu0 %v7130
    %v7882 = vpop.f32.mrf.mxu0
    %v7883 = vadd.f32 %v7498, %v7882
    %v7884 = vpop.f32.mrf.mxu0
    %7885 = vmatprep.mubr.f32.mxu0 %v7135
    %7886 = vmatmul.mubr.f32.gmra.mxu0 %v7134
    %v7887 = vpop.f32.mrf.mxu0
    %v7888 = vadd.f32 %v7503, %v7887
    %v7889 = vpop.f32.mrf.mxu0
    %7890 = vmatprep.mubr.f32.mxu0 %v7139
    %7891 = vmatmul.mubr.f32.gmra.mxu0 %v7138
    %v7892 = vpop.f32.mrf.mxu0
    %v7893 = vadd.f32 %v7508, %v7892
    %v7894 = vpop.f32.mrf.mxu0
    %7895 = vmatprep.mubr.f32.mxu0 %v7143
    %7896 = vmatmul.mubr.f32.gmra.mxu0 %v7142
    %v7897 = vpop.f32.mrf.mxu0
    %v7898 = vadd.f32 %v7513, %v7897
    %v7899 = vpop.f32.mrf.mxu0
    %7900 = vmatprep.mubr.f32.mxu0 %v7147
    %7901 = vmatmul.mubr.f32.gmra.mxu0 %v7146
    %v7902 = vpop.f32.mrf.mxu0
    %v7903 = vadd.f32 %v7518, %v7902
    %v7904 = vpop.f32.mrf.mxu0
    %7905 = vmatprep.mubr.f32.mxu0 %v7151
    %7906 = vmatmul.mubr.f32.gmra.mxu0 %v7150
    %v7907 = vpop.f32.mrf.mxu0
    %v7908 = vadd.f32 %v7523, %v7907
    %v7909 = vpop.f32.mrf.mxu0
    %7910 = vmatprep.mubr.f32.mxu0 %v7155
    %7911 = vmatmul.mubr.f32.gmra.mxu0 %v7154
    %v7912 = vpop.f32.mrf.mxu0
    %v7913 = vadd.f32 %v7528, %v7912
    %v7914 = vpop.f32.mrf.mxu0
    %7915 = vmatprep.mubr.f32.mxu0 %v7159
    %7916 = vmatmul.mubr.f32.gmra.mxu0 %v7158
    %v7917 = vpop.f32.mrf.mxu0
    %v7918 = vadd.f32 %v7533, %v7917
    %v7919 = vpop.f32.mrf.mxu0
    %7920 = vmatprep.mubr.f32.mxu0 %v7163
    %7921 = vmatmul.mubr.f32.gmra.mxu0 %v7162
    %v7922 = vpop.f32.mrf.mxu0
    %v7923 = vadd.f32 %v7538, %v7922
    %v7924 = vpop.f32.mrf.mxu0
    %7925 = vmatprep.mubr.f32.mxu0 %v7167
    %7926 = vmatmul.mubr.f32.gmra.mxu0 %v7166
    %v7927 = vpop.f32.mrf.mxu0
    %v7928 = vadd.f32 %v7543, %v7927
    %v7929 = vpop.f32.mrf.mxu0
    %7930 = vmatprep.mubr.f32.mxu0 %v7171
    %7931 = vmatmul.mubr.f32.gmra.mxu0 %v7170
    %v7932 = vpop.f32.mrf.mxu0
    %v7933 = vadd.f32 %v7548, %v7932
    %v7934 = vpop.f32.mrf.mxu0
    %7935 = vmatprep.mubr.f32.mxu0 %v7175
    %7936 = vmatmul.mubr.f32.gmra.mxu0 %v7174
    %v7937 = vpop.f32.mrf.mxu0
    %v7938 = vadd.f32 %v7553, %v7937
    %v7939 = vpop.f32.mrf.mxu0
    %7940 = vmatprep.mubr.f32.mxu0 %v7179
    %7941 = vmatmul.mubr.f32.gmra.mxu0 %v7178
    %v7942 = vpop.f32.mrf.mxu0
    %v7943 = vadd.f32 %v7558, %v7942
    %v7944 = vpop.f32.mrf.mxu0
    %7945 = vmatprep.mubr.f32.mxu0 %v7183
    %7946 = vmatmul.mubr.f32.gmra.mxu0 %v7182
    %v7947 = vpop.f32.mrf.mxu0
    %v7948 = vadd.f32 %v7563, %v7947
    %v7949 = vpop.f32.mrf.mxu0
    %7950 = vmatprep.mubr.f32.mxu0 %v7187
    %7951 = vmatmul.mubr.f32.gmra.mxu0 %v7186
    %v7952 = vpop.f32.mrf.mxu0
    %v7953 = vadd.f32 %v7568, %v7952
    %v7954 = vpop.f32.mrf.mxu0
    %7955 = vmatprep.mubr.f32.mxu0 %v7191
    %7956 = vmatmul.mubr.f32.gmra.mxu0 %v7190
    %v7957 = vpop.f32.mrf.mxu0
    %v7958 = vadd.f32 %v7573, %v7957
    %v7959 = vpop.f32.mrf.mxu0
    %7960 = vmatprep.mubr.f32.mxu0 %v7195
    %7961 = vmatmul.mubr.f32.gmra.mxu0 %v7194
    %v7962 = vpop.f32.mrf.mxu0
    %v7963 = vadd.f32 %v7578, %v7962
    %v7964 = vpop.f32.mrf.mxu0
    %7965 = vdwg.mxu0
    %7966 = vst [vmem:[%s20] sm:$0xff] %v7648
    %7967 = vst [vmem:[%s20 + $0x8] sm:$0xff] %v7653
    %7968 = vst [vmem:[%s20 + $0x10] sm:$0xff] %v7658
    %7969 = vst [vmem:[%s20 + $0x18] sm:$0xff] %v7663
    %7970 = vst [vmem:[%s20 + $0x20] sm:$0xff] %v7668
    %7971 = vst [vmem:[%s20 + $0x28] sm:$0xff] %v7673
    %7972 = vst [vmem:[%s20 + $0x30] sm:$0xff] %v7678
    %7973 = vst [vmem:[%s20 + $0x38] sm:$0xff] %v7683
    %7974 = vst [vmem:[%s20 + $0x40] sm:$0xff] %v7688
    %7975 = vst [vmem:[%s20 + $0x48] sm:$0xff] %v7693
    %7976 = vst [vmem:[%s20 + $0x50] sm:$0xff] %v7698
    %7977 = vst [vmem:[%s20 + $0x58] sm:$0xff] %v7703
    %7978 = vst [vmem:[%s20 + $0x60] sm:$0xff] %v7708
    %7979 = vst [vmem:[%s20 + $0x68] sm:$0xff] %v7713
    %7980 = vst [vmem:[%s20 + $0x70] sm:$0xff] %v7718
    %7981 = vst [vmem:[%s20 + $0x78] sm:$0xff] %v7723
    %7982 = vst [vmem:[%s20 + $0x80] sm:$0xff] %v7728
    %7983 = vst [vmem:[%s20 + $0x88] sm:$0xff] %v7733
    %7984 = vst [vmem:[%s20 + $0x90] sm:$0xff] %v7738
    %7985 = vst [vmem:[%s20 + $0x98] sm:$0xff] %v7743
    %7986 = vst [vmem:[%s20 + $0xa0] sm:$0xff] %v7748
    %7987 = vst [vmem:[%s20 + $0xa8] sm:$0xff] %v7753
    %7988 = vst [vmem:[%s20 + $0xb0] sm:$0xff] %v7758
    %7989 = vst [vmem:[%s20 + $0xb8] sm:$0xff] %v7763
    %7990 = vst [vmem:[%s20 + $0xc0] sm:$0xff] %v7768
    %7991 = vst [vmem:[%s20 + $0xc8] sm:$0xff] %v7773
    %7992 = vst [vmem:[%s20 + $0xd0] sm:$0xff] %v7778
    %7993 = vst [vmem:[%s20 + $0xd8] sm:$0xff] %v7783
    %7994 = vst [vmem:[%s20 + $0xe0] sm:$0xff] %v7788
    %7995 = vst [vmem:[%s20 + $0xe8] sm:$0xff] %v7793
    %7996 = vst [vmem:[%s20 + $0xf0] sm:$0xff] %v7798
    %7997 = vst [vmem:[%s20 + $0xf8] sm:$0xff] %v7803
    %7998 = vst [vmem:[%s20 + $0x100] sm:$0xff] %v7808
    %7999 = vst [vmem:[%s20 + $0x108] sm:$0xff] %v7813
    %8000 = vst [vmem:[%s20 + $0x110] sm:$0xff] %v7818
    %8001 = vst [vmem:[%s20 + $0x118] sm:$0xff] %v7823
    %8002 = vst [vmem:[%s20 + $0x120] sm:$0xff] %v7828
    %8003 = vst [vmem:[%s20 + $0x128] sm:$0xff] %v7833
    %8004 = vst [vmem:[%s20 + $0x130] sm:$0xff] %v7838
    %8005 = vst [vmem:[%s20 + $0x138] sm:$0xff] %v7843
    %8006 = vst [vmem:[%s20 + $0x140] sm:$0xff] %v7848
    %8007 = vst [vmem:[%s20 + $0x148] sm:$0xff] %v7853
    %8008 = vst [vmem:[%s20 + $0x150] sm:$0xff] %v7858
    %8009 = vst [vmem:[%s20 + $0x158] sm:$0xff] %v7863
    %8010 = vst [vmem:[%s20 + $0x160] sm:$0xff] %v7868
    %8011 = vst [vmem:[%s20 + $0x168] sm:$0xff] %v7873
    %8012 = vst [vmem:[%s20 + $0x170] sm:$0xff] %v7878
    %8013 = vst [vmem:[%s20 + $0x178] sm:$0xff] %v7883
    %8014 = vst [vmem:[%s20 + $0x180] sm:$0xff] %v7888
    %8015 = vst [vmem:[%s20 + $0x188] sm:$0xff] %v7893
    %8016 = vst [vmem:[%s20 + $0x190] sm:$0xff] %v7898
    %8017 = vst [vmem:[%s20 + $0x198] sm:$0xff] %v7903
    %8018 = vst [vmem:[%s20 + $0x1a0] sm:$0xff] %v7908
    %8019 = vst [vmem:[%s20 + $0x1a8] sm:$0xff] %v7913
    %8020 = vst [vmem:[%s20 + $0x1b0] sm:$0xff] %v7918
    %8021 = vst [vmem:[%s20 + $0x1b8] sm:$0xff] %v7923
    %8022 = vst [vmem:[%s20 + $0x1c0] sm:$0xff] %v7928
    %8023 = vst [vmem:[%s20 + $0x1c8] sm:$0xff] %v7933
    %8024 = vst [vmem:[%s20 + $0x1d0] sm:$0xff] %v7938
    %8025 = vst [vmem:[%s20 + $0x1d8] sm:$0xff] %v7943
    %8026 = vst [vmem:[%s20 + $0x1e0] sm:$0xff] %v7948
    %8027 = vst [vmem:[%s20 + $0x1e8] sm:$0xff] %v7953
    %8028 = vst [vmem:[%s20 + $0x1f0] sm:$0xff] %v7958
    %8029 = vst [vmem:[%s20 + $0x1f8] sm:$0xff] %v7963
    // Predicated region
    $region66: #{treeqn_forward.1} parent=1 // pred_check
      _
    $region67: #{treeqn_forward.1} parent=1 // pred_check_branch
      %8031 = sbr.rel (0) target = $region69
    $region68: #{treeqn_forward.1} parent=1 // pred_region
      _
    $region69: #{treeqn_forward.1} parent=1 // pred_fallthru
      _
    // Predicated region
    $region70: #{treeqn_forward.1} parent=1 // pred_check
      _
    $region71: #{treeqn_forward.1} parent=1 // pred_check_branch
      %8033 = sbr.rel (0) target = $region73
    $region72: #{treeqn_forward.1} parent=1 // pred_region
      _
    $region73: #{treeqn_forward.1} parent=1 // pred_fallthru
      _
    // Predicated region
    $region74: #{treeqn_forward.1} parent=1 // pred_check
      _
    $region75: #{treeqn_forward.1} parent=1 // pred_check_branch
      %8035 = sbr.rel (0) target = $region77
    $region76: #{treeqn_forward.1} parent=1 // pred_region
      _
    $region77: #{treeqn_forward.1} parent=1 // pred_fallthru
      _
    // Predicated region
    $region78: #{treeqn_forward.1} parent=1 // pred_check
      _
    $region79: #{treeqn_forward.1} parent=1 // pred_check_branch
      %8037 = sbr.rel (0) target = $region81
    $region80: #{treeqn_forward.1} parent=1 // pred_region
      _
    $region81: #{treeqn_forward.1} parent=1 // pred_fallthru
      _
    // Predicated region
    $region82: #{treeqn_forward.1} parent=1 // pred_check
      _
    $region83: #{treeqn_forward.1} parent=1 // pred_check_branch
      %8039 = sbr.rel (0) target = $region85
    $region84: #{treeqn_forward.1} parent=1 // pred_region
      _
    $region85: #{treeqn_forward.1} parent=1 // pred_fallthru
      _
    // Predicated region
    $region86: #{treeqn_forward.1} parent=1 // pred_check
      _
    $region87: #{treeqn_forward.1} parent=1 // pred_check_branch
      %8041 = sbr.rel (0) target = $region89
    $region88: #{treeqn_forward.1} parent=1 // pred_region
      _
    $region89: #{treeqn_forward.1} parent=1 // pred_fallthru
      _
    // Predicated region
    $region90: #{treeqn_forward.1} parent=1 // pred_check
      _
    $region91: #{treeqn_forward.1} parent=1 // pred_check_branch
      %8043 = sbr.rel (0) target = $region93
    $region92: #{treeqn_forward.1} parent=1 // pred_region
      _
    $region93: #{treeqn_forward.1} parent=1 // pred_fallthru
      _
    // Predicated region
    $region94: #{treeqn_forward.1} parent=1 // pred_check
      _
    $region95: #{treeqn_forward.1} parent=1 // pred_check_branch
      %8045 = sbr.rel (0) target = $region97
    $region96: #{treeqn_forward.1} parent=1 // pred_region
      _
    $region97: #{treeqn_forward.1} parent=1 // pred_fallthru
      _
    // Predicated region
    $region98: #{treeqn_forward.1} parent=1 // pred_check
      _
    $region99: #{treeqn_forward.1} parent=1 // pred_check_branch
      %8047 = sbr.rel (0) target = $region101
    $region100: #{treeqn_forward.1} parent=1 // pred_region
      _
    $region101: #{treeqn_forward.1} parent=1 // pred_fallthru
      _
    // Predicated region
    $region102: #{treeqn_forward.1} parent=1 // pred_check
      _
    $region103: #{treeqn_forward.1} parent=1 // pred_check_branch
      %8049 = sbr.rel (0) target = $region105
    $region104: #{treeqn_forward.1} parent=1 // pred_region
      %s8051 = ssub.s32 16, 16
      %8052 = vsyncadd [#allocation4], %s8051
      %s8054 = sshll.u32 [#allocation3], 4
      %s8055 = int_to_ptr.vmem [resolvable:$true] %s8054
      %8057 = dma.vmem_to_hbm [thread:$0]  %s8055, 16, %s25, [#allocation4]
    $region105: #{treeqn_forward.1} parent=1 // pred_fallthru
      _
    // Predicated region
    $region106: #{treeqn_forward.1} parent=1 // pred_check
      _
    $region107: #{treeqn_forward.1} parent=1 // pred_check_branch
      %8059 = sbr.rel (0) target = $region109
    $region108: #{treeqn_forward.1} parent=1 // pred_region
      _
    $region109: #{treeqn_forward.1} parent=1 // pred_fallthru
      _
    // Predicated region
    $region110: #{treeqn_forward.1} parent=1 // pred_check
      _
    $region111: #{treeqn_forward.1} parent=1 // pred_check_branch
      %8061 = sbr.rel (0) target = $region113
    $region112: #{treeqn_forward.1} parent=1 // pred_region
      _
    $region113: #{treeqn_forward.1} parent=1 // pred_fallthru
      _
    // Predicated region
    $region114: #{treeqn_forward.1} parent=1 // pred_check
      _
    $region115: #{treeqn_forward.1} parent=1 // pred_check_branch
      %8063 = sbr.rel (0) target = $region117
    $region116: #{treeqn_forward.1} parent=1 // pred_region
      _
    $region117: #{treeqn_forward.1} parent=1 // pred_fallthru
      _
    // Predicated region
    $region118: #{treeqn_forward.1} parent=1 // pred_check
      _
    $region119: #{treeqn_forward.1} parent=1 // pred_check_branch
      %8065 = sbr.rel (0) target = $region121
    $region120: #{treeqn_forward.1} parent=1 // pred_region
      _
    $region121: #{treeqn_forward.1} parent=1 // pred_fallthru
      _
    // Predicated region
    $region122: #{treeqn_forward.1} parent=1 // pred_check
      _
    $region123: #{treeqn_forward.1} parent=1 // pred_check_branch
      %8067 = sbr.rel (0) target = $region125
    $region124: #{treeqn_forward.1} parent=1 // pred_region
      _
    $region125: #{treeqn_forward.1} parent=1 // pred_fallthru
      _
    // Predicated region
    $region126: #{treeqn_forward.1} parent=1 // pred_check
      _
    $region127: #{treeqn_forward.1} parent=1 // pred_check_branch
      %8069 = sbr.rel (0) target = $region129
    $region128: #{treeqn_forward.1} parent=1 // pred_region
      _
    $region129: #{treeqn_forward.1} parent=1 // pred_fallthru
      _
    // Predicated region
    $region130: #{treeqn_forward.1} parent=1 // pred_check
      _
    $region131: #{treeqn_forward.1} parent=1 // pred_check_branch
      %8071 = sbr.rel (0) target = $region133
    $region132: #{treeqn_forward.1} parent=1 // pred_region
      _
    $region133: #{treeqn_forward.1} parent=1 // pred_fallthru
      _
    // Predicated region
    $region134: #{treeqn_forward.1} parent=1 // pred_check
      _
    $region135: #{treeqn_forward.1} parent=1 // pred_check_branch
      %8073 = sbr.rel (0) target = $region137
    $region136: #{treeqn_forward.1} parent=1 // pred_region
      _
    $region137: #{treeqn_forward.1} parent=1 // pred_fallthru
      _
    // Predicated region
    $region138: #{treeqn_forward.1} parent=1 // pred_check
      _
    $region139: #{treeqn_forward.1} parent=1 // pred_check_branch
      %8075 = sbr.rel (0) target = $region141
    $region140: #{treeqn_forward.1} parent=1 // pred_region
      _
    $region141: #{treeqn_forward.1} parent=1 // pred_fallthru
      _
    // Predicated region
    $region142: #{treeqn_forward.1} parent=1 // pred_check
      _
    $region143: #{treeqn_forward.1} parent=1 // pred_check_branch
      %8077 = sbr.rel (0) target = $region145
    $region144: #{treeqn_forward.1} parent=1 // pred_region
      %8078 = dma.done [#allocation4], 16
    $region145: #{treeqn_forward.1} parent=1 // pred_fallthru
      _
    %8079 = vsyncpa [#allocation4], 1

</llo_original>
